<compile_context>
chip_gen: v6e
topology: v6e:2x2x1
jax: 0.10.0
libtpu: 0.0.40
codegen_flags: <defaults>
</compile_context>

<pallas_src>
import functools

import jax
import jax.numpy as jnp
from jax.experimental import pallas as pl
from jax.experimental.pallas import tpu as pltpu

_EPS = 1e-5


def _round_up(x, m):
    return ((x + m - 1) // m) * m


def _pick_tile(dim, target, align):
    """Largest tile <= target that divides `dim` and is a multiple of `align`.
    Falls back to the full dim when dim <= target or no aligned divisor exists."""
    if dim <= target:
        return dim
    start = target - (target % align)
    for cand in range(start, align - 1, -align):
        if dim % cand == 0:
            return cand
    return dim


def feature_reduction_formula(input_feature_map_size):
    if input_feature_map_size >= 4:
        return int(input_feature_map_size / 4)
    return -1


# ----------------------------- Pallas kernels ------------------------------ #

def _conv3x3_taps(x_ref, w_ref, ho, wo):
    """Direct 3x3 conv accumulation over the 9 taps.
    x_ref: (1, ho+2, wo+2, cin) pre-padded plane (bf16).
    w_ref: (9, cin, coutp) resident weights (bf16), tap-major (kh, kw).
    Returns f32 (ho*wo, coutp)."""
    cin = x_ref.shape[-1]
    acc = None
    for kh in range(3):
        for kw in range(3):
            a = x_ref[0, kh:kh + ho, kw:kw + wo, :].reshape(ho * wo, cin)
            d = jnp.dot(a, w_ref[kh * 3 + kw], preferred_element_type=jnp.float32)
            acc = d if acc is None else acc + d
    return acc


def _conv3x3_bn_relu_kernel(x_ref, w_ref, b_ref, s_ref, t_ref, o_ref, *, ho, wo):
    # conv1: o = relu((conv(x) + b) * bn2_scale + bn2_shift)
    y = _conv3x3_taps(x_ref, w_ref, ho, wo) + b_ref[...]
    o_ref[...] = jnp.maximum(y * s_ref[...] + t_ref[...], 0.0).astype(o_ref.dtype)


def _conv3x3_res_kernel(x_ref, w_ref, b_ref, r_ref, o_ref, *, ho, wo):
    # conv2 fused with the shortcut residual add.
    y = _conv3x3_taps(x_ref, w_ref, ho, wo) + b_ref[...]
    o_ref[...] = (y + r_ref[...].astype(jnp.float32)).astype(o_ref.dtype)


def _conv3x3_bias_kernel(x_ref, w_ref, b_ref, o_ref, *, ho, wo):
    y = _conv3x3_taps(x_ref, w_ref, ho, wo) + b_ref[...]
    o_ref[...] = y.astype(o_ref.dtype)


def _matmul_bias_kernel(a_ref, w_ref, b_ref, o_ref):
    # o = a @ w + b ; K fully resident (no K grid axis / no accumulator scratch).
    o_ref[...] = (jnp.dot(a_ref[...], w_ref[...], preferred_element_type=jnp.float32)
                  + b_ref[...]).astype(o_ref.dtype)


def _pool_mix_kernel(alpha_ref, x_ref, o_ref, *, red_k):
    # x_ref: (1, red_k, Wo, Cp) = one row of pooling windows, channels on the lane dim.
    # o = alpha*max_window + (1-alpha)*avg_window, stored lane-dense (red_in, Cp).
    a = alpha_ref[0]                              # scalar from SMEM
    x = x_ref[0].astype(jnp.float32)              # (red_k, Wo, Cp)
    wo, cp = x.shape[1], x.shape[2]
    red_in = wo // red_k
    colmax = jnp.max(x, axis=0)                   # within-window H reduce -> (Wo, Cp)
    colsum = jnp.sum(x, axis=0)
    colmax = colmax.reshape(red_in, red_k, cp)
    colsum = colsum.reshape(red_in, red_k, cp)
    mx = jnp.max(colmax, axis=1)                  # within-window W reduce -> (red_in, Cp)
    av = jnp.sum(colsum, axis=1) * (1.0 / (red_k * red_k))
    o_ref[0, 0] = a * mx + (1.0 - a) * av


# ------------------------------ Pallas wrappers ----------------------------- #

def conv3x3(x_pad, w9, b, *, bn2=None, residual=None, out_dtype=jnp.float32):
    """Direct 3x3 'same' conv (stride 1), one batch image per grid step.
    x_pad: (N, H+2, W+2, Cin) bf16, spatially pre-padded NHWC.
    w9:    (9, Cin, Coutp) bf16, Coutp a multiple of 128 (lane-dense stores).
    b:     (Coutp,) f32.
    bn2:   optional (scale, shift) fused as relu(y*scale+shift)  (conv1 path).
    residual: optional (N*Ho*Wo, Coutp) bf16 added in the epilogue (conv2 path).
    Returns (N*Ho*Wo, Coutp). Per-block VMEM stays in the few-100-KiB range for WRN shapes,
    well under v7x's 64 MiB (and v5e's 16 MiB default scoped limit)."""
    n, hp, wp, cin = x_pad.shape
    ho, wo = hp - 2, wp - 2
    m = ho * wo
    coutp = w9.shape[-1]

    in_specs = [
        pl.BlockSpec((1, hp, wp, cin), lambda i: (i, 0, 0, 0)),   # one padded plane
        pl.BlockSpec((9, cin, coutp), lambda i: (0, 0, 0)),       # resident weights
        pl.BlockSpec((1, coutp), lambda i: (0, 0)),               # bias
    ]
    args = [x_pad, w9, b.reshape(1, coutp)]
    if bn2 is not None:
        kernel = functools.partial(_conv3x3_bn_relu_kernel, ho=ho, wo=wo)
        in_specs += [pl.BlockSpec((1, coutp), lambda i: (0, 0)),
                     pl.BlockSpec((1, coutp), lambda i: (0, 0))]
        args += [bn2[0].reshape(1, coutp), bn2[1].reshape(1, coutp)]
    elif residual is not None:
        kernel = functools.partial(_conv3x3_res_kernel, ho=ho, wo=wo)
        in_specs += [pl.BlockSpec((m, coutp), lambda i: (i, 0))]  # residual (bf16)
        args += [residual]
    else:
        kernel = functools.partial(_conv3x3_bias_kernel, ho=ho, wo=wo)

    return pl.pallas_call(
        kernel,
        out_shape=jax.ShapeDtypeStruct((n * m, coutp), out_dtype),
        grid_spec=pltpu.PrefetchScalarGridSpec(
            num_scalar_prefetch=0,
            grid=(n,),
            in_specs=in_specs,
            out_specs=pl.BlockSpec((m, coutp), lambda i: (i, 0)),
        ),
        compiler_params=pltpu.CompilerParams(dimension_semantics=("parallel",)),
    )(*args)


def matmul_bias(a, w, b, *, out_dtype=jnp.float32, target_tm=512, target_tn=512):
    """o = a @ w + b with K fully resident (used for the 1x1 shortcut and the classifier;
    K*N*2B <= ~1 MiB for every use here)."""
    m, k = a.shape
    n = w.shape[1]
    tm = _pick_tile(m, target_tm, 8)
    tn = _pick_tile(n, target_tn, 128)
    grid = (m // tm, n // tn)
    return pl.pallas_call(
        _matmul_bias_kernel,
        out_shape=jax.ShapeDtypeStruct((m, n), out_dtype),
        grid_spec=pltpu.PrefetchScalarGridSpec(
            num_scalar_prefetch=0,
            grid=grid,
            in_specs=[
                pl.BlockSpec((tm, k), lambda i, j: (i, 0)),
                pl.BlockSpec((k, tn), lambda i, j: (0, j)),       # resident along M
                pl.BlockSpec((1, tn), lambda i, j: (0, j)),
            ],
            out_specs=pl.BlockSpec((tm, tn), lambda i, j: (i, j)),
        ),
        compiler_params=pltpu.CompilerParams(
            dimension_semantics=("parallel", "parallel")),
    )(a, w, b.reshape(1, n))


def pool_mix(alpha, fwd, red_k):
    """alpha*MaxPool_k + (1-alpha)*AvgPool_k over fwd (N, Ho, Wo, Cp), channels-last.
    One row of pooling windows per grid step; alpha lives in SMEM."""
    n, ho, wo, cp = fwd.shape
    red_in = ho // red_k
    kernel = functools.partial(_pool_mix_kernel, red_k=red_k)
    return pl.pallas_call(
        kernel,
        out_shape=jax.ShapeDtypeStruct((n, red_in, red_in, cp), jnp.float32),
        grid_spec=pltpu.PrefetchScalarGridSpec(
            num_scalar_prefetch=0,
            grid=(n, red_in),
            in_specs=[
                pl.BlockSpec(memory_space=pltpu.MemorySpace.SMEM),            # alpha (1,)
                pl.BlockSpec((1, red_k, wo, cp), lambda i, j: (i, j, 0, 0)),  # window row
            ],
            out_specs=pl.BlockSpec((1, 1, red_in, cp), lambda i, j: (i, j, 0, 0)),
        ),
        compiler_params=pltpu.CompilerParams(
            dimension_semantics=("parallel", "parallel")),
    )(alpha, fwd)


# ------------------------------- model glue -------------------------------- #

def init_params(key, in_channels, channels, num_classes, input_size, stride):
    ks = jax.random.split(key, 20)
    cinp = _round_up(in_channels, 16)     # sublane-friendly K for the bf16 MXU
    cp = _round_up(channels, 128)         # lane-dense Cout
    ncp = _round_up(num_classes, 128)     # lane-dense classifier width
    p = {}
    # BN1 (applied XLA-side, unpadded).
    p["bn1_gamma"] = 1.0 + 0.1 * jax.random.normal(ks[0], (in_channels,), jnp.float32)
    p["bn1_beta"] = 0.1 * jax.random.normal(ks[1], (in_channels,), jnp.float32)
    p["bn1_mean"] = 0.1 * jax.random.normal(ks[2], (in_channels,), jnp.float32)
    p["bn1_var"] = jax.random.uniform(ks[3], (in_channels,), jnp.float32, 0.5, 1.5)
    # conv1 3x3: torch weight (out, in, 3, 3) -> (9 taps, cin_pad, cout_pad) bf16.
    w1_t = 0.1 * jax.random.normal(ks[4], (channels, in_channels, 3, 3), jnp.float32)
    w1 = jnp.transpose(w1_t, (2, 3, 1, 0)).reshape(9, in_channels, channels)
    p["w1"] = jnp.pad(w1, ((0, 0), (0, cinp - in_channels), (0, cp - channels))
                      ).astype(jnp.bfloat16)
    p["b1"] = jnp.pad(0.1 * jax.random.normal(ks[5], (channels,), jnp.float32),
                      (0, cp - channels))
    # BN2 (padded so folded scale/shift are 0 on padded channels).
    p["bn2_gamma"] = jnp.pad(1.0 + 0.1 * jax.random.normal(ks[6], (channels,), jnp.float32),
                             (0, cp - channels))
    p["bn2_beta"] = jnp.pad(0.1 * jax.random.normal(ks[7], (channels,), jnp.float32),
                            (0, cp - channels))
    p["bn2_mean"] = jnp.pad(0.1 * jax.random.normal(ks[8], (channels,), jnp.float32),
                            (0, cp - channels))
    p["bn2_var"] = jnp.pad(jax.random.uniform(ks[9], (channels,), jnp.float32, 0.5, 1.5),
                           (0, cp - channels), constant_values=1.0)
    # conv2 3x3 (cin is conv1's padded output width).
    w2_t = 0.1 * jax.random.normal(ks[10], (channels, channels, 3, 3), jnp.float32)
    w2 = jnp.transpose(w2_t, (2, 3, 1, 0)).reshape(9, channels, channels)
    p["w2"] = jnp.pad(w2, ((0, 0), (0, cp - channels), (0, cp - channels))
                      ).astype(jnp.bfloat16)
    p["b2"] = jnp.pad(0.1 * jax.random.normal(ks[11], (channels,), jnp.float32),
                      (0, cp - channels))
    # 1x1 shortcut conv (only when stride != 1 or in != out).
    if stride != 1 or in_channels != channels:
        wsc_t = 0.1 * jax.random.normal(ks[12], (channels, in_channels, 1, 1), jnp.float32)
        wsc = jnp.transpose(wsc_t[:, :, 0, 0], (1, 0))
        p["wsc"] = jnp.pad(wsc, ((0, cinp - in_channels), (0, cp - channels))
                           ).astype(jnp.bfloat16)
        p["bsc"] = jnp.pad(0.1 * jax.random.normal(ks[13], (channels,), jnp.float32),
                           (0, cp - channels))
    # Internal classifier. Torch Linear weight is (num_classes, feat) over NCHW-flattened
    # (c, h, w) features; fold the (h, w, c_padded) layout permutation plus the lane padding
    # into the stored weight so the runtime path needs no transpose and stores are lane-dense.
    red_k = feature_reduction_formula(input_size)
    red_in = input_size if red_k == -1 else input_size // red_k
    if red_k != -1:
        p["alpha"] = jax.random.uniform(ks[14], (1,), jnp.float32)
    feat = channels * red_in * red_in
    wl_t = 0.1 * jax.random.normal(ks[15], (num_classes, feat), jnp.float32)
    wl = wl_t.T.reshape(channels, red_in, red_in, num_classes).transpose(1, 2, 0, 3)
    wl = jnp.pad(wl, ((0, 0), (0, 0), (0, cp - channels), (0, ncp - num_classes)))
    p["wl"] = wl.reshape(red_in * red_in * cp, ncp).astype(jnp.bfloat16)
    p["bl"] = jnp.pad(0.1 * jax.random.normal(ks[16], (num_classes,), jnp.float32),
                      (0, ncp - num_classes))
    return p


def internal_classifier(params, fwd, input_size, num_classes):
    n, ho, wo, cp = fwd.shape
    if ho != input_size or wo != input_size:
        raise ValueError(
            f"internal classifier was sized for {input_size}x{input_size} features, "
            f"got {ho}x{wo}")
    red_k = feature_reduction_formula(input_size)
    if red_k == -1:
        flat = fwd.reshape(n, ho * wo * cp)            # (h, w, c) order; wl rows permuted
    else:
        red_in = input_size // red_k
        mixed = pool_mix(params["alpha"], fwd, red_k)  # (n, red_in, red_in, cp)
        flat = mixed.reshape(n, red_in * red_in * cp)
    logits = matmul_bias(flat.astype(jnp.bfloat16), params["wl"], params["bl"],
                         out_dtype=jnp.float32)
    return logits[:, :num_classes]


def wide_basic_forward(params, x_nchw, *, stride=1, channels=8, input_size=16,
                       num_classes=10):
    n, cin, h, w = x_nchw.shape
    cinp = params["w1"].shape[1]
    cp = params["w1"].shape[2]

    x = jnp.transpose(x_nchw, (0, 2, 3, 1)).astype(jnp.float32)   # NHWC

    # Eval-mode BN folds (f32).
    s1 = params["bn1_gamma"] * jax.lax.rsqrt(params["bn1_var"] + _EPS)
    t1 = params["bn1_beta"] - params["bn1_mean"] * s1
    s2 = params["bn2_gamma"] * jax.lax.rsqrt(params["bn2_var"] + _EPS)
    t2 = params["bn2_beta"] - params["bn2_mean"] * s2

    # BN1 + ReLU hoisted out of the conv kernel (per pixel, fused with the pads XLA-side).
    xa = jnp.maximum(x * s1 + t1, 0.0)
    xa = jnp.pad(xa, ((0, 0), (0, 0), (0, 0), (0, cinp - cin)))
    xa = jnp.pad(xa, ((0, 0), (1, 1), (1, 1), (0, 0))).astype(jnp.bfloat16)

    # conv1 (3x3, stride 1) with bias + BN2 + ReLU fused into the epilogue. Dropout = identity.
    y2 = conv3x3(xa, params["w1"], params["b1"], bn2=(s2, t2),
                 out_dtype=jnp.bfloat16)                          # (n*h*w, cp)
    y2p = jnp.pad(y2.reshape(n, h, w, cp), ((0, 0), (1, 1), (1, 1), (0, 0)))

    # Shortcut branch (1x1 conv on the raw input, or identity), kept bf16.
    if stride != 1 or cin != channels:
        xs = x[:, ::stride, ::stride, :]
        hs, ws = xs.shape[1], xs.shape[2]
        xs = jnp.pad(xs, ((0, 0), (0, 0), (0, 0), (0, cinp - cin)))
        res = matmul_bias(xs.reshape(n * hs * ws, cinp).astype(jnp.bfloat16),
                          params["wsc"], params["bsc"], out_dtype=jnp.bfloat16)
    else:
        xs = jnp.pad(x, ((0, 0), (0, 0), (0, 0), (0, cp - cin)))
        res = xs.reshape(n * h * w, cp).astype(jnp.bfloat16)

    # conv2 fused with the residual add.
    if stride == 1:
        fwd2d = conv3x3(y2p, params["w2"], params["b2"], residual=res,
                        out_dtype=jnp.float32)
        fwd = fwd2d.reshape(n, h, w, cp)
    else:
        # TODO(synk): strided conv2 computes the stride-1 output and subsamples XLA-side
        #             (extra compute); a halo-tiled strided kernel would avoid it.
        y_full = conv3x3(y2p, params["w2"], params["b2"],
                         out_dtype=jnp.float32).reshape(n, h, w, cp)
        ho = (h - 1) // stride + 1
        wo = (w - 1) // stride + 1
        fwd = y_full[:, ::stride, ::stride, :] + \
            res.reshape(n, ho, wo, cp).astype(jnp.float32)

    out = internal_classifier(params, fwd, input_size, num_classes)

    fwd_nchw = jnp.transpose(fwd[..., :channels], (0, 3, 1, 2))
    return fwd_nchw, 1, out


# ----------------------- pure-XLA reference (for checking) ------------------ #

def _q(x):  # bf16 round-trip (mirror the kernel path's quantization points)
    return x.astype(jnp.bfloat16).astype(jnp.float32)


def reference_forward(params, x_nchw, *, stride, channels, input_size, num_classes):
    n, cin, h, w = x_nchw.shape
    cinp = params["w1"].shape[1]
    cp = params["w1"].shape[2]
    x = jnp.transpose(x_nchw, (0, 2, 3, 1)).astype(jnp.float32)

    s1 = params["bn1_gamma"] * jax.lax.rsqrt(params["bn1_var"] + _EPS)
    t1 = params["bn1_beta"] - params["bn1_mean"] * s1
    s2 = params["bn2_gamma"] * jax.lax.rsqrt(params["bn2_var"] + _EPS)
    t2 = params["bn2_beta"] - params["bn2_mean"] * s2

    xa = jnp.maximum(x * s1 + t1, 0.0)
    xa = _q(jnp.pad(xa, ((0, 0), (0, 0), (0, 0), (0, cinp - cin))))
    w1 = params["w1"].astype(jnp.float32).reshape(3, 3, cinp, cp)
    y = jax.lax.conv_general_dilated(xa, w1, (1, 1), ((1, 1), (1, 1)),
                                     dimension_numbers=("NHWC", "HWIO", "NHWC"))
    y = _q(jnp.maximum((y + params["b1"]) * s2 + t2, 0.0))

    if stride != 1 or cin != channels:
        xs = _q(jnp.pad(x[:, ::stride, ::stride, :],
                        ((0, 0), (0, 0), (0, 0), (0, cinp - cin))))
        res = _q(xs @ params["wsc"].astype(jnp.float32) + params["bsc"])
    else:
        res = _q(jnp.pad(x, ((0, 0), (0, 0), (0, 0), (0, cp - cin))))

    w2 = params["w2"].astype(jnp.float32).reshape(3, 3, cp, cp)
    yc = jax.lax.conv_general_dilated(y, w2, (stride, stride), ((1, 1), (1, 1)),
                                      dimension_numbers=("NHWC", "HWIO", "NHWC"))
    fwd = yc + params["b2"] + res.reshape(yc.shape)

    red_k = feature_reduction_formula(input_size)
    if red_k == -1:
        flat = fwd.reshape(n, -1)
    else:
        red_in = input_size // red_k
        xw = fwd.reshape(n, red_in, red_k, red_in, red_k, cp)
        a = params["alpha"][0]
        mixed = a * xw.max(axis=(2, 4)) + (1.0 - a) * xw.mean(axis=(2, 4))
        flat = mixed.reshape(n, -1)
    logits = _q(flat) @ params["wl"].astype(jnp.float32) + params["bl"]
    fwd_nchw = jnp.transpose(fwd[..., :channels], (0, 3, 1, 2))
    return fwd_nchw, logits[:, :num_classes]


# --------------------------------- main ------------------------------------ #

if __name__ == "__main__":
    key = jax.random.PRNGKey(0)
    kx, kp = jax.random.split(key)

    N, Cin, H, W = 2, 4, 16, 16
    channels = 8
    num_classes = 10
    stride = 1
    input_size = 16  # params[2]: spatial size seen by the internal classifier

    x = jax.random.normal(kx, (N, Cin, H, W), jnp.float32)
    params = init_params(kp, Cin, channels, num_classes, input_size, stride)

    fn = jax.jit(functools.partial(wide_basic_forward, stride=stride, channels=channels,
                                   input_size=input_size, num_classes=num_classes))
    fwd, flag, logits = fn(params, x)
    jax.block_until_ready((fwd, logits))

    assert fwd.shape == (N, channels, H // stride, W // stride), fwd.shape
    assert logits.shape == (N, num_classes), logits.shape

    # Numerical cross-check against a plain-XLA reference of the same lowering.
    fwd_ref, logits_ref = reference_forward(params, x, stride=stride, channels=channels,
                                            input_size=input_size, num_classes=num_classes)
    assert float(jnp.max(jnp.abs(fwd - fwd_ref))) < 3e-2
    assert float(jnp.max(jnp.abs(logits - logits_ref))) < 3e-2

    print("KERNEL_OK")
</pallas_src>

<mosaic_0001>
module attributes {stable_mosaic.version = 11 : i64} {
  func.func @_matmul_bias_kernel(%arg0: i32, %arg1: i32, %arg2: memref<512x16xbf16, #tpu.memory_space<vmem>>, %arg3: memref<16x128xbf16, #tpu.memory_space<vmem>>, %arg4: memref<1x128xf32, #tpu.memory_space<vmem>>, %arg5: memref<512x128xbf16, #tpu.memory_space<vmem>>) attributes {dimension_semantics = [#tpu.dimension_semantics<parallel>, #tpu.dimension_semantics<parallel>], iteration_bounds = array<i64: 1, 1>, scalar_prefetch = 0 : i64, scratch_operands = 0 : i64, tpu.core_type = #tpu.core_type<tc>, window_params = [{transform_indices = @transform_0, window_bounds = array<i64: 512, 16>}, {transform_indices = @transform_1, window_bounds = array<i64: 16, 128>}, {transform_indices = @transform_2, window_bounds = array<i64: 1, 128>}, {transform_indices = @transform_3, window_bounds = array<i64: 512, 128>}]} {
    %c0 = arith.constant 0 : index
    %c0_0 = arith.constant 0 : index
    %0 = vector.load %arg2[%c0, %c0_0] : memref<512x16xbf16, #tpu.memory_space<vmem>>, vector<512x16xbf16>
    %c0_1 = arith.constant 0 : index
    %c0_2 = arith.constant 0 : index
    %1 = vector.load %arg3[%c0_1, %c0_2] : memref<16x128xbf16, #tpu.memory_space<vmem>>, vector<16x128xbf16>
    %cst = arith.constant dense<0.000000e+00> : vector<512x128xf32>
    %2 = tpu.matmul %0, %1, %cst {dimension_numbers = #tpu.dot_dimension_numbers<[1], [0], [0], [1], [0, 0, 1, 1], [], []>} : vector<512x16xbf16>, vector<16x128xbf16>, vector<512x128xf32> -> vector<512x128xf32>
    %c0_3 = arith.constant 0 : index
    %c0_4 = arith.constant 0 : index
    %3 = vector.load %arg4[%c0_3, %c0_4] : memref<1x128xf32, #tpu.memory_space<vmem>>, vector<1x128xf32>
    %4 = vector.broadcast %3 : vector<1x128xf32> to vector<512x128xf32>
    %5 = arith.addf %2, %4 : vector<512x128xf32>
    %6 = arith.truncf %5 : vector<512x128xf32> to vector<512x128xbf16>
    %c0_5 = arith.constant 0 : index
    %c0_6 = arith.constant 0 : index
    %7 = vector.load %arg5[%c0_5, %c0_6] : memref<512x128xbf16, #tpu.memory_space<vmem>>, vector<512x128xbf16>
    tpu.vector_store %arg5[%c0_5, %c0_6], %6 {strides = array<i32>} : memref<512x128xbf16, #tpu.memory_space<vmem>>, vector<512x128xbf16>,
    return
  }
  func.func @transform_0(%arg0: i32, %arg1: i32) -> (i32, i32) {
    %c0_i32 = arith.constant 0 : i32
    %c0_i32_0 = arith.constant 0 : i32
    return %arg0, %c0_i32 : i32, i32
  }
  func.func @transform_1(%arg0: i32, %arg1: i32) -> (i32, i32) {
    %c0_i32 = arith.constant 0 : i32
    %c0_i32_0 = arith.constant 0 : i32
    return %c0_i32, %arg1 : i32, i32
  }
  func.func @transform_2(%arg0: i32, %arg1: i32) -> (i32, i32) {
    %c0_i32 = arith.constant 0 : i32
    %c0_i32_0 = arith.constant 0 : i32
    return %c0_i32, %arg1 : i32, i32
  }
  func.func @transform_3(%arg0: i32, %arg1: i32) -> (i32, i32) {
    %c0_i32 = arith.constant 0 : i32
    return %arg0, %arg1 : i32, i32
  }
}

module attributes {stable_mosaic.version = 11 : i64} {
  func.func @_conv3x3_bn_relu_kernel(%arg0: i32, %arg1: memref<1x18x18x16xbf16, #tpu.memory_space<vmem>>, %arg2: memref<9x16x128xbf16, #tpu.memory_space<vmem>>, %arg3: memref<1x128xf32, #tpu.memory_space<vmem>>, %arg4: memref<1x128xf32, #tpu.memory_space<vmem>>, %arg5: memref<1x128xf32, #tpu.memory_space<vmem>>, %arg6: memref<256x128xbf16, #tpu.memory_space<vmem>>) attributes {dimension_semantics = [#tpu.dimension_semantics<parallel>], iteration_bounds = array<i64: 2>, scalar_prefetch = 0 : i64, scratch_operands = 0 : i64, tpu.core_type = #tpu.core_type<tc>, window_params = [{transform_indices = @transform_0, window_bounds = array<i64: 1, 18, 18, 16>}, {pipeline_mode = #tpu.pipeline_mode<synchronous>, transform_indices = @transform_1, window_bounds = array<i64: 9, 16, 128>}, {pipeline_mode = #tpu.pipeline_mode<synchronous>, transform_indices = @transform_2, window_bounds = array<i64: 1, 128>}, {pipeline_mode = #tpu.pipeline_mode<synchronous>, transform_indices = @transform_3, window_bounds = array<i64: 1, 128>}, {pipeline_mode = #tpu.pipeline_mode<synchronous>, transform_indices = @transform_4, window_bounds = array<i64: 1, 128>}, {transform_indices = @transform_5, window_bounds = array<i64: 256, 128>}]} {
    %c0 = arith.constant 0 : index
    %c0_0 = arith.constant 0 : index
    %c0_1 = arith.constant 0 : index
    %c0_2 = arith.constant 0 : index
    %0 = vector.load %arg1[%c0, %c0_0, %c0_1, %c0_2] : memref<1x18x18x16xbf16, #tpu.memory_space<vmem>>, vector<1x16x16x16xbf16>
    %1 = vector.shape_cast %0 : vector<1x16x16x16xbf16> to vector<16x16x16xbf16>
    %2 = vector.shape_cast %1 : vector<16x16x16xbf16> to vector<256x16xbf16>
    %c0_3 = arith.constant 0 : index
    %c0_4 = arith.constant 0 : index
    %c0_5 = arith.constant 0 : index
    %3 = vector.load %arg2[%c0_3, %c0_4, %c0_5] : memref<9x16x128xbf16, #tpu.memory_space<vmem>>, vector<1x16x128xbf16>
    %4 = vector.shape_cast %3 : vector<1x16x128xbf16> to vector<16x128xbf16>
    %cst = arith.constant dense<0.000000e+00> : vector<256x128xf32>
    %5 = tpu.matmul %2, %4, %cst {dimension_numbers = #tpu.dot_dimension_numbers<[1], [0], [0], [1], [0, 0, 1, 1], [], []>} : vector<256x16xbf16>, vector<16x128xbf16>, vector<256x128xf32> -> vector<256x128xf32>
    %c0_6 = arith.constant 0 : index
    %c0_7 = arith.constant 0 : index
    %c1 = arith.constant 1 : index
    %c0_8 = arith.constant 0 : index
    %6 = vector.load %arg1[%c0_6, %c0_7, %c1, %c0_8] : memref<1x18x18x16xbf16, #tpu.memory_space<vmem>>, vector<1x16x16x16xbf16>
    %7 = vector.shape_cast %6 : vector<1x16x16x16xbf16> to vector<16x16x16xbf16>
    %8 = vector.shape_cast %7 : vector<16x16x16xbf16> to vector<256x16xbf16>
    %c1_9 = arith.constant 1 : index
    %c0_10 = arith.constant 0 : index
    %c0_11 = arith.constant 0 : index
    %9 = vector.load %arg2[%c1_9, %c0_10, %c0_11] : memref<9x16x128xbf16, #tpu.memory_space<vmem>>, vector<1x16x128xbf16>
    %10 = vector.shape_cast %9 : vector<1x16x128xbf16> to vector<16x128xbf16>
    %cst_12 = arith.constant dense<0.000000e+00> : vector<256x128xf32>
    %11 = tpu.matmul %8, %10, %cst_12 {dimension_numbers = #tpu.dot_dimension_numbers<[1], [0], [0], [1], [0, 0, 1, 1], [], []>} : vector<256x16xbf16>, vector<16x128xbf16>, vector<256x128xf32> -> vector<256x128xf32>
    %12 = arith.addf %5, %11 : vector<256x128xf32>
    %c0_13 = arith.constant 0 : index
    %c0_14 = arith.constant 0 : index
    %c2 = arith.constant 2 : index
    %c0_15 = arith.constant 0 : index
    %13 = vector.load %arg1[%c0_13, %c0_14, %c2, %c0_15] : memref<1x18x18x16xbf16, #tpu.memory_space<vmem>>, vector<1x16x16x16xbf16>
    %14 = vector.shape_cast %13 : vector<1x16x16x16xbf16> to vector<16x16x16xbf16>
    %15 = vector.shape_cast %14 : vector<16x16x16xbf16> to vector<256x16xbf16>
    %c2_16 = arith.constant 2 : index
    %c0_17 = arith.constant 0 : index
    %c0_18 = arith.constant 0 : index
    %16 = vector.load %arg2[%c2_16, %c0_17, %c0_18] : memref<9x16x128xbf16, #tpu.memory_space<vmem>>, vector<1x16x128xbf16>
    %17 = vector.shape_cast %16 : vector<1x16x128xbf16> to vector<16x128xbf16>
    %cst_19 = arith.constant dense<0.000000e+00> : vector<256x128xf32>
    %18 = tpu.matmul %15, %17, %cst_19 {dimension_numbers = #tpu.dot_dimension_numbers<[1], [0], [0], [1], [0, 0, 1, 1], [], []>} : vector<256x16xbf16>, vector<16x128xbf16>, vector<256x128xf32> -> vector<256x128xf32>
    %19 = arith.addf %12, %18 : vector<256x128xf32>
    %c0_20 = arith.constant 0 : index
    %c1_21 = arith.constant 1 : index
    %c0_22 = arith.constant 0 : index
    %c0_23 = arith.constant 0 : index
    %20 = vector.load %arg1[%c0_20, %c1_21, %c0_22, %c0_23] : memref<1x18x18x16xbf16, #tpu.memory_space<vmem>>, vector<1x16x16x16xbf16>
    %21 = vector.shape_cast %20 : vector<1x16x16x16xbf16> to vector<16x16x16xbf16>
    %22 = vector.shape_cast %21 : vector<16x16x16xbf16> to vector<256x16xbf16>
    %c3 = arith.constant 3 : index
    %c0_24 = arith.constant 0 : index
    %c0_25 = arith.constant 0 : index
    %23 = vector.load %arg2[%c3, %c0_24, %c0_25] : memref<9x16x128xbf16, #tpu.memory_space<vmem>>, vector<1x16x128xbf16>
    %24 = vector.shape_cast %23 : vector<1x16x128xbf16> to vector<16x128xbf16>
    %cst_26 = arith.constant dense<0.000000e+00> : vector<256x128xf32>
    %25 = tpu.matmul %22, %24, %cst_26 {dimension_numbers = #tpu.dot_dimension_numbers<[1], [0], [0], [1], [0, 0, 1, 1], [], []>} : vector<256x16xbf16>, vector<16x128xbf16>, vector<256x128xf32> -> vector<256x128xf32>
    %26 = arith.addf %19, %25 : vector<256x128xf32>
    %c0_27 = arith.constant 0 : index
    %c1_28 = arith.constant 1 : index
    %c1_29 = arith.constant 1 : index
    %c0_30 = arith.constant 0 : index
    %27 = vector.load %arg1[%c0_27, %c1_28, %c1_29, %c0_30] : memref<1x18x18x16xbf16, #tpu.memory_space<vmem>>, vector<1x16x16x16xbf16>
    %28 = vector.shape_cast %27 : vector<1x16x16x16xbf16> to vector<16x16x16xbf16>
    %29 = vector.shape_cast %28 : vector<16x16x16xbf16> to vector<256x16xbf16>
    %c4 = arith.constant 4 : index
    %c0_31 = arith.constant 0 : index
    %c0_32 = arith.constant 0 : index
    %30 = vector.load %arg2[%c4, %c0_31, %c0_32] : memref<9x16x128xbf16, #tpu.memory_space<vmem>>, vector<1x16x128xbf16>
    %31 = vector.shape_cast %30 : vector<1x16x128xbf16> to vector<16x128xbf16>
    %cst_33 = arith.constant dense<0.000000e+00> : vector<256x128xf32>
    %32 = tpu.matmul %29, %31, %cst_33 {dimension_numbers = #tpu.dot_dimension_numbers<[1], [0], [0], [1], [0, 0, 1, 1], [], []>} : vector<256x16xbf16>, vector<16x128xbf16>, vector<256x128xf32> -> vector<256x128xf32>
    %33 = arith.addf %26, %32 : vector<256x128xf32>
    %c0_34 = arith.constant 0 : index
    %c1_35 = arith.constant 1 : index
    %c2_36 = arith.constant 2 : index
    %c0_37 = arith.constant 0 : index
    %34 = vector.load %arg1[%c0_34, %c1_35, %c2_36, %c0_37] : memref<1x18x18x16xbf16, #tpu.memory_space<vmem>>, vector<1x16x16x16xbf16>
    %35 = vector.shape_cast %34 : vector<1x16x16x16xbf16> to vector<16x16x16xbf16>
    %36 = vector.shape_cast %35 : vector<16x16x16xbf16> to vector<256x16xbf16>
    %c5 = arith.constant 5 : index
    %c0_38 = arith.constant 0 : index
    %c0_39 = arith.constant 0 : index
    %37 = vector.load %arg2[%c5, %c0_38, %c0_39] : memref<9x16x128xbf16, #tpu.memory_space<vmem>>, vector<1x16x128xbf16>
    %38 = vector.shape_cast %37 : vector<1x16x128xbf16> to vector<16x128xbf16>
    %cst_40 = arith.constant dense<0.000000e+00> : vector<256x128xf32>
    %39 = tpu.matmul %36, %38, %cst_40 {dimension_numbers = #tpu.dot_dimension_numbers<[1], [0], [0], [1], [0, 0, 1, 1], [], []>} : vector<256x16xbf16>, vector<16x128xbf16>, vector<256x128xf32> -> vector<256x128xf32>
    %40 = arith.addf %33, %39 : vector<256x128xf32>
    %c0_41 = arith.constant 0 : index
    %c2_42 = arith.constant 2 : index
    %c0_43 = arith.constant 0 : index
    %c0_44 = arith.constant 0 : index
    %41 = vector.load %arg1[%c0_41, %c2_42, %c0_43, %c0_44] : memref<1x18x18x16xbf16, #tpu.memory_space<vmem>>, vector<1x16x16x16xbf16>
    %42 = vector.shape_cast %41 : vector<1x16x16x16xbf16> to vector<16x16x16xbf16>
    %43 = vector.shape_cast %42 : vector<16x16x16xbf16> to vector<256x16xbf16>
    %c6 = arith.constant 6 : index
    %c0_45 = arith.constant 0 : index
    %c0_46 = arith.constant 0 : index
    %44 = vector.load %arg2[%c6, %c0_45, %c0_46] : memref<9x16x128xbf16, #tpu.memory_space<vmem>>, vector<1x16x128xbf16>
    %45 = vector.shape_cast %44 : vector<1x16x128xbf16> to vector<16x128xbf16>
    %cst_47 = arith.constant dense<0.000000e+00> : vector<256x128xf32>
    %46 = tpu.matmul %43, %45, %cst_47 {dimension_numbers = #tpu.dot_dimension_numbers<[1], [0], [0], [1], [0, 0, 1, 1], [], []>} : vector<256x16xbf16>, vector<16x128xbf16>, vector<256x128xf32> -> vector<256x128xf32>
    %47 = arith.addf %40, %46 : vector<256x128xf32>
    %c0_48 = arith.constant 0 : index
    %c2_49 = arith.constant 2 : index
    %c1_50 = arith.constant 1 : index
    %c0_51 = arith.constant 0 : index
    %48 = vector.load %arg1[%c0_48, %c2_49, %c1_50, %c0_51] : memref<1x18x18x16xbf16, #tpu.memory_space<vmem>>, vector<1x16x16x16xbf16>
    %49 = vector.shape_cast %48 : vector<1x16x16x16xbf16> to vector<16x16x16xbf16>
    %50 = vector.shape_cast %49 : vector<16x16x16xbf16> to vector<256x16xbf16>
    %c7 = arith.constant 7 : index
    %c0_52 = arith.constant 0 : index
    %c0_53 = arith.constant 0 : index
    %51 = vector.load %arg2[%c7, %c0_52, %c0_53] : memref<9x16x128xbf16, #tpu.memory_space<vmem>>, vector<1x16x128xbf16>
    %52 = vector.shape_cast %51 : vector<1x16x128xbf16> to vector<16x128xbf16>
    %cst_54 = arith.constant dense<0.000000e+00> : vector<256x128xf32>
    %53 = tpu.matmul %50, %52, %cst_54 {dimension_numbers = #tpu.dot_dimension_numbers<[1], [0], [0], [1], [0, 0, 1, 1], [], []>} : vector<256x16xbf16>, vector<16x128xbf16>, vector<256x128xf32> -> vector<256x128xf32>
    %54 = arith.addf %47, %53 : vector<256x128xf32>
    %c0_55 = arith.constant 0 : index
    %c2_56 = arith.constant 2 : index
    %c2_57 = arith.constant 2 : index
    %c0_58 = arith.constant 0 : index
    %55 = vector.load %arg1[%c0_55, %c2_56, %c2_57, %c0_58] : memref<1x18x18x16xbf16, #tpu.memory_space<vmem>>, vector<1x16x16x16xbf16>
    %56 = vector.shape_cast %55 : vector<1x16x16x16xbf16> to vector<16x16x16xbf16>
    %57 = vector.shape_cast %56 : vector<16x16x16xbf16> to vector<256x16xbf16>
    %c8 = arith.constant 8 : index
    %c0_59 = arith.constant 0 : index
    %c0_60 = arith.constant 0 : index
    %58 = vector.load %arg2[%c8, %c0_59, %c0_60] : memref<9x16x128xbf16, #tpu.memory_space<vmem>>, vector<1x16x128xbf16>
    %59 = vector.shape_cast %58 : vector<1x16x128xbf16> to vector<16x128xbf16>
    %cst_61 = arith.constant dense<0.000000e+00> : vector<256x128xf32>
    %60 = tpu.matmul %57, %59, %cst_61 {dimension_numbers = #tpu.dot_dimension_numbers<[1], [0], [0], [1], [0, 0, 1, 1], [], []>} : vector<256x16xbf16>, vector<16x128xbf16>, vector<256x128xf32> -> vector<256x128xf32>
    %61 = arith.addf %54, %60 : vector<256x128xf32>
    %c0_62 = arith.constant 0 : index
    %c0_63 = arith.constant 0 : index
    %62 = vector.load %arg3[%c0_62, %c0_63] : memref<1x128xf32, #tpu.memory_space<vmem>>, vector<1x128xf32>
    %63 = vector.broadcast %62 : vector<1x128xf32> to vector<256x128xf32>
    %64 = arith.addf %61, %63 : vector<256x128xf32>
    %c0_64 = arith.constant 0 : index
    %c0_65 = arith.constant 0 : index
    %65 = vector.load %arg4[%c0_64, %c0_65] : memref<1x128xf32, #tpu.memory_space<vmem>>, vector<1x128xf32>
    %66 = vector.broadcast %65 : vector<1x128xf32> to vector<256x128xf32>
    %67 = arith.mulf %64, %66 : vector<256x128xf32>
    %c0_66 = arith.constant 0 : index
    %c0_67 = arith.constant 0 : index
    %68 = vector.load %arg5[%c0_66, %c0_67] : memref<1x128xf32, #tpu.memory_space<vmem>>, vector<1x128xf32>
    %69 = vector.broadcast %68 : vector<1x128xf32> to vector<256x128xf32>
    %70 = arith.addf %67, %69 : vector<256x128xf32>
    %cst_68 = arith.constant 0.000000e+00 : f32
    %71 = vector.broadcast %cst_68 : f32 to vector<256x128xf32>
    %72 = arith.maximumf %70, %71 : vector<256x128xf32>
    %73 = arith.truncf %72 : vector<256x128xf32> to vector<256x128xbf16>
    %c0_69 = arith.constant 0 : index
    %c0_70 = arith.constant 0 : index
    %74 = vector.load %arg6[%c0_69, %c0_70] : memref<256x128xbf16, #tpu.memory_space<vmem>>, vector<256x128xbf16>
    tpu.vector_store %arg6[%c0_69, %c0_70], %73 {strides = array<i32>} : memref<256x128xbf16, #tpu.memory_space<vmem>>, vector<256x128xbf16>,
    return
  }
  func.func @transform_0(%arg0: i32) -> (i32, i32, i32, i32) {
    %c0_i32 = arith.constant 0 : i32
    %c0_i32_0 = arith.constant 0 : i32
    %c0_i32_1 = arith.constant 0 : i32
    %c0_i32_2 = arith.constant 0 : i32
    return %arg0, %c0_i32, %c0_i32_0, %c0_i32_1 : i32, i32, i32, i32
  }
  func.func @transform_1(%arg0: i32) -> (i32, i32, i32) {
    %c0_i32 = arith.constant 0 : i32
    %c0_i32_0 = arith.constant 0 : i32
    %c0_i32_1 = arith.constant 0 : i32
    %c0_i32_2 = arith.constant 0 : i32
    return %c0_i32, %c0_i32_0, %c0_i32_1 : i32, i32, i32
  }
  func.func @transform_2(%arg0: i32) -> (i32, i32) {
    %c0_i32 = arith.constant 0 : i32
    %c0_i32_0 = arith.constant 0 : i32
    %c0_i32_1 = arith.constant 0 : i32
    return %c0_i32, %c0_i32_0 : i32, i32
  }
  func.func @transform_3(%arg0: i32) -> (i32, i32) {
    %c0_i32 = arith.constant 0 : i32
    %c0_i32_0 = arith.constant 0 : i32
    %c0_i32_1 = arith.constant 0 : i32
    return %c0_i32, %c0_i32_0 : i32, i32
  }
  func.func @transform_4(%arg0: i32) -> (i32, i32) {
    %c0_i32 = arith.constant 0 : i32
    %c0_i32_0 = arith.constant 0 : i32
    %c0_i32_1 = arith.constant 0 : i32
    return %c0_i32, %c0_i32_0 : i32, i32
  }
  func.func @transform_5(%arg0: i32) -> (i32, i32) {
    %c0_i32 = arith.constant 0 : i32
    %c0_i32_0 = arith.constant 0 : i32
    return %arg0, %c0_i32 : i32, i32
  }
}

module attributes {stable_mosaic.version = 11 : i64} {
  func.func @_conv3x3_res_kernel(%arg0: i32, %arg1: memref<1x18x18x128xbf16, #tpu.memory_space<vmem>>, %arg2: memref<9x128x128xbf16, #tpu.memory_space<vmem>>, %arg3: memref<1x128xf32, #tpu.memory_space<vmem>>, %arg4: memref<256x128xbf16, #tpu.memory_space<vmem>>, %arg5: memref<256x128xf32, #tpu.memory_space<vmem>>) attributes {dimension_semantics = [#tpu.dimension_semantics<parallel>], iteration_bounds = array<i64: 2>, scalar_prefetch = 0 : i64, scratch_operands = 0 : i64, tpu.core_type = #tpu.core_type<tc>, window_params = [{transform_indices = @transform_0, window_bounds = array<i64: 1, 18, 18, 128>}, {pipeline_mode = #tpu.pipeline_mode<synchronous>, transform_indices = @transform_1, window_bounds = array<i64: 9, 128, 128>}, {pipeline_mode = #tpu.pipeline_mode<synchronous>, transform_indices = @transform_2, window_bounds = array<i64: 1, 128>}, {transform_indices = @transform_3, window_bounds = array<i64: 256, 128>}, {transform_indices = @transform_4, window_bounds = array<i64: 256, 128>}]} {
    %c0 = arith.constant 0 : index
    %c0_0 = arith.constant 0 : index
    %c0_1 = arith.constant 0 : index
    %c0_2 = arith.constant 0 : index
    %0 = vector.load %arg1[%c0, %c0_0, %c0_1, %c0_2] : memref<1x18x18x128xbf16, #tpu.memory_space<vmem>>, vector<1x16x16x128xbf16>
    %1 = vector.shape_cast %0 : vector<1x16x16x128xbf16> to vector<16x16x128xbf16>
    %2 = vector.shape_cast %1 : vector<16x16x128xbf16> to vector<256x128xbf16>
    %c0_3 = arith.constant 0 : index
    %c0_4 = arith.constant 0 : index
    %c0_5 = arith.constant 0 : index
    %3 = vector.load %arg2[%c0_3, %c0_4, %c0_5] : memref<9x128x128xbf16, #tpu.memory_space<vmem>>, vector<1x128x128xbf16>
    %4 = vector.shape_cast %3 : vector<1x128x128xbf16> to vector<128x128xbf16>
    %cst = arith.constant dense<0.000000e+00> : vector<256x128xf32>
    %5 = tpu.matmul %2, %4, %cst {dimension_numbers = #tpu.dot_dimension_numbers<[1], [0], [0], [1], [0, 0, 1, 1], [], []>} : vector<256x128xbf16>, vector<128x128xbf16>, vector<256x128xf32> -> vector<256x128xf32>
    %c0_6 = arith.constant 0 : index
    %c0_7 = arith.constant 0 : index
    %c1 = arith.constant 1 : index
    %c0_8 = arith.constant 0 : index
    %6 = vector.load %arg1[%c0_6, %c0_7, %c1, %c0_8] : memref<1x18x18x128xbf16, #tpu.memory_space<vmem>>, vector<1x16x16x128xbf16>
    %7 = vector.shape_cast %6 : vector<1x16x16x128xbf16> to vector<16x16x128xbf16>
    %8 = vector.shape_cast %7 : vector<16x16x128xbf16> to vector<256x128xbf16>
    %c1_9 = arith.constant 1 : index
    %c0_10 = arith.constant 0 : index
    %c0_11 = arith.constant 0 : index
    %9 = vector.load %arg2[%c1_9, %c0_10, %c0_11] : memref<9x128x128xbf16, #tpu.memory_space<vmem>>, vector<1x128x128xbf16>
    %10 = vector.shape_cast %9 : vector<1x128x128xbf16> to vector<128x128xbf16>
    %cst_12 = arith.constant dense<0.000000e+00> : vector<256x128xf32>
    %11 = tpu.matmul %8, %10, %cst_12 {dimension_numbers = #tpu.dot_dimension_numbers<[1], [0], [0], [1], [0, 0, 1, 1], [], []>} : vector<256x128xbf16>, vector<128x128xbf16>, vector<256x128xf32> -> vector<256x128xf32>
    %12 = arith.addf %5, %11 : vector<256x128xf32>
    %c0_13 = arith.constant 0 : index
    %c0_14 = arith.constant 0 : index
    %c2 = arith.constant 2 : index
    %c0_15 = arith.constant 0 : index
    %13 = vector.load %arg1[%c0_13, %c0_14, %c2, %c0_15] : memref<1x18x18x128xbf16, #tpu.memory_space<vmem>>, vector<1x16x16x128xbf16>
    %14 = vector.shape_cast %13 : vector<1x16x16x128xbf16> to vector<16x16x128xbf16>
    %15 = vector.shape_cast %14 : vector<16x16x128xbf16> to vector<256x128xbf16>
    %c2_16 = arith.constant 2 : index
    %c0_17 = arith.constant 0 : index
    %c0_18 = arith.constant 0 : index
    %16 = vector.load %arg2[%c2_16, %c0_17, %c0_18] : memref<9x128x128xbf16, #tpu.memory_space<vmem>>, vector<1x128x128xbf16>
    %17 = vector.shape_cast %16 : vector<1x128x128xbf16> to vector<128x128xbf16>
    %cst_19 = arith.constant dense<0.000000e+00> : vector<256x128xf32>
    %18 = tpu.matmul %15, %17, %cst_19 {dimension_numbers = #tpu.dot_dimension_numbers<[1], [0], [0], [1], [0, 0, 1, 1], [], []>} : vector<256x128xbf16>, vector<128x128xbf16>, vector<256x128xf32> -> vector<256x128xf32>
    %19 = arith.addf %12, %18 : vector<256x128xf32>
    %c0_20 = arith.constant 0 : index
    %c1_21 = arith.constant 1 : index
    %c0_22 = arith.constant 0 : index
    %c0_23 = arith.constant 0 : index
    %20 = vector.load %arg1[%c0_20, %c1_21, %c0_22, %c0_23] : memref<1x18x18x128xbf16, #tpu.memory_space<vmem>>, vector<1x16x16x128xbf16>
    %21 = vector.shape_cast %20 : vector<1x16x16x128xbf16> to vector<16x16x128xbf16>
    %22 = vector.shape_cast %21 : vector<16x16x128xbf16> to vector<256x128xbf16>
    %c3 = arith.constant 3 : index
    %c0_24 = arith.constant 0 : index
    %c0_25 = arith.constant 0 : index
    %23 = vector.load %arg2[%c3, %c0_24, %c0_25] : memref<9x128x128xbf16, #tpu.memory_space<vmem>>, vector<1x128x128xbf16>
    %24 = vector.shape_cast %23 : vector<1x128x128xbf16> to vector<128x128xbf16>
    %cst_26 = arith.constant dense<0.000000e+00> : vector<256x128xf32>
    %25 = tpu.matmul %22, %24, %cst_26 {dimension_numbers = #tpu.dot_dimension_numbers<[1], [0], [0], [1], [0, 0, 1, 1], [], []>} : vector<256x128xbf16>, vector<128x128xbf16>, vector<256x128xf32> -> vector<256x128xf32>
    %26 = arith.addf %19, %25 : vector<256x128xf32>
    %c0_27 = arith.constant 0 : index
    %c1_28 = arith.constant 1 : index
    %c1_29 = arith.constant 1 : index
    %c0_30 = arith.constant 0 : index
    %27 = vector.load %arg1[%c0_27, %c1_28, %c1_29, %c0_30] : memref<1x18x18x128xbf16, #tpu.memory_space<vmem>>, vector<1x16x16x128xbf16>
    %28 = vector.shape_cast %27 : vector<1x16x16x128xbf16> to vector<16x16x128xbf16>
    %29 = vector.shape_cast %28 : vector<16x16x128xbf16> to vector<256x128xbf16>
    %c4 = arith.constant 4 : index
    %c0_31 = arith.constant 0 : index
    %c0_32 = arith.constant 0 : index
    %30 = vector.load %arg2[%c4, %c0_31, %c0_32] : memref<9x128x128xbf16, #tpu.memory_space<vmem>>, vector<1x128x128xbf16>
    %31 = vector.shape_cast %30 : vector<1x128x128xbf16> to vector<128x128xbf16>
    %cst_33 = arith.constant dense<0.000000e+00> : vector<256x128xf32>
    %32 = tpu.matmul %29, %31, %cst_33 {dimension_numbers = #tpu.dot_dimension_numbers<[1], [0], [0], [1], [0, 0, 1, 1], [], []>} : vector<256x128xbf16>, vector<128x128xbf16>, vector<256x128xf32> -> vector<256x128xf32>
    %33 = arith.addf %26, %32 : vector<256x128xf32>
    %c0_34 = arith.constant 0 : index
    %c1_35 = arith.constant 1 : index
    %c2_36 = arith.constant 2 : index
    %c0_37 = arith.constant 0 : index
    %34 = vector.load %arg1[%c0_34, %c1_35, %c2_36, %c0_37] : memref<1x18x18x128xbf16, #tpu.memory_space<vmem>>, vector<1x16x16x128xbf16>
    %35 = vector.shape_cast %34 : vector<1x16x16x128xbf16> to vector<16x16x128xbf16>
    %36 = vector.shape_cast %35 : vector<16x16x128xbf16> to vector<256x128xbf16>
    %c5 = arith.constant 5 : index
    %c0_38 = arith.constant 0 : index
    %c0_39 = arith.constant 0 : index
    %37 = vector.load %arg2[%c5, %c0_38, %c0_39] : memref<9x128x128xbf16, #tpu.memory_space<vmem>>, vector<1x128x128xbf16>
    %38 = vector.shape_cast %37 : vector<1x128x128xbf16> to vector<128x128xbf16>
    %cst_40 = arith.constant dense<0.000000e+00> : vector<256x128xf32>
    %39 = tpu.matmul %36, %38, %cst_40 {dimension_numbers = #tpu.dot_dimension_numbers<[1], [0], [0], [1], [0, 0, 1, 1], [], []>} : vector<256x128xbf16>, vector<128x128xbf16>, vector<256x128xf32> -> vector<256x128xf32>
    %40 = arith.addf %33, %39 : vector<256x128xf32>
    %c0_41 = arith.constant 0 : index
    %c2_42 = arith.constant 2 : index
    %c0_43 = arith.constant 0 : index
    %c0_44 = arith.constant 0 : index
    %41 = vector.load %arg1[%c0_41, %c2_42, %c0_43, %c0_44] : memref<1x18x18x128xbf16, #tpu.memory_space<vmem>>, vector<1x16x16x128xbf16>
    %42 = vector.shape_cast %41 : vector<1x16x16x128xbf16> to vector<16x16x128xbf16>
    %43 = vector.shape_cast %42 : vector<16x16x128xbf16> to vector<256x128xbf16>
    %c6 = arith.constant 6 : index
    %c0_45 = arith.constant 0 : index
    %c0_46 = arith.constant 0 : index
    %44 = vector.load %arg2[%c6, %c0_45, %c0_46] : memref<9x128x128xbf16, #tpu.memory_space<vmem>>, vector<1x128x128xbf16>
    %45 = vector.shape_cast %44 : vector<1x128x128xbf16> to vector<128x128xbf16>
    %cst_47 = arith.constant dense<0.000000e+00> : vector<256x128xf32>
    %46 = tpu.matmul %43, %45, %cst_47 {dimension_numbers = #tpu.dot_dimension_numbers<[1], [0], [0], [1], [0, 0, 1, 1], [], []>} : vector<256x128xbf16>, vector<128x128xbf16>, vector<256x128xf32> -> vector<256x128xf32>
    %47 = arith.addf %40, %46 : vector<256x128xf32>
    %c0_48 = arith.constant 0 : index
    %c2_49 = arith.constant 2 : index
    %c1_50 = arith.constant 1 : index
    %c0_51 = arith.constant 0 : index
    %48 = vector.load %arg1[%c0_48, %c2_49, %c1_50, %c0_51] : memref<1x18x18x128xbf16, #tpu.memory_space<vmem>>, vector<1x16x16x128xbf16>
    %49 = vector.shape_cast %48 : vector<1x16x16x128xbf16> to vector<16x16x128xbf16>
    %50 = vector.shape_cast %49 : vector<16x16x128xbf16> to vector<256x128xbf16>
    %c7 = arith.constant 7 : index
    %c0_52 = arith.constant 0 : index
    %c0_53 = arith.constant 0 : index
    %51 = vector.load %arg2[%c7, %c0_52, %c0_53] : memref<9x128x128xbf16, #tpu.memory_space<vmem>>, vector<1x128x128xbf16>
    %52 = vector.shape_cast %51 : vector<1x128x128xbf16> to vector<128x128xbf16>
    %cst_54 = arith.constant dense<0.000000e+00> : vector<256x128xf32>
    %53 = tpu.matmul %50, %52, %cst_54 {dimension_numbers = #tpu.dot_dimension_numbers<[1], [0], [0], [1], [0, 0, 1, 1], [], []>} : vector<256x128xbf16>, vector<128x128xbf16>, vector<256x128xf32> -> vector<256x128xf32>
    %54 = arith.addf %47, %53 : vector<256x128xf32>
    %c0_55 = arith.constant 0 : index
    %c2_56 = arith.constant 2 : index
    %c2_57 = arith.constant 2 : index
    %c0_58 = arith.constant 0 : index
    %55 = vector.load %arg1[%c0_55, %c2_56, %c2_57, %c0_58] : memref<1x18x18x128xbf16, #tpu.memory_space<vmem>>, vector<1x16x16x128xbf16>
    %56 = vector.shape_cast %55 : vector<1x16x16x128xbf16> to vector<16x16x128xbf16>
    %57 = vector.shape_cast %56 : vector<16x16x128xbf16> to vector<256x128xbf16>
    %c8 = arith.constant 8 : index
    %c0_59 = arith.constant 0 : index
    %c0_60 = arith.constant 0 : index
    %58 = vector.load %arg2[%c8, %c0_59, %c0_60] : memref<9x128x128xbf16, #tpu.memory_space<vmem>>, vector<1x128x128xbf16>
    %59 = vector.shape_cast %58 : vector<1x128x128xbf16> to vector<128x128xbf16>
    %cst_61 = arith.constant dense<0.000000e+00> : vector<256x128xf32>
    %60 = tpu.matmul %57, %59, %cst_61 {dimension_numbers = #tpu.dot_dimension_numbers<[1], [0], [0], [1], [0, 0, 1, 1], [], []>} : vector<256x128xbf16>, vector<128x128xbf16>, vector<256x128xf32> -> vector<256x128xf32>
    %61 = arith.addf %54, %60 : vector<256x128xf32>
    %c0_62 = arith.constant 0 : index
    %c0_63 = arith.constant 0 : index
    %62 = vector.load %arg3[%c0_62, %c0_63] : memref<1x128xf32, #tpu.memory_space<vmem>>, vector<1x128xf32>
    %63 = vector.broadcast %62 : vector<1x128xf32> to vector<256x128xf32>
    %64 = arith.addf %61, %63 : vector<256x128xf32>
    %c0_64 = arith.constant 0 : index
    %c0_65 = arith.constant 0 : index
    %65 = vector.load %arg4[%c0_64, %c0_65] : memref<256x128xbf16, #tpu.memory_space<vmem>>, vector<256x128xbf16>
    %66 = arith.extf %65 : vector<256x128xbf16> to vector<256x128xf32>
    %67 = arith.addf %64, %66 : vector<256x128xf32>
    %c0_66 = arith.constant 0 : index
    %c0_67 = arith.constant 0 : index
    %68 = vector.load %arg5[%c0_66, %c0_67] : memref<256x128xf32, #tpu.memory_space<vmem>>, vector<256x128xf32>
    tpu.vector_store %arg5[%c0_66, %c0_67], %67 {strides = array<i32>} : memref<256x128xf32, #tpu.memory_space<vmem>>, vector<256x128xf32>,
    return
  }
  func.func @transform_0(%arg0: i32) -> (i32, i32, i32, i32) {
    %c0_i32 = arith.constant 0 : i32
    %c0_i32_0 = arith.constant 0 : i32
    %c0_i32_1 = arith.constant 0 : i32
    %c0_i32_2 = arith.constant 0 : i32
    return %arg0, %c0_i32, %c0_i32_0, %c0_i32_1 : i32, i32, i32, i32
  }
  func.func @transform_1(%arg0: i32) -> (i32, i32, i32) {
    %c0_i32 = arith.constant 0 : i32
    %c0_i32_0 = arith.constant 0 : i32
    %c0_i32_1 = arith.constant 0 : i32
    %c0_i32_2 = arith.constant 0 : i32
    return %c0_i32, %c0_i32_0, %c0_i32_1 : i32, i32, i32
  }
  func.func @transform_2(%arg0: i32) -> (i32, i32) {
    %c0_i32 = arith.constant 0 : i32
    %c0_i32_0 = arith.constant 0 : i32
    %c0_i32_1 = arith.constant 0 : i32
    return %c0_i32, %c0_i32_0 : i32, i32
  }
  func.func @transform_3(%arg0: i32) -> (i32, i32) {
    %c0_i32 = arith.constant 0 : i32
    %c0_i32_0 = arith.constant 0 : i32
    return %arg0, %c0_i32 : i32, i32
  }
  func.func @transform_4(%arg0: i32) -> (i32, i32) {
    %c0_i32 = arith.constant 0 : i32
    %c0_i32_0 = arith.constant 0 : i32
    return %arg0, %c0_i32 : i32, i32
  }
}

module attributes {stable_mosaic.version = 11 : i64} {
  func.func @_pool_mix_kernel(%arg0: i32, %arg1: i32, %arg2: memref<1xf32, #tpu.memory_space<smem>>, %arg3: memref<1x4x16x128xf32, #tpu.memory_space<vmem>>, %arg4: memref<1x1x4x128xf32, #tpu.memory_space<vmem>>) attributes {dimension_semantics = [#tpu.dimension_semantics<parallel>, #tpu.dimension_semantics<parallel>], iteration_bounds = array<i64: 2, 4>, scalar_prefetch = 0 : i64, scratch_operands = 0 : i64, tpu.core_type = #tpu.core_type<tc>, window_params = [{transform_indices = @transform_0, window_bounds = array<i64: 1>}, {transform_indices = @transform_1, window_bounds = array<i64: 1, 4, 16, 128>}, {transform_indices = @transform_2, window_bounds = array<i64: 1, 1, 4, 128>}]} {
    %c0 = arith.constant 0 : index
    %0 = memref.load %arg2[%c0] : memref<1xf32, #tpu.memory_space<smem>>
    %c0_0 = arith.constant 0 : index
    %c0_1 = arith.constant 0 : index
    %c0_2 = arith.constant 0 : index
    %c0_3 = arith.constant 0 : index
    %1 = vector.load %arg3[%c0_0, %c0_1, %c0_2, %c0_3] : memref<1x4x16x128xf32, #tpu.memory_space<vmem>>, vector<1x4x16x128xf32>
    %2 = vector.shape_cast %1 : vector<1x4x16x128xf32> to vector<4x16x128xf32>
    %cst = arith.constant dense<0xFF800000> : vector<16x128xf32>
    %3 = vector.multi_reduction <maximumf>, %2, %cst [0] : vector<4x16x128xf32> to vector<16x128xf32>
    %cst_4 = arith.constant dense<0.000000e+00> : vector<16x128xf32>
    %4 = vector.multi_reduction <add>, %2, %cst_4 [0] : vector<4x16x128xf32> to vector<16x128xf32>
    %5 = vector.shape_cast %3 : vector<16x128xf32> to vector<4x4x128xf32>
    %6 = vector.shape_cast %4 : vector<16x128xf32> to vector<4x4x128xf32>
    %cst_5 = arith.constant dense<0xFF800000> : vector<4x128xf32>
    %7 = vector.multi_reduction <maximumf>, %5, %cst_5 [1] : vector<4x4x128xf32> to vector<4x128xf32>
    %cst_6 = arith.constant dense<0.000000e+00> : vector<4x128xf32>
    %8 = vector.multi_reduction <add>, %6, %cst_6 [1] : vector<4x4x128xf32> to vector<4x128xf32>
    %cst_7 = arith.constant 6.250000e-02 : f32
    %9 = vector.broadcast %cst_7 : f32 to vector<4x128xf32>
    %10 = arith.mulf %8, %9 : vector<4x128xf32>
    %11 = vector.broadcast %0 : f32 to vector<4x128xf32>
    %12 = arith.mulf %11, %7 : vector<4x128xf32>
    %cst_8 = arith.constant 1.000000e+00 : f32
    %13 = arith.subf %cst_8, %0 : f32
    %14 = vector.broadcast %13 : f32 to vector<4x128xf32>
    %15 = arith.mulf %14, %10 : vector<4x128xf32>
    %16 = arith.addf %12, %15 : vector<4x128xf32>
    %c0_9 = arith.constant 0 : index
    %c0_10 = arith.constant 0 : index
    %c0_11 = arith.constant 0 : index
    %c0_12 = arith.constant 0 : index
    %17 = vector.load %arg4[%c0_9, %c0_10, %c0_11, %c0_12] : memref<1x1x4x128xf32, #tpu.memory_space<vmem>>, vector<1x1x4x128xf32>
    %18 = vector.shape_cast %17 : vector<1x1x4x128xf32> to vector<4x128xf32>
    %19 = vector.shape_cast %16 : vector<4x128xf32> to vector<1x1x4x128xf32>
    tpu.vector_store %arg4[%c0_9, %c0_10, %c0_11, %c0_12], %19 {strides = array<i32>} : memref<1x1x4x128xf32, #tpu.memory_space<vmem>>, vector<1x1x4x128xf32>,
    return
  }
  func.func @transform_0(%arg0: i32, %arg1: i32) -> i32 {
    %c0_i32 = arith.constant 0 : i32
    %c0_i32_0 = arith.constant 0 : i32
    return %c0_i32 : i32
  }
  func.func @transform_1(%arg0: i32, %arg1: i32) -> (i32, i32, i32, i32) {
    %c0_i32 = arith.constant 0 : i32
    %c0_i32_0 = arith.constant 0 : i32
    %c0_i32_1 = arith.constant 0 : i32
    return %arg0, %arg1, %c0_i32, %c0_i32_0 : i32, i32, i32, i32
  }
  func.func @transform_2(%arg0: i32, %arg1: i32) -> (i32, i32, i32, i32) {
    %c0_i32 = arith.constant 0 : i32
    %c0_i32_0 = arith.constant 0 : i32
    %c0_i32_1 = arith.constant 0 : i32
    return %arg0, %arg1, %c0_i32, %c0_i32_0 : i32, i32, i32, i32
  }
}

module attributes {stable_mosaic.version = 11 : i64} {
  func.func @_matmul_bias_kernel(%arg0: i32, %arg1: i32, %arg2: memref<2x2048xbf16, #tpu.memory_space<vmem>>, %arg3: memref<2048x128xbf16, #tpu.memory_space<vmem>>, %arg4: memref<1x128xf32, #tpu.memory_space<vmem>>, %arg5: memref<2x128xf32, #tpu.memory_space<vmem>>) attributes {dimension_semantics = [#tpu.dimension_semantics<parallel>, #tpu.dimension_semantics<parallel>], iteration_bounds = array<i64: 1, 1>, scalar_prefetch = 0 : i64, scratch_operands = 0 : i64, tpu.core_type = #tpu.core_type<tc>, window_params = [{transform_indices = @transform_0, window_bounds = array<i64: 2, 2048>}, {transform_indices = @transform_1, window_bounds = array<i64: 2048, 128>}, {transform_indices = @transform_2, window_bounds = array<i64: 1, 128>}, {transform_indices = @transform_3, window_bounds = array<i64: 2, 128>}]} {
    %c0 = arith.constant 0 : index
    %c0_0 = arith.constant 0 : index
    %0 = vector.load %arg2[%c0, %c0_0] : memref<2x2048xbf16, #tpu.memory_space<vmem>>, vector<2x2048xbf16>
    %c0_1 = arith.constant 0 : index
    %c0_2 = arith.constant 0 : index
    %1 = vector.load %arg3[%c0_1, %c0_2] : memref<2048x128xbf16, #tpu.memory_space<vmem>>, vector<2048x128xbf16>
    %cst = arith.constant dense<0.000000e+00> : vector<2x128xf32>
    %2 = tpu.matmul %0, %1, %cst {dimension_numbers = #tpu.dot_dimension_numbers<[1], [0], [0], [1], [0, 0, 1, 1], [], []>} : vector<2x2048xbf16>, vector<2048x128xbf16>, vector<2x128xf32> -> vector<2x128xf32>
    %c0_3 = arith.constant 0 : index
    %c0_4 = arith.constant 0 : index
    %3 = vector.load %arg4[%c0_3, %c0_4] : memref<1x128xf32, #tpu.memory_space<vmem>>, vector<1x128xf32>
    %4 = vector.broadcast %3 : vector<1x128xf32> to vector<2x128xf32>
    %5 = arith.addf %2, %4 : vector<2x128xf32>
    %c0_5 = arith.constant 0 : index
    %c0_6 = arith.constant 0 : index
    %6 = vector.load %arg5[%c0_5, %c0_6] : memref<2x128xf32, #tpu.memory_space<vmem>>, vector<2x128xf32>
    tpu.vector_store %arg5[%c0_5, %c0_6], %5 {strides = array<i32>} : memref<2x128xf32, #tpu.memory_space<vmem>>, vector<2x128xf32>,
    return
  }
  func.func @transform_0(%arg0: i32, %arg1: i32) -> (i32, i32) {
    %c0_i32 = arith.constant 0 : i32
    %c0_i32_0 = arith.constant 0 : i32
    return %arg0, %c0_i32 : i32, i32
  }
  func.func @transform_1(%arg0: i32, %arg1: i32) -> (i32, i32) {
    %c0_i32 = arith.constant 0 : i32
    %c0_i32_0 = arith.constant 0 : i32
    return %c0_i32, %arg1 : i32, i32
  }
  func.func @transform_2(%arg0: i32, %arg1: i32) -> (i32, i32) {
    %c0_i32 = arith.constant 0 : i32
    %c0_i32_0 = arith.constant 0 : i32
    return %c0_i32, %arg1 : i32, i32
  }
  func.func @transform_3(%arg0: i32, %arg1: i32) -> (i32, i32) {
    %c0_i32 = arith.constant 0 : i32
    return %arg0, %arg1 : i32, i32
  }
}

</mosaic_0001>

<llo_original>
// kernel: wide_basic_forward.6
$region0: #{wide_basic_forward.6}
  #allocation0 [shape = 'u32[]', space=smem, size = 0x4, offset = 0x4, fixed_abs, tag = 'smem constant byte address 0x4 - core index']
  #allocation1 [shape = 'u32[144,128]{1,0:T(1,128)}', space=vmem, size = 0x12000, scoped, tag = 'internal scratch']
  %s0 = inlined_call_operand.vmem [shape: bf16[512,16], index: 0, kind: input, shape index: {}]
  %s1 = inlined_call_operand.vmem [shape: bf16[16,128], index: 1, kind: input, shape index: {}]
  %s2 = inlined_call_operand.vmem [shape: f32[1,128], index: 2, kind: input, shape index: {}]
  %s3 = inlined_call_operand.vmem [shape: bf16[512,128], index: 3, kind: output, shape index: {}]
  %s4 = sld [smem:[#allocation0]]
  $region22: #{wide_basic_forward.6} parent=0
    _
  %s6 = ssub.s32 1, %s4
  %s7 = scalar_select 0, %s6, %s4
  // Predicated region
  $region2: #{wide_basic_forward.6} parent=0 // pred_check
    _
  $region3: #{wide_basic_forward.6} parent=0 // pred_check_branch
    %9 = sbr.rel (0) target = $region5
  $region4: #{wide_basic_forward.6} parent=0 // pred_region
    _
  $region5: #{wide_basic_forward.6} parent=0 // pred_fallthru
    _
  // Predicated region
  $region6: #{wide_basic_forward.6} parent=0 // pred_check
    _
  $region7: #{wide_basic_forward.6} parent=0 // pred_check_branch
    %11 = sbr.rel (0) target = $region9
  $region8: #{wide_basic_forward.6} parent=0 // pred_region
    _
  $region9: #{wide_basic_forward.6} parent=0 // pred_fallthru
    _
  // Predicated region
  $region10: #{wide_basic_forward.6} parent=0 // pred_check
    _
  $region11: #{wide_basic_forward.6} parent=0 // pred_check_branch
    %13 = sbr.rel (0) target = $region13
  $region12: #{wide_basic_forward.6} parent=0 // pred_region
    _
  $region13: #{wide_basic_forward.6} parent=0 // pred_fallthru
    _
  %v15 = vld [vmem:[%s0] sm:$0xf]
  %v16 = vld [vmem:[%s0 + $0x4] sm:$0xf]
  %v17 = vld [vmem:[%s0 + $0x8] sm:$0xf]
  %v18 = vld [vmem:[%s0 + $0xc] sm:$0xf]
  %v19 = vld [vmem:[%s0 + $0x10] sm:$0xf]
  %v20 = vld [vmem:[%s0 + $0x14] sm:$0xf]
  %v21 = vld [vmem:[%s0 + $0x18] sm:$0xf]
  %v22 = vld [vmem:[%s0 + $0x1c] sm:$0xf]
  %v23 = vld [vmem:[%s0 + $0x20] sm:$0xf]
  %v24 = vld [vmem:[%s0 + $0x24] sm:$0xf]
  %v25 = vld [vmem:[%s0 + $0x28] sm:$0xf]
  %v26 = vld [vmem:[%s0 + $0x2c] sm:$0xf]
  %v27 = vld [vmem:[%s0 + $0x30] sm:$0xf]
  %v28 = vld [vmem:[%s0 + $0x34] sm:$0xf]
  %v29 = vld [vmem:[%s0 + $0x38] sm:$0xf]
  %v30 = vld [vmem:[%s0 + $0x3c] sm:$0xf]
  %v31 = vld [vmem:[%s0 + $0x40] sm:$0xf]
  %v32 = vld [vmem:[%s0 + $0x44] sm:$0xf]
  %v33 = vld [vmem:[%s0 + $0x48] sm:$0xf]
  %v34 = vld [vmem:[%s0 + $0x4c] sm:$0xf]
  %v35 = vld [vmem:[%s0 + $0x50] sm:$0xf]
  %v36 = vld [vmem:[%s0 + $0x54] sm:$0xf]
  %v37 = vld [vmem:[%s0 + $0x58] sm:$0xf]
  %v38 = vld [vmem:[%s0 + $0x5c] sm:$0xf]
  %v39 = vld [vmem:[%s0 + $0x60] sm:$0xf]
  %v40 = vld [vmem:[%s0 + $0x64] sm:$0xf]
  %v41 = vld [vmem:[%s0 + $0x68] sm:$0xf]
  %v42 = vld [vmem:[%s0 + $0x6c] sm:$0xf]
  %v43 = vld [vmem:[%s0 + $0x70] sm:$0xf]
  %v44 = vld [vmem:[%s0 + $0x74] sm:$0xf]
  %v45 = vld [vmem:[%s0 + $0x78] sm:$0xf]
  %v46 = vld [vmem:[%s0 + $0x7c] sm:$0xf]
  %v47 = vld [vmem:[%s0 + $0x80] sm:$0xf]
  %v48 = vld [vmem:[%s0 + $0x84] sm:$0xf]
  %v49 = vld [vmem:[%s0 + $0x88] sm:$0xf]
  %v50 = vld [vmem:[%s0 + $0x8c] sm:$0xf]
  %v51 = vld [vmem:[%s0 + $0x90] sm:$0xf]
  %v52 = vld [vmem:[%s0 + $0x94] sm:$0xf]
  %v53 = vld [vmem:[%s0 + $0x98] sm:$0xf]
  %v54 = vld [vmem:[%s0 + $0x9c] sm:$0xf]
  %v55 = vld [vmem:[%s0 + $0xa0] sm:$0xf]
  %v56 = vld [vmem:[%s0 + $0xa4] sm:$0xf]
  %v57 = vld [vmem:[%s0 + $0xa8] sm:$0xf]
  %v58 = vld [vmem:[%s0 + $0xac] sm:$0xf]
  %v59 = vld [vmem:[%s0 + $0xb0] sm:$0xf]
  %v60 = vld [vmem:[%s0 + $0xb4] sm:$0xf]
  %v61 = vld [vmem:[%s0 + $0xb8] sm:$0xf]
  %v62 = vld [vmem:[%s0 + $0xbc] sm:$0xf]
  %v63 = vld [vmem:[%s0 + $0xc0] sm:$0xf]
  %v64 = vld [vmem:[%s0 + $0xc4] sm:$0xf]
  %v65 = vld [vmem:[%s0 + $0xc8] sm:$0xf]
  %v66 = vld [vmem:[%s0 + $0xcc] sm:$0xf]
  %v67 = vld [vmem:[%s0 + $0xd0] sm:$0xf]
  %v68 = vld [vmem:[%s0 + $0xd4] sm:$0xf]
  %v69 = vld [vmem:[%s0 + $0xd8] sm:$0xf]
  %v70 = vld [vmem:[%s0 + $0xdc] sm:$0xf]
  %v71 = vld [vmem:[%s0 + $0xe0] sm:$0xf]
  %v72 = vld [vmem:[%s0 + $0xe4] sm:$0xf]
  %v73 = vld [vmem:[%s0 + $0xe8] sm:$0xf]
  %v74 = vld [vmem:[%s0 + $0xec] sm:$0xf]
  %v75 = vld [vmem:[%s0 + $0xf0] sm:$0xf]
  %v76 = vld [vmem:[%s0 + $0xf4] sm:$0xf]
  %v77 = vld [vmem:[%s0 + $0xf8] sm:$0xf]
  %v78 = vld [vmem:[%s0 + $0xfc] sm:$0xf]
  %v79 = vld [vmem:[%s1] sm:$0xf]
  %v80 = vld [vmem:[%s1 + $0x4] sm:$0xf]
  %v81 = vld [vmem:[%s2] sm:$0x1]
  %v83 = vlaneseq
  %v84 = vshrl.u32 %v83, 7
  %v85 = vsub.s32 0, %v84
  %v86 = vrot.slane %v81, %v85
  %v152 = vunpack.c.l.b16 %v15
  %v153 = vunpack.c.l.b16 %v16
  %v154 = vunpack.c.l.b16 %v17
  %v155 = vunpack.c.l.b16 %v18
  %v156 = vunpack.c.l.b16 %v19
  %v157 = vunpack.c.l.b16 %v20
  %v158 = vunpack.c.l.b16 %v21
  %v159 = vunpack.c.l.b16 %v22
  %v160 = vunpack.c.l.b16 %v23
  %v161 = vunpack.c.l.b16 %v24
  %v162 = vunpack.c.l.b16 %v25
  %v163 = vunpack.c.l.b16 %v26
  %v164 = vunpack.c.l.b16 %v27
  %v165 = vunpack.c.l.b16 %v28
  %v166 = vunpack.c.l.b16 %v29
  %v167 = vunpack.c.l.b16 %v30
  %v168 = vunpack.c.l.b16 %v31
  %v169 = vunpack.c.l.b16 %v32
  %v170 = vunpack.c.l.b16 %v33
  %v171 = vunpack.c.l.b16 %v34
  %v172 = vunpack.c.l.b16 %v35
  %v173 = vunpack.c.l.b16 %v36
  %v174 = vunpack.c.l.b16 %v37
  %v175 = vunpack.c.l.b16 %v38
  %v176 = vunpack.c.l.b16 %v39
  %v177 = vunpack.c.l.b16 %v40
  %v178 = vunpack.c.l.b16 %v41
  %v179 = vunpack.c.l.b16 %v42
  %v180 = vunpack.c.l.b16 %v43
  %v181 = vunpack.c.l.b16 %v44
  %v182 = vunpack.c.l.b16 %v45
  %v183 = vunpack.c.l.b16 %v46
  %v184 = vunpack.c.l.b16 %v47
  %v185 = vunpack.c.l.b16 %v48
  %v186 = vunpack.c.l.b16 %v49
  %v187 = vunpack.c.l.b16 %v50
  %v188 = vunpack.c.l.b16 %v51
  %v189 = vunpack.c.l.b16 %v52
  %v190 = vunpack.c.l.b16 %v53
  %v191 = vunpack.c.l.b16 %v54
  %v192 = vunpack.c.l.b16 %v55
  %v193 = vunpack.c.l.b16 %v56
  %v194 = vunpack.c.l.b16 %v57
  %v195 = vunpack.c.l.b16 %v58
  %v196 = vunpack.c.l.b16 %v59
  %v197 = vunpack.c.l.b16 %v60
  %v198 = vunpack.c.l.b16 %v61
  %v199 = vunpack.c.l.b16 %v62
  %v200 = vunpack.c.l.b16 %v63
  %v201 = vunpack.c.l.b16 %v64
  %v202 = vunpack.c.l.b16 %v65
  %v203 = vunpack.c.l.b16 %v66
  %v204 = vunpack.c.l.b16 %v67
  %v205 = vunpack.c.l.b16 %v68
  %v206 = vunpack.c.l.b16 %v69
  %v207 = vunpack.c.l.b16 %v70
  %v208 = vunpack.c.l.b16 %v71
  %v209 = vunpack.c.l.b16 %v72
  %v210 = vunpack.c.l.b16 %v73
  %v211 = vunpack.c.l.b16 %v74
  %v212 = vunpack.c.l.b16 %v75
  %v213 = vunpack.c.l.b16 %v76
  %v214 = vunpack.c.l.b16 %v77
  %v215 = vunpack.c.l.b16 %v78
  %v216 = vpack.c.b16 %v153, %v152
  %v217 = vpack.c.b16 %v155, %v154
  %v218 = vpack.c.b16 %v157, %v156
  %v219 = vpack.c.b16 %v159, %v158
  %v220 = vpack.c.b16 %v161, %v160
  %v221 = vpack.c.b16 %v163, %v162
  %v222 = vpack.c.b16 %v165, %v164
  %v223 = vpack.c.b16 %v167, %v166
  %v224 = vpack.c.b16 %v169, %v168
  %v225 = vpack.c.b16 %v171, %v170
  %v226 = vpack.c.b16 %v173, %v172
  %v227 = vpack.c.b16 %v175, %v174
  %v228 = vpack.c.b16 %v177, %v176
  %v229 = vpack.c.b16 %v179, %v178
  %v230 = vpack.c.b16 %v181, %v180
  %v231 = vpack.c.b16 %v183, %v182
  %v232 = vpack.c.b16 %v185, %v184
  %v233 = vpack.c.b16 %v187, %v186
  %v234 = vpack.c.b16 %v189, %v188
  %v235 = vpack.c.b16 %v191, %v190
  %v236 = vpack.c.b16 %v193, %v192
  %v237 = vpack.c.b16 %v195, %v194
  %v238 = vpack.c.b16 %v197, %v196
  %v239 = vpack.c.b16 %v199, %v198
  %v240 = vpack.c.b16 %v201, %v200
  %v241 = vpack.c.b16 %v203, %v202
  %v242 = vpack.c.b16 %v205, %v204
  %v243 = vpack.c.b16 %v207, %v206
  %v244 = vpack.c.b16 %v209, %v208
  %v245 = vpack.c.b16 %v211, %v210
  %v246 = vpack.c.b16 %v213, %v212
  %v247 = vpack.c.b16 %v215, %v214
  %v250 = vunpack.c.l.b16 %v79
  %v251 = vunpack.c.l.b16 %v80
  %v252 = vpack.c.b16 %v251, %v250
  %vm254 = vcmask 130048
  %v256 = vsel %vm254, %v216, 0
  %v259 = vsel %vm254, %v217, 0
  %v262 = vsel %vm254, %v218, 0
  %v265 = vsel %vm254, %v219, 0
  %v268 = vsel %vm254, %v220, 0
  %v271 = vsel %vm254, %v221, 0
  %v274 = vsel %vm254, %v222, 0
  %v277 = vsel %vm254, %v223, 0
  %v280 = vsel %vm254, %v224, 0
  %v283 = vsel %vm254, %v225, 0
  %v286 = vsel %vm254, %v226, 0
  %v289 = vsel %vm254, %v227, 0
  %v292 = vsel %vm254, %v228, 0
  %v295 = vsel %vm254, %v229, 0
  %v298 = vsel %vm254, %v230, 0
  %v301 = vsel %vm254, %v231, 0
  %v304 = vsel %vm254, %v232, 0
  %v307 = vsel %vm254, %v233, 0
  %v310 = vsel %vm254, %v234, 0
  %v313 = vsel %vm254, %v235, 0
  %v316 = vsel %vm254, %v236, 0
  %v319 = vsel %vm254, %v237, 0
  %v322 = vsel %vm254, %v238, 0
  %v325 = vsel %vm254, %v239, 0
  %v328 = vsel %vm254, %v240, 0
  %v331 = vsel %vm254, %v241, 0
  %v334 = vsel %vm254, %v242, 0
  %v337 = vsel %vm254, %v243, 0
  %v340 = vsel %vm254, %v244, 0
  %v343 = vsel %vm254, %v245, 0
  %v346 = vsel %vm254, %v246, 0
  %v349 = vsel %vm254, %v247, 0
  %351 = vmatprep.subr.bf16.mxu0 0
  %352 = vmatpush1.bf16.msra.mxu0 0
  %353 = vmatprep.subr.bf16.mxu0 0
  %354 = vmatpush1.bf16.msra.mxu0 0
  %355 = vmatprep.subr.bf16.mxu0 0
  %356 = vmatpush1.bf16.msra.mxu0 0
  %357 = vmatprep.subr.bf16.mxu0 0
  %358 = vmatpush1.bf16.msra.mxu0 0
  %359 = vmatprep.subr.bf16.mxu0 0
  %360 = vmatpush1.bf16.msra.mxu0 0
  %361 = vmatprep.subr.bf16.mxu0 0
  %362 = vmatpush1.bf16.msra.mxu0 0
  %363 = vmatprep.subr.bf16.mxu0 0
  %364 = vmatpush1.bf16.msra.mxu0 0
  %365 = vmatprep.subr.bf16.mxu0 0
  %366 = vmatpush1.bf16.msra.mxu0 %v252
  %367 = vmatprep.subr.bf16.mxu0 0
  %368 = vmatpush2.bf16.msra.mxu0 0
  %369 = vmatprep.subr.bf16.mxu0 0
  %370 = vmatpush2.bf16.msra.mxu0 0
  %371 = vmatprep.subr.bf16.mxu0 0
  %372 = vmatpush2.bf16.msra.mxu0 0
  %373 = vmatprep.subr.bf16.mxu0 0
  %374 = vmatpush2.bf16.msra.mxu0 0
  %375 = vmatprep.subr.bf16.mxu0 0
  %376 = vmatpush2.bf16.msra.mxu0 0
  %377 = vmatprep.subr.bf16.mxu0 0
  %378 = vmatpush2.bf16.msra.mxu0 0
  %379 = vmatprep.subr.bf16.mxu0 0
  %380 = vmatpush2.bf16.msra.mxu0 0
  %381 = vmatprep.subr.bf16.mxu0 0
  %382 = vmatpush2.bf16.msra.mxu0 0
  %383 = vmatprep.mubr.bf16.mxu0 0
  %384 = vmatmul.mubr.bf16.gmra.mxu0 %v256
  %v385 = vpop.f32.mrf.mxu0
  %v386 = vadd.f32 %v86, %v385
  %v387 = vpop.f32.mrf.mxu0
  %v388 = vpop.f32.mrf.mxu0
  %v389 = vadd.f32 %v86, %v388
  %v390 = vpop.f32.mrf.mxu0
  %391 = vmatprep.mubr.bf16.mxu0 0
  %392 = vmatmul.mubr.bf16.gmra.mxu0 %v259
  %v393 = vpop.f32.mrf.mxu0
  %v394 = vadd.f32 %v86, %v393
  %v395 = vpop.f32.mrf.mxu0
  %v396 = vpop.f32.mrf.mxu0
  %v397 = vadd.f32 %v86, %v396
  %v398 = vpop.f32.mrf.mxu0
  %399 = vmatprep.mubr.bf16.mxu0 0
  %400 = vmatmul.mubr.bf16.gmra.mxu0 %v262
  %v401 = vpop.f32.mrf.mxu0
  %v402 = vadd.f32 %v86, %v401
  %v403 = vpop.f32.mrf.mxu0
  %v404 = vpop.f32.mrf.mxu0
  %v405 = vadd.f32 %v86, %v404
  %v406 = vpop.f32.mrf.mxu0
  %407 = vmatprep.mubr.bf16.mxu0 0
  %408 = vmatmul.mubr.bf16.gmra.mxu0 %v265
  %v409 = vpop.f32.mrf.mxu0
  %v410 = vadd.f32 %v86, %v409
  %v411 = vpop.f32.mrf.mxu0
  %v412 = vpop.f32.mrf.mxu0
  %v413 = vadd.f32 %v86, %v412
  %v414 = vpop.f32.mrf.mxu0
  %415 = vmatprep.mubr.bf16.mxu0 0
  %416 = vmatmul.mubr.bf16.gmra.mxu0 %v268
  %v417 = vpop.f32.mrf.mxu0
  %v418 = vadd.f32 %v86, %v417
  %v419 = vpop.f32.mrf.mxu0
  %v420 = vpop.f32.mrf.mxu0
  %v421 = vadd.f32 %v86, %v420
  %v422 = vpop.f32.mrf.mxu0
  %423 = vmatprep.mubr.bf16.mxu0 0
  %424 = vmatmul.mubr.bf16.gmra.mxu0 %v271
  %v425 = vpop.f32.mrf.mxu0
  %v426 = vadd.f32 %v86, %v425
  %v427 = vpop.f32.mrf.mxu0
  %v428 = vpop.f32.mrf.mxu0
  %v429 = vadd.f32 %v86, %v428
  %v430 = vpop.f32.mrf.mxu0
  %431 = vmatprep.mubr.bf16.mxu0 0
  %432 = vmatmul.mubr.bf16.gmra.mxu0 %v274
  %v433 = vpop.f32.mrf.mxu0
  %v434 = vadd.f32 %v86, %v433
  %v435 = vpop.f32.mrf.mxu0
  %v436 = vpop.f32.mrf.mxu0
  %v437 = vadd.f32 %v86, %v436
  %v438 = vpop.f32.mrf.mxu0
  %439 = vmatprep.mubr.bf16.mxu0 0
  %440 = vmatmul.mubr.bf16.gmra.mxu0 %v277
  %v441 = vpop.f32.mrf.mxu0
  %v442 = vadd.f32 %v86, %v441
  %v443 = vpop.f32.mrf.mxu0
  %v444 = vpop.f32.mrf.mxu0
  %v445 = vadd.f32 %v86, %v444
  %v446 = vpop.f32.mrf.mxu0
  %447 = vmatprep.mubr.bf16.mxu0 0
  %448 = vmatmul.mubr.bf16.gmra.mxu0 %v280
  %v449 = vpop.f32.mrf.mxu0
  %v450 = vadd.f32 %v86, %v449
  %v451 = vpop.f32.mrf.mxu0
  %v452 = vpop.f32.mrf.mxu0
  %v453 = vadd.f32 %v86, %v452
  %v454 = vpop.f32.mrf.mxu0
  %455 = vmatprep.mubr.bf16.mxu0 0
  %456 = vmatmul.mubr.bf16.gmra.mxu0 %v283
  %v457 = vpop.f32.mrf.mxu0
  %v458 = vadd.f32 %v86, %v457
  %v459 = vpop.f32.mrf.mxu0
  %v460 = vpop.f32.mrf.mxu0
  %v461 = vadd.f32 %v86, %v460
  %v462 = vpop.f32.mrf.mxu0
  %463 = vmatprep.mubr.bf16.mxu0 0
  %464 = vmatmul.mubr.bf16.gmra.mxu0 %v286
  %v465 = vpop.f32.mrf.mxu0
  %v466 = vadd.f32 %v86, %v465
  %v467 = vpop.f32.mrf.mxu0
  %v468 = vpop.f32.mrf.mxu0
  %v469 = vadd.f32 %v86, %v468
  %v470 = vpop.f32.mrf.mxu0
  %471 = vmatprep.mubr.bf16.mxu0 0
  %472 = vmatmul.mubr.bf16.gmra.mxu0 %v289
  %v473 = vpop.f32.mrf.mxu0
  %v474 = vadd.f32 %v86, %v473
  %v475 = vpop.f32.mrf.mxu0
  %v476 = vpop.f32.mrf.mxu0
  %v477 = vadd.f32 %v86, %v476
  %v478 = vpop.f32.mrf.mxu0
  %479 = vmatprep.mubr.bf16.mxu0 0
  %480 = vmatmul.mubr.bf16.gmra.mxu0 %v292
  %v481 = vpop.f32.mrf.mxu0
  %v482 = vadd.f32 %v86, %v481
  %v483 = vpop.f32.mrf.mxu0
  %v484 = vpop.f32.mrf.mxu0
  %v485 = vadd.f32 %v86, %v484
  %v486 = vpop.f32.mrf.mxu0
  %487 = vmatprep.mubr.bf16.mxu0 0
  %488 = vmatmul.mubr.bf16.gmra.mxu0 %v295
  %v489 = vpop.f32.mrf.mxu0
  %v490 = vadd.f32 %v86, %v489
  %v491 = vpop.f32.mrf.mxu0
  %v492 = vpop.f32.mrf.mxu0
  %v493 = vadd.f32 %v86, %v492
  %v494 = vpop.f32.mrf.mxu0
  %495 = vmatprep.mubr.bf16.mxu0 0
  %496 = vmatmul.mubr.bf16.gmra.mxu0 %v298
  %v497 = vpop.f32.mrf.mxu0
  %v498 = vadd.f32 %v86, %v497
  %v499 = vpop.f32.mrf.mxu0
  %v500 = vpop.f32.mrf.mxu0
  %v501 = vadd.f32 %v86, %v500
  %v502 = vpop.f32.mrf.mxu0
  %503 = vmatprep.mubr.bf16.mxu0 0
  %504 = vmatmul.mubr.bf16.gmra.mxu0 %v301
  %v505 = vpop.f32.mrf.mxu0
  %v506 = vadd.f32 %v86, %v505
  %v507 = vpop.f32.mrf.mxu0
  %v508 = vpop.f32.mrf.mxu0
  %v509 = vadd.f32 %v86, %v508
  %v510 = vpop.f32.mrf.mxu0
  %511 = vmatprep.mubr.bf16.mxu0 0
  %512 = vmatmul.mubr.bf16.gmra.mxu0 %v304
  %v513 = vpop.f32.mrf.mxu0
  %v514 = vadd.f32 %v86, %v513
  %v515 = vpop.f32.mrf.mxu0
  %v516 = vpop.f32.mrf.mxu0
  %v517 = vadd.f32 %v86, %v516
  %v518 = vpop.f32.mrf.mxu0
  %519 = vmatprep.mubr.bf16.mxu0 0
  %520 = vmatmul.mubr.bf16.gmra.mxu0 %v307
  %v521 = vpop.f32.mrf.mxu0
  %v522 = vadd.f32 %v86, %v521
  %v523 = vpop.f32.mrf.mxu0
  %v524 = vpop.f32.mrf.mxu0
  %v525 = vadd.f32 %v86, %v524
  %v526 = vpop.f32.mrf.mxu0
  %527 = vmatprep.mubr.bf16.mxu0 0
  %528 = vmatmul.mubr.bf16.gmra.mxu0 %v310
  %v529 = vpop.f32.mrf.mxu0
  %v530 = vadd.f32 %v86, %v529
  %v531 = vpop.f32.mrf.mxu0
  %v532 = vpop.f32.mrf.mxu0
  %v533 = vadd.f32 %v86, %v532
  %v534 = vpop.f32.mrf.mxu0
  %535 = vmatprep.mubr.bf16.mxu0 0
  %536 = vmatmul.mubr.bf16.gmra.mxu0 %v313
  %v537 = vpop.f32.mrf.mxu0
  %v538 = vadd.f32 %v86, %v537
  %v539 = vpop.f32.mrf.mxu0
  %v540 = vpop.f32.mrf.mxu0
  %v541 = vadd.f32 %v86, %v540
  %v542 = vpop.f32.mrf.mxu0
  %543 = vmatprep.mubr.bf16.mxu0 0
  %544 = vmatmul.mubr.bf16.gmra.mxu0 %v316
  %v545 = vpop.f32.mrf.mxu0
  %v546 = vadd.f32 %v86, %v545
  %v547 = vpop.f32.mrf.mxu0
  %v548 = vpop.f32.mrf.mxu0
  %v549 = vadd.f32 %v86, %v548
  %v550 = vpop.f32.mrf.mxu0
  %551 = vmatprep.mubr.bf16.mxu0 0
  %552 = vmatmul.mubr.bf16.gmra.mxu0 %v319
  %v553 = vpop.f32.mrf.mxu0
  %v554 = vadd.f32 %v86, %v553
  %v555 = vpop.f32.mrf.mxu0
  %v556 = vpop.f32.mrf.mxu0
  %v557 = vadd.f32 %v86, %v556
  %v558 = vpop.f32.mrf.mxu0
  %559 = vmatprep.mubr.bf16.mxu0 0
  %560 = vmatmul.mubr.bf16.gmra.mxu0 %v322
  %v561 = vpop.f32.mrf.mxu0
  %v562 = vadd.f32 %v86, %v561
  %v563 = vpop.f32.mrf.mxu0
  %v564 = vpop.f32.mrf.mxu0
  %v565 = vadd.f32 %v86, %v564
  %v566 = vpop.f32.mrf.mxu0
  %567 = vmatprep.mubr.bf16.mxu0 0
  %568 = vmatmul.mubr.bf16.gmra.mxu0 %v325
  %v569 = vpop.f32.mrf.mxu0
  %v570 = vadd.f32 %v86, %v569
  %v571 = vpop.f32.mrf.mxu0
  %v572 = vpop.f32.mrf.mxu0
  %v573 = vadd.f32 %v86, %v572
  %v574 = vpop.f32.mrf.mxu0
  %575 = vmatprep.mubr.bf16.mxu0 0
  %576 = vmatmul.mubr.bf16.gmra.mxu0 %v328
  %v577 = vpop.f32.mrf.mxu0
  %v578 = vadd.f32 %v86, %v577
  %v579 = vpop.f32.mrf.mxu0
  %v580 = vpop.f32.mrf.mxu0
  %v581 = vadd.f32 %v86, %v580
  %v582 = vpop.f32.mrf.mxu0
  %583 = vmatprep.mubr.bf16.mxu0 0
  %584 = vmatmul.mubr.bf16.gmra.mxu0 %v331
  %v585 = vpop.f32.mrf.mxu0
  %v586 = vadd.f32 %v86, %v585
  %v587 = vpop.f32.mrf.mxu0
  %v588 = vpop.f32.mrf.mxu0
  %v589 = vadd.f32 %v86, %v588
  %v590 = vpop.f32.mrf.mxu0
  %591 = vmatprep.mubr.bf16.mxu0 0
  %592 = vmatmul.mubr.bf16.gmra.mxu0 %v334
  %v593 = vpop.f32.mrf.mxu0
  %v594 = vadd.f32 %v86, %v593
  %v595 = vpop.f32.mrf.mxu0
  %v596 = vpop.f32.mrf.mxu0
  %v597 = vadd.f32 %v86, %v596
  %v598 = vpop.f32.mrf.mxu0
  %599 = vmatprep.mubr.bf16.mxu0 0
  %600 = vmatmul.mubr.bf16.gmra.mxu0 %v337
  %v601 = vpop.f32.mrf.mxu0
  %v602 = vadd.f32 %v86, %v601
  %v603 = vpop.f32.mrf.mxu0
  %v604 = vpop.f32.mrf.mxu0
  %v605 = vadd.f32 %v86, %v604
  %v606 = vpop.f32.mrf.mxu0
  %607 = vmatprep.mubr.bf16.mxu0 0
  %608 = vmatmul.mubr.bf16.gmra.mxu0 %v340
  %v609 = vpop.f32.mrf.mxu0
  %v610 = vadd.f32 %v86, %v609
  %v611 = vpop.f32.mrf.mxu0
  %v612 = vpop.f32.mrf.mxu0
  %v613 = vadd.f32 %v86, %v612
  %v614 = vpop.f32.mrf.mxu0
  %615 = vmatprep.mubr.bf16.mxu0 0
  %616 = vmatmul.mubr.bf16.gmra.mxu0 %v343
  %v617 = vpop.f32.mrf.mxu0
  %v618 = vadd.f32 %v86, %v617
  %v619 = vpop.f32.mrf.mxu0
  %v620 = vpop.f32.mrf.mxu0
  %v621 = vadd.f32 %v86, %v620
  %v622 = vpop.f32.mrf.mxu0
  %623 = vmatprep.mubr.bf16.mxu0 0
  %624 = vmatmul.mubr.bf16.gmra.mxu0 %v346
  %v625 = vpop.f32.mrf.mxu0
  %v626 = vadd.f32 %v86, %v625
  %v627 = vpop.f32.mrf.mxu0
  %v628 = vpop.f32.mrf.mxu0
  %v629 = vadd.f32 %v86, %v628
  %v630 = vpop.f32.mrf.mxu0
  %631 = vmatprep.mubr.bf16.mxu0 0
  %632 = vmatmul.mubr.bf16.gmra.mxu0 %v349
  %v633 = vpop.f32.mrf.mxu0
  %v634 = vadd.f32 %v86, %v633
  %v635 = vpop.f32.mrf.mxu0
  %v636 = vpop.f32.mrf.mxu0
  %v637 = vadd.f32 %v86, %v636
  %v638 = vpop.f32.mrf.mxu0
  %639 = vdwg.mxu0
  %v640 = vpack.c.bf16 %v389, %v386
  %v641 = vpack.c.bf16 %v397, %v394
  %v642 = vpack.c.bf16 %v405, %v402
  %v643 = vpack.c.bf16 %v413, %v410
  %v644 = vpack.c.bf16 %v421, %v418
  %v645 = vpack.c.bf16 %v429, %v426
  %v646 = vpack.c.bf16 %v437, %v434
  %v647 = vpack.c.bf16 %v445, %v442
  %v648 = vpack.c.bf16 %v453, %v450
  %v649 = vpack.c.bf16 %v461, %v458
  %v650 = vpack.c.bf16 %v469, %v466
  %v651 = vpack.c.bf16 %v477, %v474
  %v652 = vpack.c.bf16 %v485, %v482
  %v653 = vpack.c.bf16 %v493, %v490
  %v654 = vpack.c.bf16 %v501, %v498
  %v655 = vpack.c.bf16 %v509, %v506
  %v656 = vpack.c.bf16 %v517, %v514
  %v657 = vpack.c.bf16 %v525, %v522
  %v658 = vpack.c.bf16 %v533, %v530
  %v659 = vpack.c.bf16 %v541, %v538
  %v660 = vpack.c.bf16 %v549, %v546
  %v661 = vpack.c.bf16 %v557, %v554
  %v662 = vpack.c.bf16 %v565, %v562
  %v663 = vpack.c.bf16 %v573, %v570
  %v664 = vpack.c.bf16 %v581, %v578
  %v665 = vpack.c.bf16 %v589, %v586
  %v666 = vpack.c.bf16 %v597, %v594
  %v667 = vpack.c.bf16 %v605, %v602
  %v668 = vpack.c.bf16 %v613, %v610
  %v669 = vpack.c.bf16 %v621, %v618
  %v670 = vpack.c.bf16 %v629, %v626
  %v671 = vpack.c.bf16 %v637, %v634
  %v704 = vunpack.c.l.b16 %v640
  %v705 = vunpack.c.h.b16 %v640
  %v706 = vunpack.c.l.b16 %v641
  %v707 = vunpack.c.h.b16 %v641
  %v708 = vunpack.c.l.b16 %v642
  %v709 = vunpack.c.h.b16 %v642
  %v710 = vunpack.c.l.b16 %v643
  %v711 = vunpack.c.h.b16 %v643
  %v712 = vunpack.c.l.b16 %v644
  %v713 = vunpack.c.h.b16 %v644
  %v714 = vunpack.c.l.b16 %v645
  %v715 = vunpack.c.h.b16 %v645
  %v716 = vunpack.c.l.b16 %v646
  %v717 = vunpack.c.h.b16 %v646
  %v718 = vunpack.c.l.b16 %v647
  %v719 = vunpack.c.h.b16 %v647
  %v720 = vunpack.c.l.b16 %v648
  %v721 = vunpack.c.h.b16 %v648
  %v722 = vunpack.c.l.b16 %v649
  %v723 = vunpack.c.h.b16 %v649
  %v724 = vunpack.c.l.b16 %v650
  %v725 = vunpack.c.h.b16 %v650
  %v726 = vunpack.c.l.b16 %v651
  %v727 = vunpack.c.h.b16 %v651
  %v728 = vunpack.c.l.b16 %v652
  %v729 = vunpack.c.h.b16 %v652
  %v730 = vunpack.c.l.b16 %v653
  %v731 = vunpack.c.h.b16 %v653
  %v732 = vunpack.c.l.b16 %v654
  %v733 = vunpack.c.h.b16 %v654
  %v734 = vunpack.c.l.b16 %v655
  %v735 = vunpack.c.h.b16 %v655
  %v736 = vunpack.c.l.b16 %v656
  %v737 = vunpack.c.h.b16 %v656
  %v738 = vunpack.c.l.b16 %v657
  %v739 = vunpack.c.h.b16 %v657
  %v740 = vunpack.c.l.b16 %v658
  %v741 = vunpack.c.h.b16 %v658
  %v742 = vunpack.c.l.b16 %v659
  %v743 = vunpack.c.h.b16 %v659
  %v744 = vunpack.c.l.b16 %v660
  %v745 = vunpack.c.h.b16 %v660
  %v746 = vunpack.c.l.b16 %v661
  %v747 = vunpack.c.h.b16 %v661
  %v748 = vunpack.c.l.b16 %v662
  %v749 = vunpack.c.h.b16 %v662
  %v750 = vunpack.c.l.b16 %v663
  %v751 = vunpack.c.h.b16 %v663
  %v752 = vunpack.c.l.b16 %v664
  %v753 = vunpack.c.h.b16 %v664
  %v754 = vunpack.c.l.b16 %v665
  %v755 = vunpack.c.h.b16 %v665
  %v756 = vunpack.c.l.b16 %v666
  %v757 = vunpack.c.h.b16 %v666
  %v758 = vunpack.c.l.b16 %v667
  %v759 = vunpack.c.h.b16 %v667
  %v760 = vunpack.c.l.b16 %v668
  %v761 = vunpack.c.h.b16 %v668
  %v762 = vunpack.c.l.b16 %v669
  %v763 = vunpack.c.h.b16 %v669
  %v764 = vunpack.c.l.b16 %v670
  %v765 = vunpack.c.h.b16 %v670
  %v766 = vunpack.c.l.b16 %v671
  %v767 = vunpack.c.h.b16 %v671
  %v768 = vpack.c.b16 %v704, %v704
  %v769 = vpack.c.b16 %v705, %v705
  %v770 = vpack.c.b16 %v706, %v706
  %v771 = vpack.c.b16 %v707, %v707
  %v772 = vpack.c.b16 %v708, %v708
  %v773 = vpack.c.b16 %v709, %v709
  %v774 = vpack.c.b16 %v710, %v710
  %v775 = vpack.c.b16 %v711, %v711
  %v776 = vpack.c.b16 %v712, %v712
  %v777 = vpack.c.b16 %v713, %v713
  %v778 = vpack.c.b16 %v714, %v714
  %v779 = vpack.c.b16 %v715, %v715
  %v780 = vpack.c.b16 %v716, %v716
  %v781 = vpack.c.b16 %v717, %v717
  %v782 = vpack.c.b16 %v718, %v718
  %v783 = vpack.c.b16 %v719, %v719
  %v784 = vpack.c.b16 %v720, %v720
  %v785 = vpack.c.b16 %v721, %v721
  %v786 = vpack.c.b16 %v722, %v722
  %v787 = vpack.c.b16 %v723, %v723
  %v788 = vpack.c.b16 %v724, %v724
  %v789 = vpack.c.b16 %v725, %v725
  %v790 = vpack.c.b16 %v726, %v726
  %v791 = vpack.c.b16 %v727, %v727
  %v792 = vpack.c.b16 %v728, %v728
  %v793 = vpack.c.b16 %v729, %v729
  %v794 = vpack.c.b16 %v730, %v730
  %v795 = vpack.c.b16 %v731, %v731
  %v796 = vpack.c.b16 %v732, %v732
  %v797 = vpack.c.b16 %v733, %v733
  %v798 = vpack.c.b16 %v734, %v734
  %v799 = vpack.c.b16 %v735, %v735
  %v800 = vpack.c.b16 %v736, %v736
  %v801 = vpack.c.b16 %v737, %v737
  %v802 = vpack.c.b16 %v738, %v738
  %v803 = vpack.c.b16 %v739, %v739
  %v804 = vpack.c.b16 %v740, %v740
  %v805 = vpack.c.b16 %v741, %v741
  %v806 = vpack.c.b16 %v742, %v742
  %v807 = vpack.c.b16 %v743, %v743
  %v808 = vpack.c.b16 %v744, %v744
  %v809 = vpack.c.b16 %v745, %v745
  %v810 = vpack.c.b16 %v746, %v746
  %v811 = vpack.c.b16 %v747, %v747
  %v812 = vpack.c.b16 %v748, %v748
  %v813 = vpack.c.b16 %v749, %v749
  %v814 = vpack.c.b16 %v750, %v750
  %v815 = vpack.c.b16 %v751, %v751
  %v816 = vpack.c.b16 %v752, %v752
  %v817 = vpack.c.b16 %v753, %v753
  %v818 = vpack.c.b16 %v754, %v754
  %v819 = vpack.c.b16 %v755, %v755
  %v820 = vpack.c.b16 %v756, %v756
  %v821 = vpack.c.b16 %v757, %v757
  %v822 = vpack.c.b16 %v758, %v758
  %v823 = vpack.c.b16 %v759, %v759
  %v824 = vpack.c.b16 %v760, %v760
  %v825 = vpack.c.b16 %v761, %v761
  %v826 = vpack.c.b16 %v762, %v762
  %v827 = vpack.c.b16 %v763, %v763
  %v828 = vpack.c.b16 %v764, %v764
  %v829 = vpack.c.b16 %v765, %v765
  %v830 = vpack.c.b16 %v766, %v766
  %v831 = vpack.c.b16 %v767, %v767
  %896 = vst [vmem:[%s3] sm:$0xf] %v768
  %897 = vst [vmem:[%s3 + $0x4] sm:$0xf] %v769
  %898 = vst [vmem:[%s3 + $0x8] sm:$0xf] %v770
  %899 = vst [vmem:[%s3 + $0xc] sm:$0xf] %v771
  %900 = vst [vmem:[%s3 + $0x10] sm:$0xf] %v772
  %901 = vst [vmem:[%s3 + $0x14] sm:$0xf] %v773
  %902 = vst [vmem:[%s3 + $0x18] sm:$0xf] %v774
  %903 = vst [vmem:[%s3 + $0x1c] sm:$0xf] %v775
  %904 = vst [vmem:[%s3 + $0x20] sm:$0xf] %v776
  %905 = vst [vmem:[%s3 + $0x24] sm:$0xf] %v777
  %906 = vst [vmem:[%s3 + $0x28] sm:$0xf] %v778
  %907 = vst [vmem:[%s3 + $0x2c] sm:$0xf] %v779
  %908 = vst [vmem:[%s3 + $0x30] sm:$0xf] %v780
  %909 = vst [vmem:[%s3 + $0x34] sm:$0xf] %v781
  %910 = vst [vmem:[%s3 + $0x38] sm:$0xf] %v782
  %911 = vst [vmem:[%s3 + $0x3c] sm:$0xf] %v783
  %912 = vst [vmem:[%s3 + $0x40] sm:$0xf] %v784
  %913 = vst [vmem:[%s3 + $0x44] sm:$0xf] %v785
  %914 = vst [vmem:[%s3 + $0x48] sm:$0xf] %v786
  %915 = vst [vmem:[%s3 + $0x4c] sm:$0xf] %v787
  %916 = vst [vmem:[%s3 + $0x50] sm:$0xf] %v788
  %917 = vst [vmem:[%s3 + $0x54] sm:$0xf] %v789
  %918 = vst [vmem:[%s3 + $0x58] sm:$0xf] %v790
  %919 = vst [vmem:[%s3 + $0x5c] sm:$0xf] %v791
  %920 = vst [vmem:[%s3 + $0x60] sm:$0xf] %v792
  %921 = vst [vmem:[%s3 + $0x64] sm:$0xf] %v793
  %922 = vst [vmem:[%s3 + $0x68] sm:$0xf] %v794
  %923 = vst [vmem:[%s3 + $0x6c] sm:$0xf] %v795
  %924 = vst [vmem:[%s3 + $0x70] sm:$0xf] %v796
  %925 = vst [vmem:[%s3 + $0x74] sm:$0xf] %v797
  %926 = vst [vmem:[%s3 + $0x78] sm:$0xf] %v798
  %927 = vst [vmem:[%s3 + $0x7c] sm:$0xf] %v799
  %928 = vst [vmem:[%s3 + $0x80] sm:$0xf] %v800
  %929 = vst [vmem:[%s3 + $0x84] sm:$0xf] %v801
  %930 = vst [vmem:[%s3 + $0x88] sm:$0xf] %v802
  %931 = vst [vmem:[%s3 + $0x8c] sm:$0xf] %v803
  %932 = vst [vmem:[%s3 + $0x90] sm:$0xf] %v804
  %933 = vst [vmem:[%s3 + $0x94] sm:$0xf] %v805
  %934 = vst [vmem:[%s3 + $0x98] sm:$0xf] %v806
  %935 = vst [vmem:[%s3 + $0x9c] sm:$0xf] %v807
  %936 = vst [vmem:[%s3 + $0xa0] sm:$0xf] %v808
  %937 = vst [vmem:[%s3 + $0xa4] sm:$0xf] %v809
  %938 = vst [vmem:[%s3 + $0xa8] sm:$0xf] %v810
  %939 = vst [vmem:[%s3 + $0xac] sm:$0xf] %v811
  %940 = vst [vmem:[%s3 + $0xb0] sm:$0xf] %v812
  %941 = vst [vmem:[%s3 + $0xb4] sm:$0xf] %v813
  %942 = vst [vmem:[%s3 + $0xb8] sm:$0xf] %v814
  %943 = vst [vmem:[%s3 + $0xbc] sm:$0xf] %v815
  %944 = vst [vmem:[%s3 + $0xc0] sm:$0xf] %v816
  %945 = vst [vmem:[%s3 + $0xc4] sm:$0xf] %v817
  %946 = vst [vmem:[%s3 + $0xc8] sm:$0xf] %v818
  %947 = vst [vmem:[%s3 + $0xcc] sm:$0xf] %v819
  %948 = vst [vmem:[%s3 + $0xd0] sm:$0xf] %v820
  %949 = vst [vmem:[%s3 + $0xd4] sm:$0xf] %v821
  %950 = vst [vmem:[%s3 + $0xd8] sm:$0xf] %v822
  %951 = vst [vmem:[%s3 + $0xdc] sm:$0xf] %v823
  %952 = vst [vmem:[%s3 + $0xe0] sm:$0xf] %v824
  %953 = vst [vmem:[%s3 + $0xe4] sm:$0xf] %v825
  %954 = vst [vmem:[%s3 + $0xe8] sm:$0xf] %v826
  %955 = vst [vmem:[%s3 + $0xec] sm:$0xf] %v827
  %956 = vst [vmem:[%s3 + $0xf0] sm:$0xf] %v828
  %957 = vst [vmem:[%s3 + $0xf4] sm:$0xf] %v829
  %958 = vst [vmem:[%s3 + $0xf8] sm:$0xf] %v830
  %959 = vst [vmem:[%s3 + $0xfc] sm:$0xf] %v831
  // Predicated region
  $region14: #{wide_basic_forward.6} parent=0 // pred_check
    _
  $region15: #{wide_basic_forward.6} parent=0 // pred_check_branch
    %961 = sbr.rel (0) target = $region17
  $region16: #{wide_basic_forward.6} parent=0 // pred_region
    _
  $region17: #{wide_basic_forward.6} parent=0 // pred_fallthru
    _
  // Predicated region
  $region18: #{wide_basic_forward.6} parent=0 // pred_check
    _
  $region19: #{wide_basic_forward.6} parent=0 // pred_check_branch
    %963 = sbr.rel (0) target = $region21
  $region20: #{wide_basic_forward.6} parent=0 // pred_region
    _
  $region21: #{wide_basic_forward.6} parent=0 // pred_fallthru
    _

// kernel: wide_basic_forward.8
$region0: #{wide_basic_forward.8}
  #allocation0 [shape = 'u32[]', space=smem, size = 0x4, offset = 0x4, fixed_abs, tag = 'smem constant byte address 0x4 - core index']
  #allocation1 [shape = 'u32[144,128]{1,0:T(1,128)}', space=vmem, size = 0x12000, scoped, tag = 'internal scratch']
  #allocation2 [shape = 'f32[1]{0:T(128)S(6)}', space=smem, size = 0x200, scoped, tag = 'scoped memory for wide_basic_forward.8']
  %s0 = inlined_call_operand.<no memory space> [shape: f32[1], index: 0, kind: input, shape index: {}]
  %s1 = inlined_call_operand.vmem [shape: f32[2,16,16,128], index: 1, kind: input, shape index: {}]
  %s2 = inlined_call_operand.vmem [shape: f32[2,4,4,128], index: 2, kind: output, shape index: {}]
  %s3 = sld [smem:[#allocation0]]
  $region41: #{wide_basic_forward.8} parent=0
    _
  %s5 = ssub.s32 1, %s3
  %s6 = scalar_select 0, %s5, %s3
  %7 = sst [smem:[#allocation2]] %s0
  loop: start=0, step=1, limit=10
  $region2: #{wide_basic_forward.8} parent=0 // loop_pre_header
    _
  $region3: #{wide_basic_forward.8} parent=0 // loop_header
    %s9 = sphi 0, %s13
    %p10 = scmp.ge.s32.totalorder %s9, 10
    %s16 = sphi 0, %s28
    %s17 = sphi 0, %s24
    %s18 = sphi 0, %s16
    %s19 = sphi 0, %s17
    %s20 = sphi 0, %s18
    %s21 = sphi 0, %s19
    %s29 = sphi 0, %s29
    %s31 = sphi 0, %s29
    %s32 = sphi 0, %s31
    %s46 = sphi 0, %s32
    %s54 = sphi 0, %s56
    %s57 = sphi 0, %s54
    %s58 = sphi 0, %s57
    %s74 = sphi 0, %s58
    %s82 = sphi 0, %s84
    %s85 = sphi 0, %s82
    %s86 = sphi 0, %s85
    %s102 = sphi 0, %s86
  $region4: #{wide_basic_forward.8} parent=0 // loop_header_branch
    %12 = sbr.rel (%p10) target = $region8
  $region5: #{wide_basic_forward.8} parent=0 // loop_body
    %s14 = ssub.s32 %s9, 1
    %s15 = ssub.s32 %s9, 2
    %s22 = sadd.s32 1, %s17
    %p23 = scmp.ge.s32.totalorder %s22, 4
    %s24 = scalar_select %p23, 0, %s22
    %s25 = sadd.s32 1, %s16
    %s26 = scalar_select %p23, %s25, %s16
    %p27 = scmp.ge.s32.totalorder %s26, 2
    %s28 = scalar_select %p27, 0, %s26
    %s30 = sadd.s32 %s29, 1
    %p33 = scmp.eq.s32.totalorder %s9, 7
    %p34 = scmp.ne.s32.totalorder %s29, %s31
    %p35 = scmp.eq.s32.totalorder %s9, 0
    %p36 = por %p34, %p35
    %p37 = scmp.ne.s32.totalorder %s29, %s31
    %p38 = scmp.eq.s32.totalorder %s14, 7
    %p39 = por %p37, %p38
    %p40 = scmp.ne.s32.totalorder %s31, %s32
    %p41 = scmp.eq.s32.totalorder %s14, 0
    %p42 = por %p40, %p41
    %p43 = scmp.ne.s32.totalorder %s31, %s32
    %p44 = scmp.eq.s32.totalorder %s15, 7
    %p45 = por %p43, %p44
    %p47 = scmp.ne.s32.totalorder %s32, %s46
    %p48 = scmp.eq.s32.totalorder %s15, 0
    %p49 = por %p47, %p48
    %s50 = ssub.s32 %s16, %s28
    %s51 = ssub.s32 %s17, %s24
    %s52 = sor.u32 %s50, %s51
    %p53 = scmp.eq.s32.totalorder %s52, 0
    %s55 = sadd.s32 %s54, 1
    %s56 = scalar_select %p53, %s54, %s55
    %p59 = pneg %p53
    %p60 = scmp.eq.s32.totalorder %s9, 7
    %p61 = por %p59, %p60
    %p62 = scmp.ne.s32.totalorder %s54, %s57
    %p63 = scmp.eq.s32.totalorder %s9, 0
    %p64 = por %p62, %p63
    %p65 = scmp.ne.s32.totalorder %s54, %s57
    %p66 = scmp.eq.s32.totalorder %s14, 7
    %p67 = por %p65, %p66
    %p68 = scmp.ne.s32.totalorder %s57, %s58
    %p69 = scmp.eq.s32.totalorder %s14, 0
    %p70 = por %p68, %p69
    %p71 = scmp.ne.s32.totalorder %s57, %s58
    %p72 = scmp.eq.s32.totalorder %s15, 7
    %p73 = por %p71, %p72
    %p75 = scmp.ne.s32.totalorder %s58, %s74
    %p76 = scmp.eq.s32.totalorder %s15, 0
    %p77 = por %p75, %p76
    %s78 = ssub.s32 %s16, %s28
    %s79 = ssub.s32 %s17, %s24
    %s80 = sor.u32 %s78, %s79
    %p81 = scmp.eq.s32.totalorder %s80, 0
    %s83 = sadd.s32 %s82, 1
    %s84 = scalar_select %p81, %s82, %s83
    %p87 = pneg %p81
    %p88 = scmp.eq.s32.totalorder %s9, 7
    %p89 = por %p87, %p88
    %p90 = scmp.ne.s32.totalorder %s82, %s85
    %p91 = scmp.eq.s32.totalorder %s9, 0
    %p92 = por %p90, %p91
    %p93 = scmp.ne.s32.totalorder %s82, %s85
    %p94 = scmp.eq.s32.totalorder %s14, 7
    %p95 = por %p93, %p94
    %p96 = scmp.ne.s32.totalorder %s85, %s86
    %p97 = scmp.eq.s32.totalorder %s14, 0
    %p98 = por %p96, %p97
    %p99 = scmp.ne.s32.totalorder %s85, %s86
    %p100 = scmp.eq.s32.totalorder %s15, 7
    %p101 = por %p99, %p100
    %p103 = scmp.ne.s32.totalorder %s86, %s102
    %p104 = scmp.eq.s32.totalorder %s15, 0
    %p105 = por %p103, %p104
    %p106 = scmp.le.s32.totalorder 1, %s9
    %p107 = scmp.lt.s32.totalorder %s9, 9
    %p108 = pnand %p106, %p107
    %p109 = pneg %p108
    // Predicated region
    $region9: #{wide_basic_forward.8} parent=5 // pred_check
      _
    $region10: #{wide_basic_forward.8} parent=5 // pred_check_branch
      %111 = sbr.rel (%p108) target = $region12
    $region11: #{wide_basic_forward.8} parent=5 // pred_region
      %s112 = ssub.s32 %s9, 1
      // Predicated region
      $region13: #{wide_basic_forward.8} parent=11 // pred_check
        %p113 = pneg %p42
      $region14: #{wide_basic_forward.8} parent=11 // pred_check_branch
        %115 = sbr.rel (%p113) target = $region16
      $region15: #{wide_basic_forward.8} parent=11 // pred_region
        _
      $region16: #{wide_basic_forward.8} parent=11 // pred_fallthru
        _
    $region12: #{wide_basic_forward.8} parent=5 // pred_fallthru
      _
    %p116 = scmp.lt.s32.totalorder %s9, 8
    // Predicated region
    $region17: #{wide_basic_forward.8} parent=5 // pred_check
      %p117 = pneg %p116
    $region18: #{wide_basic_forward.8} parent=5 // pred_check_branch
      %119 = sbr.rel (%p117) target = $region20
    $region19: #{wide_basic_forward.8} parent=5 // pred_region
      // Predicated region
      $region21: #{wide_basic_forward.8} parent=19 // pred_check
        %p120 = pneg %p64
      $region22: #{wide_basic_forward.8} parent=19 // pred_check_branch
        %122 = sbr.rel (%p120) target = $region24
      $region23: #{wide_basic_forward.8} parent=19 // pred_region
        %s123 = smul.u32 4, %s17
        %p124 = scmp.lt.s32.totalorder %s16, 1
        %s125 = scalar_select %p124, %s16, 1
        %p126 = scmp.lt.s32.totalorder %s123, 15
        %s127 = scalar_select %p126, %s123, 15
        %s128 = smul.addr %s127, 2
        %s129 = smul.addr %s125, 32
        %s130 = sadd.s32 %s128, %s129
        %s131 = smul.addr %s130, 8
        %s132 = scalar_lea.vmem %s1, %s131
        %s133 = smul.u32 4, %s17
      $region24: #{wide_basic_forward.8} parent=19 // pred_fallthru
        _
    $region20: #{wide_basic_forward.8} parent=5 // pred_fallthru
      _
    %p134 = scmp.le.s32.totalorder 1, %s9
    %p135 = scmp.lt.s32.totalorder %s9, 9
    %p136 = pnand %p134, %p135
    %p137 = pneg %p136
    // Predicated region
    $region25: #{wide_basic_forward.8} parent=5 // pred_check
      _
    $region26: #{wide_basic_forward.8} parent=5 // pred_check_branch
      %139 = sbr.rel (%p136) target = $region28
    $region27: #{wide_basic_forward.8} parent=5 // pred_region
      %s140 = ssub.s32 %s9, 1
      %p141 = pneg %p42
      %p142 = pneg %p39
      %s143 = smul.u32 4, %s19
      %p144 = scmp.lt.s32.totalorder %s18, 1
      %s145 = scalar_select %p144, %s18, 1
      %p146 = scmp.lt.s32.totalorder %s143, 15
      %s147 = scalar_select %p146, %s143, 15
      %s148 = smul.addr %s147, 2
      %s149 = smul.addr %s145, 32
      %s150 = sadd.s32 %s148, %s149
      %s151 = smul.addr %s150, 8
      %s152 = scalar_lea.vmem %s1, %s151
      %p153 = pneg %p70
      %p154 = pneg %p67
      %p155 = pneg %p98
      %p156 = pneg %p95
      %p157 = scmp.lt.s32.totalorder %s18, 1
      %s158 = scalar_select %p157, %s18, 1
      %p159 = scmp.lt.s32.totalorder %s19, 3
      %s160 = scalar_select %p159, %s19, 3
      %s161 = smul.addr %s158, 4
      %s162 = sadd.s32 %s160, %s161
      %s163 = smul.addr %s162, 4
      %s164 = scalar_lea.vmem %s2, %s163
      %s165 = smul.u32 4, %s19
      %p166 = scmp.lt.s32.totalorder %s18, 1
      %s167 = scalar_select %p166, %s18, 1
      %p168 = scmp.lt.s32.totalorder %s165, 15
      %s169 = scalar_select %p168, %s165, 15
      %s170 = smul.addr %s169, 2
      %s171 = smul.addr %s167, 32
      %s172 = sadd.s32 %s170, %s171
      %s173 = smul.addr %s172, 8
      %s174 = scalar_lea.vmem %s1, %s173
      %s175 = smul.u32 4, %s19
      %p176 = scmp.lt.s32.totalorder %s18, 1
      %s177 = scalar_select %p176, %s18, 1
      %p178 = scmp.lt.s32.totalorder %s19, 3
      %s179 = scalar_select %p178, %s19, 3
      %s180 = smul.addr %s177, 4
      %s181 = sadd.s32 %s179, %s180
      %s182 = smul.addr %s181, 4
      %s183 = scalar_lea.vmem %s2, %s182
      %s184 = sld [smem:[#allocation2]]
      %v185 = vld [vmem:[%s174] sm:$0xff]
      %v186 = vld [vmem:[%s174 + $0x8] sm:$0xff]
      %v187 = vld [vmem:[%s174 + $0x10] sm:$0xff]
      %v188 = vld [vmem:[%s174 + $0x18] sm:$0xff]
      %v189 = vld [vmem:[%s174 + $0x20] sm:$0xff]
      %v190 = vld [vmem:[%s174 + $0x28] sm:$0xff]
      %v191 = vld [vmem:[%s174 + $0x30] sm:$0xff]
      %v192 = vld [vmem:[%s174 + $0x38] sm:$0xff]
      %v193 = vmax.f32 %v185, %v189
      %v194 = vmax.f32 %v187, %v191
      %v195 = vmax.f32 %v193, %v194
      %v196 = vmax.f32 %v186, %v190
      %v197 = vmax.f32 %v188, %v192
      %v198 = vmax.f32 %v196, %v197
      %v199 = vadd.f32 %v185, %v187
      %v200 = vadd.f32 %v199, %v189
      %v201 = vadd.f32 %v200, %v191
      %v202 = vadd.f32 %v186, %v188
      %v203 = vadd.f32 %v202, %v190
      %v204 = vadd.f32 %v203, %v192
      %v207 = vcombine.high %v195, %v195
      %v208 = vcombine.high %v198, %v198
      %v213 = vcombine.high %v201, %v201
      %v214 = vcombine.high %v204, %v204
      %vm217 = vcmask 1043456
      %v218 = vsel %vm217, %v195, -inf
      %v219 = vrot.slane %v218, 4
      %v220 = vmax.f32 %v218, %v219
      %v221 = vrot.slane %v220, 2
      %v222 = vmax.f32 %v220, %v221
      %v223 = vrot.slane %v222, 1
      %v224 = vmax.f32 %v222, %v223
      %v225 = vsel %vm217, %v207, -inf
      %v226 = vrot.slane %v225, 4
      %v227 = vmax.f32 %v225, %v226
      %v228 = vrot.slane %v227, 2
      %v229 = vmax.f32 %v227, %v228
      %v230 = vrot.slane %v229, 1
      %v231 = vmax.f32 %v229, %v230
      %v232 = vsel %vm217, %v198, -inf
      %v233 = vrot.slane %v232, 4
      %v234 = vmax.f32 %v232, %v233
      %v235 = vrot.slane %v234, 2
      %v236 = vmax.f32 %v234, %v235
      %v237 = vrot.slane %v236, 1
      %v238 = vmax.f32 %v236, %v237
      %v239 = vsel %vm217, %v208, -inf
      %v240 = vrot.slane %v239, 4
      %v241 = vmax.f32 %v239, %v240
      %v242 = vrot.slane %v241, 2
      %v243 = vmax.f32 %v241, %v242
      %v244 = vrot.slane %v243, 1
      %v245 = vmax.f32 %v243, %v244
      %v246 = vsel %vm217, %v201, 0.0
      %v247 = vrot.slane %v246, 4
      %v248 = vadd.f32 %v246, %v247
      %v249 = vrot.slane %v248, 2
      %v250 = vadd.f32 %v248, %v249
      %v251 = vrot.slane %v250, 1
      %v252 = vadd.f32 %v250, %v251
      %v253 = vsel %vm217, %v213, 0.0
      %v254 = vrot.slane %v253, 4
      %v255 = vadd.f32 %v253, %v254
      %v256 = vrot.slane %v255, 2
      %v257 = vadd.f32 %v255, %v256
      %v258 = vrot.slane %v257, 1
      %v259 = vadd.f32 %v257, %v258
      %v260 = vsel %vm217, %v204, 0.0
      %v261 = vrot.slane %v260, 4
      %v262 = vadd.f32 %v260, %v261
      %v263 = vrot.slane %v262, 2
      %v264 = vadd.f32 %v262, %v263
      %v265 = vrot.slane %v264, 1
      %v266 = vadd.f32 %v264, %v265
      %v267 = vsel %vm217, %v214, 0.0
      %v268 = vrot.slane %v267, 4
      %v269 = vadd.f32 %v267, %v268
      %v270 = vrot.slane %v269, 2
      %v271 = vadd.f32 %v269, %v270
      %v272 = vrot.slane %v271, 1
      %v273 = vadd.f32 %v271, %v272
      %v274 = vmul.f32 %v252, 0.0625
      %v275 = vmul.f32 %v259, 0.0625
      %v276 = vmul.f32 %v266, 0.0625
      %v277 = vmul.f32 %v273, 0.0625
      %v278 = vstv %s184
      %v279 = vmul.f32 %v278, %v224
      %v280 = vmul.f32 %v278, %v231
      %v281 = vmul.f32 %v278, %v238
      %v282 = vmul.f32 %v278, %v245
      %s283 = ssub.f32 1.0, %s184
      %v284 = vstv %s283
      %v285 = vmul.f32 %v284, %v274
      %v286 = vmul.f32 %v284, %v275
      %v287 = vmul.f32 %v284, %v276
      %v288 = vmul.f32 %v284, %v277
      %v289 = vadd.f32 %v279, %v285
      %v290 = vadd.f32 %v280, %v286
      %v291 = vadd.f32 %v281, %v287
      %v292 = vadd.f32 %v282, %v288
      %vm297 = vcmask 1041409
      %v298 = vsel %vm297, %v290, %v289
      %vm299 = vcmask 1042434
      %v300 = vsel %vm299, %v291, %v298
      %vm301 = vcmask 1043459
      %v302 = vsel %vm301, %v292, %v300
      %304 = vst [vmem:[%s183] sm:$0xf] %v302
      %p305 = scmp.lt.s32.totalorder %s18, 1
      %s306 = scalar_select %p305, %s18, 1
      %p307 = scmp.lt.s32.totalorder %s19, 3
      %s308 = scalar_select %p307, %s19, 3
      %s309 = smul.addr %s306, 4
      %s310 = sadd.s32 %s308, %s309
      %s311 = smul.addr %s310, 4
      %s312 = scalar_lea.vmem %s2, %s311
      // Predicated region
      $region29: #{wide_basic_forward.8} parent=27 // pred_check
        %p313 = pneg %p95
      $region30: #{wide_basic_forward.8} parent=27 // pred_check_branch
        %315 = sbr.rel (%p313) target = $region32
      $region31: #{wide_basic_forward.8} parent=27 // pred_region
        _
      $region32: #{wide_basic_forward.8} parent=27 // pred_fallthru
        _
    $region28: #{wide_basic_forward.8} parent=5 // pred_fallthru
      _
    %p316 = scmp.le.s32.totalorder 2, %s9
    // Predicated region
    $region33: #{wide_basic_forward.8} parent=5 // pred_check
      %p317 = pneg %p316
    $region34: #{wide_basic_forward.8} parent=5 // pred_check_branch
      %319 = sbr.rel (%p317) target = $region36
    $region35: #{wide_basic_forward.8} parent=5 // pred_region
      %s320 = ssub.s32 %s9, 2
      // Predicated region
      $region37: #{wide_basic_forward.8} parent=35 // pred_check
        %p321 = pneg %p101
      $region38: #{wide_basic_forward.8} parent=35 // pred_check_branch
        %323 = sbr.rel (%p321) target = $region40
      $region39: #{wide_basic_forward.8} parent=35 // pred_region
        %p324 = scmp.lt.s32.totalorder %s20, 1
        %s325 = scalar_select %p324, %s20, 1
        %p326 = scmp.lt.s32.totalorder %s21, 3
        %s327 = scalar_select %p326, %s21, 3
        %s328 = smul.addr %s325, 4
        %s329 = sadd.s32 %s327, %s328
        %s330 = smul.addr %s329, 4
        %s331 = scalar_lea.vmem %s2, %s330
      $region40: #{wide_basic_forward.8} parent=35 // pred_fallthru
        _
    $region36: #{wide_basic_forward.8} parent=5 // pred_fallthru
      _
  $region6: #{wide_basic_forward.8} parent=0 // loop_footer
    %s13 = sadd.s32 1, %s9
  $region7: #{wide_basic_forward.8} parent=0 // loop_footer_branch
    %8 = sbr.rel target = $region3
  $region8: #{wide_basic_forward.8} parent=0 // loop_exit
    _

// kernel: wide_basic_forward.9
$region0: #{wide_basic_forward.9}
  #allocation0 [shape = 'u32[]', space=smem, size = 0x4, offset = 0x4, fixed_abs, tag = 'smem constant byte address 0x4 - core index']
  #allocation1 [shape = 'u32[144,128]{1,0:T(1,128)}', space=vmem, size = 0x12000, scoped, tag = 'internal scratch']
  %s0 = inlined_call_operand.vmem [shape: bf16[2,2048], index: 0, kind: input, shape index: {}]
  %s1 = inlined_call_operand.vmem [shape: bf16[2048,128], index: 1, kind: input, shape index: {}]
  %s2 = inlined_call_operand.vmem [shape: f32[1,128], index: 2, kind: input, shape index: {}]
  %s3 = inlined_call_operand.hbm [shape: f32[2,128], index: 3, kind: output, shape index: {}]
  %s4 = sld [smem:[#allocation0]]
  $region22: #{wide_basic_forward.9} parent=0
    _
  %s6 = ssub.s32 1, %s4
  %s7 = scalar_select 0, %s6, %s4
  $region1: #{wide_basic_forward.9} parent=0
    #allocation2 [shape = 'u8[1024]{0}', space=vmem, size = 0x400, scoped, tag = 'output window, operand 0, single buffered']
    #allocation3 [shape = 's32[1]{0}', space=sflag, size = 0x4, scoped, tag = 'scoped memory for wide_basic_forward.9']
    %8 = vsyncpa [#allocation3], 0
    // Predicated region
    $region2: #{wide_basic_forward.9} parent=1 // pred_check
      _
    $region3: #{wide_basic_forward.9} parent=1 // pred_check_branch
      %10 = sbr.rel (0) target = $region5
    $region4: #{wide_basic_forward.9} parent=1 // pred_region
      _
    $region5: #{wide_basic_forward.9} parent=1 // pred_fallthru
      _
    // Predicated region
    $region6: #{wide_basic_forward.9} parent=1 // pred_check
      _
    $region7: #{wide_basic_forward.9} parent=1 // pred_check_branch
      %12 = sbr.rel (0) target = $region9
    $region8: #{wide_basic_forward.9} parent=1 // pred_region
      _
    $region9: #{wide_basic_forward.9} parent=1 // pred_fallthru
      _
    // Predicated region
    $region10: #{wide_basic_forward.9} parent=1 // pred_check
      _
    $region11: #{wide_basic_forward.9} parent=1 // pred_check_branch
      %14 = sbr.rel (0) target = $region13
    $region12: #{wide_basic_forward.9} parent=1 // pred_region
      _
    $region13: #{wide_basic_forward.9} parent=1 // pred_fallthru
      _
    %v16 = vld [vmem:[%s0] sm:$0xff]
    %v17 = vld [vmem:[%s0 + $0x8] sm:$0xff]
    %v18 = vld [vmem:[%s1] sm:$0xf]
    %v19 = vld [vmem:[%s1 + $0x4] sm:$0xf]
    %v20 = vld [vmem:[%s1 + $0x8] sm:$0xf]
    %v21 = vld [vmem:[%s1 + $0xc] sm:$0xf]
    %v22 = vld [vmem:[%s1 + $0x10] sm:$0xf]
    %v23 = vld [vmem:[%s1 + $0x14] sm:$0xf]
    %v24 = vld [vmem:[%s1 + $0x18] sm:$0xf]
    %v25 = vld [vmem:[%s1 + $0x1c] sm:$0xf]
    %v26 = vld [vmem:[%s1 + $0x20] sm:$0xf]
    %v27 = vld [vmem:[%s1 + $0x24] sm:$0xf]
    %v28 = vld [vmem:[%s1 + $0x28] sm:$0xf]
    %v29 = vld [vmem:[%s1 + $0x2c] sm:$0xf]
    %v30 = vld [vmem:[%s1 + $0x30] sm:$0xf]
    %v31 = vld [vmem:[%s1 + $0x34] sm:$0xf]
    %v32 = vld [vmem:[%s1 + $0x38] sm:$0xf]
    %v33 = vld [vmem:[%s1 + $0x3c] sm:$0xf]
    %v34 = vld [vmem:[%s1 + $0x40] sm:$0xf]
    %v35 = vld [vmem:[%s1 + $0x44] sm:$0xf]
    %v36 = vld [vmem:[%s1 + $0x48] sm:$0xf]
    %v37 = vld [vmem:[%s1 + $0x4c] sm:$0xf]
    %v38 = vld [vmem:[%s1 + $0x50] sm:$0xf]
    %v39 = vld [vmem:[%s1 + $0x54] sm:$0xf]
    %v40 = vld [vmem:[%s1 + $0x58] sm:$0xf]
    %v41 = vld [vmem:[%s1 + $0x5c] sm:$0xf]
    %v42 = vld [vmem:[%s1 + $0x60] sm:$0xf]
    %v43 = vld [vmem:[%s1 + $0x64] sm:$0xf]
    %v44 = vld [vmem:[%s1 + $0x68] sm:$0xf]
    %v45 = vld [vmem:[%s1 + $0x6c] sm:$0xf]
    %v46 = vld [vmem:[%s1 + $0x70] sm:$0xf]
    %v47 = vld [vmem:[%s1 + $0x74] sm:$0xf]
    %v48 = vld [vmem:[%s1 + $0x78] sm:$0xf]
    %v49 = vld [vmem:[%s1 + $0x7c] sm:$0xf]
    %v50 = vld [vmem:[%s1 + $0x80] sm:$0xf]
    %v51 = vld [vmem:[%s1 + $0x84] sm:$0xf]
    %v52 = vld [vmem:[%s1 + $0x88] sm:$0xf]
    %v53 = vld [vmem:[%s1 + $0x8c] sm:$0xf]
    %v54 = vld [vmem:[%s1 + $0x90] sm:$0xf]
    %v55 = vld [vmem:[%s1 + $0x94] sm:$0xf]
    %v56 = vld [vmem:[%s1 + $0x98] sm:$0xf]
    %v57 = vld [vmem:[%s1 + $0x9c] sm:$0xf]
    %v58 = vld [vmem:[%s1 + $0xa0] sm:$0xf]
    %v59 = vld [vmem:[%s1 + $0xa4] sm:$0xf]
    %v60 = vld [vmem:[%s1 + $0xa8] sm:$0xf]
    %v61 = vld [vmem:[%s1 + $0xac] sm:$0xf]
    %v62 = vld [vmem:[%s1 + $0xb0] sm:$0xf]
    %v63 = vld [vmem:[%s1 + $0xb4] sm:$0xf]
    %v64 = vld [vmem:[%s1 + $0xb8] sm:$0xf]
    %v65 = vld [vmem:[%s1 + $0xbc] sm:$0xf]
    %v66 = vld [vmem:[%s1 + $0xc0] sm:$0xf]
    %v67 = vld [vmem:[%s1 + $0xc4] sm:$0xf]
    %v68 = vld [vmem:[%s1 + $0xc8] sm:$0xf]
    %v69 = vld [vmem:[%s1 + $0xcc] sm:$0xf]
    %v70 = vld [vmem:[%s1 + $0xd0] sm:$0xf]
    %v71 = vld [vmem:[%s1 + $0xd4] sm:$0xf]
    %v72 = vld [vmem:[%s1 + $0xd8] sm:$0xf]
    %v73 = vld [vmem:[%s1 + $0xdc] sm:$0xf]
    %v74 = vld [vmem:[%s1 + $0xe0] sm:$0xf]
    %v75 = vld [vmem:[%s1 + $0xe4] sm:$0xf]
    %v76 = vld [vmem:[%s1 + $0xe8] sm:$0xf]
    %v77 = vld [vmem:[%s1 + $0xec] sm:$0xf]
    %v78 = vld [vmem:[%s1 + $0xf0] sm:$0xf]
    %v79 = vld [vmem:[%s1 + $0xf4] sm:$0xf]
    %v80 = vld [vmem:[%s1 + $0xf8] sm:$0xf]
    %v81 = vld [vmem:[%s1 + $0xfc] sm:$0xf]
    %v82 = vld [vmem:[%s1 + $0x100] sm:$0xf]
    %v83 = vld [vmem:[%s1 + $0x104] sm:$0xf]
    %v84 = vld [vmem:[%s1 + $0x108] sm:$0xf]
    %v85 = vld [vmem:[%s1 + $0x10c] sm:$0xf]
    %v86 = vld [vmem:[%s1 + $0x110] sm:$0xf]
    %v87 = vld [vmem:[%s1 + $0x114] sm:$0xf]
    %v88 = vld [vmem:[%s1 + $0x118] sm:$0xf]
    %v89 = vld [vmem:[%s1 + $0x11c] sm:$0xf]
    %v90 = vld [vmem:[%s1 + $0x120] sm:$0xf]
    %v91 = vld [vmem:[%s1 + $0x124] sm:$0xf]
    %v92 = vld [vmem:[%s1 + $0x128] sm:$0xf]
    %v93 = vld [vmem:[%s1 + $0x12c] sm:$0xf]
    %v94 = vld [vmem:[%s1 + $0x130] sm:$0xf]
    %v95 = vld [vmem:[%s1 + $0x134] sm:$0xf]
    %v96 = vld [vmem:[%s1 + $0x138] sm:$0xf]
    %v97 = vld [vmem:[%s1 + $0x13c] sm:$0xf]
    %v98 = vld [vmem:[%s1 + $0x140] sm:$0xf]
    %v99 = vld [vmem:[%s1 + $0x144] sm:$0xf]
    %v100 = vld [vmem:[%s1 + $0x148] sm:$0xf]
    %v101 = vld [vmem:[%s1 + $0x14c] sm:$0xf]
    %v102 = vld [vmem:[%s1 + $0x150] sm:$0xf]
    %v103 = vld [vmem:[%s1 + $0x154] sm:$0xf]
    %v104 = vld [vmem:[%s1 + $0x158] sm:$0xf]
    %v105 = vld [vmem:[%s1 + $0x15c] sm:$0xf]
    %v106 = vld [vmem:[%s1 + $0x160] sm:$0xf]
    %v107 = vld [vmem:[%s1 + $0x164] sm:$0xf]
    %v108 = vld [vmem:[%s1 + $0x168] sm:$0xf]
    %v109 = vld [vmem:[%s1 + $0x16c] sm:$0xf]
    %v110 = vld [vmem:[%s1 + $0x170] sm:$0xf]
    %v111 = vld [vmem:[%s1 + $0x174] sm:$0xf]
    %v112 = vld [vmem:[%s1 + $0x178] sm:$0xf]
    %v113 = vld [vmem:[%s1 + $0x17c] sm:$0xf]
    %v114 = vld [vmem:[%s1 + $0x180] sm:$0xf]
    %v115 = vld [vmem:[%s1 + $0x184] sm:$0xf]
    %v116 = vld [vmem:[%s1 + $0x188] sm:$0xf]
    %v117 = vld [vmem:[%s1 + $0x18c] sm:$0xf]
    %v118 = vld [vmem:[%s1 + $0x190] sm:$0xf]
    %v119 = vld [vmem:[%s1 + $0x194] sm:$0xf]
    %v120 = vld [vmem:[%s1 + $0x198] sm:$0xf]
    %v121 = vld [vmem:[%s1 + $0x19c] sm:$0xf]
    %v122 = vld [vmem:[%s1 + $0x1a0] sm:$0xf]
    %v123 = vld [vmem:[%s1 + $0x1a4] sm:$0xf]
    %v124 = vld [vmem:[%s1 + $0x1a8] sm:$0xf]
    %v125 = vld [vmem:[%s1 + $0x1ac] sm:$0xf]
    %v126 = vld [vmem:[%s1 + $0x1b0] sm:$0xf]
    %v127 = vld [vmem:[%s1 + $0x1b4] sm:$0xf]
    %v128 = vld [vmem:[%s1 + $0x1b8] sm:$0xf]
    %v129 = vld [vmem:[%s1 + $0x1bc] sm:$0xf]
    %v130 = vld [vmem:[%s1 + $0x1c0] sm:$0xf]
    %v131 = vld [vmem:[%s1 + $0x1c4] sm:$0xf]
    %v132 = vld [vmem:[%s1 + $0x1c8] sm:$0xf]
    %v133 = vld [vmem:[%s1 + $0x1cc] sm:$0xf]
    %v134 = vld [vmem:[%s1 + $0x1d0] sm:$0xf]
    %v135 = vld [vmem:[%s1 + $0x1d4] sm:$0xf]
    %v136 = vld [vmem:[%s1 + $0x1d8] sm:$0xf]
    %v137 = vld [vmem:[%s1 + $0x1dc] sm:$0xf]
    %v138 = vld [vmem:[%s1 + $0x1e0] sm:$0xf]
    %v139 = vld [vmem:[%s1 + $0x1e4] sm:$0xf]
    %v140 = vld [vmem:[%s1 + $0x1e8] sm:$0xf]
    %v141 = vld [vmem:[%s1 + $0x1ec] sm:$0xf]
    %v142 = vld [vmem:[%s1 + $0x1f0] sm:$0xf]
    %v143 = vld [vmem:[%s1 + $0x1f4] sm:$0xf]
    %v144 = vld [vmem:[%s1 + $0x1f8] sm:$0xf]
    %v145 = vld [vmem:[%s1 + $0x1fc] sm:$0xf]
    %v146 = vld [vmem:[%s1 + $0x200] sm:$0xf]
    %v147 = vld [vmem:[%s1 + $0x204] sm:$0xf]
    %v148 = vld [vmem:[%s1 + $0x208] sm:$0xf]
    %v149 = vld [vmem:[%s1 + $0x20c] sm:$0xf]
    %v150 = vld [vmem:[%s1 + $0x210] sm:$0xf]
    %v151 = vld [vmem:[%s1 + $0x214] sm:$0xf]
    %v152 = vld [vmem:[%s1 + $0x218] sm:$0xf]
    %v153 = vld [vmem:[%s1 + $0x21c] sm:$0xf]
    %v154 = vld [vmem:[%s1 + $0x220] sm:$0xf]
    %v155 = vld [vmem:[%s1 + $0x224] sm:$0xf]
    %v156 = vld [vmem:[%s1 + $0x228] sm:$0xf]
    %v157 = vld [vmem:[%s1 + $0x22c] sm:$0xf]
    %v158 = vld [vmem:[%s1 + $0x230] sm:$0xf]
    %v159 = vld [vmem:[%s1 + $0x234] sm:$0xf]
    %v160 = vld [vmem:[%s1 + $0x238] sm:$0xf]
    %v161 = vld [vmem:[%s1 + $0x23c] sm:$0xf]
    %v162 = vld [vmem:[%s1 + $0x240] sm:$0xf]
    %v163 = vld [vmem:[%s1 + $0x244] sm:$0xf]
    %v164 = vld [vmem:[%s1 + $0x248] sm:$0xf]
    %v165 = vld [vmem:[%s1 + $0x24c] sm:$0xf]
    %v166 = vld [vmem:[%s1 + $0x250] sm:$0xf]
    %v167 = vld [vmem:[%s1 + $0x254] sm:$0xf]
    %v168 = vld [vmem:[%s1 + $0x258] sm:$0xf]
    %v169 = vld [vmem:[%s1 + $0x25c] sm:$0xf]
    %v170 = vld [vmem:[%s1 + $0x260] sm:$0xf]
    %v171 = vld [vmem:[%s1 + $0x264] sm:$0xf]
    %v172 = vld [vmem:[%s1 + $0x268] sm:$0xf]
    %v173 = vld [vmem:[%s1 + $0x26c] sm:$0xf]
    %v174 = vld [vmem:[%s1 + $0x270] sm:$0xf]
    %v175 = vld [vmem:[%s1 + $0x274] sm:$0xf]
    %v176 = vld [vmem:[%s1 + $0x278] sm:$0xf]
    %v177 = vld [vmem:[%s1 + $0x27c] sm:$0xf]
    %v178 = vld [vmem:[%s1 + $0x280] sm:$0xf]
    %v179 = vld [vmem:[%s1 + $0x284] sm:$0xf]
    %v180 = vld [vmem:[%s1 + $0x288] sm:$0xf]
    %v181 = vld [vmem:[%s1 + $0x28c] sm:$0xf]
    %v182 = vld [vmem:[%s1 + $0x290] sm:$0xf]
    %v183 = vld [vmem:[%s1 + $0x294] sm:$0xf]
    %v184 = vld [vmem:[%s1 + $0x298] sm:$0xf]
    %v185 = vld [vmem:[%s1 + $0x29c] sm:$0xf]
    %v186 = vld [vmem:[%s1 + $0x2a0] sm:$0xf]
    %v187 = vld [vmem:[%s1 + $0x2a4] sm:$0xf]
    %v188 = vld [vmem:[%s1 + $0x2a8] sm:$0xf]
    %v189 = vld [vmem:[%s1 + $0x2ac] sm:$0xf]
    %v190 = vld [vmem:[%s1 + $0x2b0] sm:$0xf]
    %v191 = vld [vmem:[%s1 + $0x2b4] sm:$0xf]
    %v192 = vld [vmem:[%s1 + $0x2b8] sm:$0xf]
    %v193 = vld [vmem:[%s1 + $0x2bc] sm:$0xf]
    %v194 = vld [vmem:[%s1 + $0x2c0] sm:$0xf]
    %v195 = vld [vmem:[%s1 + $0x2c4] sm:$0xf]
    %v196 = vld [vmem:[%s1 + $0x2c8] sm:$0xf]
    %v197 = vld [vmem:[%s1 + $0x2cc] sm:$0xf]
    %v198 = vld [vmem:[%s1 + $0x2d0] sm:$0xf]
    %v199 = vld [vmem:[%s1 + $0x2d4] sm:$0xf]
    %v200 = vld [vmem:[%s1 + $0x2d8] sm:$0xf]
    %v201 = vld [vmem:[%s1 + $0x2dc] sm:$0xf]
    %v202 = vld [vmem:[%s1 + $0x2e0] sm:$0xf]
    %v203 = vld [vmem:[%s1 + $0x2e4] sm:$0xf]
    %v204 = vld [vmem:[%s1 + $0x2e8] sm:$0xf]
    %v205 = vld [vmem:[%s1 + $0x2ec] sm:$0xf]
    %v206 = vld [vmem:[%s1 + $0x2f0] sm:$0xf]
    %v207 = vld [vmem:[%s1 + $0x2f4] sm:$0xf]
    %v208 = vld [vmem:[%s1 + $0x2f8] sm:$0xf]
    %v209 = vld [vmem:[%s1 + $0x2fc] sm:$0xf]
    %v210 = vld [vmem:[%s1 + $0x300] sm:$0xf]
    %v211 = vld [vmem:[%s1 + $0x304] sm:$0xf]
    %v212 = vld [vmem:[%s1 + $0x308] sm:$0xf]
    %v213 = vld [vmem:[%s1 + $0x30c] sm:$0xf]
    %v214 = vld [vmem:[%s1 + $0x310] sm:$0xf]
    %v215 = vld [vmem:[%s1 + $0x314] sm:$0xf]
    %v216 = vld [vmem:[%s1 + $0x318] sm:$0xf]
    %v217 = vld [vmem:[%s1 + $0x31c] sm:$0xf]
    %v218 = vld [vmem:[%s1 + $0x320] sm:$0xf]
    %v219 = vld [vmem:[%s1 + $0x324] sm:$0xf]
    %v220 = vld [vmem:[%s1 + $0x328] sm:$0xf]
    %v221 = vld [vmem:[%s1 + $0x32c] sm:$0xf]
    %v222 = vld [vmem:[%s1 + $0x330] sm:$0xf]
    %v223 = vld [vmem:[%s1 + $0x334] sm:$0xf]
    %v224 = vld [vmem:[%s1 + $0x338] sm:$0xf]
    %v225 = vld [vmem:[%s1 + $0x33c] sm:$0xf]
    %v226 = vld [vmem:[%s1 + $0x340] sm:$0xf]
    %v227 = vld [vmem:[%s1 + $0x344] sm:$0xf]
    %v228 = vld [vmem:[%s1 + $0x348] sm:$0xf]
    %v229 = vld [vmem:[%s1 + $0x34c] sm:$0xf]
    %v230 = vld [vmem:[%s1 + $0x350] sm:$0xf]
    %v231 = vld [vmem:[%s1 + $0x354] sm:$0xf]
    %v232 = vld [vmem:[%s1 + $0x358] sm:$0xf]
    %v233 = vld [vmem:[%s1 + $0x35c] sm:$0xf]
    %v234 = vld [vmem:[%s1 + $0x360] sm:$0xf]
    %v235 = vld [vmem:[%s1 + $0x364] sm:$0xf]
    %v236 = vld [vmem:[%s1 + $0x368] sm:$0xf]
    %v237 = vld [vmem:[%s1 + $0x36c] sm:$0xf]
    %v238 = vld [vmem:[%s1 + $0x370] sm:$0xf]
    %v239 = vld [vmem:[%s1 + $0x374] sm:$0xf]
    %v240 = vld [vmem:[%s1 + $0x378] sm:$0xf]
    %v241 = vld [vmem:[%s1 + $0x37c] sm:$0xf]
    %v242 = vld [vmem:[%s1 + $0x380] sm:$0xf]
    %v243 = vld [vmem:[%s1 + $0x384] sm:$0xf]
    %v244 = vld [vmem:[%s1 + $0x388] sm:$0xf]
    %v245 = vld [vmem:[%s1 + $0x38c] sm:$0xf]
    %v246 = vld [vmem:[%s1 + $0x390] sm:$0xf]
    %v247 = vld [vmem:[%s1 + $0x394] sm:$0xf]
    %v248 = vld [vmem:[%s1 + $0x398] sm:$0xf]
    %v249 = vld [vmem:[%s1 + $0x39c] sm:$0xf]
    %v250 = vld [vmem:[%s1 + $0x3a0] sm:$0xf]
    %v251 = vld [vmem:[%s1 + $0x3a4] sm:$0xf]
    %v252 = vld [vmem:[%s1 + $0x3a8] sm:$0xf]
    %v253 = vld [vmem:[%s1 + $0x3ac] sm:$0xf]
    %v254 = vld [vmem:[%s1 + $0x3b0] sm:$0xf]
    %v255 = vld [vmem:[%s1 + $0x3b4] sm:$0xf]
    %v256 = vld [vmem:[%s1 + $0x3b8] sm:$0xf]
    %v257 = vld [vmem:[%s1 + $0x3bc] sm:$0xf]
    %v258 = vld [vmem:[%s1 + $0x3c0] sm:$0xf]
    %v259 = vld [vmem:[%s1 + $0x3c4] sm:$0xf]
    %v260 = vld [vmem:[%s1 + $0x3c8] sm:$0xf]
    %v261 = vld [vmem:[%s1 + $0x3cc] sm:$0xf]
    %v262 = vld [vmem:[%s1 + $0x3d0] sm:$0xf]
    %v263 = vld [vmem:[%s1 + $0x3d4] sm:$0xf]
    %v264 = vld [vmem:[%s1 + $0x3d8] sm:$0xf]
    %v265 = vld [vmem:[%s1 + $0x3dc] sm:$0xf]
    %v266 = vld [vmem:[%s1 + $0x3e0] sm:$0xf]
    %v267 = vld [vmem:[%s1 + $0x3e4] sm:$0xf]
    %v268 = vld [vmem:[%s1 + $0x3e8] sm:$0xf]
    %v269 = vld [vmem:[%s1 + $0x3ec] sm:$0xf]
    %v270 = vld [vmem:[%s1 + $0x3f0] sm:$0xf]
    %v271 = vld [vmem:[%s1 + $0x3f4] sm:$0xf]
    %v272 = vld [vmem:[%s1 + $0x3f8] sm:$0xf]
    %v273 = vld [vmem:[%s1 + $0x3fc] sm:$0xf]
    %v274 = vld [vmem:[%s2] sm:$0x1]
    %v276 = vlaneseq
    %v277 = vshrl.u32 %v276, 7
    %v278 = vsub.s32 0, %v277
    %v279 = vrot.slane %v274, %v278
    %v283 = vcombine.high %v16, %v16
    %v285 = vunpack.c.l.s4 1966171168
    %v286 = vunpack.c.0.s8 %v285
    %v287 = vlaneseq
    %v288 = vshrl.u32 %v287, 7
    %v289 = vsub.s32 %v286, %v288
    %v290 = vrot.slane %v16, %v289
    %v292 = vunpack.c.l.s4 1966171168
    %v293 = vunpack.c.0.s8 %v292
    %v294 = vlaneseq
    %v295 = vshrl.u32 %v294, 7
    %v296 = vsub.s32 %v293, %v295
    %v297 = vrot.slane %v283, %v296
    %v298 = vcombine.high %v290, %v290
    %v299 = vcombine.high %v297, %v297
    %v301 = vunpack.c.l.s4 1966171168
    %v302 = vunpack.c.0.s8 %v301
    %v303 = vlaneseq
    %v304 = vshrl.u32 %v303, 7
    %v305 = vsub.s32 %v302, %v304
    %v306 = vrot.slane %v290, %v305
    %v308 = vunpack.c.l.s4 1966171168
    %v309 = vunpack.c.0.s8 %v308
    %v310 = vlaneseq
    %v311 = vshrl.u32 %v310, 7
    %v312 = vsub.s32 %v309, %v311
    %v313 = vrot.slane %v297, %v312
    %v315 = vunpack.c.l.s4 1966171168
    %v316 = vunpack.c.0.s8 %v315
    %v317 = vlaneseq
    %v318 = vshrl.u32 %v317, 7
    %v319 = vsub.s32 %v316, %v318
    %v320 = vrot.slane %v298, %v319
    %v322 = vunpack.c.l.s4 1966171168
    %v323 = vunpack.c.0.s8 %v322
    %v324 = vlaneseq
    %v325 = vshrl.u32 %v324, 7
    %v326 = vsub.s32 %v323, %v325
    %v327 = vrot.slane %v299, %v326
    %v328 = vcombine.high %v306, %v306
    %v329 = vcombine.high %v313, %v313
    %v330 = vcombine.high %v320, %v320
    %v331 = vcombine.high %v327, %v327
    %v332 = vcombine.high %v17, %v17
    %v334 = vunpack.c.l.s4 1966171168
    %v335 = vunpack.c.0.s8 %v334
    %v336 = vlaneseq
    %v337 = vshrl.u32 %v336, 7
    %v338 = vsub.s32 %v335, %v337
    %v339 = vrot.slane %v17, %v338
    %v341 = vunpack.c.l.s4 1966171168
    %v342 = vunpack.c.0.s8 %v341
    %v343 = vlaneseq
    %v344 = vshrl.u32 %v343, 7
    %v345 = vsub.s32 %v342, %v344
    %v346 = vrot.slane %v332, %v345
    %v347 = vcombine.high %v339, %v339
    %v348 = vcombine.high %v346, %v346
    %v350 = vunpack.c.l.s4 1966171168
    %v351 = vunpack.c.0.s8 %v350
    %v352 = vlaneseq
    %v353 = vshrl.u32 %v352, 7
    %v354 = vsub.s32 %v351, %v353
    %v355 = vrot.slane %v339, %v354
    %v357 = vunpack.c.l.s4 1966171168
    %v358 = vunpack.c.0.s8 %v357
    %v359 = vlaneseq
    %v360 = vshrl.u32 %v359, 7
    %v361 = vsub.s32 %v358, %v360
    %v362 = vrot.slane %v346, %v361
    %v364 = vunpack.c.l.s4 1966171168
    %v365 = vunpack.c.0.s8 %v364
    %v366 = vlaneseq
    %v367 = vshrl.u32 %v366, 7
    %v368 = vsub.s32 %v365, %v367
    %v369 = vrot.slane %v347, %v368
    %v371 = vunpack.c.l.s4 1966171168
    %v372 = vunpack.c.0.s8 %v371
    %v373 = vlaneseq
    %v374 = vshrl.u32 %v373, 7
    %v375 = vsub.s32 %v372, %v374
    %v376 = vrot.slane %v348, %v375
    %v377 = vcombine.high %v355, %v355
    %v378 = vcombine.high %v362, %v362
    %v379 = vcombine.high %v369, %v369
    %v380 = vcombine.high %v376, %v376
    %v653 = vunpack.c.l.b16 %v18
    %v654 = vunpack.c.l.b16 %v19
    %v655 = vunpack.c.l.b16 %v20
    %v656 = vunpack.c.l.b16 %v21
    %v657 = vunpack.c.l.b16 %v22
    %v658 = vunpack.c.l.b16 %v23
    %v659 = vunpack.c.l.b16 %v24
    %v660 = vunpack.c.l.b16 %v25
    %v661 = vunpack.c.l.b16 %v26
    %v662 = vunpack.c.l.b16 %v27
    %v663 = vunpack.c.l.b16 %v28
    %v664 = vunpack.c.l.b16 %v29
    %v665 = vunpack.c.l.b16 %v30
    %v666 = vunpack.c.l.b16 %v31
    %v667 = vunpack.c.l.b16 %v32
    %v668 = vunpack.c.l.b16 %v33
    %v669 = vunpack.c.l.b16 %v34
    %v670 = vunpack.c.l.b16 %v35
    %v671 = vunpack.c.l.b16 %v36
    %v672 = vunpack.c.l.b16 %v37
    %v673 = vunpack.c.l.b16 %v38
    %v674 = vunpack.c.l.b16 %v39
    %v675 = vunpack.c.l.b16 %v40
    %v676 = vunpack.c.l.b16 %v41
    %v677 = vunpack.c.l.b16 %v42
    %v678 = vunpack.c.l.b16 %v43
    %v679 = vunpack.c.l.b16 %v44
    %v680 = vunpack.c.l.b16 %v45
    %v681 = vunpack.c.l.b16 %v46
    %v682 = vunpack.c.l.b16 %v47
    %v683 = vunpack.c.l.b16 %v48
    %v684 = vunpack.c.l.b16 %v49
    %v685 = vunpack.c.l.b16 %v50
    %v686 = vunpack.c.l.b16 %v51
    %v687 = vunpack.c.l.b16 %v52
    %v688 = vunpack.c.l.b16 %v53
    %v689 = vunpack.c.l.b16 %v54
    %v690 = vunpack.c.l.b16 %v55
    %v691 = vunpack.c.l.b16 %v56
    %v692 = vunpack.c.l.b16 %v57
    %v693 = vunpack.c.l.b16 %v58
    %v694 = vunpack.c.l.b16 %v59
    %v695 = vunpack.c.l.b16 %v60
    %v696 = vunpack.c.l.b16 %v61
    %v697 = vunpack.c.l.b16 %v62
    %v698 = vunpack.c.l.b16 %v63
    %v699 = vunpack.c.l.b16 %v64
    %v700 = vunpack.c.l.b16 %v65
    %v701 = vunpack.c.l.b16 %v66
    %v702 = vunpack.c.l.b16 %v67
    %v703 = vunpack.c.l.b16 %v68
    %v704 = vunpack.c.l.b16 %v69
    %v705 = vunpack.c.l.b16 %v70
    %v706 = vunpack.c.l.b16 %v71
    %v707 = vunpack.c.l.b16 %v72
    %v708 = vunpack.c.l.b16 %v73
    %v709 = vunpack.c.l.b16 %v74
    %v710 = vunpack.c.l.b16 %v75
    %v711 = vunpack.c.l.b16 %v76
    %v712 = vunpack.c.l.b16 %v77
    %v713 = vunpack.c.l.b16 %v78
    %v714 = vunpack.c.l.b16 %v79
    %v715 = vunpack.c.l.b16 %v80
    %v716 = vunpack.c.l.b16 %v81
    %v717 = vunpack.c.l.b16 %v82
    %v718 = vunpack.c.l.b16 %v83
    %v719 = vunpack.c.l.b16 %v84
    %v720 = vunpack.c.l.b16 %v85
    %v721 = vunpack.c.l.b16 %v86
    %v722 = vunpack.c.l.b16 %v87
    %v723 = vunpack.c.l.b16 %v88
    %v724 = vunpack.c.l.b16 %v89
    %v725 = vunpack.c.l.b16 %v90
    %v726 = vunpack.c.l.b16 %v91
    %v727 = vunpack.c.l.b16 %v92
    %v728 = vunpack.c.l.b16 %v93
    %v729 = vunpack.c.l.b16 %v94
    %v730 = vunpack.c.l.b16 %v95
    %v731 = vunpack.c.l.b16 %v96
    %v732 = vunpack.c.l.b16 %v97
    %v733 = vunpack.c.l.b16 %v98
    %v734 = vunpack.c.l.b16 %v99
    %v735 = vunpack.c.l.b16 %v100
    %v736 = vunpack.c.l.b16 %v101
    %v737 = vunpack.c.l.b16 %v102
    %v738 = vunpack.c.l.b16 %v103
    %v739 = vunpack.c.l.b16 %v104
    %v740 = vunpack.c.l.b16 %v105
    %v741 = vunpack.c.l.b16 %v106
    %v742 = vunpack.c.l.b16 %v107
    %v743 = vunpack.c.l.b16 %v108
    %v744 = vunpack.c.l.b16 %v109
    %v745 = vunpack.c.l.b16 %v110
    %v746 = vunpack.c.l.b16 %v111
    %v747 = vunpack.c.l.b16 %v112
    %v748 = vunpack.c.l.b16 %v113
    %v749 = vunpack.c.l.b16 %v114
    %v750 = vunpack.c.l.b16 %v115
    %v751 = vunpack.c.l.b16 %v116
    %v752 = vunpack.c.l.b16 %v117
    %v753 = vunpack.c.l.b16 %v118
    %v754 = vunpack.c.l.b16 %v119
    %v755 = vunpack.c.l.b16 %v120
    %v756 = vunpack.c.l.b16 %v121
    %v757 = vunpack.c.l.b16 %v122
    %v758 = vunpack.c.l.b16 %v123
    %v759 = vunpack.c.l.b16 %v124
    %v760 = vunpack.c.l.b16 %v125
    %v761 = vunpack.c.l.b16 %v126
    %v762 = vunpack.c.l.b16 %v127
    %v763 = vunpack.c.l.b16 %v128
    %v764 = vunpack.c.l.b16 %v129
    %v765 = vunpack.c.l.b16 %v130
    %v766 = vunpack.c.l.b16 %v131
    %v767 = vunpack.c.l.b16 %v132
    %v768 = vunpack.c.l.b16 %v133
    %v769 = vunpack.c.l.b16 %v134
    %v770 = vunpack.c.l.b16 %v135
    %v771 = vunpack.c.l.b16 %v136
    %v772 = vunpack.c.l.b16 %v137
    %v773 = vunpack.c.l.b16 %v138
    %v774 = vunpack.c.l.b16 %v139
    %v775 = vunpack.c.l.b16 %v140
    %v776 = vunpack.c.l.b16 %v141
    %v777 = vunpack.c.l.b16 %v142
    %v778 = vunpack.c.l.b16 %v143
    %v779 = vunpack.c.l.b16 %v144
    %v780 = vunpack.c.l.b16 %v145
    %v781 = vunpack.c.l.b16 %v146
    %v782 = vunpack.c.l.b16 %v147
    %v783 = vunpack.c.l.b16 %v148
    %v784 = vunpack.c.l.b16 %v149
    %v785 = vunpack.c.l.b16 %v150
    %v786 = vunpack.c.l.b16 %v151
    %v787 = vunpack.c.l.b16 %v152
    %v788 = vunpack.c.l.b16 %v153
    %v789 = vunpack.c.l.b16 %v154
    %v790 = vunpack.c.l.b16 %v155
    %v791 = vunpack.c.l.b16 %v156
    %v792 = vunpack.c.l.b16 %v157
    %v793 = vunpack.c.l.b16 %v158
    %v794 = vunpack.c.l.b16 %v159
    %v795 = vunpack.c.l.b16 %v160
    %v796 = vunpack.c.l.b16 %v161
    %v797 = vunpack.c.l.b16 %v162
    %v798 = vunpack.c.l.b16 %v163
    %v799 = vunpack.c.l.b16 %v164
    %v800 = vunpack.c.l.b16 %v165
    %v801 = vunpack.c.l.b16 %v166
    %v802 = vunpack.c.l.b16 %v167
    %v803 = vunpack.c.l.b16 %v168
    %v804 = vunpack.c.l.b16 %v169
    %v805 = vunpack.c.l.b16 %v170
    %v806 = vunpack.c.l.b16 %v171
    %v807 = vunpack.c.l.b16 %v172
    %v808 = vunpack.c.l.b16 %v173
    %v809 = vunpack.c.l.b16 %v174
    %v810 = vunpack.c.l.b16 %v175
    %v811 = vunpack.c.l.b16 %v176
    %v812 = vunpack.c.l.b16 %v177
    %v813 = vunpack.c.l.b16 %v178
    %v814 = vunpack.c.l.b16 %v179
    %v815 = vunpack.c.l.b16 %v180
    %v816 = vunpack.c.l.b16 %v181
    %v817 = vunpack.c.l.b16 %v182
    %v818 = vunpack.c.l.b16 %v183
    %v819 = vunpack.c.l.b16 %v184
    %v820 = vunpack.c.l.b16 %v185
    %v821 = vunpack.c.l.b16 %v186
    %v822 = vunpack.c.l.b16 %v187
    %v823 = vunpack.c.l.b16 %v188
    %v824 = vunpack.c.l.b16 %v189
    %v825 = vunpack.c.l.b16 %v190
    %v826 = vunpack.c.l.b16 %v191
    %v827 = vunpack.c.l.b16 %v192
    %v828 = vunpack.c.l.b16 %v193
    %v829 = vunpack.c.l.b16 %v194
    %v830 = vunpack.c.l.b16 %v195
    %v831 = vunpack.c.l.b16 %v196
    %v832 = vunpack.c.l.b16 %v197
    %v833 = vunpack.c.l.b16 %v198
    %v834 = vunpack.c.l.b16 %v199
    %v835 = vunpack.c.l.b16 %v200
    %v836 = vunpack.c.l.b16 %v201
    %v837 = vunpack.c.l.b16 %v202
    %v838 = vunpack.c.l.b16 %v203
    %v839 = vunpack.c.l.b16 %v204
    %v840 = vunpack.c.l.b16 %v205
    %v841 = vunpack.c.l.b16 %v206
    %v842 = vunpack.c.l.b16 %v207
    %v843 = vunpack.c.l.b16 %v208
    %v844 = vunpack.c.l.b16 %v209
    %v845 = vunpack.c.l.b16 %v210
    %v846 = vunpack.c.l.b16 %v211
    %v847 = vunpack.c.l.b16 %v212
    %v848 = vunpack.c.l.b16 %v213
    %v849 = vunpack.c.l.b16 %v214
    %v850 = vunpack.c.l.b16 %v215
    %v851 = vunpack.c.l.b16 %v216
    %v852 = vunpack.c.l.b16 %v217
    %v853 = vunpack.c.l.b16 %v218
    %v854 = vunpack.c.l.b16 %v219
    %v855 = vunpack.c.l.b16 %v220
    %v856 = vunpack.c.l.b16 %v221
    %v857 = vunpack.c.l.b16 %v222
    %v858 = vunpack.c.l.b16 %v223
    %v859 = vunpack.c.l.b16 %v224
    %v860 = vunpack.c.l.b16 %v225
    %v861 = vunpack.c.l.b16 %v226
    %v862 = vunpack.c.l.b16 %v227
    %v863 = vunpack.c.l.b16 %v228
    %v864 = vunpack.c.l.b16 %v229
    %v865 = vunpack.c.l.b16 %v230
    %v866 = vunpack.c.l.b16 %v231
    %v867 = vunpack.c.l.b16 %v232
    %v868 = vunpack.c.l.b16 %v233
    %v869 = vunpack.c.l.b16 %v234
    %v870 = vunpack.c.l.b16 %v235
    %v871 = vunpack.c.l.b16 %v236
    %v872 = vunpack.c.l.b16 %v237
    %v873 = vunpack.c.l.b16 %v238
    %v874 = vunpack.c.l.b16 %v239
    %v875 = vunpack.c.l.b16 %v240
    %v876 = vunpack.c.l.b16 %v241
    %v877 = vunpack.c.l.b16 %v242
    %v878 = vunpack.c.l.b16 %v243
    %v879 = vunpack.c.l.b16 %v244
    %v880 = vunpack.c.l.b16 %v245
    %v881 = vunpack.c.l.b16 %v246
    %v882 = vunpack.c.l.b16 %v247
    %v883 = vunpack.c.l.b16 %v248
    %v884 = vunpack.c.l.b16 %v249
    %v885 = vunpack.c.l.b16 %v250
    %v886 = vunpack.c.l.b16 %v251
    %v887 = vunpack.c.l.b16 %v252
    %v888 = vunpack.c.l.b16 %v253
    %v889 = vunpack.c.l.b16 %v254
    %v890 = vunpack.c.l.b16 %v255
    %v891 = vunpack.c.l.b16 %v256
    %v892 = vunpack.c.l.b16 %v257
    %v893 = vunpack.c.l.b16 %v258
    %v894 = vunpack.c.l.b16 %v259
    %v895 = vunpack.c.l.b16 %v260
    %v896 = vunpack.c.l.b16 %v261
    %v897 = vunpack.c.l.b16 %v262
    %v898 = vunpack.c.l.b16 %v263
    %v899 = vunpack.c.l.b16 %v264
    %v900 = vunpack.c.l.b16 %v265
    %v901 = vunpack.c.l.b16 %v266
    %v902 = vunpack.c.l.b16 %v267
    %v903 = vunpack.c.l.b16 %v268
    %v904 = vunpack.c.l.b16 %v269
    %v905 = vunpack.c.l.b16 %v270
    %v906 = vunpack.c.l.b16 %v271
    %v907 = vunpack.c.l.b16 %v272
    %v908 = vunpack.c.l.b16 %v273
    %v909 = vpack.c.b16 %v654, %v653
    %v910 = vpack.c.b16 %v656, %v655
    %v911 = vpack.c.b16 %v658, %v657
    %v912 = vpack.c.b16 %v660, %v659
    %v913 = vpack.c.b16 %v662, %v661
    %v914 = vpack.c.b16 %v664, %v663
    %v915 = vpack.c.b16 %v666, %v665
    %v916 = vpack.c.b16 %v668, %v667
    %v917 = vpack.c.b16 %v670, %v669
    %v918 = vpack.c.b16 %v672, %v671
    %v919 = vpack.c.b16 %v674, %v673
    %v920 = vpack.c.b16 %v676, %v675
    %v921 = vpack.c.b16 %v678, %v677
    %v922 = vpack.c.b16 %v680, %v679
    %v923 = vpack.c.b16 %v682, %v681
    %v924 = vpack.c.b16 %v684, %v683
    %v925 = vpack.c.b16 %v686, %v685
    %v926 = vpack.c.b16 %v688, %v687
    %v927 = vpack.c.b16 %v690, %v689
    %v928 = vpack.c.b16 %v692, %v691
    %v929 = vpack.c.b16 %v694, %v693
    %v930 = vpack.c.b16 %v696, %v695
    %v931 = vpack.c.b16 %v698, %v697
    %v932 = vpack.c.b16 %v700, %v699
    %v933 = vpack.c.b16 %v702, %v701
    %v934 = vpack.c.b16 %v704, %v703
    %v935 = vpack.c.b16 %v706, %v705
    %v936 = vpack.c.b16 %v708, %v707
    %v937 = vpack.c.b16 %v710, %v709
    %v938 = vpack.c.b16 %v712, %v711
    %v939 = vpack.c.b16 %v714, %v713
    %v940 = vpack.c.b16 %v716, %v715
    %v941 = vpack.c.b16 %v718, %v717
    %v942 = vpack.c.b16 %v720, %v719
    %v943 = vpack.c.b16 %v722, %v721
    %v944 = vpack.c.b16 %v724, %v723
    %v945 = vpack.c.b16 %v726, %v725
    %v946 = vpack.c.b16 %v728, %v727
    %v947 = vpack.c.b16 %v730, %v729
    %v948 = vpack.c.b16 %v732, %v731
    %v949 = vpack.c.b16 %v734, %v733
    %v950 = vpack.c.b16 %v736, %v735
    %v951 = vpack.c.b16 %v738, %v737
    %v952 = vpack.c.b16 %v740, %v739
    %v953 = vpack.c.b16 %v742, %v741
    %v954 = vpack.c.b16 %v744, %v743
    %v955 = vpack.c.b16 %v746, %v745
    %v956 = vpack.c.b16 %v748, %v747
    %v957 = vpack.c.b16 %v750, %v749
    %v958 = vpack.c.b16 %v752, %v751
    %v959 = vpack.c.b16 %v754, %v753
    %v960 = vpack.c.b16 %v756, %v755
    %v961 = vpack.c.b16 %v758, %v757
    %v962 = vpack.c.b16 %v760, %v759
    %v963 = vpack.c.b16 %v762, %v761
    %v964 = vpack.c.b16 %v764, %v763
    %v965 = vpack.c.b16 %v766, %v765
    %v966 = vpack.c.b16 %v768, %v767
    %v967 = vpack.c.b16 %v770, %v769
    %v968 = vpack.c.b16 %v772, %v771
    %v969 = vpack.c.b16 %v774, %v773
    %v970 = vpack.c.b16 %v776, %v775
    %v971 = vpack.c.b16 %v778, %v777
    %v972 = vpack.c.b16 %v780, %v779
    %v973 = vpack.c.b16 %v782, %v781
    %v974 = vpack.c.b16 %v784, %v783
    %v975 = vpack.c.b16 %v786, %v785
    %v976 = vpack.c.b16 %v788, %v787
    %v977 = vpack.c.b16 %v790, %v789
    %v978 = vpack.c.b16 %v792, %v791
    %v979 = vpack.c.b16 %v794, %v793
    %v980 = vpack.c.b16 %v796, %v795
    %v981 = vpack.c.b16 %v798, %v797
    %v982 = vpack.c.b16 %v800, %v799
    %v983 = vpack.c.b16 %v802, %v801
    %v984 = vpack.c.b16 %v804, %v803
    %v985 = vpack.c.b16 %v806, %v805
    %v986 = vpack.c.b16 %v808, %v807
    %v987 = vpack.c.b16 %v810, %v809
    %v988 = vpack.c.b16 %v812, %v811
    %v989 = vpack.c.b16 %v814, %v813
    %v990 = vpack.c.b16 %v816, %v815
    %v991 = vpack.c.b16 %v818, %v817
    %v992 = vpack.c.b16 %v820, %v819
    %v993 = vpack.c.b16 %v822, %v821
    %v994 = vpack.c.b16 %v824, %v823
    %v995 = vpack.c.b16 %v826, %v825
    %v996 = vpack.c.b16 %v828, %v827
    %v997 = vpack.c.b16 %v830, %v829
    %v998 = vpack.c.b16 %v832, %v831
    %v999 = vpack.c.b16 %v834, %v833
    %v1000 = vpack.c.b16 %v836, %v835
    %v1001 = vpack.c.b16 %v838, %v837
    %v1002 = vpack.c.b16 %v840, %v839
    %v1003 = vpack.c.b16 %v842, %v841
    %v1004 = vpack.c.b16 %v844, %v843
    %v1005 = vpack.c.b16 %v846, %v845
    %v1006 = vpack.c.b16 %v848, %v847
    %v1007 = vpack.c.b16 %v850, %v849
    %v1008 = vpack.c.b16 %v852, %v851
    %v1009 = vpack.c.b16 %v854, %v853
    %v1010 = vpack.c.b16 %v856, %v855
    %v1011 = vpack.c.b16 %v858, %v857
    %v1012 = vpack.c.b16 %v860, %v859
    %v1013 = vpack.c.b16 %v862, %v861
    %v1014 = vpack.c.b16 %v864, %v863
    %v1015 = vpack.c.b16 %v866, %v865
    %v1016 = vpack.c.b16 %v868, %v867
    %v1017 = vpack.c.b16 %v870, %v869
    %v1018 = vpack.c.b16 %v872, %v871
    %v1019 = vpack.c.b16 %v874, %v873
    %v1020 = vpack.c.b16 %v876, %v875
    %v1021 = vpack.c.b16 %v878, %v877
    %v1022 = vpack.c.b16 %v880, %v879
    %v1023 = vpack.c.b16 %v882, %v881
    %v1024 = vpack.c.b16 %v884, %v883
    %v1025 = vpack.c.b16 %v886, %v885
    %v1026 = vpack.c.b16 %v888, %v887
    %v1027 = vpack.c.b16 %v890, %v889
    %v1028 = vpack.c.b16 %v892, %v891
    %v1029 = vpack.c.b16 %v894, %v893
    %v1030 = vpack.c.b16 %v896, %v895
    %v1031 = vpack.c.b16 %v898, %v897
    %v1032 = vpack.c.b16 %v900, %v899
    %v1033 = vpack.c.b16 %v902, %v901
    %v1034 = vpack.c.b16 %v904, %v903
    %v1035 = vpack.c.b16 %v906, %v905
    %v1036 = vpack.c.b16 %v908, %v907
    %1165 = vmatprep.subr.bf16.mxu0 0
    %1166 = vmatpush1.bf16.msra.mxu0 %v916
    %1167 = vmatprep.subr.bf16.mxu0 0
    %1168 = vmatpush1.bf16.msra.mxu0 %v915
    %1169 = vmatprep.subr.bf16.mxu0 0
    %1170 = vmatpush1.bf16.msra.mxu0 %v914
    %1171 = vmatprep.subr.bf16.mxu0 0
    %1172 = vmatpush1.bf16.msra.mxu0 %v913
    %1173 = vmatprep.subr.bf16.mxu0 0
    %1174 = vmatpush1.bf16.msra.mxu0 %v912
    %1175 = vmatprep.subr.bf16.mxu0 0
    %1176 = vmatpush1.bf16.msra.mxu0 %v911
    %1177 = vmatprep.subr.bf16.mxu0 0
    %1178 = vmatpush1.bf16.msra.mxu0 %v910
    %1179 = vmatprep.subr.bf16.mxu0 0
    %1180 = vmatpush1.bf16.msra.mxu0 %v909
    %1181 = vmatprep.subr.bf16.mxu0 0
    %1182 = vmatpush2.bf16.msra.mxu0 %v924
    %1183 = vmatprep.subr.bf16.mxu0 0
    %1184 = vmatpush2.bf16.msra.mxu0 %v923
    %1185 = vmatprep.subr.bf16.mxu0 0
    %1186 = vmatpush2.bf16.msra.mxu0 %v922
    %1187 = vmatprep.subr.bf16.mxu0 0
    %1188 = vmatpush2.bf16.msra.mxu0 %v921
    %1189 = vmatprep.subr.bf16.mxu0 0
    %1190 = vmatpush2.bf16.msra.mxu0 %v920
    %1191 = vmatprep.subr.bf16.mxu0 0
    %1192 = vmatpush2.bf16.msra.mxu0 %v919
    %1193 = vmatprep.subr.bf16.mxu0 0
    %1194 = vmatpush2.bf16.msra.mxu0 %v918
    %1195 = vmatprep.subr.bf16.mxu0 0
    %1196 = vmatpush2.bf16.msra.mxu0 %v917
    %1197 = vmatprep.mubr.bf16.mxu0 %v320
    %1198 = vmatmul.mubr.bf16.gmra.mxu0 %v306
    %v1199 = vpop.f32.mrf.mxu0
    %v1200 = vadd.f32 %v279, %v1199
    %v1201 = vpop.f32.mrf.mxu0
    %v1202 = vpop.f32.mrf.mxu0
    %v1203 = vpop.f32.mrf.mxu0
    %1204 = vdwg.mxu0
    %1205 = vmatprep.subr.bf16.mxu0 0
    %1206 = vmatpush1.bf16.msra.mxu0 %v932
    %1207 = vmatprep.subr.bf16.mxu0 0
    %1208 = vmatpush1.bf16.msra.mxu0 %v931
    %1209 = vmatprep.subr.bf16.mxu0 0
    %1210 = vmatpush1.bf16.msra.mxu0 %v930
    %1211 = vmatprep.subr.bf16.mxu0 0
    %1212 = vmatpush1.bf16.msra.mxu0 %v929
    %1213 = vmatprep.subr.bf16.mxu0 0
    %1214 = vmatpush1.bf16.msra.mxu0 %v928
    %1215 = vmatprep.subr.bf16.mxu0 0
    %1216 = vmatpush1.bf16.msra.mxu0 %v927
    %1217 = vmatprep.subr.bf16.mxu0 0
    %1218 = vmatpush1.bf16.msra.mxu0 %v926
    %1219 = vmatprep.subr.bf16.mxu0 0
    %1220 = vmatpush1.bf16.msra.mxu0 %v925
    %1221 = vmatprep.subr.bf16.mxu0 0
    %1222 = vmatpush2.bf16.msra.mxu0 %v940
    %1223 = vmatprep.subr.bf16.mxu0 0
    %1224 = vmatpush2.bf16.msra.mxu0 %v939
    %1225 = vmatprep.subr.bf16.mxu0 0
    %1226 = vmatpush2.bf16.msra.mxu0 %v938
    %1227 = vmatprep.subr.bf16.mxu0 0
    %1228 = vmatpush2.bf16.msra.mxu0 %v937
    %1229 = vmatprep.subr.bf16.mxu0 0
    %1230 = vmatpush2.bf16.msra.mxu0 %v936
    %1231 = vmatprep.subr.bf16.mxu0 0
    %1232 = vmatpush2.bf16.msra.mxu0 %v935
    %1233 = vmatprep.subr.bf16.mxu0 0
    %1234 = vmatpush2.bf16.msra.mxu0 %v934
    %1235 = vmatprep.subr.bf16.mxu0 0
    %1236 = vmatpush2.bf16.msra.mxu0 %v933
    %1237 = vmatprep.mubr.bf16.mxu0 %v330
    %1238 = vmatmul.mubr.bf16.gmra.mxu0 %v328
    %v1239 = vpop.f32.mrf.mxu0
    %v1240 = vadd.f32 %v1200, %v1239
    %v1241 = vpop.f32.mrf.mxu0
    %v1242 = vpop.f32.mrf.mxu0
    %v1243 = vpop.f32.mrf.mxu0
    %1244 = vdwg.mxu0
    %1245 = vmatprep.subr.bf16.mxu0 0
    %1246 = vmatpush1.bf16.msra.mxu0 %v948
    %1247 = vmatprep.subr.bf16.mxu0 0
    %1248 = vmatpush1.bf16.msra.mxu0 %v947
    %1249 = vmatprep.subr.bf16.mxu0 0
    %1250 = vmatpush1.bf16.msra.mxu0 %v946
    %1251 = vmatprep.subr.bf16.mxu0 0
    %1252 = vmatpush1.bf16.msra.mxu0 %v945
    %1253 = vmatprep.subr.bf16.mxu0 0
    %1254 = vmatpush1.bf16.msra.mxu0 %v944
    %1255 = vmatprep.subr.bf16.mxu0 0
    %1256 = vmatpush1.bf16.msra.mxu0 %v943
    %1257 = vmatprep.subr.bf16.mxu0 0
    %1258 = vmatpush1.bf16.msra.mxu0 %v942
    %1259 = vmatprep.subr.bf16.mxu0 0
    %1260 = vmatpush1.bf16.msra.mxu0 %v941
    %1261 = vmatprep.subr.bf16.mxu0 0
    %1262 = vmatpush2.bf16.msra.mxu0 %v956
    %1263 = vmatprep.subr.bf16.mxu0 0
    %1264 = vmatpush2.bf16.msra.mxu0 %v955
    %1265 = vmatprep.subr.bf16.mxu0 0
    %1266 = vmatpush2.bf16.msra.mxu0 %v954
    %1267 = vmatprep.subr.bf16.mxu0 0
    %1268 = vmatpush2.bf16.msra.mxu0 %v953
    %1269 = vmatprep.subr.bf16.mxu0 0
    %1270 = vmatpush2.bf16.msra.mxu0 %v952
    %1271 = vmatprep.subr.bf16.mxu0 0
    %1272 = vmatpush2.bf16.msra.mxu0 %v951
    %1273 = vmatprep.subr.bf16.mxu0 0
    %1274 = vmatpush2.bf16.msra.mxu0 %v950
    %1275 = vmatprep.subr.bf16.mxu0 0
    %1276 = vmatpush2.bf16.msra.mxu0 %v949
    %1277 = vmatprep.mubr.bf16.mxu0 %v327
    %1278 = vmatmul.mubr.bf16.gmra.mxu0 %v313
    %v1279 = vpop.f32.mrf.mxu0
    %v1280 = vadd.f32 %v1240, %v1279
    %v1281 = vpop.f32.mrf.mxu0
    %v1282 = vpop.f32.mrf.mxu0
    %v1283 = vpop.f32.mrf.mxu0
    %1284 = vdwg.mxu0
    %1285 = vmatprep.subr.bf16.mxu0 0
    %1286 = vmatpush1.bf16.msra.mxu0 %v964
    %1287 = vmatprep.subr.bf16.mxu0 0
    %1288 = vmatpush1.bf16.msra.mxu0 %v963
    %1289 = vmatprep.subr.bf16.mxu0 0
    %1290 = vmatpush1.bf16.msra.mxu0 %v962
    %1291 = vmatprep.subr.bf16.mxu0 0
    %1292 = vmatpush1.bf16.msra.mxu0 %v961
    %1293 = vmatprep.subr.bf16.mxu0 0
    %1294 = vmatpush1.bf16.msra.mxu0 %v960
    %1295 = vmatprep.subr.bf16.mxu0 0
    %1296 = vmatpush1.bf16.msra.mxu0 %v959
    %1297 = vmatprep.subr.bf16.mxu0 0
    %1298 = vmatpush1.bf16.msra.mxu0 %v958
    %1299 = vmatprep.subr.bf16.mxu0 0
    %1300 = vmatpush1.bf16.msra.mxu0 %v957
    %1301 = vmatprep.subr.bf16.mxu0 0
    %1302 = vmatpush2.bf16.msra.mxu0 %v972
    %1303 = vmatprep.subr.bf16.mxu0 0
    %1304 = vmatpush2.bf16.msra.mxu0 %v971
    %1305 = vmatprep.subr.bf16.mxu0 0
    %1306 = vmatpush2.bf16.msra.mxu0 %v970
    %1307 = vmatprep.subr.bf16.mxu0 0
    %1308 = vmatpush2.bf16.msra.mxu0 %v969
    %1309 = vmatprep.subr.bf16.mxu0 0
    %1310 = vmatpush2.bf16.msra.mxu0 %v968
    %1311 = vmatprep.subr.bf16.mxu0 0
    %1312 = vmatpush2.bf16.msra.mxu0 %v967
    %1313 = vmatprep.subr.bf16.mxu0 0
    %1314 = vmatpush2.bf16.msra.mxu0 %v966
    %1315 = vmatprep.subr.bf16.mxu0 0
    %1316 = vmatpush2.bf16.msra.mxu0 %v965
    %1317 = vmatprep.mubr.bf16.mxu0 %v331
    %1318 = vmatmul.mubr.bf16.gmra.mxu0 %v329
    %v1319 = vpop.f32.mrf.mxu0
    %v1320 = vadd.f32 %v1280, %v1319
    %v1321 = vpop.f32.mrf.mxu0
    %v1322 = vpop.f32.mrf.mxu0
    %v1323 = vpop.f32.mrf.mxu0
    %1324 = vdwg.mxu0
    %1325 = vmatprep.subr.bf16.mxu0 0
    %1326 = vmatpush1.bf16.msra.mxu0 %v980
    %1327 = vmatprep.subr.bf16.mxu0 0
    %1328 = vmatpush1.bf16.msra.mxu0 %v979
    %1329 = vmatprep.subr.bf16.mxu0 0
    %1330 = vmatpush1.bf16.msra.mxu0 %v978
    %1331 = vmatprep.subr.bf16.mxu0 0
    %1332 = vmatpush1.bf16.msra.mxu0 %v977
    %1333 = vmatprep.subr.bf16.mxu0 0
    %1334 = vmatpush1.bf16.msra.mxu0 %v976
    %1335 = vmatprep.subr.bf16.mxu0 0
    %1336 = vmatpush1.bf16.msra.mxu0 %v975
    %1337 = vmatprep.subr.bf16.mxu0 0
    %1338 = vmatpush1.bf16.msra.mxu0 %v974
    %1339 = vmatprep.subr.bf16.mxu0 0
    %1340 = vmatpush1.bf16.msra.mxu0 %v973
    %1341 = vmatprep.subr.bf16.mxu0 0
    %1342 = vmatpush2.bf16.msra.mxu0 %v988
    %1343 = vmatprep.subr.bf16.mxu0 0
    %1344 = vmatpush2.bf16.msra.mxu0 %v987
    %1345 = vmatprep.subr.bf16.mxu0 0
    %1346 = vmatpush2.bf16.msra.mxu0 %v986
    %1347 = vmatprep.subr.bf16.mxu0 0
    %1348 = vmatpush2.bf16.msra.mxu0 %v985
    %1349 = vmatprep.subr.bf16.mxu0 0
    %1350 = vmatpush2.bf16.msra.mxu0 %v984
    %1351 = vmatprep.subr.bf16.mxu0 0
    %1352 = vmatpush2.bf16.msra.mxu0 %v983
    %1353 = vmatprep.subr.bf16.mxu0 0
    %1354 = vmatpush2.bf16.msra.mxu0 %v982
    %1355 = vmatprep.subr.bf16.mxu0 0
    %1356 = vmatpush2.bf16.msra.mxu0 %v981
    %1357 = vmatprep.mubr.bf16.mxu0 %v369
    %1358 = vmatmul.mubr.bf16.gmra.mxu0 %v355
    %v1359 = vpop.f32.mrf.mxu0
    %v1360 = vadd.f32 %v1320, %v1359
    %v1361 = vpop.f32.mrf.mxu0
    %v1362 = vpop.f32.mrf.mxu0
    %v1363 = vpop.f32.mrf.mxu0
    %1364 = vdwg.mxu0
    %1365 = vmatprep.subr.bf16.mxu0 0
    %1366 = vmatpush1.bf16.msra.mxu0 %v996
    %1367 = vmatprep.subr.bf16.mxu0 0
    %1368 = vmatpush1.bf16.msra.mxu0 %v995
    %1369 = vmatprep.subr.bf16.mxu0 0
    %1370 = vmatpush1.bf16.msra.mxu0 %v994
    %1371 = vmatprep.subr.bf16.mxu0 0
    %1372 = vmatpush1.bf16.msra.mxu0 %v993
    %1373 = vmatprep.subr.bf16.mxu0 0
    %1374 = vmatpush1.bf16.msra.mxu0 %v992
    %1375 = vmatprep.subr.bf16.mxu0 0
    %1376 = vmatpush1.bf16.msra.mxu0 %v991
    %1377 = vmatprep.subr.bf16.mxu0 0
    %1378 = vmatpush1.bf16.msra.mxu0 %v990
    %1379 = vmatprep.subr.bf16.mxu0 0
    %1380 = vmatpush1.bf16.msra.mxu0 %v989
    %1381 = vmatprep.subr.bf16.mxu0 0
    %1382 = vmatpush2.bf16.msra.mxu0 %v1004
    %1383 = vmatprep.subr.bf16.mxu0 0
    %1384 = vmatpush2.bf16.msra.mxu0 %v1003
    %1385 = vmatprep.subr.bf16.mxu0 0
    %1386 = vmatpush2.bf16.msra.mxu0 %v1002
    %1387 = vmatprep.subr.bf16.mxu0 0
    %1388 = vmatpush2.bf16.msra.mxu0 %v1001
    %1389 = vmatprep.subr.bf16.mxu0 0
    %1390 = vmatpush2.bf16.msra.mxu0 %v1000
    %1391 = vmatprep.subr.bf16.mxu0 0
    %1392 = vmatpush2.bf16.msra.mxu0 %v999
    %1393 = vmatprep.subr.bf16.mxu0 0
    %1394 = vmatpush2.bf16.msra.mxu0 %v998
    %1395 = vmatprep.subr.bf16.mxu0 0
    %1396 = vmatpush2.bf16.msra.mxu0 %v997
    %1397 = vmatprep.mubr.bf16.mxu0 %v379
    %1398 = vmatmul.mubr.bf16.gmra.mxu0 %v377
    %v1399 = vpop.f32.mrf.mxu0
    %v1400 = vadd.f32 %v1360, %v1399
    %v1401 = vpop.f32.mrf.mxu0
    %v1402 = vpop.f32.mrf.mxu0
    %v1403 = vpop.f32.mrf.mxu0
    %1404 = vdwg.mxu0
    %1405 = vmatprep.subr.bf16.mxu0 0
    %1406 = vmatpush1.bf16.msra.mxu0 %v1012
    %1407 = vmatprep.subr.bf16.mxu0 0
    %1408 = vmatpush1.bf16.msra.mxu0 %v1011
    %1409 = vmatprep.subr.bf16.mxu0 0
    %1410 = vmatpush1.bf16.msra.mxu0 %v1010
    %1411 = vmatprep.subr.bf16.mxu0 0
    %1412 = vmatpush1.bf16.msra.mxu0 %v1009
    %1413 = vmatprep.subr.bf16.mxu0 0
    %1414 = vmatpush1.bf16.msra.mxu0 %v1008
    %1415 = vmatprep.subr.bf16.mxu0 0
    %1416 = vmatpush1.bf16.msra.mxu0 %v1007
    %1417 = vmatprep.subr.bf16.mxu0 0
    %1418 = vmatpush1.bf16.msra.mxu0 %v1006
    %1419 = vmatprep.subr.bf16.mxu0 0
    %1420 = vmatpush1.bf16.msra.mxu0 %v1005
    %1421 = vmatprep.subr.bf16.mxu0 0
    %1422 = vmatpush2.bf16.msra.mxu0 %v1020
    %1423 = vmatprep.subr.bf16.mxu0 0
    %1424 = vmatpush2.bf16.msra.mxu0 %v1019
    %1425 = vmatprep.subr.bf16.mxu0 0
    %1426 = vmatpush2.bf16.msra.mxu0 %v1018
    %1427 = vmatprep.subr.bf16.mxu0 0
    %1428 = vmatpush2.bf16.msra.mxu0 %v1017
    %1429 = vmatprep.subr.bf16.mxu0 0
    %1430 = vmatpush2.bf16.msra.mxu0 %v1016
    %1431 = vmatprep.subr.bf16.mxu0 0
    %1432 = vmatpush2.bf16.msra.mxu0 %v1015
    %1433 = vmatprep.subr.bf16.mxu0 0
    %1434 = vmatpush2.bf16.msra.mxu0 %v1014
    %1435 = vmatprep.subr.bf16.mxu0 0
    %1436 = vmatpush2.bf16.msra.mxu0 %v1013
    %1437 = vmatprep.mubr.bf16.mxu0 %v376
    %1438 = vmatmul.mubr.bf16.gmra.mxu0 %v362
    %v1439 = vpop.f32.mrf.mxu0
    %v1440 = vadd.f32 %v1400, %v1439
    %v1441 = vpop.f32.mrf.mxu0
    %v1442 = vpop.f32.mrf.mxu0
    %v1443 = vpop.f32.mrf.mxu0
    %1444 = vdwg.mxu0
    %1445 = vmatprep.subr.bf16.mxu0 0
    %1446 = vmatpush1.bf16.msra.mxu0 %v1028
    %1447 = vmatprep.subr.bf16.mxu0 0
    %1448 = vmatpush1.bf16.msra.mxu0 %v1027
    %1449 = vmatprep.subr.bf16.mxu0 0
    %1450 = vmatpush1.bf16.msra.mxu0 %v1026
    %1451 = vmatprep.subr.bf16.mxu0 0
    %1452 = vmatpush1.bf16.msra.mxu0 %v1025
    %1453 = vmatprep.subr.bf16.mxu0 0
    %1454 = vmatpush1.bf16.msra.mxu0 %v1024
    %1455 = vmatprep.subr.bf16.mxu0 0
    %1456 = vmatpush1.bf16.msra.mxu0 %v1023
    %1457 = vmatprep.subr.bf16.mxu0 0
    %1458 = vmatpush1.bf16.msra.mxu0 %v1022
    %1459 = vmatprep.subr.bf16.mxu0 0
    %1460 = vmatpush1.bf16.msra.mxu0 %v1021
    %1461 = vmatprep.subr.bf16.mxu0 0
    %1462 = vmatpush2.bf16.msra.mxu0 %v1036
    %1463 = vmatprep.subr.bf16.mxu0 0
    %1464 = vmatpush2.bf16.msra.mxu0 %v1035
    %1465 = vmatprep.subr.bf16.mxu0 0
    %1466 = vmatpush2.bf16.msra.mxu0 %v1034
    %1467 = vmatprep.subr.bf16.mxu0 0
    %1468 = vmatpush2.bf16.msra.mxu0 %v1033
    %1469 = vmatprep.subr.bf16.mxu0 0
    %1470 = vmatpush2.bf16.msra.mxu0 %v1032
    %1471 = vmatprep.subr.bf16.mxu0 0
    %1472 = vmatpush2.bf16.msra.mxu0 %v1031
    %1473 = vmatprep.subr.bf16.mxu0 0
    %1474 = vmatpush2.bf16.msra.mxu0 %v1030
    %1475 = vmatprep.subr.bf16.mxu0 0
    %1476 = vmatpush2.bf16.msra.mxu0 %v1029
    %1477 = vmatprep.mubr.bf16.mxu0 %v380
    %1478 = vmatmul.mubr.bf16.gmra.mxu0 %v378
    %v1479 = vpop.f32.mrf.mxu0
    %v1480 = vadd.f32 %v1440, %v1479
    %v1481 = vpop.f32.mrf.mxu0
    %v1482 = vpop.f32.mrf.mxu0
    %v1483 = vpop.f32.mrf.mxu0
    %1484 = vdwg.mxu0
    %1485 = vst [vmem:[#allocation2] sm:$0x3] %v1480
    // Predicated region
    $region14: #{wide_basic_forward.9} parent=1 // pred_check
      _
    $region15: #{wide_basic_forward.9} parent=1 // pred_check_branch
      %1487 = sbr.rel (0) target = $region17
    $region16: #{wide_basic_forward.9} parent=1 // pred_region
      %s1489 = ssub.s32 32, 32
      %1490 = vsyncadd [#allocation3], %s1489
      %s1492 = sshll.u32 [#allocation2], 4
      %s1493 = int_to_ptr.vmem [resolvable:$true] %s1492
      %1495 = dma.vmem_to_hbm [thread:$0]  %s1493, 32, %s3, [#allocation3]
    $region17: #{wide_basic_forward.9} parent=1 // pred_fallthru
      _
    // Predicated region
    $region18: #{wide_basic_forward.9} parent=1 // pred_check
      _
    $region19: #{wide_basic_forward.9} parent=1 // pred_check_branch
      %1497 = sbr.rel (0) target = $region21
    $region20: #{wide_basic_forward.9} parent=1 // pred_region
      %1498 = dma.done [#allocation3], 32
    $region21: #{wide_basic_forward.9} parent=1 // pred_fallthru
      _
    %1499 = vsyncpa [#allocation3], 1

// kernel: wide_basic_forward.5
$region0: #{wide_basic_forward.5}
  #allocation0 [shape = 'u32[]', space=smem, size = 0x4, offset = 0x4, fixed_abs, tag = 'smem constant byte address 0x4 - core index']
  #allocation1 [shape = 'u32[144,128]{1,0:T(1,128)}', space=vmem, size = 0x12000, scoped, tag = 'internal scratch']
  %s0 = inlined_call_operand.vmem [shape: bf16[2,18,18,16], index: 0, kind: input, shape index: {}]
  %s1 = inlined_call_operand.vmem [shape: bf16[9,16,128], index: 1, kind: input, shape index: {}]
  %s2 = inlined_call_operand.vmem [shape: f32[1,128], index: 2, kind: input, shape index: {}]
  %s3 = inlined_call_operand.vmem [shape: f32[1,128], index: 3, kind: input, shape index: {}]
  %s4 = inlined_call_operand.vmem [shape: f32[1,128], index: 4, kind: input, shape index: {}]
  %s5 = inlined_call_operand.vmem [shape: bf16[512,128], index: 5, kind: output, shape index: {}]
  %s6 = sld [smem:[#allocation0]]
  $region53: #{wide_basic_forward.5} parent=0
    _
  %s8 = ssub.s32 1, %s6
  %s9 = scalar_select 0, %s8, %s6
  loop: start=0, step=1, limit=4
  $region2: #{wide_basic_forward.5} parent=0 // loop_pre_header
    _
  $region3: #{wide_basic_forward.5} parent=0 // loop_header
    %s11 = sphi 0, %s15
    %p12 = scmp.ge.s32.totalorder %s11, 4
    %s21 = sphi 0, %s23
    %s24 = sphi 0, %s21
    %s25 = sphi 0, %s24
    %s41 = sphi 0, %s25
    %s45 = sphi 0, %s45
    %s47 = sphi 0, %s45
    %s48 = sphi 0, %s47
    %s62 = sphi 0, %s48
    %s66 = sphi 0, %s66
    %s68 = sphi 0, %s66
    %s69 = sphi 0, %s68
    %s83 = sphi 0, %s69
    %s87 = sphi 0, %s87
    %s89 = sphi 0, %s87
    %s90 = sphi 0, %s89
    %s104 = sphi 0, %s90
    %s108 = sphi 0, %s108
    %s110 = sphi 0, %s108
    %s111 = sphi 0, %s110
    %s125 = sphi 0, %s111
    %s131 = sphi 0, %s133
    %s134 = sphi 0, %s131
    %s135 = sphi 0, %s134
    %s151 = sphi 0, %s135
  $region4: #{wide_basic_forward.5} parent=0 // loop_header_branch
    %14 = sbr.rel (%p12) target = $region8
  $region5: #{wide_basic_forward.5} parent=0 // loop_body
    %s16 = ssub.s32 %s11, 1
    %s17 = ssub.s32 %s11, 2
    %s18 = sadd.s32 %s11, 1
    %s19 = ssub.s32 %s11, %s18
    %p20 = scmp.eq.s32.totalorder %s19, 0
    %s22 = sadd.s32 %s21, 1
    %s23 = scalar_select %p20, %s21, %s22
    %p26 = pneg %p20
    %p27 = scmp.eq.s32.totalorder %s11, 1
    %p28 = por %p26, %p27
    %p29 = scmp.ne.s32.totalorder %s21, %s24
    %p30 = scmp.eq.s32.totalorder %s11, 0
    %p31 = por %p29, %p30
    %p32 = scmp.ne.s32.totalorder %s21, %s24
    %p33 = scmp.eq.s32.totalorder %s16, 1
    %p34 = por %p32, %p33
    %p35 = scmp.ne.s32.totalorder %s24, %s25
    %p36 = scmp.eq.s32.totalorder %s16, 0
    %p37 = por %p35, %p36
    %p38 = scmp.ne.s32.totalorder %s24, %s25
    %p39 = scmp.eq.s32.totalorder %s17, 1
    %p40 = por %p38, %p39
    %p42 = scmp.ne.s32.totalorder %s25, %s41
    %p43 = scmp.eq.s32.totalorder %s17, 0
    %p44 = por %p42, %p43
    %s46 = sadd.s32 %s45, 1
    %p49 = scmp.eq.s32.totalorder %s11, 1
    %p50 = scmp.ne.s32.totalorder %s45, %s47
    %p51 = scmp.eq.s32.totalorder %s11, 0
    %p52 = por %p50, %p51
    %p53 = scmp.ne.s32.totalorder %s45, %s47
    %p54 = scmp.eq.s32.totalorder %s16, 1
    %p55 = por %p53, %p54
    %p56 = scmp.ne.s32.totalorder %s47, %s48
    %p57 = scmp.eq.s32.totalorder %s16, 0
    %p58 = por %p56, %p57
    %p59 = scmp.ne.s32.totalorder %s47, %s48
    %p60 = scmp.eq.s32.totalorder %s17, 1
    %p61 = por %p59, %p60
    %p63 = scmp.ne.s32.totalorder %s48, %s62
    %p64 = scmp.eq.s32.totalorder %s17, 0
    %p65 = por %p63, %p64
    %s67 = sadd.s32 %s66, 1
    %p70 = scmp.eq.s32.totalorder %s11, 1
    %p71 = scmp.ne.s32.totalorder %s66, %s68
    %p72 = scmp.eq.s32.totalorder %s11, 0
    %p73 = por %p71, %p72
    %p74 = scmp.ne.s32.totalorder %s66, %s68
    %p75 = scmp.eq.s32.totalorder %s16, 1
    %p76 = por %p74, %p75
    %p77 = scmp.ne.s32.totalorder %s68, %s69
    %p78 = scmp.eq.s32.totalorder %s16, 0
    %p79 = por %p77, %p78
    %p80 = scmp.ne.s32.totalorder %s68, %s69
    %p81 = scmp.eq.s32.totalorder %s17, 1
    %p82 = por %p80, %p81
    %p84 = scmp.ne.s32.totalorder %s69, %s83
    %p85 = scmp.eq.s32.totalorder %s17, 0
    %p86 = por %p84, %p85
    %s88 = sadd.s32 %s87, 1
    %p91 = scmp.eq.s32.totalorder %s11, 1
    %p92 = scmp.ne.s32.totalorder %s87, %s89
    %p93 = scmp.eq.s32.totalorder %s11, 0
    %p94 = por %p92, %p93
    %p95 = scmp.ne.s32.totalorder %s87, %s89
    %p96 = scmp.eq.s32.totalorder %s16, 1
    %p97 = por %p95, %p96
    %p98 = scmp.ne.s32.totalorder %s89, %s90
    %p99 = scmp.eq.s32.totalorder %s16, 0
    %p100 = por %p98, %p99
    %p101 = scmp.ne.s32.totalorder %s89, %s90
    %p102 = scmp.eq.s32.totalorder %s17, 1
    %p103 = por %p101, %p102
    %p105 = scmp.ne.s32.totalorder %s90, %s104
    %p106 = scmp.eq.s32.totalorder %s17, 0
    %p107 = por %p105, %p106
    %s109 = sadd.s32 %s108, 1
    %p112 = scmp.eq.s32.totalorder %s11, 1
    %p113 = scmp.ne.s32.totalorder %s108, %s110
    %p114 = scmp.eq.s32.totalorder %s11, 0
    %p115 = por %p113, %p114
    %p116 = scmp.ne.s32.totalorder %s108, %s110
    %p117 = scmp.eq.s32.totalorder %s16, 1
    %p118 = por %p116, %p117
    %p119 = scmp.ne.s32.totalorder %s110, %s111
    %p120 = scmp.eq.s32.totalorder %s16, 0
    %p121 = por %p119, %p120
    %p122 = scmp.ne.s32.totalorder %s110, %s111
    %p123 = scmp.eq.s32.totalorder %s17, 1
    %p124 = por %p122, %p123
    %p126 = scmp.ne.s32.totalorder %s111, %s125
    %p127 = scmp.eq.s32.totalorder %s17, 0
    %p128 = por %p126, %p127
    %s129 = ssub.s32 %s11, %s18
    %p130 = scmp.eq.s32.totalorder %s129, 0
    %s132 = sadd.s32 %s131, 1
    %s133 = scalar_select %p130, %s131, %s132
    %p136 = pneg %p130
    %p137 = scmp.eq.s32.totalorder %s11, 1
    %p138 = por %p136, %p137
    %p139 = scmp.ne.s32.totalorder %s131, %s134
    %p140 = scmp.eq.s32.totalorder %s11, 0
    %p141 = por %p139, %p140
    %p142 = scmp.ne.s32.totalorder %s131, %s134
    %p143 = scmp.eq.s32.totalorder %s16, 1
    %p144 = por %p142, %p143
    %p145 = scmp.ne.s32.totalorder %s134, %s135
    %p146 = scmp.eq.s32.totalorder %s16, 0
    %p147 = por %p145, %p146
    %p148 = scmp.ne.s32.totalorder %s134, %s135
    %p149 = scmp.eq.s32.totalorder %s17, 1
    %p150 = por %p148, %p149
    %p152 = scmp.ne.s32.totalorder %s135, %s151
    %p153 = scmp.eq.s32.totalorder %s17, 0
    %p154 = por %p152, %p153
    %p155 = scmp.le.s32.totalorder 1, %s11
    %p156 = scmp.lt.s32.totalorder %s11, 3
    %p157 = pnand %p155, %p156
    %p158 = pneg %p157
    // Predicated region
    $region9: #{wide_basic_forward.5} parent=5 // pred_check
      _
    $region10: #{wide_basic_forward.5} parent=5 // pred_check_branch
      %160 = sbr.rel (%p157) target = $region12
    $region11: #{wide_basic_forward.5} parent=5 // pred_region
      %s161 = ssub.s32 %s11, 1
      // Predicated region
      $region13: #{wide_basic_forward.5} parent=11 // pred_check
        %p162 = pneg %p58
      $region14: #{wide_basic_forward.5} parent=11 // pred_check_branch
        %164 = sbr.rel (%p162) target = $region16
      $region15: #{wide_basic_forward.5} parent=11 // pred_region
        _
      $region16: #{wide_basic_forward.5} parent=11 // pred_fallthru
        _
      // Predicated region
      $region17: #{wide_basic_forward.5} parent=11 // pred_check
        %p165 = pneg %p79
      $region18: #{wide_basic_forward.5} parent=11 // pred_check_branch
        %167 = sbr.rel (%p165) target = $region20
      $region19: #{wide_basic_forward.5} parent=11 // pred_region
        _
      $region20: #{wide_basic_forward.5} parent=11 // pred_fallthru
        _
      // Predicated region
      $region21: #{wide_basic_forward.5} parent=11 // pred_check
        %p168 = pneg %p100
      $region22: #{wide_basic_forward.5} parent=11 // pred_check_branch
        %170 = sbr.rel (%p168) target = $region24
      $region23: #{wide_basic_forward.5} parent=11 // pred_region
        _
      $region24: #{wide_basic_forward.5} parent=11 // pred_fallthru
        _
      // Predicated region
      $region25: #{wide_basic_forward.5} parent=11 // pred_check
        %p171 = pneg %p121
      $region26: #{wide_basic_forward.5} parent=11 // pred_check_branch
        %173 = sbr.rel (%p171) target = $region28
      $region27: #{wide_basic_forward.5} parent=11 // pred_region
        _
      $region28: #{wide_basic_forward.5} parent=11 // pred_fallthru
        _
    $region12: #{wide_basic_forward.5} parent=5 // pred_fallthru
      _
    %p174 = scmp.lt.s32.totalorder %s11, 2
    // Predicated region
    $region29: #{wide_basic_forward.5} parent=5 // pred_check
      %p175 = pneg %p174
    $region30: #{wide_basic_forward.5} parent=5 // pred_check_branch
      %177 = sbr.rel (%p175) target = $region32
    $region31: #{wide_basic_forward.5} parent=5 // pred_region
      // Predicated region
      $region33: #{wide_basic_forward.5} parent=31 // pred_check
        %p178 = pneg %p31
      $region34: #{wide_basic_forward.5} parent=31 // pred_check_branch
        %180 = sbr.rel (%p178) target = $region36
      $region35: #{wide_basic_forward.5} parent=31 // pred_region
        %p181 = scmp.lt.s32.totalorder %s11, 1
        %s182 = scalar_select %p181, %s11, 1
        %s183 = smul.addr %s182, 54
        %s184 = smul.addr %s183, 4
        %s185 = scalar_lea.vmem %s0, %s184
      $region36: #{wide_basic_forward.5} parent=31 // pred_fallthru
        _
    $region32: #{wide_basic_forward.5} parent=5 // pred_fallthru
      _
    %p186 = scmp.le.s32.totalorder 1, %s11
    %p187 = scmp.lt.s32.totalorder %s11, 3
    %p188 = pnand %p186, %p187
    %p189 = pneg %p188
    // Predicated region
    $region37: #{wide_basic_forward.5} parent=5 // pred_check
      _
    $region38: #{wide_basic_forward.5} parent=5 // pred_check_branch
      %191 = sbr.rel (%p188) target = $region40
    $region39: #{wide_basic_forward.5} parent=5 // pred_region
      %s192 = ssub.s32 %s11, 1
      %p193 = scmp.lt.s32.totalorder %s16, 1
      %s194 = scalar_select %p193, %s16, 1
      %s195 = smul.addr %s194, 54
      %s196 = smul.addr %s195, 4
      %s197 = scalar_lea.vmem %s0, %s196
      %p198 = pneg %p37
      %p199 = pneg %p34
      %p200 = pneg %p58
      %p201 = pneg %p55
      %p202 = pneg %p79
      %p203 = pneg %p76
      %p204 = pneg %p100
      %p205 = pneg %p97
      %p206 = pneg %p121
      %p207 = pneg %p118
      %p208 = pneg %p147
      %p209 = pneg %p144
      %s210 = smul.u32 32, %s16
      %p211 = scmp.lt.s32.totalorder %s210, 63
      %s212 = scalar_select %p211, %s210, 63
      %s213 = smul.addr %s212, 4
      %s214 = scalar_lea.vmem %s5, %s213
      %p215 = scmp.lt.s32.totalorder %s16, 1
      %s216 = scalar_select %p215, %s16, 1
      %s217 = smul.addr %s216, 54
      %s218 = smul.addr %s217, 4
      %s219 = scalar_lea.vmem %s0, %s218
      %s220 = smul.u32 32, %s16
      %p221 = scmp.lt.s32.totalorder %s220, 63
      %s222 = scalar_select %p221, %s220, 63
      %s223 = smul.addr %s222, 4
      %s224 = scalar_lea.vmem %s5, %s223
      %s225 = smul.u32 32, %s16
      %v227 = vld [vmem:[%s219] sm:$0xf]
      %v228 = vld [vmem:[%s219 + $0x4] sm:$0xf]
      %v229 = vld [vmem:[%s219 + $0xc] sm:$0xf]
      %v230 = vld [vmem:[%s219 + $0x10] sm:$0xf]
      %v231 = vld [vmem:[%s219 + $0x18] sm:$0xf]
      %v232 = vld [vmem:[%s219 + $0x1c] sm:$0xf]
      %v233 = vld [vmem:[%s219 + $0x24] sm:$0xf]
      %v234 = vld [vmem:[%s219 + $0x28] sm:$0xf]
      %v235 = vld [vmem:[%s219 + $0x30] sm:$0xf]
      %v236 = vld [vmem:[%s219 + $0x34] sm:$0xf]
      %v237 = vld [vmem:[%s219 + $0x3c] sm:$0xf]
      %v238 = vld [vmem:[%s219 + $0x40] sm:$0xf]
      %v239 = vld [vmem:[%s219 + $0x48] sm:$0xf]
      %v240 = vld [vmem:[%s219 + $0x4c] sm:$0xf]
      %v241 = vld [vmem:[%s219 + $0x54] sm:$0xf]
      %v242 = vld [vmem:[%s219 + $0x58] sm:$0xf]
      %v243 = vld [vmem:[%s219 + $0x60] sm:$0xf]
      %v244 = vld [vmem:[%s219 + $0x64] sm:$0xf]
      %v245 = vld [vmem:[%s219 + $0x6c] sm:$0xf]
      %v246 = vld [vmem:[%s219 + $0x70] sm:$0xf]
      %v247 = vld [vmem:[%s219 + $0x78] sm:$0xf]
      %v248 = vld [vmem:[%s219 + $0x7c] sm:$0xf]
      %v249 = vld [vmem:[%s219 + $0x84] sm:$0xf]
      %v250 = vld [vmem:[%s219 + $0x88] sm:$0xf]
      %v251 = vld [vmem:[%s219 + $0x90] sm:$0xf]
      %v252 = vld [vmem:[%s219 + $0x94] sm:$0xf]
      %v253 = vld [vmem:[%s219 + $0x9c] sm:$0xf]
      %v254 = vld [vmem:[%s219 + $0xa0] sm:$0xf]
      %v255 = vld [vmem:[%s219 + $0xa8] sm:$0xf]
      %v256 = vld [vmem:[%s219 + $0xac] sm:$0xf]
      %v257 = vld [vmem:[%s219 + $0xb4] sm:$0xf]
      %v258 = vld [vmem:[%s219 + $0xb8] sm:$0xf]
      %v259 = vld [vmem:[%s1] sm:$0xf]
      %v260 = vld [vmem:[%s1 + $0x4] sm:$0xf]
      %v261 = vld [vmem:[%s219 + $0x8] sm:$0x1]
      %v262 = vld [vmem:[%s219 + $0x14] sm:$0x1]
      %v263 = vld [vmem:[%s219 + $0x20] sm:$0x1]
      %v264 = vld [vmem:[%s219 + $0x2c] sm:$0x1]
      %v265 = vld [vmem:[%s219 + $0x38] sm:$0x1]
      %v266 = vld [vmem:[%s219 + $0x44] sm:$0x1]
      %v267 = vld [vmem:[%s219 + $0x50] sm:$0x1]
      %v268 = vld [vmem:[%s219 + $0x5c] sm:$0x1]
      %v269 = vld [vmem:[%s219 + $0x68] sm:$0x1]
      %v270 = vld [vmem:[%s219 + $0x74] sm:$0x1]
      %v271 = vld [vmem:[%s219 + $0x80] sm:$0x1]
      %v272 = vld [vmem:[%s219 + $0x8c] sm:$0x1]
      %v273 = vld [vmem:[%s219 + $0x98] sm:$0x1]
      %v274 = vld [vmem:[%s219 + $0xa4] sm:$0x1]
      %v275 = vld [vmem:[%s219 + $0xb0] sm:$0x1]
      %v276 = vld [vmem:[%s219 + $0xbc] sm:$0x1]
      %vm277 = vsmask.f32 3328
      %vm278 = vsmask.f32 7440
      %vm279 = vmor %vm277, %vm278
      %v281 = vshrl.u32 %v227, 16
      %v283 = vrot.slane %v281, 4
      %v284 = vshll.u32 %v227, 16
      %v286 = vrot.slane %v284, 5
      %v287 = vor.u32 %v283, %v286
      %v288 = vrot.slane %v287, 4
      %v290 = vshll.u32 %v228, 16
      %v292 = vrot.slane %v290, 5
      %v293 = vsel %vm279, %v288, %v292
      %v294 = vshrl.u32 %v228, 16
      %v296 = vrot.slane %v294, 4
      %v297 = vor.u32 %v296, %v292
      %v298 = vrot.slane %v297, 4
      %v300 = vshll.u32 %v261, 16
      %v302 = vrot.slane %v300, 5
      %v303 = vsel %vm279, %v298, %v302
      %v305 = vshrl.u32 %v229, 16
      %v307 = vrot.slane %v305, 4
      %v308 = vshll.u32 %v229, 16
      %v310 = vrot.slane %v308, 5
      %v311 = vor.u32 %v307, %v310
      %v312 = vrot.slane %v311, 4
      %v314 = vshll.u32 %v230, 16
      %v316 = vrot.slane %v314, 5
      %v317 = vsel %vm279, %v312, %v316
      %v318 = vshrl.u32 %v230, 16
      %v320 = vrot.slane %v318, 4
      %v321 = vor.u32 %v320, %v316
      %v322 = vrot.slane %v321, 4
      %v324 = vshll.u32 %v262, 16
      %v326 = vrot.slane %v324, 5
      %v327 = vsel %vm279, %v322, %v326
      %v329 = vshrl.u32 %v231, 16
      %v331 = vrot.slane %v329, 4
      %v332 = vshll.u32 %v231, 16
      %v334 = vrot.slane %v332, 5
      %v335 = vor.u32 %v331, %v334
      %v336 = vrot.slane %v335, 4
      %v338 = vshll.u32 %v232, 16
      %v340 = vrot.slane %v338, 5
      %v341 = vsel %vm279, %v336, %v340
      %v342 = vshrl.u32 %v232, 16
      %v344 = vrot.slane %v342, 4
      %v345 = vor.u32 %v344, %v340
      %v346 = vrot.slane %v345, 4
      %v348 = vshll.u32 %v263, 16
      %v350 = vrot.slane %v348, 5
      %v351 = vsel %vm279, %v346, %v350
      %v353 = vshrl.u32 %v233, 16
      %v355 = vrot.slane %v353, 4
      %v356 = vshll.u32 %v233, 16
      %v358 = vrot.slane %v356, 5
      %v359 = vor.u32 %v355, %v358
      %v360 = vrot.slane %v359, 4
      %v362 = vshll.u32 %v234, 16
      %v364 = vrot.slane %v362, 5
      %v365 = vsel %vm279, %v360, %v364
      %v366 = vshrl.u32 %v234, 16
      %v368 = vrot.slane %v366, 4
      %v369 = vor.u32 %v368, %v364
      %v370 = vrot.slane %v369, 4
      %v372 = vshll.u32 %v264, 16
      %v374 = vrot.slane %v372, 5
      %v375 = vsel %vm279, %v370, %v374
      %v377 = vshrl.u32 %v235, 16
      %v379 = vrot.slane %v377, 4
      %v380 = vshll.u32 %v235, 16
      %v382 = vrot.slane %v380, 5
      %v383 = vor.u32 %v379, %v382
      %v384 = vrot.slane %v383, 4
      %v386 = vshll.u32 %v236, 16
      %v388 = vrot.slane %v386, 5
      %v389 = vsel %vm279, %v384, %v388
      %v390 = vshrl.u32 %v236, 16
      %v392 = vrot.slane %v390, 4
      %v393 = vor.u32 %v392, %v388
      %v394 = vrot.slane %v393, 4
      %v396 = vshll.u32 %v265, 16
      %v398 = vrot.slane %v396, 5
      %v399 = vsel %vm279, %v394, %v398
      %v401 = vshrl.u32 %v237, 16
      %v403 = vrot.slane %v401, 4
      %v404 = vshll.u32 %v237, 16
      %v406 = vrot.slane %v404, 5
      %v407 = vor.u32 %v403, %v406
      %v408 = vrot.slane %v407, 4
      %v410 = vshll.u32 %v238, 16
      %v412 = vrot.slane %v410, 5
      %v413 = vsel %vm279, %v408, %v412
      %v414 = vshrl.u32 %v238, 16
      %v416 = vrot.slane %v414, 4
      %v417 = vor.u32 %v416, %v412
      %v418 = vrot.slane %v417, 4
      %v420 = vshll.u32 %v266, 16
      %v422 = vrot.slane %v420, 5
      %v423 = vsel %vm279, %v418, %v422
      %v425 = vshrl.u32 %v239, 16
      %v427 = vrot.slane %v425, 4
      %v428 = vshll.u32 %v239, 16
      %v430 = vrot.slane %v428, 5
      %v431 = vor.u32 %v427, %v430
      %v432 = vrot.slane %v431, 4
      %v434 = vshll.u32 %v240, 16
      %v436 = vrot.slane %v434, 5
      %v437 = vsel %vm279, %v432, %v436
      %v438 = vshrl.u32 %v240, 16
      %v440 = vrot.slane %v438, 4
      %v441 = vor.u32 %v440, %v436
      %v442 = vrot.slane %v441, 4
      %v444 = vshll.u32 %v267, 16
      %v446 = vrot.slane %v444, 5
      %v447 = vsel %vm279, %v442, %v446
      %v449 = vshrl.u32 %v241, 16
      %v451 = vrot.slane %v449, 4
      %v452 = vshll.u32 %v241, 16
      %v454 = vrot.slane %v452, 5
      %v455 = vor.u32 %v451, %v454
      %v456 = vrot.slane %v455, 4
      %v458 = vshll.u32 %v242, 16
      %v460 = vrot.slane %v458, 5
      %v461 = vsel %vm279, %v456, %v460
      %v462 = vshrl.u32 %v242, 16
      %v464 = vrot.slane %v462, 4
      %v465 = vor.u32 %v464, %v460
      %v466 = vrot.slane %v465, 4
      %v468 = vshll.u32 %v268, 16
      %v470 = vrot.slane %v468, 5
      %v471 = vsel %vm279, %v466, %v470
      %v473 = vshrl.u32 %v243, 16
      %v475 = vrot.slane %v473, 4
      %v476 = vshll.u32 %v243, 16
      %v478 = vrot.slane %v476, 5
      %v479 = vor.u32 %v475, %v478
      %v480 = vrot.slane %v479, 4
      %v482 = vshll.u32 %v244, 16
      %v484 = vrot.slane %v482, 5
      %v485 = vsel %vm279, %v480, %v484
      %v486 = vshrl.u32 %v244, 16
      %v488 = vrot.slane %v486, 4
      %v489 = vor.u32 %v488, %v484
      %v490 = vrot.slane %v489, 4
      %v492 = vshll.u32 %v269, 16
      %v494 = vrot.slane %v492, 5
      %v495 = vsel %vm279, %v490, %v494
      %v497 = vshrl.u32 %v245, 16
      %v499 = vrot.slane %v497, 4
      %v500 = vshll.u32 %v245, 16
      %v502 = vrot.slane %v500, 5
      %v503 = vor.u32 %v499, %v502
      %v504 = vrot.slane %v503, 4
      %v506 = vshll.u32 %v246, 16
      %v508 = vrot.slane %v506, 5
      %v509 = vsel %vm279, %v504, %v508
      %v510 = vshrl.u32 %v246, 16
      %v512 = vrot.slane %v510, 4
      %v513 = vor.u32 %v512, %v508
      %v514 = vrot.slane %v513, 4
      %v516 = vshll.u32 %v270, 16
      %v518 = vrot.slane %v516, 5
      %v519 = vsel %vm279, %v514, %v518
      %v521 = vshrl.u32 %v247, 16
      %v523 = vrot.slane %v521, 4
      %v524 = vshll.u32 %v247, 16
      %v526 = vrot.slane %v524, 5
      %v527 = vor.u32 %v523, %v526
      %v528 = vrot.slane %v527, 4
      %v530 = vshll.u32 %v248, 16
      %v532 = vrot.slane %v530, 5
      %v533 = vsel %vm279, %v528, %v532
      %v534 = vshrl.u32 %v248, 16
      %v536 = vrot.slane %v534, 4
      %v537 = vor.u32 %v536, %v532
      %v538 = vrot.slane %v537, 4
      %v540 = vshll.u32 %v271, 16
      %v542 = vrot.slane %v540, 5
      %v543 = vsel %vm279, %v538, %v542
      %v545 = vshrl.u32 %v249, 16
      %v547 = vrot.slane %v545, 4
      %v548 = vshll.u32 %v249, 16
      %v550 = vrot.slane %v548, 5
      %v551 = vor.u32 %v547, %v550
      %v552 = vrot.slane %v551, 4
      %v554 = vshll.u32 %v250, 16
      %v556 = vrot.slane %v554, 5
      %v557 = vsel %vm279, %v552, %v556
      %v558 = vshrl.u32 %v250, 16
      %v560 = vrot.slane %v558, 4
      %v561 = vor.u32 %v560, %v556
      %v562 = vrot.slane %v561, 4
      %v564 = vshll.u32 %v272, 16
      %v566 = vrot.slane %v564, 5
      %v567 = vsel %vm279, %v562, %v566
      %v569 = vshrl.u32 %v251, 16
      %v571 = vrot.slane %v569, 4
      %v572 = vshll.u32 %v251, 16
      %v574 = vrot.slane %v572, 5
      %v575 = vor.u32 %v571, %v574
      %v576 = vrot.slane %v575, 4
      %v578 = vshll.u32 %v252, 16
      %v580 = vrot.slane %v578, 5
      %v581 = vsel %vm279, %v576, %v580
      %v582 = vshrl.u32 %v252, 16
      %v584 = vrot.slane %v582, 4
      %v585 = vor.u32 %v584, %v580
      %v586 = vrot.slane %v585, 4
      %v588 = vshll.u32 %v273, 16
      %v590 = vrot.slane %v588, 5
      %v591 = vsel %vm279, %v586, %v590
      %v593 = vshrl.u32 %v253, 16
      %v595 = vrot.slane %v593, 4
      %v596 = vshll.u32 %v253, 16
      %v598 = vrot.slane %v596, 5
      %v599 = vor.u32 %v595, %v598
      %v600 = vrot.slane %v599, 4
      %v602 = vshll.u32 %v254, 16
      %v604 = vrot.slane %v602, 5
      %v605 = vsel %vm279, %v600, %v604
      %v606 = vshrl.u32 %v254, 16
      %v608 = vrot.slane %v606, 4
      %v609 = vor.u32 %v608, %v604
      %v610 = vrot.slane %v609, 4
      %v612 = vshll.u32 %v274, 16
      %v614 = vrot.slane %v612, 5
      %v615 = vsel %vm279, %v610, %v614
      %v617 = vshrl.u32 %v255, 16
      %v619 = vrot.slane %v617, 4
      %v620 = vshll.u32 %v255, 16
      %v622 = vrot.slane %v620, 5
      %v623 = vor.u32 %v619, %v622
      %v624 = vrot.slane %v623, 4
      %v626 = vshll.u32 %v256, 16
      %v628 = vrot.slane %v626, 5
      %v629 = vsel %vm279, %v624, %v628
      %v630 = vshrl.u32 %v256, 16
      %v632 = vrot.slane %v630, 4
      %v633 = vor.u32 %v632, %v628
      %v634 = vrot.slane %v633, 4
      %v636 = vshll.u32 %v275, 16
      %v638 = vrot.slane %v636, 5
      %v639 = vsel %vm279, %v634, %v638
      %v641 = vshrl.u32 %v257, 16
      %v643 = vrot.slane %v641, 4
      %v644 = vshll.u32 %v257, 16
      %v646 = vrot.slane %v644, 5
      %v647 = vor.u32 %v643, %v646
      %v648 = vrot.slane %v647, 4
      %v650 = vshll.u32 %v258, 16
      %v652 = vrot.slane %v650, 5
      %v653 = vsel %vm279, %v648, %v652
      %v654 = vshrl.u32 %v258, 16
      %v656 = vrot.slane %v654, 4
      %v657 = vor.u32 %v656, %v652
      %v658 = vrot.slane %v657, 4
      %v660 = vshll.u32 %v276, 16
      %v662 = vrot.slane %v660, 5
      %v663 = vsel %vm279, %v658, %v662
      %s664 = scalar_lea.vmem %s1, 8
      %v665 = vld [vmem:[%s664] sm:$0xf]
      %v666 = vld [vmem:[%s664 + $0x4] sm:$0xf]
      %v667 = vunpack.c.l.b16 %v293
      %v668 = vunpack.c.l.b16 %v303
      %v669 = vunpack.c.l.b16 %v317
      %v670 = vunpack.c.l.b16 %v327
      %v671 = vunpack.c.l.b16 %v341
      %v672 = vunpack.c.l.b16 %v351
      %v673 = vunpack.c.l.b16 %v365
      %v674 = vunpack.c.l.b16 %v375
      %v675 = vunpack.c.l.b16 %v389
      %v676 = vunpack.c.l.b16 %v399
      %v677 = vunpack.c.l.b16 %v413
      %v678 = vunpack.c.l.b16 %v423
      %v679 = vunpack.c.l.b16 %v437
      %v680 = vunpack.c.l.b16 %v447
      %v681 = vunpack.c.l.b16 %v461
      %v682 = vunpack.c.l.b16 %v471
      %v683 = vunpack.c.l.b16 %v485
      %v684 = vunpack.c.l.b16 %v495
      %v685 = vunpack.c.l.b16 %v509
      %v686 = vunpack.c.l.b16 %v519
      %v687 = vunpack.c.l.b16 %v533
      %v688 = vunpack.c.l.b16 %v543
      %v689 = vunpack.c.l.b16 %v557
      %v690 = vunpack.c.l.b16 %v567
      %v691 = vunpack.c.l.b16 %v581
      %v692 = vunpack.c.l.b16 %v591
      %v693 = vunpack.c.l.b16 %v605
      %v694 = vunpack.c.l.b16 %v615
      %v695 = vunpack.c.l.b16 %v629
      %v696 = vunpack.c.l.b16 %v639
      %v697 = vunpack.c.l.b16 %v653
      %v698 = vunpack.c.l.b16 %v663
      %v699 = vpack.c.b16 %v668, %v667
      %v700 = vpack.c.b16 %v670, %v669
      %v701 = vpack.c.b16 %v672, %v671
      %v702 = vpack.c.b16 %v674, %v673
      %v703 = vpack.c.b16 %v676, %v675
      %v704 = vpack.c.b16 %v678, %v677
      %v705 = vpack.c.b16 %v680, %v679
      %v706 = vpack.c.b16 %v682, %v681
      %v707 = vpack.c.b16 %v684, %v683
      %v708 = vpack.c.b16 %v686, %v685
      %v709 = vpack.c.b16 %v688, %v687
      %v710 = vpack.c.b16 %v690, %v689
      %v711 = vpack.c.b16 %v692, %v691
      %v712 = vpack.c.b16 %v694, %v693
      %v713 = vpack.c.b16 %v696, %v695
      %v714 = vpack.c.b16 %v698, %v697
      %v717 = vunpack.c.l.b16 %v665
      %v718 = vunpack.c.l.b16 %v666
      %v719 = vpack.c.b16 %v718, %v717
      %vm721 = vcmask 130048
      %v723 = vsel %vm721, %v699, 0
      %v726 = vsel %vm721, %v700, 0
      %v729 = vsel %vm721, %v701, 0
      %v732 = vsel %vm721, %v702, 0
      %v735 = vsel %vm721, %v703, 0
      %v738 = vsel %vm721, %v704, 0
      %v741 = vsel %vm721, %v705, 0
      %v744 = vsel %vm721, %v706, 0
      %v747 = vsel %vm721, %v707, 0
      %v750 = vsel %vm721, %v708, 0
      %v753 = vsel %vm721, %v709, 0
      %v756 = vsel %vm721, %v710, 0
      %v759 = vsel %vm721, %v711, 0
      %v762 = vsel %vm721, %v712, 0
      %v765 = vsel %vm721, %v713, 0
      %v768 = vsel %vm721, %v714, 0
      %770 = vmatprep.subr.bf16.mxu0 0
      %771 = vmatpush1.bf16.msra.mxu0 0
      %772 = vmatprep.subr.bf16.mxu0 0
      %773 = vmatpush1.bf16.msra.mxu0 0
      %774 = vmatprep.subr.bf16.mxu0 0
      %775 = vmatpush1.bf16.msra.mxu0 0
      %776 = vmatprep.subr.bf16.mxu0 0
      %777 = vmatpush1.bf16.msra.mxu0 0
      %778 = vmatprep.subr.bf16.mxu0 0
      %779 = vmatpush1.bf16.msra.mxu0 0
      %780 = vmatprep.subr.bf16.mxu0 0
      %781 = vmatpush1.bf16.msra.mxu0 0
      %782 = vmatprep.subr.bf16.mxu0 0
      %783 = vmatpush1.bf16.msra.mxu0 0
      %784 = vmatprep.subr.bf16.mxu0 0
      %785 = vmatpush1.bf16.msra.mxu0 %v719
      %786 = vmatprep.subr.bf16.mxu0 0
      %787 = vmatpush2.bf16.msra.mxu0 0
      %788 = vmatprep.subr.bf16.mxu0 0
      %789 = vmatpush2.bf16.msra.mxu0 0
      %790 = vmatprep.subr.bf16.mxu0 0
      %791 = vmatpush2.bf16.msra.mxu0 0
      %792 = vmatprep.subr.bf16.mxu0 0
      %793 = vmatpush2.bf16.msra.mxu0 0
      %794 = vmatprep.subr.bf16.mxu0 0
      %795 = vmatpush2.bf16.msra.mxu0 0
      %796 = vmatprep.subr.bf16.mxu0 0
      %797 = vmatpush2.bf16.msra.mxu0 0
      %798 = vmatprep.subr.bf16.mxu0 0
      %799 = vmatpush2.bf16.msra.mxu0 0
      %800 = vmatprep.subr.bf16.mxu0 0
      %801 = vmatpush2.bf16.msra.mxu0 0
      %802 = vmatprep.mubr.bf16.mxu0 0
      %803 = vmatmul.mubr.bf16.gmra.mxu0 %v723
      %v804 = vpop.f32.mrf.mxu0
      %v805 = vadd.f32 0.0, %v804
      %v806 = vpop.f32.mrf.mxu0
      %v807 = vpop.f32.mrf.mxu0
      %v808 = vadd.f32 0.0, %v807
      %v809 = vpop.f32.mrf.mxu0
      %810 = vmatprep.mubr.bf16.mxu0 0
      %811 = vmatmul.mubr.bf16.gmra.mxu0 %v726
      %v812 = vpop.f32.mrf.mxu0
      %v813 = vadd.f32 0.0, %v812
      %v814 = vpop.f32.mrf.mxu0
      %v815 = vpop.f32.mrf.mxu0
      %v816 = vadd.f32 0.0, %v815
      %v817 = vpop.f32.mrf.mxu0
      %818 = vmatprep.mubr.bf16.mxu0 0
      %819 = vmatmul.mubr.bf16.gmra.mxu0 %v729
      %v820 = vpop.f32.mrf.mxu0
      %v821 = vadd.f32 0.0, %v820
      %v822 = vpop.f32.mrf.mxu0
      %v823 = vpop.f32.mrf.mxu0
      %v824 = vadd.f32 0.0, %v823
      %v825 = vpop.f32.mrf.mxu0
      %826 = vmatprep.mubr.bf16.mxu0 0
      %827 = vmatmul.mubr.bf16.gmra.mxu0 %v732
      %v828 = vpop.f32.mrf.mxu0
      %v829 = vadd.f32 0.0, %v828
      %v830 = vpop.f32.mrf.mxu0
      %v831 = vpop.f32.mrf.mxu0
      %v832 = vadd.f32 0.0, %v831
      %v833 = vpop.f32.mrf.mxu0
      %834 = vmatprep.mubr.bf16.mxu0 0
      %835 = vmatmul.mubr.bf16.gmra.mxu0 %v735
      %v836 = vpop.f32.mrf.mxu0
      %v837 = vadd.f32 0.0, %v836
      %v838 = vpop.f32.mrf.mxu0
      %v839 = vpop.f32.mrf.mxu0
      %v840 = vadd.f32 0.0, %v839
      %v841 = vpop.f32.mrf.mxu0
      %842 = vmatprep.mubr.bf16.mxu0 0
      %843 = vmatmul.mubr.bf16.gmra.mxu0 %v738
      %v844 = vpop.f32.mrf.mxu0
      %v845 = vadd.f32 0.0, %v844
      %v846 = vpop.f32.mrf.mxu0
      %v847 = vpop.f32.mrf.mxu0
      %v848 = vadd.f32 0.0, %v847
      %v849 = vpop.f32.mrf.mxu0
      %850 = vmatprep.mubr.bf16.mxu0 0
      %851 = vmatmul.mubr.bf16.gmra.mxu0 %v741
      %v852 = vpop.f32.mrf.mxu0
      %v853 = vadd.f32 0.0, %v852
      %v854 = vpop.f32.mrf.mxu0
      %v855 = vpop.f32.mrf.mxu0
      %v856 = vadd.f32 0.0, %v855
      %v857 = vpop.f32.mrf.mxu0
      %858 = vmatprep.mubr.bf16.mxu0 0
      %859 = vmatmul.mubr.bf16.gmra.mxu0 %v744
      %v860 = vpop.f32.mrf.mxu0
      %v861 = vadd.f32 0.0, %v860
      %v862 = vpop.f32.mrf.mxu0
      %v863 = vpop.f32.mrf.mxu0
      %v864 = vadd.f32 0.0, %v863
      %v865 = vpop.f32.mrf.mxu0
      %866 = vmatprep.mubr.bf16.mxu0 0
      %867 = vmatmul.mubr.bf16.gmra.mxu0 %v747
      %v868 = vpop.f32.mrf.mxu0
      %v869 = vadd.f32 0.0, %v868
      %v870 = vpop.f32.mrf.mxu0
      %v871 = vpop.f32.mrf.mxu0
      %v872 = vadd.f32 0.0, %v871
      %v873 = vpop.f32.mrf.mxu0
      %874 = vmatprep.mubr.bf16.mxu0 0
      %875 = vmatmul.mubr.bf16.gmra.mxu0 %v750
      %v876 = vpop.f32.mrf.mxu0
      %v877 = vadd.f32 0.0, %v876
      %v878 = vpop.f32.mrf.mxu0
      %v879 = vpop.f32.mrf.mxu0
      %v880 = vadd.f32 0.0, %v879
      %v881 = vpop.f32.mrf.mxu0
      %882 = vmatprep.mubr.bf16.mxu0 0
      %883 = vmatmul.mubr.bf16.gmra.mxu0 %v753
      %v884 = vpop.f32.mrf.mxu0
      %v885 = vadd.f32 0.0, %v884
      %v886 = vpop.f32.mrf.mxu0
      %v887 = vpop.f32.mrf.mxu0
      %v888 = vadd.f32 0.0, %v887
      %v889 = vpop.f32.mrf.mxu0
      %890 = vmatprep.mubr.bf16.mxu0 0
      %891 = vmatmul.mubr.bf16.gmra.mxu0 %v756
      %v892 = vpop.f32.mrf.mxu0
      %v893 = vadd.f32 0.0, %v892
      %v894 = vpop.f32.mrf.mxu0
      %v895 = vpop.f32.mrf.mxu0
      %v896 = vadd.f32 0.0, %v895
      %v897 = vpop.f32.mrf.mxu0
      %898 = vmatprep.mubr.bf16.mxu0 0
      %899 = vmatmul.mubr.bf16.gmra.mxu0 %v759
      %v900 = vpop.f32.mrf.mxu0
      %v901 = vadd.f32 0.0, %v900
      %v902 = vpop.f32.mrf.mxu0
      %v903 = vpop.f32.mrf.mxu0
      %v904 = vadd.f32 0.0, %v903
      %v905 = vpop.f32.mrf.mxu0
      %906 = vmatprep.mubr.bf16.mxu0 0
      %907 = vmatmul.mubr.bf16.gmra.mxu0 %v762
      %v908 = vpop.f32.mrf.mxu0
      %v909 = vadd.f32 0.0, %v908
      %v910 = vpop.f32.mrf.mxu0
      %v911 = vpop.f32.mrf.mxu0
      %v912 = vadd.f32 0.0, %v911
      %v913 = vpop.f32.mrf.mxu0
      %914 = vmatprep.mubr.bf16.mxu0 0
      %915 = vmatmul.mubr.bf16.gmra.mxu0 %v765
      %v916 = vpop.f32.mrf.mxu0
      %v917 = vadd.f32 0.0, %v916
      %v918 = vpop.f32.mrf.mxu0
      %v919 = vpop.f32.mrf.mxu0
      %v920 = vadd.f32 0.0, %v919
      %v921 = vpop.f32.mrf.mxu0
      %922 = vmatprep.mubr.bf16.mxu0 0
      %923 = vmatmul.mubr.bf16.gmra.mxu0 %v768
      %v924 = vpop.f32.mrf.mxu0
      %v925 = vadd.f32 0.0, %v924
      %v926 = vpop.f32.mrf.mxu0
      %v927 = vpop.f32.mrf.mxu0
      %v928 = vadd.f32 0.0, %v927
      %v929 = vpop.f32.mrf.mxu0
      %930 = vdwg.mxu0
      %v963 = vunpack.c.l.b16 %v227
      %v964 = vunpack.c.l.b16 %v228
      %v965 = vunpack.c.l.b16 %v229
      %v966 = vunpack.c.l.b16 %v230
      %v967 = vunpack.c.l.b16 %v231
      %v968 = vunpack.c.l.b16 %v232
      %v969 = vunpack.c.l.b16 %v233
      %v970 = vunpack.c.l.b16 %v234
      %v971 = vunpack.c.l.b16 %v235
      %v972 = vunpack.c.l.b16 %v236
      %v973 = vunpack.c.l.b16 %v237
      %v974 = vunpack.c.l.b16 %v238
      %v975 = vunpack.c.l.b16 %v239
      %v976 = vunpack.c.l.b16 %v240
      %v977 = vunpack.c.l.b16 %v241
      %v978 = vunpack.c.l.b16 %v242
      %v979 = vunpack.c.l.b16 %v243
      %v980 = vunpack.c.l.b16 %v244
      %v981 = vunpack.c.l.b16 %v245
      %v982 = vunpack.c.l.b16 %v246
      %v983 = vunpack.c.l.b16 %v247
      %v984 = vunpack.c.l.b16 %v248
      %v985 = vunpack.c.l.b16 %v249
      %v986 = vunpack.c.l.b16 %v250
      %v987 = vunpack.c.l.b16 %v251
      %v988 = vunpack.c.l.b16 %v252
      %v989 = vunpack.c.l.b16 %v253
      %v990 = vunpack.c.l.b16 %v254
      %v991 = vunpack.c.l.b16 %v255
      %v992 = vunpack.c.l.b16 %v256
      %v993 = vunpack.c.l.b16 %v257
      %v994 = vunpack.c.l.b16 %v258
      %v995 = vpack.c.b16 %v964, %v963
      %v996 = vpack.c.b16 %v966, %v965
      %v997 = vpack.c.b16 %v968, %v967
      %v998 = vpack.c.b16 %v970, %v969
      %v999 = vpack.c.b16 %v972, %v971
      %v1000 = vpack.c.b16 %v974, %v973
      %v1001 = vpack.c.b16 %v976, %v975
      %v1002 = vpack.c.b16 %v978, %v977
      %v1003 = vpack.c.b16 %v980, %v979
      %v1004 = vpack.c.b16 %v982, %v981
      %v1005 = vpack.c.b16 %v984, %v983
      %v1006 = vpack.c.b16 %v986, %v985
      %v1007 = vpack.c.b16 %v988, %v987
      %v1008 = vpack.c.b16 %v990, %v989
      %v1009 = vpack.c.b16 %v992, %v991
      %v1010 = vpack.c.b16 %v994, %v993
      %v1013 = vunpack.c.l.b16 %v259
      %v1014 = vunpack.c.l.b16 %v260
      %v1015 = vpack.c.b16 %v1014, %v1013
      %v1018 = vsel %vm721, %v995, 0
      %v1021 = vsel %vm721, %v996, 0
      %v1024 = vsel %vm721, %v997, 0
      %v1027 = vsel %vm721, %v998, 0
      %v1030 = vsel %vm721, %v999, 0
      %v1033 = vsel %vm721, %v1000, 0
      %v1036 = vsel %vm721, %v1001, 0
      %v1039 = vsel %vm721, %v1002, 0
      %v1042 = vsel %vm721, %v1003, 0
      %v1045 = vsel %vm721, %v1004, 0
      %v1048 = vsel %vm721, %v1005, 0
      %v1051 = vsel %vm721, %v1006, 0
      %v1054 = vsel %vm721, %v1007, 0
      %v1057 = vsel %vm721, %v1008, 0
      %v1060 = vsel %vm721, %v1009, 0
      %v1063 = vsel %vm721, %v1010, 0
      %1065 = vmatprep.subr.bf16.mxu0 0
      %1066 = vmatpush1.bf16.msra.mxu0 0
      %1067 = vmatprep.subr.bf16.mxu0 0
      %1068 = vmatpush1.bf16.msra.mxu0 0
      %1069 = vmatprep.subr.bf16.mxu0 0
      %1070 = vmatpush1.bf16.msra.mxu0 0
      %1071 = vmatprep.subr.bf16.mxu0 0
      %1072 = vmatpush1.bf16.msra.mxu0 0
      %1073 = vmatprep.subr.bf16.mxu0 0
      %1074 = vmatpush1.bf16.msra.mxu0 0
      %1075 = vmatprep.subr.bf16.mxu0 0
      %1076 = vmatpush1.bf16.msra.mxu0 0
      %1077 = vmatprep.subr.bf16.mxu0 0
      %1078 = vmatpush1.bf16.msra.mxu0 0
      %1079 = vmatprep.subr.bf16.mxu0 0
      %1080 = vmatpush1.bf16.msra.mxu0 %v1015
      %1081 = vmatprep.subr.bf16.mxu0 0
      %1082 = vmatpush2.bf16.msra.mxu0 0
      %1083 = vmatprep.subr.bf16.mxu0 0
      %1084 = vmatpush2.bf16.msra.mxu0 0
      %1085 = vmatprep.subr.bf16.mxu0 0
      %1086 = vmatpush2.bf16.msra.mxu0 0
      %1087 = vmatprep.subr.bf16.mxu0 0
      %1088 = vmatpush2.bf16.msra.mxu0 0
      %1089 = vmatprep.subr.bf16.mxu0 0
      %1090 = vmatpush2.bf16.msra.mxu0 0
      %1091 = vmatprep.subr.bf16.mxu0 0
      %1092 = vmatpush2.bf16.msra.mxu0 0
      %1093 = vmatprep.subr.bf16.mxu0 0
      %1094 = vmatpush2.bf16.msra.mxu0 0
      %1095 = vmatprep.subr.bf16.mxu0 0
      %1096 = vmatpush2.bf16.msra.mxu0 0
      %1097 = vmatprep.mubr.bf16.mxu0 0
      %1098 = vmatmul.mubr.bf16.gmra.mxu0 %v1018
      %v1099 = vpop.f32.mrf.mxu0
      %v1100 = vadd.f32 %v805, %v1099
      %v1101 = vpop.f32.mrf.mxu0
      %v1102 = vpop.f32.mrf.mxu0
      %v1103 = vadd.f32 %v808, %v1102
      %v1104 = vpop.f32.mrf.mxu0
      %1105 = vmatprep.mubr.bf16.mxu0 0
      %1106 = vmatmul.mubr.bf16.gmra.mxu0 %v1021
      %v1107 = vpop.f32.mrf.mxu0
      %v1108 = vadd.f32 %v813, %v1107
      %v1109 = vpop.f32.mrf.mxu0
      %v1110 = vpop.f32.mrf.mxu0
      %v1111 = vadd.f32 %v816, %v1110
      %v1112 = vpop.f32.mrf.mxu0
      %1113 = vmatprep.mubr.bf16.mxu0 0
      %1114 = vmatmul.mubr.bf16.gmra.mxu0 %v1024
      %v1115 = vpop.f32.mrf.mxu0
      %v1116 = vadd.f32 %v821, %v1115
      %v1117 = vpop.f32.mrf.mxu0
      %v1118 = vpop.f32.mrf.mxu0
      %v1119 = vadd.f32 %v824, %v1118
      %v1120 = vpop.f32.mrf.mxu0
      %1121 = vmatprep.mubr.bf16.mxu0 0
      %1122 = vmatmul.mubr.bf16.gmra.mxu0 %v1027
      %v1123 = vpop.f32.mrf.mxu0
      %v1124 = vadd.f32 %v829, %v1123
      %v1125 = vpop.f32.mrf.mxu0
      %v1126 = vpop.f32.mrf.mxu0
      %v1127 = vadd.f32 %v832, %v1126
      %v1128 = vpop.f32.mrf.mxu0
      %1129 = vmatprep.mubr.bf16.mxu0 0
      %1130 = vmatmul.mubr.bf16.gmra.mxu0 %v1030
      %v1131 = vpop.f32.mrf.mxu0
      %v1132 = vadd.f32 %v837, %v1131
      %v1133 = vpop.f32.mrf.mxu0
      %v1134 = vpop.f32.mrf.mxu0
      %v1135 = vadd.f32 %v840, %v1134
      %v1136 = vpop.f32.mrf.mxu0
      %1137 = vmatprep.mubr.bf16.mxu0 0
      %1138 = vmatmul.mubr.bf16.gmra.mxu0 %v1033
      %v1139 = vpop.f32.mrf.mxu0
      %v1140 = vadd.f32 %v845, %v1139
      %v1141 = vpop.f32.mrf.mxu0
      %v1142 = vpop.f32.mrf.mxu0
      %v1143 = vadd.f32 %v848, %v1142
      %v1144 = vpop.f32.mrf.mxu0
      %1145 = vmatprep.mubr.bf16.mxu0 0
      %1146 = vmatmul.mubr.bf16.gmra.mxu0 %v1036
      %v1147 = vpop.f32.mrf.mxu0
      %v1148 = vadd.f32 %v853, %v1147
      %v1149 = vpop.f32.mrf.mxu0
      %v1150 = vpop.f32.mrf.mxu0
      %v1151 = vadd.f32 %v856, %v1150
      %v1152 = vpop.f32.mrf.mxu0
      %1153 = vmatprep.mubr.bf16.mxu0 0
      %1154 = vmatmul.mubr.bf16.gmra.mxu0 %v1039
      %v1155 = vpop.f32.mrf.mxu0
      %v1156 = vadd.f32 %v861, %v1155
      %v1157 = vpop.f32.mrf.mxu0
      %v1158 = vpop.f32.mrf.mxu0
      %v1159 = vadd.f32 %v864, %v1158
      %v1160 = vpop.f32.mrf.mxu0
      %1161 = vmatprep.mubr.bf16.mxu0 0
      %1162 = vmatmul.mubr.bf16.gmra.mxu0 %v1042
      %v1163 = vpop.f32.mrf.mxu0
      %v1164 = vadd.f32 %v869, %v1163
      %v1165 = vpop.f32.mrf.mxu0
      %v1166 = vpop.f32.mrf.mxu0
      %v1167 = vadd.f32 %v872, %v1166
      %v1168 = vpop.f32.mrf.mxu0
      %1169 = vmatprep.mubr.bf16.mxu0 0
      %1170 = vmatmul.mubr.bf16.gmra.mxu0 %v1045
      %v1171 = vpop.f32.mrf.mxu0
      %v1172 = vadd.f32 %v877, %v1171
      %v1173 = vpop.f32.mrf.mxu0
      %v1174 = vpop.f32.mrf.mxu0
      %v1175 = vadd.f32 %v880, %v1174
      %v1176 = vpop.f32.mrf.mxu0
      %1177 = vmatprep.mubr.bf16.mxu0 0
      %1178 = vmatmul.mubr.bf16.gmra.mxu0 %v1048
      %v1179 = vpop.f32.mrf.mxu0
      %v1180 = vadd.f32 %v885, %v1179
      %v1181 = vpop.f32.mrf.mxu0
      %v1182 = vpop.f32.mrf.mxu0
      %v1183 = vadd.f32 %v888, %v1182
      %v1184 = vpop.f32.mrf.mxu0
      %1185 = vmatprep.mubr.bf16.mxu0 0
      %1186 = vmatmul.mubr.bf16.gmra.mxu0 %v1051
      %v1187 = vpop.f32.mrf.mxu0
      %v1188 = vadd.f32 %v893, %v1187
      %v1189 = vpop.f32.mrf.mxu0
      %v1190 = vpop.f32.mrf.mxu0
      %v1191 = vadd.f32 %v896, %v1190
      %v1192 = vpop.f32.mrf.mxu0
      %1193 = vmatprep.mubr.bf16.mxu0 0
      %1194 = vmatmul.mubr.bf16.gmra.mxu0 %v1054
      %v1195 = vpop.f32.mrf.mxu0
      %v1196 = vadd.f32 %v901, %v1195
      %v1197 = vpop.f32.mrf.mxu0
      %v1198 = vpop.f32.mrf.mxu0
      %v1199 = vadd.f32 %v904, %v1198
      %v1200 = vpop.f32.mrf.mxu0
      %1201 = vmatprep.mubr.bf16.mxu0 0
      %1202 = vmatmul.mubr.bf16.gmra.mxu0 %v1057
      %v1203 = vpop.f32.mrf.mxu0
      %v1204 = vadd.f32 %v909, %v1203
      %v1205 = vpop.f32.mrf.mxu0
      %v1206 = vpop.f32.mrf.mxu0
      %v1207 = vadd.f32 %v912, %v1206
      %v1208 = vpop.f32.mrf.mxu0
      %1209 = vmatprep.mubr.bf16.mxu0 0
      %1210 = vmatmul.mubr.bf16.gmra.mxu0 %v1060
      %v1211 = vpop.f32.mrf.mxu0
      %v1212 = vadd.f32 %v917, %v1211
      %v1213 = vpop.f32.mrf.mxu0
      %v1214 = vpop.f32.mrf.mxu0
      %v1215 = vadd.f32 %v920, %v1214
      %v1216 = vpop.f32.mrf.mxu0
      %1217 = vmatprep.mubr.bf16.mxu0 0
      %1218 = vmatmul.mubr.bf16.gmra.mxu0 %v1063
      %v1219 = vpop.f32.mrf.mxu0
      %v1220 = vadd.f32 %v925, %v1219
      %v1221 = vpop.f32.mrf.mxu0
      %v1222 = vpop.f32.mrf.mxu0
      %v1223 = vadd.f32 %v928, %v1222
      %v1224 = vpop.f32.mrf.mxu0
      %1225 = vdwg.mxu0
      %v1226 = vld [vmem:[%s219] sm:$0xe]
      %v1227 = vld [vmem:[%s219 + $0xc] sm:$0xe]
      %v1228 = vld [vmem:[%s219 + $0x18] sm:$0xe]
      %v1229 = vld [vmem:[%s219 + $0x24] sm:$0xe]
      %v1230 = vld [vmem:[%s219 + $0x30] sm:$0xe]
      %v1231 = vld [vmem:[%s219 + $0x3c] sm:$0xe]
      %v1232 = vld [vmem:[%s219 + $0x48] sm:$0xe]
      %v1233 = vld [vmem:[%s219 + $0x54] sm:$0xe]
      %v1234 = vld [vmem:[%s219 + $0x60] sm:$0xe]
      %v1235 = vld [vmem:[%s219 + $0x6c] sm:$0xe]
      %v1236 = vld [vmem:[%s219 + $0x78] sm:$0xe]
      %v1237 = vld [vmem:[%s219 + $0x84] sm:$0xe]
      %v1238 = vld [vmem:[%s219 + $0x90] sm:$0xe]
      %v1239 = vld [vmem:[%s219 + $0x9c] sm:$0xe]
      %v1240 = vld [vmem:[%s219 + $0xa8] sm:$0xe]
      %v1241 = vld [vmem:[%s219 + $0xb4] sm:$0xe]
      %vm1274 = vcmask 1042432
      %vm1275 = vcmask 1046532
      %vm1276 = vmor %vm1274, %vm1275
      %v1277 = vrot.slane %v1226, 5
      %v1278 = vrot.slane %v1277, 4
      %v1279 = vrot.slane %v228, 5
      %v1280 = vsel %vm1276, %v1278, %v1279
      %v1281 = vrot.slane %v1279, 4
      %v1282 = vrot.slane %v261, 5
      %v1283 = vsel %vm1276, %v1281, %v1282
      %v1284 = vrot.slane %v1227, 5
      %v1285 = vrot.slane %v1284, 4
      %v1286 = vrot.slane %v230, 5
      %v1287 = vsel %vm1276, %v1285, %v1286
      %v1288 = vrot.slane %v1286, 4
      %v1289 = vrot.slane %v262, 5
      %v1290 = vsel %vm1276, %v1288, %v1289
      %v1291 = vrot.slane %v1228, 5
      %v1292 = vrot.slane %v1291, 4
      %v1293 = vrot.slane %v232, 5
      %v1294 = vsel %vm1276, %v1292, %v1293
      %v1295 = vrot.slane %v1293, 4
      %v1296 = vrot.slane %v263, 5
      %v1297 = vsel %vm1276, %v1295, %v1296
      %v1298 = vrot.slane %v1229, 5
      %v1299 = vrot.slane %v1298, 4
      %v1300 = vrot.slane %v234, 5
      %v1301 = vsel %vm1276, %v1299, %v1300
      %v1302 = vrot.slane %v1300, 4
      %v1303 = vrot.slane %v264, 5
      %v1304 = vsel %vm1276, %v1302, %v1303
      %v1305 = vrot.slane %v1230, 5
      %v1306 = vrot.slane %v1305, 4
      %v1307 = vrot.slane %v236, 5
      %v1308 = vsel %vm1276, %v1306, %v1307
      %v1309 = vrot.slane %v1307, 4
      %v1310 = vrot.slane %v265, 5
      %v1311 = vsel %vm1276, %v1309, %v1310
      %v1312 = vrot.slane %v1231, 5
      %v1313 = vrot.slane %v1312, 4
      %v1314 = vrot.slane %v238, 5
      %v1315 = vsel %vm1276, %v1313, %v1314
      %v1316 = vrot.slane %v1314, 4
      %v1317 = vrot.slane %v266, 5
      %v1318 = vsel %vm1276, %v1316, %v1317
      %v1319 = vrot.slane %v1232, 5
      %v1320 = vrot.slane %v1319, 4
      %v1321 = vrot.slane %v240, 5
      %v1322 = vsel %vm1276, %v1320, %v1321
      %v1323 = vrot.slane %v1321, 4
      %v1324 = vrot.slane %v267, 5
      %v1325 = vsel %vm1276, %v1323, %v1324
      %v1326 = vrot.slane %v1233, 5
      %v1327 = vrot.slane %v1326, 4
      %v1328 = vrot.slane %v242, 5
      %v1329 = vsel %vm1276, %v1327, %v1328
      %v1330 = vrot.slane %v1328, 4
      %v1331 = vrot.slane %v268, 5
      %v1332 = vsel %vm1276, %v1330, %v1331
      %v1333 = vrot.slane %v1234, 5
      %v1334 = vrot.slane %v1333, 4
      %v1335 = vrot.slane %v244, 5
      %v1336 = vsel %vm1276, %v1334, %v1335
      %v1337 = vrot.slane %v1335, 4
      %v1338 = vrot.slane %v269, 5
      %v1339 = vsel %vm1276, %v1337, %v1338
      %v1340 = vrot.slane %v1235, 5
      %v1341 = vrot.slane %v1340, 4
      %v1342 = vrot.slane %v246, 5
      %v1343 = vsel %vm1276, %v1341, %v1342
      %v1344 = vrot.slane %v1342, 4
      %v1345 = vrot.slane %v270, 5
      %v1346 = vsel %vm1276, %v1344, %v1345
      %v1347 = vrot.slane %v1236, 5
      %v1348 = vrot.slane %v1347, 4
      %v1349 = vrot.slane %v248, 5
      %v1350 = vsel %vm1276, %v1348, %v1349
      %v1351 = vrot.slane %v1349, 4
      %v1352 = vrot.slane %v271, 5
      %v1353 = vsel %vm1276, %v1351, %v1352
      %v1354 = vrot.slane %v1237, 5
      %v1355 = vrot.slane %v1354, 4
      %v1356 = vrot.slane %v250, 5
      %v1357 = vsel %vm1276, %v1355, %v1356
      %v1358 = vrot.slane %v1356, 4
      %v1359 = vrot.slane %v272, 5
      %v1360 = vsel %vm1276, %v1358, %v1359
      %v1361 = vrot.slane %v1238, 5
      %v1362 = vrot.slane %v1361, 4
      %v1363 = vrot.slane %v252, 5
      %v1364 = vsel %vm1276, %v1362, %v1363
      %v1365 = vrot.slane %v1363, 4
      %v1366 = vrot.slane %v273, 5
      %v1367 = vsel %vm1276, %v1365, %v1366
      %v1368 = vrot.slane %v1239, 5
      %v1369 = vrot.slane %v1368, 4
      %v1370 = vrot.slane %v254, 5
      %v1371 = vsel %vm1276, %v1369, %v1370
      %v1372 = vrot.slane %v1370, 4
      %v1373 = vrot.slane %v274, 5
      %v1374 = vsel %vm1276, %v1372, %v1373
      %v1375 = vrot.slane %v1240, 5
      %v1376 = vrot.slane %v1375, 4
      %v1377 = vrot.slane %v256, 5
      %v1378 = vsel %vm1276, %v1376, %v1377
      %v1379 = vrot.slane %v1377, 4
      %v1380 = vrot.slane %v275, 5
      %v1381 = vsel %vm1276, %v1379, %v1380
      %v1382 = vrot.slane %v1241, 5
      %v1383 = vrot.slane %v1382, 4
      %v1384 = vrot.slane %v258, 5
      %v1385 = vsel %vm1276, %v1383, %v1384
      %v1386 = vrot.slane %v1384, 4
      %v1387 = vrot.slane %v276, 5
      %v1388 = vsel %vm1276, %v1386, %v1387
      %s1389 = scalar_lea.vmem %s1, 16
      %v1390 = vld [vmem:[%s1389] sm:$0xf]
      %v1391 = vld [vmem:[%s1389 + $0x4] sm:$0xf]
      %v1392 = vunpack.c.l.b16 %v1280
      %v1393 = vunpack.c.l.b16 %v1283
      %v1394 = vunpack.c.l.b16 %v1287
      %v1395 = vunpack.c.l.b16 %v1290
      %v1396 = vunpack.c.l.b16 %v1294
      %v1397 = vunpack.c.l.b16 %v1297
      %v1398 = vunpack.c.l.b16 %v1301
      %v1399 = vunpack.c.l.b16 %v1304
      %v1400 = vunpack.c.l.b16 %v1308
      %v1401 = vunpack.c.l.b16 %v1311
      %v1402 = vunpack.c.l.b16 %v1315
      %v1403 = vunpack.c.l.b16 %v1318
      %v1404 = vunpack.c.l.b16 %v1322
      %v1405 = vunpack.c.l.b16 %v1325
      %v1406 = vunpack.c.l.b16 %v1329
      %v1407 = vunpack.c.l.b16 %v1332
      %v1408 = vunpack.c.l.b16 %v1336
      %v1409 = vunpack.c.l.b16 %v1339
      %v1410 = vunpack.c.l.b16 %v1343
      %v1411 = vunpack.c.l.b16 %v1346
      %v1412 = vunpack.c.l.b16 %v1350
      %v1413 = vunpack.c.l.b16 %v1353
      %v1414 = vunpack.c.l.b16 %v1357
      %v1415 = vunpack.c.l.b16 %v1360
      %v1416 = vunpack.c.l.b16 %v1364
      %v1417 = vunpack.c.l.b16 %v1367
      %v1418 = vunpack.c.l.b16 %v1371
      %v1419 = vunpack.c.l.b16 %v1374
      %v1420 = vunpack.c.l.b16 %v1378
      %v1421 = vunpack.c.l.b16 %v1381
      %v1422 = vunpack.c.l.b16 %v1385
      %v1423 = vunpack.c.l.b16 %v1388
      %v1424 = vpack.c.b16 %v1393, %v1392
      %v1425 = vpack.c.b16 %v1395, %v1394
      %v1426 = vpack.c.b16 %v1397, %v1396
      %v1427 = vpack.c.b16 %v1399, %v1398
      %v1428 = vpack.c.b16 %v1401, %v1400
      %v1429 = vpack.c.b16 %v1403, %v1402
      %v1430 = vpack.c.b16 %v1405, %v1404
      %v1431 = vpack.c.b16 %v1407, %v1406
      %v1432 = vpack.c.b16 %v1409, %v1408
      %v1433 = vpack.c.b16 %v1411, %v1410
      %v1434 = vpack.c.b16 %v1413, %v1412
      %v1435 = vpack.c.b16 %v1415, %v1414
      %v1436 = vpack.c.b16 %v1417, %v1416
      %v1437 = vpack.c.b16 %v1419, %v1418
      %v1438 = vpack.c.b16 %v1421, %v1420
      %v1439 = vpack.c.b16 %v1423, %v1422
      %v1442 = vunpack.c.l.b16 %v1390
      %v1443 = vunpack.c.l.b16 %v1391
      %v1444 = vpack.c.b16 %v1443, %v1442
      %v1447 = vsel %vm721, %v1424, 0
      %v1450 = vsel %vm721, %v1425, 0
      %v1453 = vsel %vm721, %v1426, 0
      %v1456 = vsel %vm721, %v1427, 0
      %v1459 = vsel %vm721, %v1428, 0
      %v1462 = vsel %vm721, %v1429, 0
      %v1465 = vsel %vm721, %v1430, 0
      %v1468 = vsel %vm721, %v1431, 0
      %v1471 = vsel %vm721, %v1432, 0
      %v1474 = vsel %vm721, %v1433, 0
      %v1477 = vsel %vm721, %v1434, 0
      %v1480 = vsel %vm721, %v1435, 0
      %v1483 = vsel %vm721, %v1436, 0
      %v1486 = vsel %vm721, %v1437, 0
      %v1489 = vsel %vm721, %v1438, 0
      %v1492 = vsel %vm721, %v1439, 0
      %1494 = vmatprep.subr.bf16.mxu0 0
      %1495 = vmatpush1.bf16.msra.mxu0 0
      %1496 = vmatprep.subr.bf16.mxu0 0
      %1497 = vmatpush1.bf16.msra.mxu0 0
      %1498 = vmatprep.subr.bf16.mxu0 0
      %1499 = vmatpush1.bf16.msra.mxu0 0
      %1500 = vmatprep.subr.bf16.mxu0 0
      %1501 = vmatpush1.bf16.msra.mxu0 0
      %1502 = vmatprep.subr.bf16.mxu0 0
      %1503 = vmatpush1.bf16.msra.mxu0 0
      %1504 = vmatprep.subr.bf16.mxu0 0
      %1505 = vmatpush1.bf16.msra.mxu0 0
      %1506 = vmatprep.subr.bf16.mxu0 0
      %1507 = vmatpush1.bf16.msra.mxu0 0
      %1508 = vmatprep.subr.bf16.mxu0 0
      %1509 = vmatpush1.bf16.msra.mxu0 %v1444
      %1510 = vmatprep.subr.bf16.mxu0 0
      %1511 = vmatpush2.bf16.msra.mxu0 0
      %1512 = vmatprep.subr.bf16.mxu0 0
      %1513 = vmatpush2.bf16.msra.mxu0 0
      %1514 = vmatprep.subr.bf16.mxu0 0
      %1515 = vmatpush2.bf16.msra.mxu0 0
      %1516 = vmatprep.subr.bf16.mxu0 0
      %1517 = vmatpush2.bf16.msra.mxu0 0
      %1518 = vmatprep.subr.bf16.mxu0 0
      %1519 = vmatpush2.bf16.msra.mxu0 0
      %1520 = vmatprep.subr.bf16.mxu0 0
      %1521 = vmatpush2.bf16.msra.mxu0 0
      %1522 = vmatprep.subr.bf16.mxu0 0
      %1523 = vmatpush2.bf16.msra.mxu0 0
      %1524 = vmatprep.subr.bf16.mxu0 0
      %1525 = vmatpush2.bf16.msra.mxu0 0
      %1526 = vmatprep.mubr.bf16.mxu0 0
      %1527 = vmatmul.mubr.bf16.gmra.mxu0 %v1447
      %v1528 = vpop.f32.mrf.mxu0
      %v1529 = vadd.f32 0.0, %v1528
      %v1530 = vpop.f32.mrf.mxu0
      %v1531 = vpop.f32.mrf.mxu0
      %v1532 = vadd.f32 0.0, %v1531
      %v1533 = vpop.f32.mrf.mxu0
      %1534 = vmatprep.mubr.bf16.mxu0 0
      %1535 = vmatmul.mubr.bf16.gmra.mxu0 %v1450
      %v1536 = vpop.f32.mrf.mxu0
      %v1537 = vadd.f32 0.0, %v1536
      %v1538 = vpop.f32.mrf.mxu0
      %v1539 = vpop.f32.mrf.mxu0
      %v1540 = vadd.f32 0.0, %v1539
      %v1541 = vpop.f32.mrf.mxu0
      %1542 = vmatprep.mubr.bf16.mxu0 0
      %1543 = vmatmul.mubr.bf16.gmra.mxu0 %v1453
      %v1544 = vpop.f32.mrf.mxu0
      %v1545 = vadd.f32 0.0, %v1544
      %v1546 = vpop.f32.mrf.mxu0
      %v1547 = vpop.f32.mrf.mxu0
      %v1548 = vadd.f32 0.0, %v1547
      %v1549 = vpop.f32.mrf.mxu0
      %1550 = vmatprep.mubr.bf16.mxu0 0
      %1551 = vmatmul.mubr.bf16.gmra.mxu0 %v1456
      %v1552 = vpop.f32.mrf.mxu0
      %v1553 = vadd.f32 0.0, %v1552
      %v1554 = vpop.f32.mrf.mxu0
      %v1555 = vpop.f32.mrf.mxu0
      %v1556 = vadd.f32 0.0, %v1555
      %v1557 = vpop.f32.mrf.mxu0
      %1558 = vmatprep.mubr.bf16.mxu0 0
      %1559 = vmatmul.mubr.bf16.gmra.mxu0 %v1459
      %v1560 = vpop.f32.mrf.mxu0
      %v1561 = vadd.f32 0.0, %v1560
      %v1562 = vpop.f32.mrf.mxu0
      %v1563 = vpop.f32.mrf.mxu0
      %v1564 = vadd.f32 0.0, %v1563
      %v1565 = vpop.f32.mrf.mxu0
      %1566 = vmatprep.mubr.bf16.mxu0 0
      %1567 = vmatmul.mubr.bf16.gmra.mxu0 %v1462
      %v1568 = vpop.f32.mrf.mxu0
      %v1569 = vadd.f32 0.0, %v1568
      %v1570 = vpop.f32.mrf.mxu0
      %v1571 = vpop.f32.mrf.mxu0
      %v1572 = vadd.f32 0.0, %v1571
      %v1573 = vpop.f32.mrf.mxu0
      %1574 = vmatprep.mubr.bf16.mxu0 0
      %1575 = vmatmul.mubr.bf16.gmra.mxu0 %v1465
      %v1576 = vpop.f32.mrf.mxu0
      %v1577 = vadd.f32 0.0, %v1576
      %v1578 = vpop.f32.mrf.mxu0
      %v1579 = vpop.f32.mrf.mxu0
      %v1580 = vadd.f32 0.0, %v1579
      %v1581 = vpop.f32.mrf.mxu0
      %1582 = vmatprep.mubr.bf16.mxu0 0
      %1583 = vmatmul.mubr.bf16.gmra.mxu0 %v1468
      %v1584 = vpop.f32.mrf.mxu0
      %v1585 = vadd.f32 0.0, %v1584
      %v1586 = vpop.f32.mrf.mxu0
      %v1587 = vpop.f32.mrf.mxu0
      %v1588 = vadd.f32 0.0, %v1587
      %v1589 = vpop.f32.mrf.mxu0
      %1590 = vmatprep.mubr.bf16.mxu0 0
      %1591 = vmatmul.mubr.bf16.gmra.mxu0 %v1471
      %v1592 = vpop.f32.mrf.mxu0
      %v1593 = vadd.f32 0.0, %v1592
      %v1594 = vpop.f32.mrf.mxu0
      %v1595 = vpop.f32.mrf.mxu0
      %v1596 = vadd.f32 0.0, %v1595
      %v1597 = vpop.f32.mrf.mxu0
      %1598 = vmatprep.mubr.bf16.mxu0 0
      %1599 = vmatmul.mubr.bf16.gmra.mxu0 %v1474
      %v1600 = vpop.f32.mrf.mxu0
      %v1601 = vadd.f32 0.0, %v1600
      %v1602 = vpop.f32.mrf.mxu0
      %v1603 = vpop.f32.mrf.mxu0
      %v1604 = vadd.f32 0.0, %v1603
      %v1605 = vpop.f32.mrf.mxu0
      %1606 = vmatprep.mubr.bf16.mxu0 0
      %1607 = vmatmul.mubr.bf16.gmra.mxu0 %v1477
      %v1608 = vpop.f32.mrf.mxu0
      %v1609 = vadd.f32 0.0, %v1608
      %v1610 = vpop.f32.mrf.mxu0
      %v1611 = vpop.f32.mrf.mxu0
      %v1612 = vadd.f32 0.0, %v1611
      %v1613 = vpop.f32.mrf.mxu0
      %1614 = vmatprep.mubr.bf16.mxu0 0
      %1615 = vmatmul.mubr.bf16.gmra.mxu0 %v1480
      %v1616 = vpop.f32.mrf.mxu0
      %v1617 = vadd.f32 0.0, %v1616
      %v1618 = vpop.f32.mrf.mxu0
      %v1619 = vpop.f32.mrf.mxu0
      %v1620 = vadd.f32 0.0, %v1619
      %v1621 = vpop.f32.mrf.mxu0
      %1622 = vmatprep.mubr.bf16.mxu0 0
      %1623 = vmatmul.mubr.bf16.gmra.mxu0 %v1483
      %v1624 = vpop.f32.mrf.mxu0
      %v1625 = vadd.f32 0.0, %v1624
      %v1626 = vpop.f32.mrf.mxu0
      %v1627 = vpop.f32.mrf.mxu0
      %v1628 = vadd.f32 0.0, %v1627
      %v1629 = vpop.f32.mrf.mxu0
      %1630 = vmatprep.mubr.bf16.mxu0 0
      %1631 = vmatmul.mubr.bf16.gmra.mxu0 %v1486
      %v1632 = vpop.f32.mrf.mxu0
      %v1633 = vadd.f32 0.0, %v1632
      %v1634 = vpop.f32.mrf.mxu0
      %v1635 = vpop.f32.mrf.mxu0
      %v1636 = vadd.f32 0.0, %v1635
      %v1637 = vpop.f32.mrf.mxu0
      %1638 = vmatprep.mubr.bf16.mxu0 0
      %1639 = vmatmul.mubr.bf16.gmra.mxu0 %v1489
      %v1640 = vpop.f32.mrf.mxu0
      %v1641 = vadd.f32 0.0, %v1640
      %v1642 = vpop.f32.mrf.mxu0
      %v1643 = vpop.f32.mrf.mxu0
      %v1644 = vadd.f32 0.0, %v1643
      %v1645 = vpop.f32.mrf.mxu0
      %1646 = vmatprep.mubr.bf16.mxu0 0
      %1647 = vmatmul.mubr.bf16.gmra.mxu0 %v1492
      %v1648 = vpop.f32.mrf.mxu0
      %v1649 = vadd.f32 0.0, %v1648
      %v1650 = vpop.f32.mrf.mxu0
      %v1651 = vpop.f32.mrf.mxu0
      %v1652 = vadd.f32 0.0, %v1651
      %v1653 = vpop.f32.mrf.mxu0
      %1654 = vdwg.mxu0
      %v1655 = vadd.f32 %v1100, %v1529
      %v1656 = vadd.f32 %v1103, %v1532
      %v1657 = vadd.f32 %v1108, %v1537
      %v1658 = vadd.f32 %v1111, %v1540
      %v1659 = vadd.f32 %v1116, %v1545
      %v1660 = vadd.f32 %v1119, %v1548
      %v1661 = vadd.f32 %v1124, %v1553
      %v1662 = vadd.f32 %v1127, %v1556
      %v1663 = vadd.f32 %v1132, %v1561
      %v1664 = vadd.f32 %v1135, %v1564
      %v1665 = vadd.f32 %v1140, %v1569
      %v1666 = vadd.f32 %v1143, %v1572
      %v1667 = vadd.f32 %v1148, %v1577
      %v1668 = vadd.f32 %v1151, %v1580
      %v1669 = vadd.f32 %v1156, %v1585
      %v1670 = vadd.f32 %v1159, %v1588
      %v1671 = vadd.f32 %v1164, %v1593
      %v1672 = vadd.f32 %v1167, %v1596
      %v1673 = vadd.f32 %v1172, %v1601
      %v1674 = vadd.f32 %v1175, %v1604
      %v1675 = vadd.f32 %v1180, %v1609
      %v1676 = vadd.f32 %v1183, %v1612
      %v1677 = vadd.f32 %v1188, %v1617
      %v1678 = vadd.f32 %v1191, %v1620
      %v1679 = vadd.f32 %v1196, %v1625
      %v1680 = vadd.f32 %v1199, %v1628
      %v1681 = vadd.f32 %v1204, %v1633
      %v1682 = vadd.f32 %v1207, %v1636
      %v1683 = vadd.f32 %v1212, %v1641
      %v1684 = vadd.f32 %v1215, %v1644
      %v1685 = vadd.f32 %v1220, %v1649
      %v1686 = vadd.f32 %v1223, %v1652
      %s1687 = scalar_lea.vmem %s219, 12
      %v1688 = vld [vmem:[%s1687] sm:$0xf]
      %v1689 = vld [vmem:[%s1687 + $0x4] sm:$0xf]
      %v1690 = vld [vmem:[%s1687 + $0xc] sm:$0xf]
      %v1691 = vld [vmem:[%s1687 + $0x10] sm:$0xf]
      %v1692 = vld [vmem:[%s1687 + $0x18] sm:$0xf]
      %v1693 = vld [vmem:[%s1687 + $0x1c] sm:$0xf]
      %v1694 = vld [vmem:[%s1687 + $0x24] sm:$0xf]
      %v1695 = vld [vmem:[%s1687 + $0x28] sm:$0xf]
      %v1696 = vld [vmem:[%s1687 + $0x30] sm:$0xf]
      %v1697 = vld [vmem:[%s1687 + $0x34] sm:$0xf]
      %v1698 = vld [vmem:[%s1687 + $0x3c] sm:$0xf]
      %v1699 = vld [vmem:[%s1687 + $0x40] sm:$0xf]
      %v1700 = vld [vmem:[%s1687 + $0x48] sm:$0xf]
      %v1701 = vld [vmem:[%s1687 + $0x4c] sm:$0xf]
      %v1702 = vld [vmem:[%s1687 + $0x54] sm:$0xf]
      %v1703 = vld [vmem:[%s1687 + $0x58] sm:$0xf]
      %v1704 = vld [vmem:[%s1687 + $0x60] sm:$0xf]
      %v1705 = vld [vmem:[%s1687 + $0x64] sm:$0xf]
      %v1706 = vld [vmem:[%s1687 + $0x6c] sm:$0xf]
      %v1707 = vld [vmem:[%s1687 + $0x70] sm:$0xf]
      %v1708 = vld [vmem:[%s1687 + $0x78] sm:$0xf]
      %v1709 = vld [vmem:[%s1687 + $0x7c] sm:$0xf]
      %v1710 = vld [vmem:[%s1687 + $0x84] sm:$0xf]
      %v1711 = vld [vmem:[%s1687 + $0x88] sm:$0xf]
      %v1712 = vld [vmem:[%s1687 + $0x90] sm:$0xf]
      %v1713 = vld [vmem:[%s1687 + $0x94] sm:$0xf]
      %v1714 = vld [vmem:[%s1687 + $0x9c] sm:$0xf]
      %v1715 = vld [vmem:[%s1687 + $0xa0] sm:$0xf]
      %v1716 = vld [vmem:[%s1687 + $0xa8] sm:$0xf]
      %v1717 = vld [vmem:[%s1687 + $0xac] sm:$0xf]
      %v1718 = vld [vmem:[%s1687 + $0xb4] sm:$0xf]
      %v1719 = vld [vmem:[%s1687 + $0xb8] sm:$0xf]
      %s1720 = scalar_lea.vmem %s1, 24
      %v1721 = vld [vmem:[%s1720] sm:$0xf]
      %v1722 = vld [vmem:[%s1720 + $0x4] sm:$0xf]
      %v1755 = vunpack.c.l.b16 %v1688
      %v1756 = vunpack.c.l.b16 %v1689
      %v1757 = vunpack.c.l.b16 %v1690
      %v1758 = vunpack.c.l.b16 %v1691
      %v1759 = vunpack.c.l.b16 %v1692
      %v1760 = vunpack.c.l.b16 %v1693
      %v1761 = vunpack.c.l.b16 %v1694
      %v1762 = vunpack.c.l.b16 %v1695
      %v1763 = vunpack.c.l.b16 %v1696
      %v1764 = vunpack.c.l.b16 %v1697
      %v1765 = vunpack.c.l.b16 %v1698
      %v1766 = vunpack.c.l.b16 %v1699
      %v1767 = vunpack.c.l.b16 %v1700
      %v1768 = vunpack.c.l.b16 %v1701
      %v1769 = vunpack.c.l.b16 %v1702
      %v1770 = vunpack.c.l.b16 %v1703
      %v1771 = vunpack.c.l.b16 %v1704
      %v1772 = vunpack.c.l.b16 %v1705
      %v1773 = vunpack.c.l.b16 %v1706
      %v1774 = vunpack.c.l.b16 %v1707
      %v1775 = vunpack.c.l.b16 %v1708
      %v1776 = vunpack.c.l.b16 %v1709
      %v1777 = vunpack.c.l.b16 %v1710
      %v1778 = vunpack.c.l.b16 %v1711
      %v1779 = vunpack.c.l.b16 %v1712
      %v1780 = vunpack.c.l.b16 %v1713
      %v1781 = vunpack.c.l.b16 %v1714
      %v1782 = vunpack.c.l.b16 %v1715
      %v1783 = vunpack.c.l.b16 %v1716
      %v1784 = vunpack.c.l.b16 %v1717
      %v1785 = vunpack.c.l.b16 %v1718
      %v1786 = vunpack.c.l.b16 %v1719
      %v1787 = vpack.c.b16 %v1756, %v1755
      %v1788 = vpack.c.b16 %v1758, %v1757
      %v1789 = vpack.c.b16 %v1760, %v1759
      %v1790 = vpack.c.b16 %v1762, %v1761
      %v1791 = vpack.c.b16 %v1764, %v1763
      %v1792 = vpack.c.b16 %v1766, %v1765
      %v1793 = vpack.c.b16 %v1768, %v1767
      %v1794 = vpack.c.b16 %v1770, %v1769
      %v1795 = vpack.c.b16 %v1772, %v1771
      %v1796 = vpack.c.b16 %v1774, %v1773
      %v1797 = vpack.c.b16 %v1776, %v1775
      %v1798 = vpack.c.b16 %v1778, %v1777
      %v1799 = vpack.c.b16 %v1780, %v1779
      %v1800 = vpack.c.b16 %v1782, %v1781
      %v1801 = vpack.c.b16 %v1784, %v1783
      %v1802 = vpack.c.b16 %v1786, %v1785
      %v1805 = vunpack.c.l.b16 %v1721
      %v1806 = vunpack.c.l.b16 %v1722
      %v1807 = vpack.c.b16 %v1806, %v1805
      %v1810 = vsel %vm721, %v1787, 0
      %v1813 = vsel %vm721, %v1788, 0
      %v1816 = vsel %vm721, %v1789, 0
      %v1819 = vsel %vm721, %v1790, 0
      %v1822 = vsel %vm721, %v1791, 0
      %v1825 = vsel %vm721, %v1792, 0
      %v1828 = vsel %vm721, %v1793, 0
      %v1831 = vsel %vm721, %v1794, 0
      %v1834 = vsel %vm721, %v1795, 0
      %v1837 = vsel %vm721, %v1796, 0
      %v1840 = vsel %vm721, %v1797, 0
      %v1843 = vsel %vm721, %v1798, 0
      %v1846 = vsel %vm721, %v1799, 0
      %v1849 = vsel %vm721, %v1800, 0
      %v1852 = vsel %vm721, %v1801, 0
      %v1855 = vsel %vm721, %v1802, 0
      %1857 = vmatprep.subr.bf16.mxu0 0
      %1858 = vmatpush1.bf16.msra.mxu0 0
      %1859 = vmatprep.subr.bf16.mxu0 0
      %1860 = vmatpush1.bf16.msra.mxu0 0
      %1861 = vmatprep.subr.bf16.mxu0 0
      %1862 = vmatpush1.bf16.msra.mxu0 0
      %1863 = vmatprep.subr.bf16.mxu0 0
      %1864 = vmatpush1.bf16.msra.mxu0 0
      %1865 = vmatprep.subr.bf16.mxu0 0
      %1866 = vmatpush1.bf16.msra.mxu0 0
      %1867 = vmatprep.subr.bf16.mxu0 0
      %1868 = vmatpush1.bf16.msra.mxu0 0
      %1869 = vmatprep.subr.bf16.mxu0 0
      %1870 = vmatpush1.bf16.msra.mxu0 0
      %1871 = vmatprep.subr.bf16.mxu0 0
      %1872 = vmatpush1.bf16.msra.mxu0 %v1807
      %1873 = vmatprep.subr.bf16.mxu0 0
      %1874 = vmatpush2.bf16.msra.mxu0 0
      %1875 = vmatprep.subr.bf16.mxu0 0
      %1876 = vmatpush2.bf16.msra.mxu0 0
      %1877 = vmatprep.subr.bf16.mxu0 0
      %1878 = vmatpush2.bf16.msra.mxu0 0
      %1879 = vmatprep.subr.bf16.mxu0 0
      %1880 = vmatpush2.bf16.msra.mxu0 0
      %1881 = vmatprep.subr.bf16.mxu0 0
      %1882 = vmatpush2.bf16.msra.mxu0 0
      %1883 = vmatprep.subr.bf16.mxu0 0
      %1884 = vmatpush2.bf16.msra.mxu0 0
      %1885 = vmatprep.subr.bf16.mxu0 0
      %1886 = vmatpush2.bf16.msra.mxu0 0
      %1887 = vmatprep.subr.bf16.mxu0 0
      %1888 = vmatpush2.bf16.msra.mxu0 0
      %1889 = vmatprep.mubr.bf16.mxu0 0
      %1890 = vmatmul.mubr.bf16.gmra.mxu0 %v1810
      %v1891 = vpop.f32.mrf.mxu0
      %v1892 = vadd.f32 0.0, %v1891
      %v1893 = vpop.f32.mrf.mxu0
      %v1894 = vpop.f32.mrf.mxu0
      %v1895 = vadd.f32 0.0, %v1894
      %v1896 = vpop.f32.mrf.mxu0
      %1897 = vmatprep.mubr.bf16.mxu0 0
      %1898 = vmatmul.mubr.bf16.gmra.mxu0 %v1813
      %v1899 = vpop.f32.mrf.mxu0
      %v1900 = vadd.f32 0.0, %v1899
      %v1901 = vpop.f32.mrf.mxu0
      %v1902 = vpop.f32.mrf.mxu0
      %v1903 = vadd.f32 0.0, %v1902
      %v1904 = vpop.f32.mrf.mxu0
      %1905 = vmatprep.mubr.bf16.mxu0 0
      %1906 = vmatmul.mubr.bf16.gmra.mxu0 %v1816
      %v1907 = vpop.f32.mrf.mxu0
      %v1908 = vadd.f32 0.0, %v1907
      %v1909 = vpop.f32.mrf.mxu0
      %v1910 = vpop.f32.mrf.mxu0
      %v1911 = vadd.f32 0.0, %v1910
      %v1912 = vpop.f32.mrf.mxu0
      %1913 = vmatprep.mubr.bf16.mxu0 0
      %1914 = vmatmul.mubr.bf16.gmra.mxu0 %v1819
      %v1915 = vpop.f32.mrf.mxu0
      %v1916 = vadd.f32 0.0, %v1915
      %v1917 = vpop.f32.mrf.mxu0
      %v1918 = vpop.f32.mrf.mxu0
      %v1919 = vadd.f32 0.0, %v1918
      %v1920 = vpop.f32.mrf.mxu0
      %1921 = vmatprep.mubr.bf16.mxu0 0
      %1922 = vmatmul.mubr.bf16.gmra.mxu0 %v1822
      %v1923 = vpop.f32.mrf.mxu0
      %v1924 = vadd.f32 0.0, %v1923
      %v1925 = vpop.f32.mrf.mxu0
      %v1926 = vpop.f32.mrf.mxu0
      %v1927 = vadd.f32 0.0, %v1926
      %v1928 = vpop.f32.mrf.mxu0
      %1929 = vmatprep.mubr.bf16.mxu0 0
      %1930 = vmatmul.mubr.bf16.gmra.mxu0 %v1825
      %v1931 = vpop.f32.mrf.mxu0
      %v1932 = vadd.f32 0.0, %v1931
      %v1933 = vpop.f32.mrf.mxu0
      %v1934 = vpop.f32.mrf.mxu0
      %v1935 = vadd.f32 0.0, %v1934
      %v1936 = vpop.f32.mrf.mxu0
      %1937 = vmatprep.mubr.bf16.mxu0 0
      %1938 = vmatmul.mubr.bf16.gmra.mxu0 %v1828
      %v1939 = vpop.f32.mrf.mxu0
      %v1940 = vadd.f32 0.0, %v1939
      %v1941 = vpop.f32.mrf.mxu0
      %v1942 = vpop.f32.mrf.mxu0
      %v1943 = vadd.f32 0.0, %v1942
      %v1944 = vpop.f32.mrf.mxu0
      %1945 = vmatprep.mubr.bf16.mxu0 0
      %1946 = vmatmul.mubr.bf16.gmra.mxu0 %v1831
      %v1947 = vpop.f32.mrf.mxu0
      %v1948 = vadd.f32 0.0, %v1947
      %v1949 = vpop.f32.mrf.mxu0
      %v1950 = vpop.f32.mrf.mxu0
      %v1951 = vadd.f32 0.0, %v1950
      %v1952 = vpop.f32.mrf.mxu0
      %1953 = vmatprep.mubr.bf16.mxu0 0
      %1954 = vmatmul.mubr.bf16.gmra.mxu0 %v1834
      %v1955 = vpop.f32.mrf.mxu0
      %v1956 = vadd.f32 0.0, %v1955
      %v1957 = vpop.f32.mrf.mxu0
      %v1958 = vpop.f32.mrf.mxu0
      %v1959 = vadd.f32 0.0, %v1958
      %v1960 = vpop.f32.mrf.mxu0
      %1961 = vmatprep.mubr.bf16.mxu0 0
      %1962 = vmatmul.mubr.bf16.gmra.mxu0 %v1837
      %v1963 = vpop.f32.mrf.mxu0
      %v1964 = vadd.f32 0.0, %v1963
      %v1965 = vpop.f32.mrf.mxu0
      %v1966 = vpop.f32.mrf.mxu0
      %v1967 = vadd.f32 0.0, %v1966
      %v1968 = vpop.f32.mrf.mxu0
      %1969 = vmatprep.mubr.bf16.mxu0 0
      %1970 = vmatmul.mubr.bf16.gmra.mxu0 %v1840
      %v1971 = vpop.f32.mrf.mxu0
      %v1972 = vadd.f32 0.0, %v1971
      %v1973 = vpop.f32.mrf.mxu0
      %v1974 = vpop.f32.mrf.mxu0
      %v1975 = vadd.f32 0.0, %v1974
      %v1976 = vpop.f32.mrf.mxu0
      %1977 = vmatprep.mubr.bf16.mxu0 0
      %1978 = vmatmul.mubr.bf16.gmra.mxu0 %v1843
      %v1979 = vpop.f32.mrf.mxu0
      %v1980 = vadd.f32 0.0, %v1979
      %v1981 = vpop.f32.mrf.mxu0
      %v1982 = vpop.f32.mrf.mxu0
      %v1983 = vadd.f32 0.0, %v1982
      %v1984 = vpop.f32.mrf.mxu0
      %1985 = vmatprep.mubr.bf16.mxu0 0
      %1986 = vmatmul.mubr.bf16.gmra.mxu0 %v1846
      %v1987 = vpop.f32.mrf.mxu0
      %v1988 = vadd.f32 0.0, %v1987
      %v1989 = vpop.f32.mrf.mxu0
      %v1990 = vpop.f32.mrf.mxu0
      %v1991 = vadd.f32 0.0, %v1990
      %v1992 = vpop.f32.mrf.mxu0
      %1993 = vmatprep.mubr.bf16.mxu0 0
      %1994 = vmatmul.mubr.bf16.gmra.mxu0 %v1849
      %v1995 = vpop.f32.mrf.mxu0
      %v1996 = vadd.f32 0.0, %v1995
      %v1997 = vpop.f32.mrf.mxu0
      %v1998 = vpop.f32.mrf.mxu0
      %v1999 = vadd.f32 0.0, %v1998
      %v2000 = vpop.f32.mrf.mxu0
      %2001 = vmatprep.mubr.bf16.mxu0 0
      %2002 = vmatmul.mubr.bf16.gmra.mxu0 %v1852
      %v2003 = vpop.f32.mrf.mxu0
      %v2004 = vadd.f32 0.0, %v2003
      %v2005 = vpop.f32.mrf.mxu0
      %v2006 = vpop.f32.mrf.mxu0
      %v2007 = vadd.f32 0.0, %v2006
      %v2008 = vpop.f32.mrf.mxu0
      %2009 = vmatprep.mubr.bf16.mxu0 0
      %2010 = vmatmul.mubr.bf16.gmra.mxu0 %v1855
      %v2011 = vpop.f32.mrf.mxu0
      %v2012 = vadd.f32 0.0, %v2011
      %v2013 = vpop.f32.mrf.mxu0
      %v2014 = vpop.f32.mrf.mxu0
      %v2015 = vadd.f32 0.0, %v2014
      %v2016 = vpop.f32.mrf.mxu0
      %2017 = vdwg.mxu0
      %v2018 = vadd.f32 %v1655, %v1892
      %v2019 = vadd.f32 %v1656, %v1895
      %v2020 = vadd.f32 %v1657, %v1900
      %v2021 = vadd.f32 %v1658, %v1903
      %v2022 = vadd.f32 %v1659, %v1908
      %v2023 = vadd.f32 %v1660, %v1911
      %v2024 = vadd.f32 %v1661, %v1916
      %v2025 = vadd.f32 %v1662, %v1919
      %v2026 = vadd.f32 %v1663, %v1924
      %v2027 = vadd.f32 %v1664, %v1927
      %v2028 = vadd.f32 %v1665, %v1932
      %v2029 = vadd.f32 %v1666, %v1935
      %v2030 = vadd.f32 %v1667, %v1940
      %v2031 = vadd.f32 %v1668, %v1943
      %v2032 = vadd.f32 %v1669, %v1948
      %v2033 = vadd.f32 %v1670, %v1951
      %v2034 = vadd.f32 %v1671, %v1956
      %v2035 = vadd.f32 %v1672, %v1959
      %v2036 = vadd.f32 %v1673, %v1964
      %v2037 = vadd.f32 %v1674, %v1967
      %v2038 = vadd.f32 %v1675, %v1972
      %v2039 = vadd.f32 %v1676, %v1975
      %v2040 = vadd.f32 %v1677, %v1980
      %v2041 = vadd.f32 %v1678, %v1983
      %v2042 = vadd.f32 %v1679, %v1988
      %v2043 = vadd.f32 %v1680, %v1991
      %v2044 = vadd.f32 %v1681, %v1996
      %v2045 = vadd.f32 %v1682, %v1999
      %v2046 = vadd.f32 %v1683, %v2004
      %v2047 = vadd.f32 %v1684, %v2007
      %v2048 = vadd.f32 %v1685, %v2012
      %v2049 = vadd.f32 %v1686, %v2015
      %v2050 = vld [vmem:[%s1687] sm:$0xf]
      %v2051 = vld [vmem:[%s1687 + $0x4] sm:$0xf]
      %v2052 = vld [vmem:[%s1687 + $0x8] sm:$0x1]
      %v2053 = vld [vmem:[%s1687 + $0xc] sm:$0xf]
      %v2054 = vld [vmem:[%s1687 + $0x10] sm:$0xf]
      %v2055 = vld [vmem:[%s1687 + $0x14] sm:$0x1]
      %v2056 = vld [vmem:[%s1687 + $0x18] sm:$0xf]
      %v2057 = vld [vmem:[%s1687 + $0x1c] sm:$0xf]
      %v2058 = vld [vmem:[%s1687 + $0x20] sm:$0x1]
      %v2059 = vld [vmem:[%s1687 + $0x24] sm:$0xf]
      %v2060 = vld [vmem:[%s1687 + $0x28] sm:$0xf]
      %v2061 = vld [vmem:[%s1687 + $0x2c] sm:$0x1]
      %v2062 = vld [vmem:[%s1687 + $0x30] sm:$0xf]
      %v2063 = vld [vmem:[%s1687 + $0x34] sm:$0xf]
      %v2064 = vld [vmem:[%s1687 + $0x38] sm:$0x1]
      %v2065 = vld [vmem:[%s1687 + $0x3c] sm:$0xf]
      %v2066 = vld [vmem:[%s1687 + $0x40] sm:$0xf]
      %v2067 = vld [vmem:[%s1687 + $0x44] sm:$0x1]
      %v2068 = vld [vmem:[%s1687 + $0x48] sm:$0xf]
      %v2069 = vld [vmem:[%s1687 + $0x4c] sm:$0xf]
      %v2070 = vld [vmem:[%s1687 + $0x50] sm:$0x1]
      %v2071 = vld [vmem:[%s1687 + $0x54] sm:$0xf]
      %v2072 = vld [vmem:[%s1687 + $0x58] sm:$0xf]
      %v2073 = vld [vmem:[%s1687 + $0x5c] sm:$0x1]
      %v2074 = vld [vmem:[%s1687 + $0x60] sm:$0xf]
      %v2075 = vld [vmem:[%s1687 + $0x64] sm:$0xf]
      %v2076 = vld [vmem:[%s1687 + $0x68] sm:$0x1]
      %v2077 = vld [vmem:[%s1687 + $0x6c] sm:$0xf]
      %v2078 = vld [vmem:[%s1687 + $0x70] sm:$0xf]
      %v2079 = vld [vmem:[%s1687 + $0x74] sm:$0x1]
      %v2080 = vld [vmem:[%s1687 + $0x78] sm:$0xf]
      %v2081 = vld [vmem:[%s1687 + $0x7c] sm:$0xf]
      %v2082 = vld [vmem:[%s1687 + $0x80] sm:$0x1]
      %v2083 = vld [vmem:[%s1687 + $0x84] sm:$0xf]
      %v2084 = vld [vmem:[%s1687 + $0x88] sm:$0xf]
      %v2085 = vld [vmem:[%s1687 + $0x8c] sm:$0x1]
      %v2086 = vld [vmem:[%s1687 + $0x90] sm:$0xf]
      %v2087 = vld [vmem:[%s1687 + $0x94] sm:$0xf]
      %v2088 = vld [vmem:[%s1687 + $0x98] sm:$0x1]
      %v2089 = vld [vmem:[%s1687 + $0x9c] sm:$0xf]
      %v2090 = vld [vmem:[%s1687 + $0xa0] sm:$0xf]
      %v2091 = vld [vmem:[%s1687 + $0xa4] sm:$0x1]
      %v2092 = vld [vmem:[%s1687 + $0xa8] sm:$0xf]
      %v2093 = vld [vmem:[%s1687 + $0xac] sm:$0xf]
      %v2094 = vld [vmem:[%s1687 + $0xb0] sm:$0x1]
      %v2095 = vld [vmem:[%s1687 + $0xb4] sm:$0xf]
      %v2096 = vld [vmem:[%s1687 + $0xb8] sm:$0xf]
      %v2097 = vld [vmem:[%s1687 + $0xbc] sm:$0x1]
      %v2099 = vshrl.u32 %v2050, 16
      %v2101 = vrot.slane %v2099, 4
      %v2102 = vshll.u32 %v2050, 16
      %v2104 = vrot.slane %v2102, 5
      %v2105 = vor.u32 %v2101, %v2104
      %v2106 = vrot.slane %v2105, 4
      %v2108 = vshll.u32 %v2051, 16
      %v2110 = vrot.slane %v2108, 5
      %v2111 = vsel %vm279, %v2106, %v2110
      %v2112 = vshrl.u32 %v2051, 16
      %v2114 = vrot.slane %v2112, 4
      %v2115 = vor.u32 %v2114, %v2110
      %v2116 = vrot.slane %v2115, 4
      %v2118 = vshll.u32 %v2052, 16
      %v2120 = vrot.slane %v2118, 5
      %v2121 = vsel %vm279, %v2116, %v2120
      %v2123 = vshrl.u32 %v2053, 16
      %v2125 = vrot.slane %v2123, 4
      %v2126 = vshll.u32 %v2053, 16
      %v2128 = vrot.slane %v2126, 5
      %v2129 = vor.u32 %v2125, %v2128
      %v2130 = vrot.slane %v2129, 4
      %v2132 = vshll.u32 %v2054, 16
      %v2134 = vrot.slane %v2132, 5
      %v2135 = vsel %vm279, %v2130, %v2134
      %v2136 = vshrl.u32 %v2054, 16
      %v2138 = vrot.slane %v2136, 4
      %v2139 = vor.u32 %v2138, %v2134
      %v2140 = vrot.slane %v2139, 4
      %v2142 = vshll.u32 %v2055, 16
      %v2144 = vrot.slane %v2142, 5
      %v2145 = vsel %vm279, %v2140, %v2144
      %v2147 = vshrl.u32 %v2056, 16
      %v2149 = vrot.slane %v2147, 4
      %v2150 = vshll.u32 %v2056, 16
      %v2152 = vrot.slane %v2150, 5
      %v2153 = vor.u32 %v2149, %v2152
      %v2154 = vrot.slane %v2153, 4
      %v2156 = vshll.u32 %v2057, 16
      %v2158 = vrot.slane %v2156, 5
      %v2159 = vsel %vm279, %v2154, %v2158
      %v2160 = vshrl.u32 %v2057, 16
      %v2162 = vrot.slane %v2160, 4
      %v2163 = vor.u32 %v2162, %v2158
      %v2164 = vrot.slane %v2163, 4
      %v2166 = vshll.u32 %v2058, 16
      %v2168 = vrot.slane %v2166, 5
      %v2169 = vsel %vm279, %v2164, %v2168
      %v2171 = vshrl.u32 %v2059, 16
      %v2173 = vrot.slane %v2171, 4
      %v2174 = vshll.u32 %v2059, 16
      %v2176 = vrot.slane %v2174, 5
      %v2177 = vor.u32 %v2173, %v2176
      %v2178 = vrot.slane %v2177, 4
      %v2180 = vshll.u32 %v2060, 16
      %v2182 = vrot.slane %v2180, 5
      %v2183 = vsel %vm279, %v2178, %v2182
      %v2184 = vshrl.u32 %v2060, 16
      %v2186 = vrot.slane %v2184, 4
      %v2187 = vor.u32 %v2186, %v2182
      %v2188 = vrot.slane %v2187, 4
      %v2190 = vshll.u32 %v2061, 16
      %v2192 = vrot.slane %v2190, 5
      %v2193 = vsel %vm279, %v2188, %v2192
      %v2195 = vshrl.u32 %v2062, 16
      %v2197 = vrot.slane %v2195, 4
      %v2198 = vshll.u32 %v2062, 16
      %v2200 = vrot.slane %v2198, 5
      %v2201 = vor.u32 %v2197, %v2200
      %v2202 = vrot.slane %v2201, 4
      %v2204 = vshll.u32 %v2063, 16
      %v2206 = vrot.slane %v2204, 5
      %v2207 = vsel %vm279, %v2202, %v2206
      %v2208 = vshrl.u32 %v2063, 16
      %v2210 = vrot.slane %v2208, 4
      %v2211 = vor.u32 %v2210, %v2206
      %v2212 = vrot.slane %v2211, 4
      %v2214 = vshll.u32 %v2064, 16
      %v2216 = vrot.slane %v2214, 5
      %v2217 = vsel %vm279, %v2212, %v2216
      %v2219 = vshrl.u32 %v2065, 16
      %v2221 = vrot.slane %v2219, 4
      %v2222 = vshll.u32 %v2065, 16
      %v2224 = vrot.slane %v2222, 5
      %v2225 = vor.u32 %v2221, %v2224
      %v2226 = vrot.slane %v2225, 4
      %v2228 = vshll.u32 %v2066, 16
      %v2230 = vrot.slane %v2228, 5
      %v2231 = vsel %vm279, %v2226, %v2230
      %v2232 = vshrl.u32 %v2066, 16
      %v2234 = vrot.slane %v2232, 4
      %v2235 = vor.u32 %v2234, %v2230
      %v2236 = vrot.slane %v2235, 4
      %v2238 = vshll.u32 %v2067, 16
      %v2240 = vrot.slane %v2238, 5
      %v2241 = vsel %vm279, %v2236, %v2240
      %v2243 = vshrl.u32 %v2068, 16
      %v2245 = vrot.slane %v2243, 4
      %v2246 = vshll.u32 %v2068, 16
      %v2248 = vrot.slane %v2246, 5
      %v2249 = vor.u32 %v2245, %v2248
      %v2250 = vrot.slane %v2249, 4
      %v2252 = vshll.u32 %v2069, 16
      %v2254 = vrot.slane %v2252, 5
      %v2255 = vsel %vm279, %v2250, %v2254
      %v2256 = vshrl.u32 %v2069, 16
      %v2258 = vrot.slane %v2256, 4
      %v2259 = vor.u32 %v2258, %v2254
      %v2260 = vrot.slane %v2259, 4
      %v2262 = vshll.u32 %v2070, 16
      %v2264 = vrot.slane %v2262, 5
      %v2265 = vsel %vm279, %v2260, %v2264
      %v2267 = vshrl.u32 %v2071, 16
      %v2269 = vrot.slane %v2267, 4
      %v2270 = vshll.u32 %v2071, 16
      %v2272 = vrot.slane %v2270, 5
      %v2273 = vor.u32 %v2269, %v2272
      %v2274 = vrot.slane %v2273, 4
      %v2276 = vshll.u32 %v2072, 16
      %v2278 = vrot.slane %v2276, 5
      %v2279 = vsel %vm279, %v2274, %v2278
      %v2280 = vshrl.u32 %v2072, 16
      %v2282 = vrot.slane %v2280, 4
      %v2283 = vor.u32 %v2282, %v2278
      %v2284 = vrot.slane %v2283, 4
      %v2286 = vshll.u32 %v2073, 16
      %v2288 = vrot.slane %v2286, 5
      %v2289 = vsel %vm279, %v2284, %v2288
      %v2291 = vshrl.u32 %v2074, 16
      %v2293 = vrot.slane %v2291, 4
      %v2294 = vshll.u32 %v2074, 16
      %v2296 = vrot.slane %v2294, 5
      %v2297 = vor.u32 %v2293, %v2296
      %v2298 = vrot.slane %v2297, 4
      %v2300 = vshll.u32 %v2075, 16
      %v2302 = vrot.slane %v2300, 5
      %v2303 = vsel %vm279, %v2298, %v2302
      %v2304 = vshrl.u32 %v2075, 16
      %v2306 = vrot.slane %v2304, 4
      %v2307 = vor.u32 %v2306, %v2302
      %v2308 = vrot.slane %v2307, 4
      %v2310 = vshll.u32 %v2076, 16
      %v2312 = vrot.slane %v2310, 5
      %v2313 = vsel %vm279, %v2308, %v2312
      %v2315 = vshrl.u32 %v2077, 16
      %v2317 = vrot.slane %v2315, 4
      %v2318 = vshll.u32 %v2077, 16
      %v2320 = vrot.slane %v2318, 5
      %v2321 = vor.u32 %v2317, %v2320
      %v2322 = vrot.slane %v2321, 4
      %v2324 = vshll.u32 %v2078, 16
      %v2326 = vrot.slane %v2324, 5
      %v2327 = vsel %vm279, %v2322, %v2326
      %v2328 = vshrl.u32 %v2078, 16
      %v2330 = vrot.slane %v2328, 4
      %v2331 = vor.u32 %v2330, %v2326
      %v2332 = vrot.slane %v2331, 4
      %v2334 = vshll.u32 %v2079, 16
      %v2336 = vrot.slane %v2334, 5
      %v2337 = vsel %vm279, %v2332, %v2336
      %v2339 = vshrl.u32 %v2080, 16
      %v2341 = vrot.slane %v2339, 4
      %v2342 = vshll.u32 %v2080, 16
      %v2344 = vrot.slane %v2342, 5
      %v2345 = vor.u32 %v2341, %v2344
      %v2346 = vrot.slane %v2345, 4
      %v2348 = vshll.u32 %v2081, 16
      %v2350 = vrot.slane %v2348, 5
      %v2351 = vsel %vm279, %v2346, %v2350
      %v2352 = vshrl.u32 %v2081, 16
      %v2354 = vrot.slane %v2352, 4
      %v2355 = vor.u32 %v2354, %v2350
      %v2356 = vrot.slane %v2355, 4
      %v2358 = vshll.u32 %v2082, 16
      %v2360 = vrot.slane %v2358, 5
      %v2361 = vsel %vm279, %v2356, %v2360
      %v2363 = vshrl.u32 %v2083, 16
      %v2365 = vrot.slane %v2363, 4
      %v2366 = vshll.u32 %v2083, 16
      %v2368 = vrot.slane %v2366, 5
      %v2369 = vor.u32 %v2365, %v2368
      %v2370 = vrot.slane %v2369, 4
      %v2372 = vshll.u32 %v2084, 16
      %v2374 = vrot.slane %v2372, 5
      %v2375 = vsel %vm279, %v2370, %v2374
      %v2376 = vshrl.u32 %v2084, 16
      %v2378 = vrot.slane %v2376, 4
      %v2379 = vor.u32 %v2378, %v2374
      %v2380 = vrot.slane %v2379, 4
      %v2382 = vshll.u32 %v2085, 16
      %v2384 = vrot.slane %v2382, 5
      %v2385 = vsel %vm279, %v2380, %v2384
      %v2387 = vshrl.u32 %v2086, 16
      %v2389 = vrot.slane %v2387, 4
      %v2390 = vshll.u32 %v2086, 16
      %v2392 = vrot.slane %v2390, 5
      %v2393 = vor.u32 %v2389, %v2392
      %v2394 = vrot.slane %v2393, 4
      %v2396 = vshll.u32 %v2087, 16
      %v2398 = vrot.slane %v2396, 5
      %v2399 = vsel %vm279, %v2394, %v2398
      %v2400 = vshrl.u32 %v2087, 16
      %v2402 = vrot.slane %v2400, 4
      %v2403 = vor.u32 %v2402, %v2398
      %v2404 = vrot.slane %v2403, 4
      %v2406 = vshll.u32 %v2088, 16
      %v2408 = vrot.slane %v2406, 5
      %v2409 = vsel %vm279, %v2404, %v2408
      %v2411 = vshrl.u32 %v2089, 16
      %v2413 = vrot.slane %v2411, 4
      %v2414 = vshll.u32 %v2089, 16
      %v2416 = vrot.slane %v2414, 5
      %v2417 = vor.u32 %v2413, %v2416
      %v2418 = vrot.slane %v2417, 4
      %v2420 = vshll.u32 %v2090, 16
      %v2422 = vrot.slane %v2420, 5
      %v2423 = vsel %vm279, %v2418, %v2422
      %v2424 = vshrl.u32 %v2090, 16
      %v2426 = vrot.slane %v2424, 4
      %v2427 = vor.u32 %v2426, %v2422
      %v2428 = vrot.slane %v2427, 4
      %v2430 = vshll.u32 %v2091, 16
      %v2432 = vrot.slane %v2430, 5
      %v2433 = vsel %vm279, %v2428, %v2432
      %v2435 = vshrl.u32 %v2092, 16
      %v2437 = vrot.slane %v2435, 4
      %v2438 = vshll.u32 %v2092, 16
      %v2440 = vrot.slane %v2438, 5
      %v2441 = vor.u32 %v2437, %v2440
      %v2442 = vrot.slane %v2441, 4
      %v2444 = vshll.u32 %v2093, 16
      %v2446 = vrot.slane %v2444, 5
      %v2447 = vsel %vm279, %v2442, %v2446
      %v2448 = vshrl.u32 %v2093, 16
      %v2450 = vrot.slane %v2448, 4
      %v2451 = vor.u32 %v2450, %v2446
      %v2452 = vrot.slane %v2451, 4
      %v2454 = vshll.u32 %v2094, 16
      %v2456 = vrot.slane %v2454, 5
      %v2457 = vsel %vm279, %v2452, %v2456
      %v2459 = vshrl.u32 %v2095, 16
      %v2461 = vrot.slane %v2459, 4
      %v2462 = vshll.u32 %v2095, 16
      %v2464 = vrot.slane %v2462, 5
      %v2465 = vor.u32 %v2461, %v2464
      %v2466 = vrot.slane %v2465, 4
      %v2468 = vshll.u32 %v2096, 16
      %v2470 = vrot.slane %v2468, 5
      %v2471 = vsel %vm279, %v2466, %v2470
      %v2472 = vshrl.u32 %v2096, 16
      %v2474 = vrot.slane %v2472, 4
      %v2475 = vor.u32 %v2474, %v2470
      %v2476 = vrot.slane %v2475, 4
      %v2478 = vshll.u32 %v2097, 16
      %v2480 = vrot.slane %v2478, 5
      %v2481 = vsel %vm279, %v2476, %v2480
      %s2482 = scalar_lea.vmem %s1, 32
      %v2483 = vld [vmem:[%s2482] sm:$0xf]
      %v2484 = vld [vmem:[%s2482 + $0x4] sm:$0xf]
      %v2485 = vunpack.c.l.b16 %v2111
      %v2486 = vunpack.c.l.b16 %v2121
      %v2487 = vunpack.c.l.b16 %v2135
      %v2488 = vunpack.c.l.b16 %v2145
      %v2489 = vunpack.c.l.b16 %v2159
      %v2490 = vunpack.c.l.b16 %v2169
      %v2491 = vunpack.c.l.b16 %v2183
      %v2492 = vunpack.c.l.b16 %v2193
      %v2493 = vunpack.c.l.b16 %v2207
      %v2494 = vunpack.c.l.b16 %v2217
      %v2495 = vunpack.c.l.b16 %v2231
      %v2496 = vunpack.c.l.b16 %v2241
      %v2497 = vunpack.c.l.b16 %v2255
      %v2498 = vunpack.c.l.b16 %v2265
      %v2499 = vunpack.c.l.b16 %v2279
      %v2500 = vunpack.c.l.b16 %v2289
      %v2501 = vunpack.c.l.b16 %v2303
      %v2502 = vunpack.c.l.b16 %v2313
      %v2503 = vunpack.c.l.b16 %v2327
      %v2504 = vunpack.c.l.b16 %v2337
      %v2505 = vunpack.c.l.b16 %v2351
      %v2506 = vunpack.c.l.b16 %v2361
      %v2507 = vunpack.c.l.b16 %v2375
      %v2508 = vunpack.c.l.b16 %v2385
      %v2509 = vunpack.c.l.b16 %v2399
      %v2510 = vunpack.c.l.b16 %v2409
      %v2511 = vunpack.c.l.b16 %v2423
      %v2512 = vunpack.c.l.b16 %v2433
      %v2513 = vunpack.c.l.b16 %v2447
      %v2514 = vunpack.c.l.b16 %v2457
      %v2515 = vunpack.c.l.b16 %v2471
      %v2516 = vunpack.c.l.b16 %v2481
      %v2517 = vpack.c.b16 %v2486, %v2485
      %v2518 = vpack.c.b16 %v2488, %v2487
      %v2519 = vpack.c.b16 %v2490, %v2489
      %v2520 = vpack.c.b16 %v2492, %v2491
      %v2521 = vpack.c.b16 %v2494, %v2493
      %v2522 = vpack.c.b16 %v2496, %v2495
      %v2523 = vpack.c.b16 %v2498, %v2497
      %v2524 = vpack.c.b16 %v2500, %v2499
      %v2525 = vpack.c.b16 %v2502, %v2501
      %v2526 = vpack.c.b16 %v2504, %v2503
      %v2527 = vpack.c.b16 %v2506, %v2505
      %v2528 = vpack.c.b16 %v2508, %v2507
      %v2529 = vpack.c.b16 %v2510, %v2509
      %v2530 = vpack.c.b16 %v2512, %v2511
      %v2531 = vpack.c.b16 %v2514, %v2513
      %v2532 = vpack.c.b16 %v2516, %v2515
      %v2535 = vunpack.c.l.b16 %v2483
      %v2536 = vunpack.c.l.b16 %v2484
      %v2537 = vpack.c.b16 %v2536, %v2535
      %v2540 = vsel %vm721, %v2517, 0
      %v2543 = vsel %vm721, %v2518, 0
      %v2546 = vsel %vm721, %v2519, 0
      %v2549 = vsel %vm721, %v2520, 0
      %v2552 = vsel %vm721, %v2521, 0
      %v2555 = vsel %vm721, %v2522, 0
      %v2558 = vsel %vm721, %v2523, 0
      %v2561 = vsel %vm721, %v2524, 0
      %v2564 = vsel %vm721, %v2525, 0
      %v2567 = vsel %vm721, %v2526, 0
      %v2570 = vsel %vm721, %v2527, 0
      %v2573 = vsel %vm721, %v2528, 0
      %v2576 = vsel %vm721, %v2529, 0
      %v2579 = vsel %vm721, %v2530, 0
      %v2582 = vsel %vm721, %v2531, 0
      %v2585 = vsel %vm721, %v2532, 0
      %2587 = vmatprep.subr.bf16.mxu0 0
      %2588 = vmatpush1.bf16.msra.mxu0 0
      %2589 = vmatprep.subr.bf16.mxu0 0
      %2590 = vmatpush1.bf16.msra.mxu0 0
      %2591 = vmatprep.subr.bf16.mxu0 0
      %2592 = vmatpush1.bf16.msra.mxu0 0
      %2593 = vmatprep.subr.bf16.mxu0 0
      %2594 = vmatpush1.bf16.msra.mxu0 0
      %2595 = vmatprep.subr.bf16.mxu0 0
      %2596 = vmatpush1.bf16.msra.mxu0 0
      %2597 = vmatprep.subr.bf16.mxu0 0
      %2598 = vmatpush1.bf16.msra.mxu0 0
      %2599 = vmatprep.subr.bf16.mxu0 0
      %2600 = vmatpush1.bf16.msra.mxu0 0
      %2601 = vmatprep.subr.bf16.mxu0 0
      %2602 = vmatpush1.bf16.msra.mxu0 %v2537
      %2603 = vmatprep.subr.bf16.mxu0 0
      %2604 = vmatpush2.bf16.msra.mxu0 0
      %2605 = vmatprep.subr.bf16.mxu0 0
      %2606 = vmatpush2.bf16.msra.mxu0 0
      %2607 = vmatprep.subr.bf16.mxu0 0
      %2608 = vmatpush2.bf16.msra.mxu0 0
      %2609 = vmatprep.subr.bf16.mxu0 0
      %2610 = vmatpush2.bf16.msra.mxu0 0
      %2611 = vmatprep.subr.bf16.mxu0 0
      %2612 = vmatpush2.bf16.msra.mxu0 0
      %2613 = vmatprep.subr.bf16.mxu0 0
      %2614 = vmatpush2.bf16.msra.mxu0 0
      %2615 = vmatprep.subr.bf16.mxu0 0
      %2616 = vmatpush2.bf16.msra.mxu0 0
      %2617 = vmatprep.subr.bf16.mxu0 0
      %2618 = vmatpush2.bf16.msra.mxu0 0
      %2619 = vmatprep.mubr.bf16.mxu0 0
      %2620 = vmatmul.mubr.bf16.gmra.mxu0 %v2540
      %v2621 = vpop.f32.mrf.mxu0
      %v2622 = vadd.f32 0.0, %v2621
      %v2623 = vpop.f32.mrf.mxu0
      %v2624 = vpop.f32.mrf.mxu0
      %v2625 = vadd.f32 0.0, %v2624
      %v2626 = vpop.f32.mrf.mxu0
      %2627 = vmatprep.mubr.bf16.mxu0 0
      %2628 = vmatmul.mubr.bf16.gmra.mxu0 %v2543
      %v2629 = vpop.f32.mrf.mxu0
      %v2630 = vadd.f32 0.0, %v2629
      %v2631 = vpop.f32.mrf.mxu0
      %v2632 = vpop.f32.mrf.mxu0
      %v2633 = vadd.f32 0.0, %v2632
      %v2634 = vpop.f32.mrf.mxu0
      %2635 = vmatprep.mubr.bf16.mxu0 0
      %2636 = vmatmul.mubr.bf16.gmra.mxu0 %v2546
      %v2637 = vpop.f32.mrf.mxu0
      %v2638 = vadd.f32 0.0, %v2637
      %v2639 = vpop.f32.mrf.mxu0
      %v2640 = vpop.f32.mrf.mxu0
      %v2641 = vadd.f32 0.0, %v2640
      %v2642 = vpop.f32.mrf.mxu0
      %2643 = vmatprep.mubr.bf16.mxu0 0
      %2644 = vmatmul.mubr.bf16.gmra.mxu0 %v2549
      %v2645 = vpop.f32.mrf.mxu0
      %v2646 = vadd.f32 0.0, %v2645
      %v2647 = vpop.f32.mrf.mxu0
      %v2648 = vpop.f32.mrf.mxu0
      %v2649 = vadd.f32 0.0, %v2648
      %v2650 = vpop.f32.mrf.mxu0
      %2651 = vmatprep.mubr.bf16.mxu0 0
      %2652 = vmatmul.mubr.bf16.gmra.mxu0 %v2552
      %v2653 = vpop.f32.mrf.mxu0
      %v2654 = vadd.f32 0.0, %v2653
      %v2655 = vpop.f32.mrf.mxu0
      %v2656 = vpop.f32.mrf.mxu0
      %v2657 = vadd.f32 0.0, %v2656
      %v2658 = vpop.f32.mrf.mxu0
      %2659 = vmatprep.mubr.bf16.mxu0 0
      %2660 = vmatmul.mubr.bf16.gmra.mxu0 %v2555
      %v2661 = vpop.f32.mrf.mxu0
      %v2662 = vadd.f32 0.0, %v2661
      %v2663 = vpop.f32.mrf.mxu0
      %v2664 = vpop.f32.mrf.mxu0
      %v2665 = vadd.f32 0.0, %v2664
      %v2666 = vpop.f32.mrf.mxu0
      %2667 = vmatprep.mubr.bf16.mxu0 0
      %2668 = vmatmul.mubr.bf16.gmra.mxu0 %v2558
      %v2669 = vpop.f32.mrf.mxu0
      %v2670 = vadd.f32 0.0, %v2669
      %v2671 = vpop.f32.mrf.mxu0
      %v2672 = vpop.f32.mrf.mxu0
      %v2673 = vadd.f32 0.0, %v2672
      %v2674 = vpop.f32.mrf.mxu0
      %2675 = vmatprep.mubr.bf16.mxu0 0
      %2676 = vmatmul.mubr.bf16.gmra.mxu0 %v2561
      %v2677 = vpop.f32.mrf.mxu0
      %v2678 = vadd.f32 0.0, %v2677
      %v2679 = vpop.f32.mrf.mxu0
      %v2680 = vpop.f32.mrf.mxu0
      %v2681 = vadd.f32 0.0, %v2680
      %v2682 = vpop.f32.mrf.mxu0
      %2683 = vmatprep.mubr.bf16.mxu0 0
      %2684 = vmatmul.mubr.bf16.gmra.mxu0 %v2564
      %v2685 = vpop.f32.mrf.mxu0
      %v2686 = vadd.f32 0.0, %v2685
      %v2687 = vpop.f32.mrf.mxu0
      %v2688 = vpop.f32.mrf.mxu0
      %v2689 = vadd.f32 0.0, %v2688
      %v2690 = vpop.f32.mrf.mxu0
      %2691 = vmatprep.mubr.bf16.mxu0 0
      %2692 = vmatmul.mubr.bf16.gmra.mxu0 %v2567
      %v2693 = vpop.f32.mrf.mxu0
      %v2694 = vadd.f32 0.0, %v2693
      %v2695 = vpop.f32.mrf.mxu0
      %v2696 = vpop.f32.mrf.mxu0
      %v2697 = vadd.f32 0.0, %v2696
      %v2698 = vpop.f32.mrf.mxu0
      %2699 = vmatprep.mubr.bf16.mxu0 0
      %2700 = vmatmul.mubr.bf16.gmra.mxu0 %v2570
      %v2701 = vpop.f32.mrf.mxu0
      %v2702 = vadd.f32 0.0, %v2701
      %v2703 = vpop.f32.mrf.mxu0
      %v2704 = vpop.f32.mrf.mxu0
      %v2705 = vadd.f32 0.0, %v2704
      %v2706 = vpop.f32.mrf.mxu0
      %2707 = vmatprep.mubr.bf16.mxu0 0
      %2708 = vmatmul.mubr.bf16.gmra.mxu0 %v2573
      %v2709 = vpop.f32.mrf.mxu0
      %v2710 = vadd.f32 0.0, %v2709
      %v2711 = vpop.f32.mrf.mxu0
      %v2712 = vpop.f32.mrf.mxu0
      %v2713 = vadd.f32 0.0, %v2712
      %v2714 = vpop.f32.mrf.mxu0
      %2715 = vmatprep.mubr.bf16.mxu0 0
      %2716 = vmatmul.mubr.bf16.gmra.mxu0 %v2576
      %v2717 = vpop.f32.mrf.mxu0
      %v2718 = vadd.f32 0.0, %v2717
      %v2719 = vpop.f32.mrf.mxu0
      %v2720 = vpop.f32.mrf.mxu0
      %v2721 = vadd.f32 0.0, %v2720
      %v2722 = vpop.f32.mrf.mxu0
      %2723 = vmatprep.mubr.bf16.mxu0 0
      %2724 = vmatmul.mubr.bf16.gmra.mxu0 %v2579
      %v2725 = vpop.f32.mrf.mxu0
      %v2726 = vadd.f32 0.0, %v2725
      %v2727 = vpop.f32.mrf.mxu0
      %v2728 = vpop.f32.mrf.mxu0
      %v2729 = vadd.f32 0.0, %v2728
      %v2730 = vpop.f32.mrf.mxu0
      %2731 = vmatprep.mubr.bf16.mxu0 0
      %2732 = vmatmul.mubr.bf16.gmra.mxu0 %v2582
      %v2733 = vpop.f32.mrf.mxu0
      %v2734 = vadd.f32 0.0, %v2733
      %v2735 = vpop.f32.mrf.mxu0
      %v2736 = vpop.f32.mrf.mxu0
      %v2737 = vadd.f32 0.0, %v2736
      %v2738 = vpop.f32.mrf.mxu0
      %2739 = vmatprep.mubr.bf16.mxu0 0
      %2740 = vmatmul.mubr.bf16.gmra.mxu0 %v2585
      %v2741 = vpop.f32.mrf.mxu0
      %v2742 = vadd.f32 0.0, %v2741
      %v2743 = vpop.f32.mrf.mxu0
      %v2744 = vpop.f32.mrf.mxu0
      %v2745 = vadd.f32 0.0, %v2744
      %v2746 = vpop.f32.mrf.mxu0
      %2747 = vdwg.mxu0
      %v2748 = vadd.f32 %v2018, %v2622
      %v2749 = vadd.f32 %v2019, %v2625
      %v2750 = vadd.f32 %v2020, %v2630
      %v2751 = vadd.f32 %v2021, %v2633
      %v2752 = vadd.f32 %v2022, %v2638
      %v2753 = vadd.f32 %v2023, %v2641
      %v2754 = vadd.f32 %v2024, %v2646
      %v2755 = vadd.f32 %v2025, %v2649
      %v2756 = vadd.f32 %v2026, %v2654
      %v2757 = vadd.f32 %v2027, %v2657
      %v2758 = vadd.f32 %v2028, %v2662
      %v2759 = vadd.f32 %v2029, %v2665
      %v2760 = vadd.f32 %v2030, %v2670
      %v2761 = vadd.f32 %v2031, %v2673
      %v2762 = vadd.f32 %v2032, %v2678
      %v2763 = vadd.f32 %v2033, %v2681
      %v2764 = vadd.f32 %v2034, %v2686
      %v2765 = vadd.f32 %v2035, %v2689
      %v2766 = vadd.f32 %v2036, %v2694
      %v2767 = vadd.f32 %v2037, %v2697
      %v2768 = vadd.f32 %v2038, %v2702
      %v2769 = vadd.f32 %v2039, %v2705
      %v2770 = vadd.f32 %v2040, %v2710
      %v2771 = vadd.f32 %v2041, %v2713
      %v2772 = vadd.f32 %v2042, %v2718
      %v2773 = vadd.f32 %v2043, %v2721
      %v2774 = vadd.f32 %v2044, %v2726
      %v2775 = vadd.f32 %v2045, %v2729
      %v2776 = vadd.f32 %v2046, %v2734
      %v2777 = vadd.f32 %v2047, %v2737
      %v2778 = vadd.f32 %v2048, %v2742
      %v2779 = vadd.f32 %v2049, %v2745
      %v2780 = vld [vmem:[%s1687] sm:$0xe]
      %v2781 = vld [vmem:[%s1687 + $0xc] sm:$0xe]
      %v2782 = vld [vmem:[%s1687 + $0x18] sm:$0xe]
      %v2783 = vld [vmem:[%s1687 + $0x24] sm:$0xe]
      %v2784 = vld [vmem:[%s1687 + $0x30] sm:$0xe]
      %v2785 = vld [vmem:[%s1687 + $0x3c] sm:$0xe]
      %v2786 = vld [vmem:[%s1687 + $0x48] sm:$0xe]
      %v2787 = vld [vmem:[%s1687 + $0x54] sm:$0xe]
      %v2788 = vld [vmem:[%s1687 + $0x60] sm:$0xe]
      %v2789 = vld [vmem:[%s1687 + $0x6c] sm:$0xe]
      %v2790 = vld [vmem:[%s1687 + $0x78] sm:$0xe]
      %v2791 = vld [vmem:[%s1687 + $0x84] sm:$0xe]
      %v2792 = vld [vmem:[%s1687 + $0x90] sm:$0xe]
      %v2793 = vld [vmem:[%s1687 + $0x9c] sm:$0xe]
      %v2794 = vld [vmem:[%s1687 + $0xa8] sm:$0xe]
      %v2795 = vld [vmem:[%s1687 + $0xb4] sm:$0xe]
      %v2844 = vrot.slane %v2780, 5
      %v2845 = vrot.slane %v2844, 4
      %v2846 = vrot.slane %v2051, 5
      %v2847 = vsel %vm1276, %v2845, %v2846
      %v2848 = vrot.slane %v2846, 4
      %v2849 = vrot.slane %v2052, 5
      %v2850 = vsel %vm1276, %v2848, %v2849
      %v2851 = vrot.slane %v2781, 5
      %v2852 = vrot.slane %v2851, 4
      %v2853 = vrot.slane %v2054, 5
      %v2854 = vsel %vm1276, %v2852, %v2853
      %v2855 = vrot.slane %v2853, 4
      %v2856 = vrot.slane %v2055, 5
      %v2857 = vsel %vm1276, %v2855, %v2856
      %v2858 = vrot.slane %v2782, 5
      %v2859 = vrot.slane %v2858, 4
      %v2860 = vrot.slane %v2057, 5
      %v2861 = vsel %vm1276, %v2859, %v2860
      %v2862 = vrot.slane %v2860, 4
      %v2863 = vrot.slane %v2058, 5
      %v2864 = vsel %vm1276, %v2862, %v2863
      %v2865 = vrot.slane %v2783, 5
      %v2866 = vrot.slane %v2865, 4
      %v2867 = vrot.slane %v2060, 5
      %v2868 = vsel %vm1276, %v2866, %v2867
      %v2869 = vrot.slane %v2867, 4
      %v2870 = vrot.slane %v2061, 5
      %v2871 = vsel %vm1276, %v2869, %v2870
      %v2872 = vrot.slane %v2784, 5
      %v2873 = vrot.slane %v2872, 4
      %v2874 = vrot.slane %v2063, 5
      %v2875 = vsel %vm1276, %v2873, %v2874
      %v2876 = vrot.slane %v2874, 4
      %v2877 = vrot.slane %v2064, 5
      %v2878 = vsel %vm1276, %v2876, %v2877
      %v2879 = vrot.slane %v2785, 5
      %v2880 = vrot.slane %v2879, 4
      %v2881 = vrot.slane %v2066, 5
      %v2882 = vsel %vm1276, %v2880, %v2881
      %v2883 = vrot.slane %v2881, 4
      %v2884 = vrot.slane %v2067, 5
      %v2885 = vsel %vm1276, %v2883, %v2884
      %v2886 = vrot.slane %v2786, 5
      %v2887 = vrot.slane %v2886, 4
      %v2888 = vrot.slane %v2069, 5
      %v2889 = vsel %vm1276, %v2887, %v2888
      %v2890 = vrot.slane %v2888, 4
      %v2891 = vrot.slane %v2070, 5
      %v2892 = vsel %vm1276, %v2890, %v2891
      %v2893 = vrot.slane %v2787, 5
      %v2894 = vrot.slane %v2893, 4
      %v2895 = vrot.slane %v2072, 5
      %v2896 = vsel %vm1276, %v2894, %v2895
      %v2897 = vrot.slane %v2895, 4
      %v2898 = vrot.slane %v2073, 5
      %v2899 = vsel %vm1276, %v2897, %v2898
      %v2900 = vrot.slane %v2788, 5
      %v2901 = vrot.slane %v2900, 4
      %v2902 = vrot.slane %v2075, 5
      %v2903 = vsel %vm1276, %v2901, %v2902
      %v2904 = vrot.slane %v2902, 4
      %v2905 = vrot.slane %v2076, 5
      %v2906 = vsel %vm1276, %v2904, %v2905
      %v2907 = vrot.slane %v2789, 5
      %v2908 = vrot.slane %v2907, 4
      %v2909 = vrot.slane %v2078, 5
      %v2910 = vsel %vm1276, %v2908, %v2909
      %v2911 = vrot.slane %v2909, 4
      %v2912 = vrot.slane %v2079, 5
      %v2913 = vsel %vm1276, %v2911, %v2912
      %v2914 = vrot.slane %v2790, 5
      %v2915 = vrot.slane %v2914, 4
      %v2916 = vrot.slane %v2081, 5
      %v2917 = vsel %vm1276, %v2915, %v2916
      %v2918 = vrot.slane %v2916, 4
      %v2919 = vrot.slane %v2082, 5
      %v2920 = vsel %vm1276, %v2918, %v2919
      %v2921 = vrot.slane %v2791, 5
      %v2922 = vrot.slane %v2921, 4
      %v2923 = vrot.slane %v2084, 5
      %v2924 = vsel %vm1276, %v2922, %v2923
      %v2925 = vrot.slane %v2923, 4
      %v2926 = vrot.slane %v2085, 5
      %v2927 = vsel %vm1276, %v2925, %v2926
      %v2928 = vrot.slane %v2792, 5
      %v2929 = vrot.slane %v2928, 4
      %v2930 = vrot.slane %v2087, 5
      %v2931 = vsel %vm1276, %v2929, %v2930
      %v2932 = vrot.slane %v2930, 4
      %v2933 = vrot.slane %v2088, 5
      %v2934 = vsel %vm1276, %v2932, %v2933
      %v2935 = vrot.slane %v2793, 5
      %v2936 = vrot.slane %v2935, 4
      %v2937 = vrot.slane %v2090, 5
      %v2938 = vsel %vm1276, %v2936, %v2937
      %v2939 = vrot.slane %v2937, 4
      %v2940 = vrot.slane %v2091, 5
      %v2941 = vsel %vm1276, %v2939, %v2940
      %v2942 = vrot.slane %v2794, 5
      %v2943 = vrot.slane %v2942, 4
      %v2944 = vrot.slane %v2093, 5
      %v2945 = vsel %vm1276, %v2943, %v2944
      %v2946 = vrot.slane %v2944, 4
      %v2947 = vrot.slane %v2094, 5
      %v2948 = vsel %vm1276, %v2946, %v2947
      %v2949 = vrot.slane %v2795, 5
      %v2950 = vrot.slane %v2949, 4
      %v2951 = vrot.slane %v2096, 5
      %v2952 = vsel %vm1276, %v2950, %v2951
      %v2953 = vrot.slane %v2951, 4
      %v2954 = vrot.slane %v2097, 5
      %v2955 = vsel %vm1276, %v2953, %v2954
      %s2956 = scalar_lea.vmem %s1, 40
      %v2957 = vld [vmem:[%s2956] sm:$0xf]
      %v2958 = vld [vmem:[%s2956 + $0x4] sm:$0xf]
      %v2959 = vunpack.c.l.b16 %v2847
      %v2960 = vunpack.c.l.b16 %v2850
      %v2961 = vunpack.c.l.b16 %v2854
      %v2962 = vunpack.c.l.b16 %v2857
      %v2963 = vunpack.c.l.b16 %v2861
      %v2964 = vunpack.c.l.b16 %v2864
      %v2965 = vunpack.c.l.b16 %v2868
      %v2966 = vunpack.c.l.b16 %v2871
      %v2967 = vunpack.c.l.b16 %v2875
      %v2968 = vunpack.c.l.b16 %v2878
      %v2969 = vunpack.c.l.b16 %v2882
      %v2970 = vunpack.c.l.b16 %v2885
      %v2971 = vunpack.c.l.b16 %v2889
      %v2972 = vunpack.c.l.b16 %v2892
      %v2973 = vunpack.c.l.b16 %v2896
      %v2974 = vunpack.c.l.b16 %v2899
      %v2975 = vunpack.c.l.b16 %v2903
      %v2976 = vunpack.c.l.b16 %v2906
      %v2977 = vunpack.c.l.b16 %v2910
      %v2978 = vunpack.c.l.b16 %v2913
      %v2979 = vunpack.c.l.b16 %v2917
      %v2980 = vunpack.c.l.b16 %v2920
      %v2981 = vunpack.c.l.b16 %v2924
      %v2982 = vunpack.c.l.b16 %v2927
      %v2983 = vunpack.c.l.b16 %v2931
      %v2984 = vunpack.c.l.b16 %v2934
      %v2985 = vunpack.c.l.b16 %v2938
      %v2986 = vunpack.c.l.b16 %v2941
      %v2987 = vunpack.c.l.b16 %v2945
      %v2988 = vunpack.c.l.b16 %v2948
      %v2989 = vunpack.c.l.b16 %v2952
      %v2990 = vunpack.c.l.b16 %v2955
      %v2991 = vpack.c.b16 %v2960, %v2959
      %v2992 = vpack.c.b16 %v2962, %v2961
      %v2993 = vpack.c.b16 %v2964, %v2963
      %v2994 = vpack.c.b16 %v2966, %v2965
      %v2995 = vpack.c.b16 %v2968, %v2967
      %v2996 = vpack.c.b16 %v2970, %v2969
      %v2997 = vpack.c.b16 %v2972, %v2971
      %v2998 = vpack.c.b16 %v2974, %v2973
      %v2999 = vpack.c.b16 %v2976, %v2975
      %v3000 = vpack.c.b16 %v2978, %v2977
      %v3001 = vpack.c.b16 %v2980, %v2979
      %v3002 = vpack.c.b16 %v2982, %v2981
      %v3003 = vpack.c.b16 %v2984, %v2983
      %v3004 = vpack.c.b16 %v2986, %v2985
      %v3005 = vpack.c.b16 %v2988, %v2987
      %v3006 = vpack.c.b16 %v2990, %v2989
      %v3009 = vunpack.c.l.b16 %v2957
      %v3010 = vunpack.c.l.b16 %v2958
      %v3011 = vpack.c.b16 %v3010, %v3009
      %v3014 = vsel %vm721, %v2991, 0
      %v3017 = vsel %vm721, %v2992, 0
      %v3020 = vsel %vm721, %v2993, 0
      %v3023 = vsel %vm721, %v2994, 0
      %v3026 = vsel %vm721, %v2995, 0
      %v3029 = vsel %vm721, %v2996, 0
      %v3032 = vsel %vm721, %v2997, 0
      %v3035 = vsel %vm721, %v2998, 0
      %v3038 = vsel %vm721, %v2999, 0
      %v3041 = vsel %vm721, %v3000, 0
      %v3044 = vsel %vm721, %v3001, 0
      %v3047 = vsel %vm721, %v3002, 0
      %v3050 = vsel %vm721, %v3003, 0
      %v3053 = vsel %vm721, %v3004, 0
      %v3056 = vsel %vm721, %v3005, 0
      %v3059 = vsel %vm721, %v3006, 0
      %3061 = vmatprep.subr.bf16.mxu0 0
      %3062 = vmatpush1.bf16.msra.mxu0 0
      %3063 = vmatprep.subr.bf16.mxu0 0
      %3064 = vmatpush1.bf16.msra.mxu0 0
      %3065 = vmatprep.subr.bf16.mxu0 0
      %3066 = vmatpush1.bf16.msra.mxu0 0
      %3067 = vmatprep.subr.bf16.mxu0 0
      %3068 = vmatpush1.bf16.msra.mxu0 0
      %3069 = vmatprep.subr.bf16.mxu0 0
      %3070 = vmatpush1.bf16.msra.mxu0 0
      %3071 = vmatprep.subr.bf16.mxu0 0
      %3072 = vmatpush1.bf16.msra.mxu0 0
      %3073 = vmatprep.subr.bf16.mxu0 0
      %3074 = vmatpush1.bf16.msra.mxu0 0
      %3075 = vmatprep.subr.bf16.mxu0 0
      %3076 = vmatpush1.bf16.msra.mxu0 %v3011
      %3077 = vmatprep.subr.bf16.mxu0 0
      %3078 = vmatpush2.bf16.msra.mxu0 0
      %3079 = vmatprep.subr.bf16.mxu0 0
      %3080 = vmatpush2.bf16.msra.mxu0 0
      %3081 = vmatprep.subr.bf16.mxu0 0
      %3082 = vmatpush2.bf16.msra.mxu0 0
      %3083 = vmatprep.subr.bf16.mxu0 0
      %3084 = vmatpush2.bf16.msra.mxu0 0
      %3085 = vmatprep.subr.bf16.mxu0 0
      %3086 = vmatpush2.bf16.msra.mxu0 0
      %3087 = vmatprep.subr.bf16.mxu0 0
      %3088 = vmatpush2.bf16.msra.mxu0 0
      %3089 = vmatprep.subr.bf16.mxu0 0
      %3090 = vmatpush2.bf16.msra.mxu0 0
      %3091 = vmatprep.subr.bf16.mxu0 0
      %3092 = vmatpush2.bf16.msra.mxu0 0
      %3093 = vmatprep.mubr.bf16.mxu0 0
      %3094 = vmatmul.mubr.bf16.gmra.mxu0 %v3014
      %v3095 = vpop.f32.mrf.mxu0
      %v3096 = vadd.f32 0.0, %v3095
      %v3097 = vpop.f32.mrf.mxu0
      %v3098 = vpop.f32.mrf.mxu0
      %v3099 = vadd.f32 0.0, %v3098
      %v3100 = vpop.f32.mrf.mxu0
      %3101 = vmatprep.mubr.bf16.mxu0 0
      %3102 = vmatmul.mubr.bf16.gmra.mxu0 %v3017
      %v3103 = vpop.f32.mrf.mxu0
      %v3104 = vadd.f32 0.0, %v3103
      %v3105 = vpop.f32.mrf.mxu0
      %v3106 = vpop.f32.mrf.mxu0
      %v3107 = vadd.f32 0.0, %v3106
      %v3108 = vpop.f32.mrf.mxu0
      %3109 = vmatprep.mubr.bf16.mxu0 0
      %3110 = vmatmul.mubr.bf16.gmra.mxu0 %v3020
      %v3111 = vpop.f32.mrf.mxu0
      %v3112 = vadd.f32 0.0, %v3111
      %v3113 = vpop.f32.mrf.mxu0
      %v3114 = vpop.f32.mrf.mxu0
      %v3115 = vadd.f32 0.0, %v3114
      %v3116 = vpop.f32.mrf.mxu0
      %3117 = vmatprep.mubr.bf16.mxu0 0
      %3118 = vmatmul.mubr.bf16.gmra.mxu0 %v3023
      %v3119 = vpop.f32.mrf.mxu0
      %v3120 = vadd.f32 0.0, %v3119
      %v3121 = vpop.f32.mrf.mxu0
      %v3122 = vpop.f32.mrf.mxu0
      %v3123 = vadd.f32 0.0, %v3122
      %v3124 = vpop.f32.mrf.mxu0
      %3125 = vmatprep.mubr.bf16.mxu0 0
      %3126 = vmatmul.mubr.bf16.gmra.mxu0 %v3026
      %v3127 = vpop.f32.mrf.mxu0
      %v3128 = vadd.f32 0.0, %v3127
      %v3129 = vpop.f32.mrf.mxu0
      %v3130 = vpop.f32.mrf.mxu0
      %v3131 = vadd.f32 0.0, %v3130
      %v3132 = vpop.f32.mrf.mxu0
      %3133 = vmatprep.mubr.bf16.mxu0 0
      %3134 = vmatmul.mubr.bf16.gmra.mxu0 %v3029
      %v3135 = vpop.f32.mrf.mxu0
      %v3136 = vadd.f32 0.0, %v3135
      %v3137 = vpop.f32.mrf.mxu0
      %v3138 = vpop.f32.mrf.mxu0
      %v3139 = vadd.f32 0.0, %v3138
      %v3140 = vpop.f32.mrf.mxu0
      %3141 = vmatprep.mubr.bf16.mxu0 0
      %3142 = vmatmul.mubr.bf16.gmra.mxu0 %v3032
      %v3143 = vpop.f32.mrf.mxu0
      %v3144 = vadd.f32 0.0, %v3143
      %v3145 = vpop.f32.mrf.mxu0
      %v3146 = vpop.f32.mrf.mxu0
      %v3147 = vadd.f32 0.0, %v3146
      %v3148 = vpop.f32.mrf.mxu0
      %3149 = vmatprep.mubr.bf16.mxu0 0
      %3150 = vmatmul.mubr.bf16.gmra.mxu0 %v3035
      %v3151 = vpop.f32.mrf.mxu0
      %v3152 = vadd.f32 0.0, %v3151
      %v3153 = vpop.f32.mrf.mxu0
      %v3154 = vpop.f32.mrf.mxu0
      %v3155 = vadd.f32 0.0, %v3154
      %v3156 = vpop.f32.mrf.mxu0
      %3157 = vmatprep.mubr.bf16.mxu0 0
      %3158 = vmatmul.mubr.bf16.gmra.mxu0 %v3038
      %v3159 = vpop.f32.mrf.mxu0
      %v3160 = vadd.f32 0.0, %v3159
      %v3161 = vpop.f32.mrf.mxu0
      %v3162 = vpop.f32.mrf.mxu0
      %v3163 = vadd.f32 0.0, %v3162
      %v3164 = vpop.f32.mrf.mxu0
      %3165 = vmatprep.mubr.bf16.mxu0 0
      %3166 = vmatmul.mubr.bf16.gmra.mxu0 %v3041
      %v3167 = vpop.f32.mrf.mxu0
      %v3168 = vadd.f32 0.0, %v3167
      %v3169 = vpop.f32.mrf.mxu0
      %v3170 = vpop.f32.mrf.mxu0
      %v3171 = vadd.f32 0.0, %v3170
      %v3172 = vpop.f32.mrf.mxu0
      %3173 = vmatprep.mubr.bf16.mxu0 0
      %3174 = vmatmul.mubr.bf16.gmra.mxu0 %v3044
      %v3175 = vpop.f32.mrf.mxu0
      %v3176 = vadd.f32 0.0, %v3175
      %v3177 = vpop.f32.mrf.mxu0
      %v3178 = vpop.f32.mrf.mxu0
      %v3179 = vadd.f32 0.0, %v3178
      %v3180 = vpop.f32.mrf.mxu0
      %3181 = vmatprep.mubr.bf16.mxu0 0
      %3182 = vmatmul.mubr.bf16.gmra.mxu0 %v3047
      %v3183 = vpop.f32.mrf.mxu0
      %v3184 = vadd.f32 0.0, %v3183
      %v3185 = vpop.f32.mrf.mxu0
      %v3186 = vpop.f32.mrf.mxu0
      %v3187 = vadd.f32 0.0, %v3186
      %v3188 = vpop.f32.mrf.mxu0
      %3189 = vmatprep.mubr.bf16.mxu0 0
      %3190 = vmatmul.mubr.bf16.gmra.mxu0 %v3050
      %v3191 = vpop.f32.mrf.mxu0
      %v3192 = vadd.f32 0.0, %v3191
      %v3193 = vpop.f32.mrf.mxu0
      %v3194 = vpop.f32.mrf.mxu0
      %v3195 = vadd.f32 0.0, %v3194
      %v3196 = vpop.f32.mrf.mxu0
      %3197 = vmatprep.mubr.bf16.mxu0 0
      %3198 = vmatmul.mubr.bf16.gmra.mxu0 %v3053
      %v3199 = vpop.f32.mrf.mxu0
      %v3200 = vadd.f32 0.0, %v3199
      %v3201 = vpop.f32.mrf.mxu0
      %v3202 = vpop.f32.mrf.mxu0
      %v3203 = vadd.f32 0.0, %v3202
      %v3204 = vpop.f32.mrf.mxu0
      %3205 = vmatprep.mubr.bf16.mxu0 0
      %3206 = vmatmul.mubr.bf16.gmra.mxu0 %v3056
      %v3207 = vpop.f32.mrf.mxu0
      %v3208 = vadd.f32 0.0, %v3207
      %v3209 = vpop.f32.mrf.mxu0
      %v3210 = vpop.f32.mrf.mxu0
      %v3211 = vadd.f32 0.0, %v3210
      %v3212 = vpop.f32.mrf.mxu0
      %3213 = vmatprep.mubr.bf16.mxu0 0
      %3214 = vmatmul.mubr.bf16.gmra.mxu0 %v3059
      %v3215 = vpop.f32.mrf.mxu0
      %v3216 = vadd.f32 0.0, %v3215
      %v3217 = vpop.f32.mrf.mxu0
      %v3218 = vpop.f32.mrf.mxu0
      %v3219 = vadd.f32 0.0, %v3218
      %v3220 = vpop.f32.mrf.mxu0
      %3221 = vdwg.mxu0
      %v3222 = vadd.f32 %v2748, %v3096
      %v3223 = vadd.f32 %v2749, %v3099
      %v3224 = vadd.f32 %v2750, %v3104
      %v3225 = vadd.f32 %v2751, %v3107
      %v3226 = vadd.f32 %v2752, %v3112
      %v3227 = vadd.f32 %v2753, %v3115
      %v3228 = vadd.f32 %v2754, %v3120
      %v3229 = vadd.f32 %v2755, %v3123
      %v3230 = vadd.f32 %v2756, %v3128
      %v3231 = vadd.f32 %v2757, %v3131
      %v3232 = vadd.f32 %v2758, %v3136
      %v3233 = vadd.f32 %v2759, %v3139
      %v3234 = vadd.f32 %v2760, %v3144
      %v3235 = vadd.f32 %v2761, %v3147
      %v3236 = vadd.f32 %v2762, %v3152
      %v3237 = vadd.f32 %v2763, %v3155
      %v3238 = vadd.f32 %v2764, %v3160
      %v3239 = vadd.f32 %v2765, %v3163
      %v3240 = vadd.f32 %v2766, %v3168
      %v3241 = vadd.f32 %v2767, %v3171
      %v3242 = vadd.f32 %v2768, %v3176
      %v3243 = vadd.f32 %v2769, %v3179
      %v3244 = vadd.f32 %v2770, %v3184
      %v3245 = vadd.f32 %v2771, %v3187
      %v3246 = vadd.f32 %v2772, %v3192
      %v3247 = vadd.f32 %v2773, %v3195
      %v3248 = vadd.f32 %v2774, %v3200
      %v3249 = vadd.f32 %v2775, %v3203
      %v3250 = vadd.f32 %v2776, %v3208
      %v3251 = vadd.f32 %v2777, %v3211
      %v3252 = vadd.f32 %v2778, %v3216
      %v3253 = vadd.f32 %v2779, %v3219
      %s3254 = scalar_lea.vmem %s219, 24
      %v3255 = vld [vmem:[%s3254] sm:$0xf]
      %v3256 = vld [vmem:[%s3254 + $0x4] sm:$0xf]
      %v3257 = vld [vmem:[%s3254 + $0xc] sm:$0xf]
      %v3258 = vld [vmem:[%s3254 + $0x10] sm:$0xf]
      %v3259 = vld [vmem:[%s3254 + $0x18] sm:$0xf]
      %v3260 = vld [vmem:[%s3254 + $0x1c] sm:$0xf]
      %v3261 = vld [vmem:[%s3254 + $0x24] sm:$0xf]
      %v3262 = vld [vmem:[%s3254 + $0x28] sm:$0xf]
      %v3263 = vld [vmem:[%s3254 + $0x30] sm:$0xf]
      %v3264 = vld [vmem:[%s3254 + $0x34] sm:$0xf]
      %v3265 = vld [vmem:[%s3254 + $0x3c] sm:$0xf]
      %v3266 = vld [vmem:[%s3254 + $0x40] sm:$0xf]
      %v3267 = vld [vmem:[%s3254 + $0x48] sm:$0xf]
      %v3268 = vld [vmem:[%s3254 + $0x4c] sm:$0xf]
      %v3269 = vld [vmem:[%s3254 + $0x54] sm:$0xf]
      %v3270 = vld [vmem:[%s3254 + $0x58] sm:$0xf]
      %v3271 = vld [vmem:[%s3254 + $0x60] sm:$0xf]
      %v3272 = vld [vmem:[%s3254 + $0x64] sm:$0xf]
      %v3273 = vld [vmem:[%s3254 + $0x6c] sm:$0xf]
      %v3274 = vld [vmem:[%s3254 + $0x70] sm:$0xf]
      %v3275 = vld [vmem:[%s3254 + $0x78] sm:$0xf]
      %v3276 = vld [vmem:[%s3254 + $0x7c] sm:$0xf]
      %v3277 = vld [vmem:[%s3254 + $0x84] sm:$0xf]
      %v3278 = vld [vmem:[%s3254 + $0x88] sm:$0xf]
      %v3279 = vld [vmem:[%s3254 + $0x90] sm:$0xf]
      %v3280 = vld [vmem:[%s3254 + $0x94] sm:$0xf]
      %v3281 = vld [vmem:[%s3254 + $0x9c] sm:$0xf]
      %v3282 = vld [vmem:[%s3254 + $0xa0] sm:$0xf]
      %v3283 = vld [vmem:[%s3254 + $0xa8] sm:$0xf]
      %v3284 = vld [vmem:[%s3254 + $0xac] sm:$0xf]
      %v3285 = vld [vmem:[%s3254 + $0xb4] sm:$0xf]
      %v3286 = vld [vmem:[%s3254 + $0xb8] sm:$0xf]
      %s3287 = scalar_lea.vmem %s1, 48
      %v3288 = vld [vmem:[%s3287] sm:$0xf]
      %v3289 = vld [vmem:[%s3287 + $0x4] sm:$0xf]
      %v3322 = vunpack.c.l.b16 %v3255
      %v3323 = vunpack.c.l.b16 %v3256
      %v3324 = vunpack.c.l.b16 %v3257
      %v3325 = vunpack.c.l.b16 %v3258
      %v3326 = vunpack.c.l.b16 %v3259
      %v3327 = vunpack.c.l.b16 %v3260
      %v3328 = vunpack.c.l.b16 %v3261
      %v3329 = vunpack.c.l.b16 %v3262
      %v3330 = vunpack.c.l.b16 %v3263
      %v3331 = vunpack.c.l.b16 %v3264
      %v3332 = vunpack.c.l.b16 %v3265
      %v3333 = vunpack.c.l.b16 %v3266
      %v3334 = vunpack.c.l.b16 %v3267
      %v3335 = vunpack.c.l.b16 %v3268
      %v3336 = vunpack.c.l.b16 %v3269
      %v3337 = vunpack.c.l.b16 %v3270
      %v3338 = vunpack.c.l.b16 %v3271
      %v3339 = vunpack.c.l.b16 %v3272
      %v3340 = vunpack.c.l.b16 %v3273
      %v3341 = vunpack.c.l.b16 %v3274
      %v3342 = vunpack.c.l.b16 %v3275
      %v3343 = vunpack.c.l.b16 %v3276
      %v3344 = vunpack.c.l.b16 %v3277
      %v3345 = vunpack.c.l.b16 %v3278
      %v3346 = vunpack.c.l.b16 %v3279
      %v3347 = vunpack.c.l.b16 %v3280
      %v3348 = vunpack.c.l.b16 %v3281
      %v3349 = vunpack.c.l.b16 %v3282
      %v3350 = vunpack.c.l.b16 %v3283
      %v3351 = vunpack.c.l.b16 %v3284
      %v3352 = vunpack.c.l.b16 %v3285
      %v3353 = vunpack.c.l.b16 %v3286
      %v3354 = vpack.c.b16 %v3323, %v3322
      %v3355 = vpack.c.b16 %v3325, %v3324
      %v3356 = vpack.c.b16 %v3327, %v3326
      %v3357 = vpack.c.b16 %v3329, %v3328
      %v3358 = vpack.c.b16 %v3331, %v3330
      %v3359 = vpack.c.b16 %v3333, %v3332
      %v3360 = vpack.c.b16 %v3335, %v3334
      %v3361 = vpack.c.b16 %v3337, %v3336
      %v3362 = vpack.c.b16 %v3339, %v3338
      %v3363 = vpack.c.b16 %v3341, %v3340
      %v3364 = vpack.c.b16 %v3343, %v3342
      %v3365 = vpack.c.b16 %v3345, %v3344
      %v3366 = vpack.c.b16 %v3347, %v3346
      %v3367 = vpack.c.b16 %v3349, %v3348
      %v3368 = vpack.c.b16 %v3351, %v3350
      %v3369 = vpack.c.b16 %v3353, %v3352
      %v3372 = vunpack.c.l.b16 %v3288
      %v3373 = vunpack.c.l.b16 %v3289
      %v3374 = vpack.c.b16 %v3373, %v3372
      %v3377 = vsel %vm721, %v3354, 0
      %v3380 = vsel %vm721, %v3355, 0
      %v3383 = vsel %vm721, %v3356, 0
      %v3386 = vsel %vm721, %v3357, 0
      %v3389 = vsel %vm721, %v3358, 0
      %v3392 = vsel %vm721, %v3359, 0
      %v3395 = vsel %vm721, %v3360, 0
      %v3398 = vsel %vm721, %v3361, 0
      %v3401 = vsel %vm721, %v3362, 0
      %v3404 = vsel %vm721, %v3363, 0
      %v3407 = vsel %vm721, %v3364, 0
      %v3410 = vsel %vm721, %v3365, 0
      %v3413 = vsel %vm721, %v3366, 0
      %v3416 = vsel %vm721, %v3367, 0
      %v3419 = vsel %vm721, %v3368, 0
      %v3422 = vsel %vm721, %v3369, 0
      %3424 = vmatprep.subr.bf16.mxu0 0
      %3425 = vmatpush1.bf16.msra.mxu0 0
      %3426 = vmatprep.subr.bf16.mxu0 0
      %3427 = vmatpush1.bf16.msra.mxu0 0
      %3428 = vmatprep.subr.bf16.mxu0 0
      %3429 = vmatpush1.bf16.msra.mxu0 0
      %3430 = vmatprep.subr.bf16.mxu0 0
      %3431 = vmatpush1.bf16.msra.mxu0 0
      %3432 = vmatprep.subr.bf16.mxu0 0
      %3433 = vmatpush1.bf16.msra.mxu0 0
      %3434 = vmatprep.subr.bf16.mxu0 0
      %3435 = vmatpush1.bf16.msra.mxu0 0
      %3436 = vmatprep.subr.bf16.mxu0 0
      %3437 = vmatpush1.bf16.msra.mxu0 0
      %3438 = vmatprep.subr.bf16.mxu0 0
      %3439 = vmatpush1.bf16.msra.mxu0 %v3374
      %3440 = vmatprep.subr.bf16.mxu0 0
      %3441 = vmatpush2.bf16.msra.mxu0 0
      %3442 = vmatprep.subr.bf16.mxu0 0
      %3443 = vmatpush2.bf16.msra.mxu0 0
      %3444 = vmatprep.subr.bf16.mxu0 0
      %3445 = vmatpush2.bf16.msra.mxu0 0
      %3446 = vmatprep.subr.bf16.mxu0 0
      %3447 = vmatpush2.bf16.msra.mxu0 0
      %3448 = vmatprep.subr.bf16.mxu0 0
      %3449 = vmatpush2.bf16.msra.mxu0 0
      %3450 = vmatprep.subr.bf16.mxu0 0
      %3451 = vmatpush2.bf16.msra.mxu0 0
      %3452 = vmatprep.subr.bf16.mxu0 0
      %3453 = vmatpush2.bf16.msra.mxu0 0
      %3454 = vmatprep.subr.bf16.mxu0 0
      %3455 = vmatpush2.bf16.msra.mxu0 0
      %3456 = vmatprep.mubr.bf16.mxu0 0
      %3457 = vmatmul.mubr.bf16.gmra.mxu0 %v3377
      %v3458 = vpop.f32.mrf.mxu0
      %v3459 = vadd.f32 0.0, %v3458
      %v3460 = vpop.f32.mrf.mxu0
      %v3461 = vpop.f32.mrf.mxu0
      %v3462 = vadd.f32 0.0, %v3461
      %v3463 = vpop.f32.mrf.mxu0
      %3464 = vmatprep.mubr.bf16.mxu0 0
      %3465 = vmatmul.mubr.bf16.gmra.mxu0 %v3380
      %v3466 = vpop.f32.mrf.mxu0
      %v3467 = vadd.f32 0.0, %v3466
      %v3468 = vpop.f32.mrf.mxu0
      %v3469 = vpop.f32.mrf.mxu0
      %v3470 = vadd.f32 0.0, %v3469
      %v3471 = vpop.f32.mrf.mxu0
      %3472 = vmatprep.mubr.bf16.mxu0 0
      %3473 = vmatmul.mubr.bf16.gmra.mxu0 %v3383
      %v3474 = vpop.f32.mrf.mxu0
      %v3475 = vadd.f32 0.0, %v3474
      %v3476 = vpop.f32.mrf.mxu0
      %v3477 = vpop.f32.mrf.mxu0
      %v3478 = vadd.f32 0.0, %v3477
      %v3479 = vpop.f32.mrf.mxu0
      %3480 = vmatprep.mubr.bf16.mxu0 0
      %3481 = vmatmul.mubr.bf16.gmra.mxu0 %v3386
      %v3482 = vpop.f32.mrf.mxu0
      %v3483 = vadd.f32 0.0, %v3482
      %v3484 = vpop.f32.mrf.mxu0
      %v3485 = vpop.f32.mrf.mxu0
      %v3486 = vadd.f32 0.0, %v3485
      %v3487 = vpop.f32.mrf.mxu0
      %3488 = vmatprep.mubr.bf16.mxu0 0
      %3489 = vmatmul.mubr.bf16.gmra.mxu0 %v3389
      %v3490 = vpop.f32.mrf.mxu0
      %v3491 = vadd.f32 0.0, %v3490
      %v3492 = vpop.f32.mrf.mxu0
      %v3493 = vpop.f32.mrf.mxu0
      %v3494 = vadd.f32 0.0, %v3493
      %v3495 = vpop.f32.mrf.mxu0
      %3496 = vmatprep.mubr.bf16.mxu0 0
      %3497 = vmatmul.mubr.bf16.gmra.mxu0 %v3392
      %v3498 = vpop.f32.mrf.mxu0
      %v3499 = vadd.f32 0.0, %v3498
      %v3500 = vpop.f32.mrf.mxu0
      %v3501 = vpop.f32.mrf.mxu0
      %v3502 = vadd.f32 0.0, %v3501
      %v3503 = vpop.f32.mrf.mxu0
      %3504 = vmatprep.mubr.bf16.mxu0 0
      %3505 = vmatmul.mubr.bf16.gmra.mxu0 %v3395
      %v3506 = vpop.f32.mrf.mxu0
      %v3507 = vadd.f32 0.0, %v3506
      %v3508 = vpop.f32.mrf.mxu0
      %v3509 = vpop.f32.mrf.mxu0
      %v3510 = vadd.f32 0.0, %v3509
      %v3511 = vpop.f32.mrf.mxu0
      %3512 = vmatprep.mubr.bf16.mxu0 0
      %3513 = vmatmul.mubr.bf16.gmra.mxu0 %v3398
      %v3514 = vpop.f32.mrf.mxu0
      %v3515 = vadd.f32 0.0, %v3514
      %v3516 = vpop.f32.mrf.mxu0
      %v3517 = vpop.f32.mrf.mxu0
      %v3518 = vadd.f32 0.0, %v3517
      %v3519 = vpop.f32.mrf.mxu0
      %3520 = vmatprep.mubr.bf16.mxu0 0
      %3521 = vmatmul.mubr.bf16.gmra.mxu0 %v3401
      %v3522 = vpop.f32.mrf.mxu0
      %v3523 = vadd.f32 0.0, %v3522
      %v3524 = vpop.f32.mrf.mxu0
      %v3525 = vpop.f32.mrf.mxu0
      %v3526 = vadd.f32 0.0, %v3525
      %v3527 = vpop.f32.mrf.mxu0
      %3528 = vmatprep.mubr.bf16.mxu0 0
      %3529 = vmatmul.mubr.bf16.gmra.mxu0 %v3404
      %v3530 = vpop.f32.mrf.mxu0
      %v3531 = vadd.f32 0.0, %v3530
      %v3532 = vpop.f32.mrf.mxu0
      %v3533 = vpop.f32.mrf.mxu0
      %v3534 = vadd.f32 0.0, %v3533
      %v3535 = vpop.f32.mrf.mxu0
      %3536 = vmatprep.mubr.bf16.mxu0 0
      %3537 = vmatmul.mubr.bf16.gmra.mxu0 %v3407
      %v3538 = vpop.f32.mrf.mxu0
      %v3539 = vadd.f32 0.0, %v3538
      %v3540 = vpop.f32.mrf.mxu0
      %v3541 = vpop.f32.mrf.mxu0
      %v3542 = vadd.f32 0.0, %v3541
      %v3543 = vpop.f32.mrf.mxu0
      %3544 = vmatprep.mubr.bf16.mxu0 0
      %3545 = vmatmul.mubr.bf16.gmra.mxu0 %v3410
      %v3546 = vpop.f32.mrf.mxu0
      %v3547 = vadd.f32 0.0, %v3546
      %v3548 = vpop.f32.mrf.mxu0
      %v3549 = vpop.f32.mrf.mxu0
      %v3550 = vadd.f32 0.0, %v3549
      %v3551 = vpop.f32.mrf.mxu0
      %3552 = vmatprep.mubr.bf16.mxu0 0
      %3553 = vmatmul.mubr.bf16.gmra.mxu0 %v3413
      %v3554 = vpop.f32.mrf.mxu0
      %v3555 = vadd.f32 0.0, %v3554
      %v3556 = vpop.f32.mrf.mxu0
      %v3557 = vpop.f32.mrf.mxu0
      %v3558 = vadd.f32 0.0, %v3557
      %v3559 = vpop.f32.mrf.mxu0
      %3560 = vmatprep.mubr.bf16.mxu0 0
      %3561 = vmatmul.mubr.bf16.gmra.mxu0 %v3416
      %v3562 = vpop.f32.mrf.mxu0
      %v3563 = vadd.f32 0.0, %v3562
      %v3564 = vpop.f32.mrf.mxu0
      %v3565 = vpop.f32.mrf.mxu0
      %v3566 = vadd.f32 0.0, %v3565
      %v3567 = vpop.f32.mrf.mxu0
      %3568 = vmatprep.mubr.bf16.mxu0 0
      %3569 = vmatmul.mubr.bf16.gmra.mxu0 %v3419
      %v3570 = vpop.f32.mrf.mxu0
      %v3571 = vadd.f32 0.0, %v3570
      %v3572 = vpop.f32.mrf.mxu0
      %v3573 = vpop.f32.mrf.mxu0
      %v3574 = vadd.f32 0.0, %v3573
      %v3575 = vpop.f32.mrf.mxu0
      %3576 = vmatprep.mubr.bf16.mxu0 0
      %3577 = vmatmul.mubr.bf16.gmra.mxu0 %v3422
      %v3578 = vpop.f32.mrf.mxu0
      %v3579 = vadd.f32 0.0, %v3578
      %v3580 = vpop.f32.mrf.mxu0
      %v3581 = vpop.f32.mrf.mxu0
      %v3582 = vadd.f32 0.0, %v3581
      %v3583 = vpop.f32.mrf.mxu0
      %3584 = vdwg.mxu0
      %v3585 = vadd.f32 %v3222, %v3459
      %v3586 = vadd.f32 %v3223, %v3462
      %v3587 = vadd.f32 %v3224, %v3467
      %v3588 = vadd.f32 %v3225, %v3470
      %v3589 = vadd.f32 %v3226, %v3475
      %v3590 = vadd.f32 %v3227, %v3478
      %v3591 = vadd.f32 %v3228, %v3483
      %v3592 = vadd.f32 %v3229, %v3486
      %v3593 = vadd.f32 %v3230, %v3491
      %v3594 = vadd.f32 %v3231, %v3494
      %v3595 = vadd.f32 %v3232, %v3499
      %v3596 = vadd.f32 %v3233, %v3502
      %v3597 = vadd.f32 %v3234, %v3507
      %v3598 = vadd.f32 %v3235, %v3510
      %v3599 = vadd.f32 %v3236, %v3515
      %v3600 = vadd.f32 %v3237, %v3518
      %v3601 = vadd.f32 %v3238, %v3523
      %v3602 = vadd.f32 %v3239, %v3526
      %v3603 = vadd.f32 %v3240, %v3531
      %v3604 = vadd.f32 %v3241, %v3534
      %v3605 = vadd.f32 %v3242, %v3539
      %v3606 = vadd.f32 %v3243, %v3542
      %v3607 = vadd.f32 %v3244, %v3547
      %v3608 = vadd.f32 %v3245, %v3550
      %v3609 = vadd.f32 %v3246, %v3555
      %v3610 = vadd.f32 %v3247, %v3558
      %v3611 = vadd.f32 %v3248, %v3563
      %v3612 = vadd.f32 %v3249, %v3566
      %v3613 = vadd.f32 %v3250, %v3571
      %v3614 = vadd.f32 %v3251, %v3574
      %v3615 = vadd.f32 %v3252, %v3579
      %v3616 = vadd.f32 %v3253, %v3582
      %v3617 = vld [vmem:[%s3254] sm:$0xf]
      %v3618 = vld [vmem:[%s3254 + $0x4] sm:$0xf]
      %v3619 = vld [vmem:[%s3254 + $0x8] sm:$0x1]
      %v3620 = vld [vmem:[%s3254 + $0xc] sm:$0xf]
      %v3621 = vld [vmem:[%s3254 + $0x10] sm:$0xf]
      %v3622 = vld [vmem:[%s3254 + $0x14] sm:$0x1]
      %v3623 = vld [vmem:[%s3254 + $0x18] sm:$0xf]
      %v3624 = vld [vmem:[%s3254 + $0x1c] sm:$0xf]
      %v3625 = vld [vmem:[%s3254 + $0x20] sm:$0x1]
      %v3626 = vld [vmem:[%s3254 + $0x24] sm:$0xf]
      %v3627 = vld [vmem:[%s3254 + $0x28] sm:$0xf]
      %v3628 = vld [vmem:[%s3254 + $0x2c] sm:$0x1]
      %v3629 = vld [vmem:[%s3254 + $0x30] sm:$0xf]
      %v3630 = vld [vmem:[%s3254 + $0x34] sm:$0xf]
      %v3631 = vld [vmem:[%s3254 + $0x38] sm:$0x1]
      %v3632 = vld [vmem:[%s3254 + $0x3c] sm:$0xf]
      %v3633 = vld [vmem:[%s3254 + $0x40] sm:$0xf]
      %v3634 = vld [vmem:[%s3254 + $0x44] sm:$0x1]
      %v3635 = vld [vmem:[%s3254 + $0x48] sm:$0xf]
      %v3636 = vld [vmem:[%s3254 + $0x4c] sm:$0xf]
      %v3637 = vld [vmem:[%s3254 + $0x50] sm:$0x1]
      %v3638 = vld [vmem:[%s3254 + $0x54] sm:$0xf]
      %v3639 = vld [vmem:[%s3254 + $0x58] sm:$0xf]
      %v3640 = vld [vmem:[%s3254 + $0x5c] sm:$0x1]
      %v3641 = vld [vmem:[%s3254 + $0x60] sm:$0xf]
      %v3642 = vld [vmem:[%s3254 + $0x64] sm:$0xf]
      %v3643 = vld [vmem:[%s3254 + $0x68] sm:$0x1]
      %v3644 = vld [vmem:[%s3254 + $0x6c] sm:$0xf]
      %v3645 = vld [vmem:[%s3254 + $0x70] sm:$0xf]
      %v3646 = vld [vmem:[%s3254 + $0x74] sm:$0x1]
      %v3647 = vld [vmem:[%s3254 + $0x78] sm:$0xf]
      %v3648 = vld [vmem:[%s3254 + $0x7c] sm:$0xf]
      %v3649 = vld [vmem:[%s3254 + $0x80] sm:$0x1]
      %v3650 = vld [vmem:[%s3254 + $0x84] sm:$0xf]
      %v3651 = vld [vmem:[%s3254 + $0x88] sm:$0xf]
      %v3652 = vld [vmem:[%s3254 + $0x8c] sm:$0x1]
      %v3653 = vld [vmem:[%s3254 + $0x90] sm:$0xf]
      %v3654 = vld [vmem:[%s3254 + $0x94] sm:$0xf]
      %v3655 = vld [vmem:[%s3254 + $0x98] sm:$0x1]
      %v3656 = vld [vmem:[%s3254 + $0x9c] sm:$0xf]
      %v3657 = vld [vmem:[%s3254 + $0xa0] sm:$0xf]
      %v3658 = vld [vmem:[%s3254 + $0xa4] sm:$0x1]
      %v3659 = vld [vmem:[%s3254 + $0xa8] sm:$0xf]
      %v3660 = vld [vmem:[%s3254 + $0xac] sm:$0xf]
      %v3661 = vld [vmem:[%s3254 + $0xb0] sm:$0x1]
      %v3662 = vld [vmem:[%s3254 + $0xb4] sm:$0xf]
      %v3663 = vld [vmem:[%s3254 + $0xb8] sm:$0xf]
      %v3664 = vld [vmem:[%s3254 + $0xbc] sm:$0x1]
      %v3666 = vshrl.u32 %v3617, 16
      %v3668 = vrot.slane %v3666, 4
      %v3669 = vshll.u32 %v3617, 16
      %v3671 = vrot.slane %v3669, 5
      %v3672 = vor.u32 %v3668, %v3671
      %v3673 = vrot.slane %v3672, 4
      %v3675 = vshll.u32 %v3618, 16
      %v3677 = vrot.slane %v3675, 5
      %v3678 = vsel %vm279, %v3673, %v3677
      %v3679 = vshrl.u32 %v3618, 16
      %v3681 = vrot.slane %v3679, 4
      %v3682 = vor.u32 %v3681, %v3677
      %v3683 = vrot.slane %v3682, 4
      %v3685 = vshll.u32 %v3619, 16
      %v3687 = vrot.slane %v3685, 5
      %v3688 = vsel %vm279, %v3683, %v3687
      %v3690 = vshrl.u32 %v3620, 16
      %v3692 = vrot.slane %v3690, 4
      %v3693 = vshll.u32 %v3620, 16
      %v3695 = vrot.slane %v3693, 5
      %v3696 = vor.u32 %v3692, %v3695
      %v3697 = vrot.slane %v3696, 4
      %v3699 = vshll.u32 %v3621, 16
      %v3701 = vrot.slane %v3699, 5
      %v3702 = vsel %vm279, %v3697, %v3701
      %v3703 = vshrl.u32 %v3621, 16
      %v3705 = vrot.slane %v3703, 4
      %v3706 = vor.u32 %v3705, %v3701
      %v3707 = vrot.slane %v3706, 4
      %v3709 = vshll.u32 %v3622, 16
      %v3711 = vrot.slane %v3709, 5
      %v3712 = vsel %vm279, %v3707, %v3711
      %v3714 = vshrl.u32 %v3623, 16
      %v3716 = vrot.slane %v3714, 4
      %v3717 = vshll.u32 %v3623, 16
      %v3719 = vrot.slane %v3717, 5
      %v3720 = vor.u32 %v3716, %v3719
      %v3721 = vrot.slane %v3720, 4
      %v3723 = vshll.u32 %v3624, 16
      %v3725 = vrot.slane %v3723, 5
      %v3726 = vsel %vm279, %v3721, %v3725
      %v3727 = vshrl.u32 %v3624, 16
      %v3729 = vrot.slane %v3727, 4
      %v3730 = vor.u32 %v3729, %v3725
      %v3731 = vrot.slane %v3730, 4
      %v3733 = vshll.u32 %v3625, 16
      %v3735 = vrot.slane %v3733, 5
      %v3736 = vsel %vm279, %v3731, %v3735
      %v3738 = vshrl.u32 %v3626, 16
      %v3740 = vrot.slane %v3738, 4
      %v3741 = vshll.u32 %v3626, 16
      %v3743 = vrot.slane %v3741, 5
      %v3744 = vor.u32 %v3740, %v3743
      %v3745 = vrot.slane %v3744, 4
      %v3747 = vshll.u32 %v3627, 16
      %v3749 = vrot.slane %v3747, 5
      %v3750 = vsel %vm279, %v3745, %v3749
      %v3751 = vshrl.u32 %v3627, 16
      %v3753 = vrot.slane %v3751, 4
      %v3754 = vor.u32 %v3753, %v3749
      %v3755 = vrot.slane %v3754, 4
      %v3757 = vshll.u32 %v3628, 16
      %v3759 = vrot.slane %v3757, 5
      %v3760 = vsel %vm279, %v3755, %v3759
      %v3762 = vshrl.u32 %v3629, 16
      %v3764 = vrot.slane %v3762, 4
      %v3765 = vshll.u32 %v3629, 16
      %v3767 = vrot.slane %v3765, 5
      %v3768 = vor.u32 %v3764, %v3767
      %v3769 = vrot.slane %v3768, 4
      %v3771 = vshll.u32 %v3630, 16
      %v3773 = vrot.slane %v3771, 5
      %v3774 = vsel %vm279, %v3769, %v3773
      %v3775 = vshrl.u32 %v3630, 16
      %v3777 = vrot.slane %v3775, 4
      %v3778 = vor.u32 %v3777, %v3773
      %v3779 = vrot.slane %v3778, 4
      %v3781 = vshll.u32 %v3631, 16
      %v3783 = vrot.slane %v3781, 5
      %v3784 = vsel %vm279, %v3779, %v3783
      %v3786 = vshrl.u32 %v3632, 16
      %v3788 = vrot.slane %v3786, 4
      %v3789 = vshll.u32 %v3632, 16
      %v3791 = vrot.slane %v3789, 5
      %v3792 = vor.u32 %v3788, %v3791
      %v3793 = vrot.slane %v3792, 4
      %v3795 = vshll.u32 %v3633, 16
      %v3797 = vrot.slane %v3795, 5
      %v3798 = vsel %vm279, %v3793, %v3797
      %v3799 = vshrl.u32 %v3633, 16
      %v3801 = vrot.slane %v3799, 4
      %v3802 = vor.u32 %v3801, %v3797
      %v3803 = vrot.slane %v3802, 4
      %v3805 = vshll.u32 %v3634, 16
      %v3807 = vrot.slane %v3805, 5
      %v3808 = vsel %vm279, %v3803, %v3807
      %v3810 = vshrl.u32 %v3635, 16
      %v3812 = vrot.slane %v3810, 4
      %v3813 = vshll.u32 %v3635, 16
      %v3815 = vrot.slane %v3813, 5
      %v3816 = vor.u32 %v3812, %v3815
      %v3817 = vrot.slane %v3816, 4
      %v3819 = vshll.u32 %v3636, 16
      %v3821 = vrot.slane %v3819, 5
      %v3822 = vsel %vm279, %v3817, %v3821
      %v3823 = vshrl.u32 %v3636, 16
      %v3825 = vrot.slane %v3823, 4
      %v3826 = vor.u32 %v3825, %v3821
      %v3827 = vrot.slane %v3826, 4
      %v3829 = vshll.u32 %v3637, 16
      %v3831 = vrot.slane %v3829, 5
      %v3832 = vsel %vm279, %v3827, %v3831
      %v3834 = vshrl.u32 %v3638, 16
      %v3836 = vrot.slane %v3834, 4
      %v3837 = vshll.u32 %v3638, 16
      %v3839 = vrot.slane %v3837, 5
      %v3840 = vor.u32 %v3836, %v3839
      %v3841 = vrot.slane %v3840, 4
      %v3843 = vshll.u32 %v3639, 16
      %v3845 = vrot.slane %v3843, 5
      %v3846 = vsel %vm279, %v3841, %v3845
      %v3847 = vshrl.u32 %v3639, 16
      %v3849 = vrot.slane %v3847, 4
      %v3850 = vor.u32 %v3849, %v3845
      %v3851 = vrot.slane %v3850, 4
      %v3853 = vshll.u32 %v3640, 16
      %v3855 = vrot.slane %v3853, 5
      %v3856 = vsel %vm279, %v3851, %v3855
      %v3858 = vshrl.u32 %v3641, 16
      %v3860 = vrot.slane %v3858, 4
      %v3861 = vshll.u32 %v3641, 16
      %v3863 = vrot.slane %v3861, 5
      %v3864 = vor.u32 %v3860, %v3863
      %v3865 = vrot.slane %v3864, 4
      %v3867 = vshll.u32 %v3642, 16
      %v3869 = vrot.slane %v3867, 5
      %v3870 = vsel %vm279, %v3865, %v3869
      %v3871 = vshrl.u32 %v3642, 16
      %v3873 = vrot.slane %v3871, 4
      %v3874 = vor.u32 %v3873, %v3869
      %v3875 = vrot.slane %v3874, 4
      %v3877 = vshll.u32 %v3643, 16
      %v3879 = vrot.slane %v3877, 5
      %v3880 = vsel %vm279, %v3875, %v3879
      %v3882 = vshrl.u32 %v3644, 16
      %v3884 = vrot.slane %v3882, 4
      %v3885 = vshll.u32 %v3644, 16
      %v3887 = vrot.slane %v3885, 5
      %v3888 = vor.u32 %v3884, %v3887
      %v3889 = vrot.slane %v3888, 4
      %v3891 = vshll.u32 %v3645, 16
      %v3893 = vrot.slane %v3891, 5
      %v3894 = vsel %vm279, %v3889, %v3893
      %v3895 = vshrl.u32 %v3645, 16
      %v3897 = vrot.slane %v3895, 4
      %v3898 = vor.u32 %v3897, %v3893
      %v3899 = vrot.slane %v3898, 4
      %v3901 = vshll.u32 %v3646, 16
      %v3903 = vrot.slane %v3901, 5
      %v3904 = vsel %vm279, %v3899, %v3903
      %v3906 = vshrl.u32 %v3647, 16
      %v3908 = vrot.slane %v3906, 4
      %v3909 = vshll.u32 %v3647, 16
      %v3911 = vrot.slane %v3909, 5
      %v3912 = vor.u32 %v3908, %v3911
      %v3913 = vrot.slane %v3912, 4
      %v3915 = vshll.u32 %v3648, 16
      %v3917 = vrot.slane %v3915, 5
      %v3918 = vsel %vm279, %v3913, %v3917
      %v3919 = vshrl.u32 %v3648, 16
      %v3921 = vrot.slane %v3919, 4
      %v3922 = vor.u32 %v3921, %v3917
      %v3923 = vrot.slane %v3922, 4
      %v3925 = vshll.u32 %v3649, 16
      %v3927 = vrot.slane %v3925, 5
      %v3928 = vsel %vm279, %v3923, %v3927
      %v3930 = vshrl.u32 %v3650, 16
      %v3932 = vrot.slane %v3930, 4
      %v3933 = vshll.u32 %v3650, 16
      %v3935 = vrot.slane %v3933, 5
      %v3936 = vor.u32 %v3932, %v3935
      %v3937 = vrot.slane %v3936, 4
      %v3939 = vshll.u32 %v3651, 16
      %v3941 = vrot.slane %v3939, 5
      %v3942 = vsel %vm279, %v3937, %v3941
      %v3943 = vshrl.u32 %v3651, 16
      %v3945 = vrot.slane %v3943, 4
      %v3946 = vor.u32 %v3945, %v3941
      %v3947 = vrot.slane %v3946, 4
      %v3949 = vshll.u32 %v3652, 16
      %v3951 = vrot.slane %v3949, 5
      %v3952 = vsel %vm279, %v3947, %v3951
      %v3954 = vshrl.u32 %v3653, 16
      %v3956 = vrot.slane %v3954, 4
      %v3957 = vshll.u32 %v3653, 16
      %v3959 = vrot.slane %v3957, 5
      %v3960 = vor.u32 %v3956, %v3959
      %v3961 = vrot.slane %v3960, 4
      %v3963 = vshll.u32 %v3654, 16
      %v3965 = vrot.slane %v3963, 5
      %v3966 = vsel %vm279, %v3961, %v3965
      %v3967 = vshrl.u32 %v3654, 16
      %v3969 = vrot.slane %v3967, 4
      %v3970 = vor.u32 %v3969, %v3965
      %v3971 = vrot.slane %v3970, 4
      %v3973 = vshll.u32 %v3655, 16
      %v3975 = vrot.slane %v3973, 5
      %v3976 = vsel %vm279, %v3971, %v3975
      %v3978 = vshrl.u32 %v3656, 16
      %v3980 = vrot.slane %v3978, 4
      %v3981 = vshll.u32 %v3656, 16
      %v3983 = vrot.slane %v3981, 5
      %v3984 = vor.u32 %v3980, %v3983
      %v3985 = vrot.slane %v3984, 4
      %v3987 = vshll.u32 %v3657, 16
      %v3989 = vrot.slane %v3987, 5
      %v3990 = vsel %vm279, %v3985, %v3989
      %v3991 = vshrl.u32 %v3657, 16
      %v3993 = vrot.slane %v3991, 4
      %v3994 = vor.u32 %v3993, %v3989
      %v3995 = vrot.slane %v3994, 4
      %v3997 = vshll.u32 %v3658, 16
      %v3999 = vrot.slane %v3997, 5
      %v4000 = vsel %vm279, %v3995, %v3999
      %v4002 = vshrl.u32 %v3659, 16
      %v4004 = vrot.slane %v4002, 4
      %v4005 = vshll.u32 %v3659, 16
      %v4007 = vrot.slane %v4005, 5
      %v4008 = vor.u32 %v4004, %v4007
      %v4009 = vrot.slane %v4008, 4
      %v4011 = vshll.u32 %v3660, 16
      %v4013 = vrot.slane %v4011, 5
      %v4014 = vsel %vm279, %v4009, %v4013
      %v4015 = vshrl.u32 %v3660, 16
      %v4017 = vrot.slane %v4015, 4
      %v4018 = vor.u32 %v4017, %v4013
      %v4019 = vrot.slane %v4018, 4
      %v4021 = vshll.u32 %v3661, 16
      %v4023 = vrot.slane %v4021, 5
      %v4024 = vsel %vm279, %v4019, %v4023
      %v4026 = vshrl.u32 %v3662, 16
      %v4028 = vrot.slane %v4026, 4
      %v4029 = vshll.u32 %v3662, 16
      %v4031 = vrot.slane %v4029, 5
      %v4032 = vor.u32 %v4028, %v4031
      %v4033 = vrot.slane %v4032, 4
      %v4035 = vshll.u32 %v3663, 16
      %v4037 = vrot.slane %v4035, 5
      %v4038 = vsel %vm279, %v4033, %v4037
      %v4039 = vshrl.u32 %v3663, 16
      %v4041 = vrot.slane %v4039, 4
      %v4042 = vor.u32 %v4041, %v4037
      %v4043 = vrot.slane %v4042, 4
      %v4045 = vshll.u32 %v3664, 16
      %v4047 = vrot.slane %v4045, 5
      %v4048 = vsel %vm279, %v4043, %v4047
      %s4049 = scalar_lea.vmem %s1, 56
      %v4050 = vld [vmem:[%s4049] sm:$0xf]
      %v4051 = vld [vmem:[%s4049 + $0x4] sm:$0xf]
      %v4052 = vunpack.c.l.b16 %v3678
      %v4053 = vunpack.c.l.b16 %v3688
      %v4054 = vunpack.c.l.b16 %v3702
      %v4055 = vunpack.c.l.b16 %v3712
      %v4056 = vunpack.c.l.b16 %v3726
      %v4057 = vunpack.c.l.b16 %v3736
      %v4058 = vunpack.c.l.b16 %v3750
      %v4059 = vunpack.c.l.b16 %v3760
      %v4060 = vunpack.c.l.b16 %v3774
      %v4061 = vunpack.c.l.b16 %v3784
      %v4062 = vunpack.c.l.b16 %v3798
      %v4063 = vunpack.c.l.b16 %v3808
      %v4064 = vunpack.c.l.b16 %v3822
      %v4065 = vunpack.c.l.b16 %v3832
      %v4066 = vunpack.c.l.b16 %v3846
      %v4067 = vunpack.c.l.b16 %v3856
      %v4068 = vunpack.c.l.b16 %v3870
      %v4069 = vunpack.c.l.b16 %v3880
      %v4070 = vunpack.c.l.b16 %v3894
      %v4071 = vunpack.c.l.b16 %v3904
      %v4072 = vunpack.c.l.b16 %v3918
      %v4073 = vunpack.c.l.b16 %v3928
      %v4074 = vunpack.c.l.b16 %v3942
      %v4075 = vunpack.c.l.b16 %v3952
      %v4076 = vunpack.c.l.b16 %v3966
      %v4077 = vunpack.c.l.b16 %v3976
      %v4078 = vunpack.c.l.b16 %v3990
      %v4079 = vunpack.c.l.b16 %v4000
      %v4080 = vunpack.c.l.b16 %v4014
      %v4081 = vunpack.c.l.b16 %v4024
      %v4082 = vunpack.c.l.b16 %v4038
      %v4083 = vunpack.c.l.b16 %v4048
      %v4084 = vpack.c.b16 %v4053, %v4052
      %v4085 = vpack.c.b16 %v4055, %v4054
      %v4086 = vpack.c.b16 %v4057, %v4056
      %v4087 = vpack.c.b16 %v4059, %v4058
      %v4088 = vpack.c.b16 %v4061, %v4060
      %v4089 = vpack.c.b16 %v4063, %v4062
      %v4090 = vpack.c.b16 %v4065, %v4064
      %v4091 = vpack.c.b16 %v4067, %v4066
      %v4092 = vpack.c.b16 %v4069, %v4068
      %v4093 = vpack.c.b16 %v4071, %v4070
      %v4094 = vpack.c.b16 %v4073, %v4072
      %v4095 = vpack.c.b16 %v4075, %v4074
      %v4096 = vpack.c.b16 %v4077, %v4076
      %v4097 = vpack.c.b16 %v4079, %v4078
      %v4098 = vpack.c.b16 %v4081, %v4080
      %v4099 = vpack.c.b16 %v4083, %v4082
      %v4102 = vunpack.c.l.b16 %v4050
      %v4103 = vunpack.c.l.b16 %v4051
      %v4104 = vpack.c.b16 %v4103, %v4102
      %v4107 = vsel %vm721, %v4084, 0
      %v4110 = vsel %vm721, %v4085, 0
      %v4113 = vsel %vm721, %v4086, 0
      %v4116 = vsel %vm721, %v4087, 0
      %v4119 = vsel %vm721, %v4088, 0
      %v4122 = vsel %vm721, %v4089, 0
      %v4125 = vsel %vm721, %v4090, 0
      %v4128 = vsel %vm721, %v4091, 0
      %v4131 = vsel %vm721, %v4092, 0
      %v4134 = vsel %vm721, %v4093, 0
      %v4137 = vsel %vm721, %v4094, 0
      %v4140 = vsel %vm721, %v4095, 0
      %v4143 = vsel %vm721, %v4096, 0
      %v4146 = vsel %vm721, %v4097, 0
      %v4149 = vsel %vm721, %v4098, 0
      %v4152 = vsel %vm721, %v4099, 0
      %4154 = vmatprep.subr.bf16.mxu0 0
      %4155 = vmatpush1.bf16.msra.mxu0 0
      %4156 = vmatprep.subr.bf16.mxu0 0
      %4157 = vmatpush1.bf16.msra.mxu0 0
      %4158 = vmatprep.subr.bf16.mxu0 0
      %4159 = vmatpush1.bf16.msra.mxu0 0
      %4160 = vmatprep.subr.bf16.mxu0 0
      %4161 = vmatpush1.bf16.msra.mxu0 0
      %4162 = vmatprep.subr.bf16.mxu0 0
      %4163 = vmatpush1.bf16.msra.mxu0 0
      %4164 = vmatprep.subr.bf16.mxu0 0
      %4165 = vmatpush1.bf16.msra.mxu0 0
      %4166 = vmatprep.subr.bf16.mxu0 0
      %4167 = vmatpush1.bf16.msra.mxu0 0
      %4168 = vmatprep.subr.bf16.mxu0 0
      %4169 = vmatpush1.bf16.msra.mxu0 %v4104
      %4170 = vmatprep.subr.bf16.mxu0 0
      %4171 = vmatpush2.bf16.msra.mxu0 0
      %4172 = vmatprep.subr.bf16.mxu0 0
      %4173 = vmatpush2.bf16.msra.mxu0 0
      %4174 = vmatprep.subr.bf16.mxu0 0
      %4175 = vmatpush2.bf16.msra.mxu0 0
      %4176 = vmatprep.subr.bf16.mxu0 0
      %4177 = vmatpush2.bf16.msra.mxu0 0
      %4178 = vmatprep.subr.bf16.mxu0 0
      %4179 = vmatpush2.bf16.msra.mxu0 0
      %4180 = vmatprep.subr.bf16.mxu0 0
      %4181 = vmatpush2.bf16.msra.mxu0 0
      %4182 = vmatprep.subr.bf16.mxu0 0
      %4183 = vmatpush2.bf16.msra.mxu0 0
      %4184 = vmatprep.subr.bf16.mxu0 0
      %4185 = vmatpush2.bf16.msra.mxu0 0
      %4186 = vmatprep.mubr.bf16.mxu0 0
      %4187 = vmatmul.mubr.bf16.gmra.mxu0 %v4107
      %v4188 = vpop.f32.mrf.mxu0
      %v4189 = vadd.f32 0.0, %v4188
      %v4190 = vpop.f32.mrf.mxu0
      %v4191 = vpop.f32.mrf.mxu0
      %v4192 = vadd.f32 0.0, %v4191
      %v4193 = vpop.f32.mrf.mxu0
      %4194 = vmatprep.mubr.bf16.mxu0 0
      %4195 = vmatmul.mubr.bf16.gmra.mxu0 %v4110
      %v4196 = vpop.f32.mrf.mxu0
      %v4197 = vadd.f32 0.0, %v4196
      %v4198 = vpop.f32.mrf.mxu0
      %v4199 = vpop.f32.mrf.mxu0
      %v4200 = vadd.f32 0.0, %v4199
      %v4201 = vpop.f32.mrf.mxu0
      %4202 = vmatprep.mubr.bf16.mxu0 0
      %4203 = vmatmul.mubr.bf16.gmra.mxu0 %v4113
      %v4204 = vpop.f32.mrf.mxu0
      %v4205 = vadd.f32 0.0, %v4204
      %v4206 = vpop.f32.mrf.mxu0
      %v4207 = vpop.f32.mrf.mxu0
      %v4208 = vadd.f32 0.0, %v4207
      %v4209 = vpop.f32.mrf.mxu0
      %4210 = vmatprep.mubr.bf16.mxu0 0
      %4211 = vmatmul.mubr.bf16.gmra.mxu0 %v4116
      %v4212 = vpop.f32.mrf.mxu0
      %v4213 = vadd.f32 0.0, %v4212
      %v4214 = vpop.f32.mrf.mxu0
      %v4215 = vpop.f32.mrf.mxu0
      %v4216 = vadd.f32 0.0, %v4215
      %v4217 = vpop.f32.mrf.mxu0
      %4218 = vmatprep.mubr.bf16.mxu0 0
      %4219 = vmatmul.mubr.bf16.gmra.mxu0 %v4119
      %v4220 = vpop.f32.mrf.mxu0
      %v4221 = vadd.f32 0.0, %v4220
      %v4222 = vpop.f32.mrf.mxu0
      %v4223 = vpop.f32.mrf.mxu0
      %v4224 = vadd.f32 0.0, %v4223
      %v4225 = vpop.f32.mrf.mxu0
      %4226 = vmatprep.mubr.bf16.mxu0 0
      %4227 = vmatmul.mubr.bf16.gmra.mxu0 %v4122
      %v4228 = vpop.f32.mrf.mxu0
      %v4229 = vadd.f32 0.0, %v4228
      %v4230 = vpop.f32.mrf.mxu0
      %v4231 = vpop.f32.mrf.mxu0
      %v4232 = vadd.f32 0.0, %v4231
      %v4233 = vpop.f32.mrf.mxu0
      %4234 = vmatprep.mubr.bf16.mxu0 0
      %4235 = vmatmul.mubr.bf16.gmra.mxu0 %v4125
      %v4236 = vpop.f32.mrf.mxu0
      %v4237 = vadd.f32 0.0, %v4236
      %v4238 = vpop.f32.mrf.mxu0
      %v4239 = vpop.f32.mrf.mxu0
      %v4240 = vadd.f32 0.0, %v4239
      %v4241 = vpop.f32.mrf.mxu0
      %4242 = vmatprep.mubr.bf16.mxu0 0
      %4243 = vmatmul.mubr.bf16.gmra.mxu0 %v4128
      %v4244 = vpop.f32.mrf.mxu0
      %v4245 = vadd.f32 0.0, %v4244
      %v4246 = vpop.f32.mrf.mxu0
      %v4247 = vpop.f32.mrf.mxu0
      %v4248 = vadd.f32 0.0, %v4247
      %v4249 = vpop.f32.mrf.mxu0
      %4250 = vmatprep.mubr.bf16.mxu0 0
      %4251 = vmatmul.mubr.bf16.gmra.mxu0 %v4131
      %v4252 = vpop.f32.mrf.mxu0
      %v4253 = vadd.f32 0.0, %v4252
      %v4254 = vpop.f32.mrf.mxu0
      %v4255 = vpop.f32.mrf.mxu0
      %v4256 = vadd.f32 0.0, %v4255
      %v4257 = vpop.f32.mrf.mxu0
      %4258 = vmatprep.mubr.bf16.mxu0 0
      %4259 = vmatmul.mubr.bf16.gmra.mxu0 %v4134
      %v4260 = vpop.f32.mrf.mxu0
      %v4261 = vadd.f32 0.0, %v4260
      %v4262 = vpop.f32.mrf.mxu0
      %v4263 = vpop.f32.mrf.mxu0
      %v4264 = vadd.f32 0.0, %v4263
      %v4265 = vpop.f32.mrf.mxu0
      %4266 = vmatprep.mubr.bf16.mxu0 0
      %4267 = vmatmul.mubr.bf16.gmra.mxu0 %v4137
      %v4268 = vpop.f32.mrf.mxu0
      %v4269 = vadd.f32 0.0, %v4268
      %v4270 = vpop.f32.mrf.mxu0
      %v4271 = vpop.f32.mrf.mxu0
      %v4272 = vadd.f32 0.0, %v4271
      %v4273 = vpop.f32.mrf.mxu0
      %4274 = vmatprep.mubr.bf16.mxu0 0
      %4275 = vmatmul.mubr.bf16.gmra.mxu0 %v4140
      %v4276 = vpop.f32.mrf.mxu0
      %v4277 = vadd.f32 0.0, %v4276
      %v4278 = vpop.f32.mrf.mxu0
      %v4279 = vpop.f32.mrf.mxu0
      %v4280 = vadd.f32 0.0, %v4279
      %v4281 = vpop.f32.mrf.mxu0
      %4282 = vmatprep.mubr.bf16.mxu0 0
      %4283 = vmatmul.mubr.bf16.gmra.mxu0 %v4143
      %v4284 = vpop.f32.mrf.mxu0
      %v4285 = vadd.f32 0.0, %v4284
      %v4286 = vpop.f32.mrf.mxu0
      %v4287 = vpop.f32.mrf.mxu0
      %v4288 = vadd.f32 0.0, %v4287
      %v4289 = vpop.f32.mrf.mxu0
      %4290 = vmatprep.mubr.bf16.mxu0 0
      %4291 = vmatmul.mubr.bf16.gmra.mxu0 %v4146
      %v4292 = vpop.f32.mrf.mxu0
      %v4293 = vadd.f32 0.0, %v4292
      %v4294 = vpop.f32.mrf.mxu0
      %v4295 = vpop.f32.mrf.mxu0
      %v4296 = vadd.f32 0.0, %v4295
      %v4297 = vpop.f32.mrf.mxu0
      %4298 = vmatprep.mubr.bf16.mxu0 0
      %4299 = vmatmul.mubr.bf16.gmra.mxu0 %v4149
      %v4300 = vpop.f32.mrf.mxu0
      %v4301 = vadd.f32 0.0, %v4300
      %v4302 = vpop.f32.mrf.mxu0
      %v4303 = vpop.f32.mrf.mxu0
      %v4304 = vadd.f32 0.0, %v4303
      %v4305 = vpop.f32.mrf.mxu0
      %4306 = vmatprep.mubr.bf16.mxu0 0
      %4307 = vmatmul.mubr.bf16.gmra.mxu0 %v4152
      %v4308 = vpop.f32.mrf.mxu0
      %v4309 = vadd.f32 0.0, %v4308
      %v4310 = vpop.f32.mrf.mxu0
      %v4311 = vpop.f32.mrf.mxu0
      %v4312 = vadd.f32 0.0, %v4311
      %v4313 = vpop.f32.mrf.mxu0
      %4314 = vdwg.mxu0
      %v4315 = vadd.f32 %v3585, %v4189
      %v4316 = vadd.f32 %v3586, %v4192
      %v4317 = vadd.f32 %v3587, %v4197
      %v4318 = vadd.f32 %v3588, %v4200
      %v4319 = vadd.f32 %v3589, %v4205
      %v4320 = vadd.f32 %v3590, %v4208
      %v4321 = vadd.f32 %v3591, %v4213
      %v4322 = vadd.f32 %v3592, %v4216
      %v4323 = vadd.f32 %v3593, %v4221
      %v4324 = vadd.f32 %v3594, %v4224
      %v4325 = vadd.f32 %v3595, %v4229
      %v4326 = vadd.f32 %v3596, %v4232
      %v4327 = vadd.f32 %v3597, %v4237
      %v4328 = vadd.f32 %v3598, %v4240
      %v4329 = vadd.f32 %v3599, %v4245
      %v4330 = vadd.f32 %v3600, %v4248
      %v4331 = vadd.f32 %v3601, %v4253
      %v4332 = vadd.f32 %v3602, %v4256
      %v4333 = vadd.f32 %v3603, %v4261
      %v4334 = vadd.f32 %v3604, %v4264
      %v4335 = vadd.f32 %v3605, %v4269
      %v4336 = vadd.f32 %v3606, %v4272
      %v4337 = vadd.f32 %v3607, %v4277
      %v4338 = vadd.f32 %v3608, %v4280
      %v4339 = vadd.f32 %v3609, %v4285
      %v4340 = vadd.f32 %v3610, %v4288
      %v4341 = vadd.f32 %v3611, %v4293
      %v4342 = vadd.f32 %v3612, %v4296
      %v4343 = vadd.f32 %v3613, %v4301
      %v4344 = vadd.f32 %v3614, %v4304
      %v4345 = vadd.f32 %v3615, %v4309
      %v4346 = vadd.f32 %v3616, %v4312
      %v4347 = vld [vmem:[%s3254] sm:$0xe]
      %v4348 = vld [vmem:[%s3254 + $0xc] sm:$0xe]
      %v4349 = vld [vmem:[%s3254 + $0x18] sm:$0xe]
      %v4350 = vld [vmem:[%s3254 + $0x24] sm:$0xe]
      %v4351 = vld [vmem:[%s3254 + $0x30] sm:$0xe]
      %v4352 = vld [vmem:[%s3254 + $0x3c] sm:$0xe]
      %v4353 = vld [vmem:[%s3254 + $0x48] sm:$0xe]
      %v4354 = vld [vmem:[%s3254 + $0x54] sm:$0xe]
      %v4355 = vld [vmem:[%s3254 + $0x60] sm:$0xe]
      %v4356 = vld [vmem:[%s3254 + $0x6c] sm:$0xe]
      %v4357 = vld [vmem:[%s3254 + $0x78] sm:$0xe]
      %v4358 = vld [vmem:[%s3254 + $0x84] sm:$0xe]
      %v4359 = vld [vmem:[%s3254 + $0x90] sm:$0xe]
      %v4360 = vld [vmem:[%s3254 + $0x9c] sm:$0xe]
      %v4361 = vld [vmem:[%s3254 + $0xa8] sm:$0xe]
      %v4362 = vld [vmem:[%s3254 + $0xb4] sm:$0xe]
      %v4411 = vrot.slane %v4347, 5
      %v4412 = vrot.slane %v4411, 4
      %v4413 = vrot.slane %v3618, 5
      %v4414 = vsel %vm1276, %v4412, %v4413
      %v4415 = vrot.slane %v4413, 4
      %v4416 = vrot.slane %v3619, 5
      %v4417 = vsel %vm1276, %v4415, %v4416
      %v4418 = vrot.slane %v4348, 5
      %v4419 = vrot.slane %v4418, 4
      %v4420 = vrot.slane %v3621, 5
      %v4421 = vsel %vm1276, %v4419, %v4420
      %v4422 = vrot.slane %v4420, 4
      %v4423 = vrot.slane %v3622, 5
      %v4424 = vsel %vm1276, %v4422, %v4423
      %v4425 = vrot.slane %v4349, 5
      %v4426 = vrot.slane %v4425, 4
      %v4427 = vrot.slane %v3624, 5
      %v4428 = vsel %vm1276, %v4426, %v4427
      %v4429 = vrot.slane %v4427, 4
      %v4430 = vrot.slane %v3625, 5
      %v4431 = vsel %vm1276, %v4429, %v4430
      %v4432 = vrot.slane %v4350, 5
      %v4433 = vrot.slane %v4432, 4
      %v4434 = vrot.slane %v3627, 5
      %v4435 = vsel %vm1276, %v4433, %v4434
      %v4436 = vrot.slane %v4434, 4
      %v4437 = vrot.slane %v3628, 5
      %v4438 = vsel %vm1276, %v4436, %v4437
      %v4439 = vrot.slane %v4351, 5
      %v4440 = vrot.slane %v4439, 4
      %v4441 = vrot.slane %v3630, 5
      %v4442 = vsel %vm1276, %v4440, %v4441
      %v4443 = vrot.slane %v4441, 4
      %v4444 = vrot.slane %v3631, 5
      %v4445 = vsel %vm1276, %v4443, %v4444
      %v4446 = vrot.slane %v4352, 5
      %v4447 = vrot.slane %v4446, 4
      %v4448 = vrot.slane %v3633, 5
      %v4449 = vsel %vm1276, %v4447, %v4448
      %v4450 = vrot.slane %v4448, 4
      %v4451 = vrot.slane %v3634, 5
      %v4452 = vsel %vm1276, %v4450, %v4451
      %v4453 = vrot.slane %v4353, 5
      %v4454 = vrot.slane %v4453, 4
      %v4455 = vrot.slane %v3636, 5
      %v4456 = vsel %vm1276, %v4454, %v4455
      %v4457 = vrot.slane %v4455, 4
      %v4458 = vrot.slane %v3637, 5
      %v4459 = vsel %vm1276, %v4457, %v4458
      %v4460 = vrot.slane %v4354, 5
      %v4461 = vrot.slane %v4460, 4
      %v4462 = vrot.slane %v3639, 5
      %v4463 = vsel %vm1276, %v4461, %v4462
      %v4464 = vrot.slane %v4462, 4
      %v4465 = vrot.slane %v3640, 5
      %v4466 = vsel %vm1276, %v4464, %v4465
      %v4467 = vrot.slane %v4355, 5
      %v4468 = vrot.slane %v4467, 4
      %v4469 = vrot.slane %v3642, 5
      %v4470 = vsel %vm1276, %v4468, %v4469
      %v4471 = vrot.slane %v4469, 4
      %v4472 = vrot.slane %v3643, 5
      %v4473 = vsel %vm1276, %v4471, %v4472
      %v4474 = vrot.slane %v4356, 5
      %v4475 = vrot.slane %v4474, 4
      %v4476 = vrot.slane %v3645, 5
      %v4477 = vsel %vm1276, %v4475, %v4476
      %v4478 = vrot.slane %v4476, 4
      %v4479 = vrot.slane %v3646, 5
      %v4480 = vsel %vm1276, %v4478, %v4479
      %v4481 = vrot.slane %v4357, 5
      %v4482 = vrot.slane %v4481, 4
      %v4483 = vrot.slane %v3648, 5
      %v4484 = vsel %vm1276, %v4482, %v4483
      %v4485 = vrot.slane %v4483, 4
      %v4486 = vrot.slane %v3649, 5
      %v4487 = vsel %vm1276, %v4485, %v4486
      %v4488 = vrot.slane %v4358, 5
      %v4489 = vrot.slane %v4488, 4
      %v4490 = vrot.slane %v3651, 5
      %v4491 = vsel %vm1276, %v4489, %v4490
      %v4492 = vrot.slane %v4490, 4
      %v4493 = vrot.slane %v3652, 5
      %v4494 = vsel %vm1276, %v4492, %v4493
      %v4495 = vrot.slane %v4359, 5
      %v4496 = vrot.slane %v4495, 4
      %v4497 = vrot.slane %v3654, 5
      %v4498 = vsel %vm1276, %v4496, %v4497
      %v4499 = vrot.slane %v4497, 4
      %v4500 = vrot.slane %v3655, 5
      %v4501 = vsel %vm1276, %v4499, %v4500
      %v4502 = vrot.slane %v4360, 5
      %v4503 = vrot.slane %v4502, 4
      %v4504 = vrot.slane %v3657, 5
      %v4505 = vsel %vm1276, %v4503, %v4504
      %v4506 = vrot.slane %v4504, 4
      %v4507 = vrot.slane %v3658, 5
      %v4508 = vsel %vm1276, %v4506, %v4507
      %v4509 = vrot.slane %v4361, 5
      %v4510 = vrot.slane %v4509, 4
      %v4511 = vrot.slane %v3660, 5
      %v4512 = vsel %vm1276, %v4510, %v4511
      %v4513 = vrot.slane %v4511, 4
      %v4514 = vrot.slane %v3661, 5
      %v4515 = vsel %vm1276, %v4513, %v4514
      %v4516 = vrot.slane %v4362, 5
      %v4517 = vrot.slane %v4516, 4
      %v4518 = vrot.slane %v3663, 5
      %v4519 = vsel %vm1276, %v4517, %v4518
      %v4520 = vrot.slane %v4518, 4
      %v4521 = vrot.slane %v3664, 5
      %v4522 = vsel %vm1276, %v4520, %v4521
      %s4523 = scalar_lea.vmem %s1, 64
      %v4524 = vld [vmem:[%s4523] sm:$0xf]
      %v4525 = vld [vmem:[%s4523 + $0x4] sm:$0xf]
      %v4526 = vunpack.c.l.b16 %v4414
      %v4527 = vunpack.c.l.b16 %v4417
      %v4528 = vunpack.c.l.b16 %v4421
      %v4529 = vunpack.c.l.b16 %v4424
      %v4530 = vunpack.c.l.b16 %v4428
      %v4531 = vunpack.c.l.b16 %v4431
      %v4532 = vunpack.c.l.b16 %v4435
      %v4533 = vunpack.c.l.b16 %v4438
      %v4534 = vunpack.c.l.b16 %v4442
      %v4535 = vunpack.c.l.b16 %v4445
      %v4536 = vunpack.c.l.b16 %v4449
      %v4537 = vunpack.c.l.b16 %v4452
      %v4538 = vunpack.c.l.b16 %v4456
      %v4539 = vunpack.c.l.b16 %v4459
      %v4540 = vunpack.c.l.b16 %v4463
      %v4541 = vunpack.c.l.b16 %v4466
      %v4542 = vunpack.c.l.b16 %v4470
      %v4543 = vunpack.c.l.b16 %v4473
      %v4544 = vunpack.c.l.b16 %v4477
      %v4545 = vunpack.c.l.b16 %v4480
      %v4546 = vunpack.c.l.b16 %v4484
      %v4547 = vunpack.c.l.b16 %v4487
      %v4548 = vunpack.c.l.b16 %v4491
      %v4549 = vunpack.c.l.b16 %v4494
      %v4550 = vunpack.c.l.b16 %v4498
      %v4551 = vunpack.c.l.b16 %v4501
      %v4552 = vunpack.c.l.b16 %v4505
      %v4553 = vunpack.c.l.b16 %v4508
      %v4554 = vunpack.c.l.b16 %v4512
      %v4555 = vunpack.c.l.b16 %v4515
      %v4556 = vunpack.c.l.b16 %v4519
      %v4557 = vunpack.c.l.b16 %v4522
      %v4558 = vpack.c.b16 %v4527, %v4526
      %v4559 = vpack.c.b16 %v4529, %v4528
      %v4560 = vpack.c.b16 %v4531, %v4530
      %v4561 = vpack.c.b16 %v4533, %v4532
      %v4562 = vpack.c.b16 %v4535, %v4534
      %v4563 = vpack.c.b16 %v4537, %v4536
      %v4564 = vpack.c.b16 %v4539, %v4538
      %v4565 = vpack.c.b16 %v4541, %v4540
      %v4566 = vpack.c.b16 %v4543, %v4542
      %v4567 = vpack.c.b16 %v4545, %v4544
      %v4568 = vpack.c.b16 %v4547, %v4546
      %v4569 = vpack.c.b16 %v4549, %v4548
      %v4570 = vpack.c.b16 %v4551, %v4550
      %v4571 = vpack.c.b16 %v4553, %v4552
      %v4572 = vpack.c.b16 %v4555, %v4554
      %v4573 = vpack.c.b16 %v4557, %v4556
      %v4576 = vunpack.c.l.b16 %v4524
      %v4577 = vunpack.c.l.b16 %v4525
      %v4578 = vpack.c.b16 %v4577, %v4576
      %v4581 = vsel %vm721, %v4558, 0
      %v4584 = vsel %vm721, %v4559, 0
      %v4587 = vsel %vm721, %v4560, 0
      %v4590 = vsel %vm721, %v4561, 0
      %v4593 = vsel %vm721, %v4562, 0
      %v4596 = vsel %vm721, %v4563, 0
      %v4599 = vsel %vm721, %v4564, 0
      %v4602 = vsel %vm721, %v4565, 0
      %v4605 = vsel %vm721, %v4566, 0
      %v4608 = vsel %vm721, %v4567, 0
      %v4611 = vsel %vm721, %v4568, 0
      %v4614 = vsel %vm721, %v4569, 0
      %v4617 = vsel %vm721, %v4570, 0
      %v4620 = vsel %vm721, %v4571, 0
      %v4623 = vsel %vm721, %v4572, 0
      %v4626 = vsel %vm721, %v4573, 0
      %4628 = vmatprep.subr.bf16.mxu0 0
      %4629 = vmatpush1.bf16.msra.mxu0 0
      %4630 = vmatprep.subr.bf16.mxu0 0
      %4631 = vmatpush1.bf16.msra.mxu0 0
      %4632 = vmatprep.subr.bf16.mxu0 0
      %4633 = vmatpush1.bf16.msra.mxu0 0
      %4634 = vmatprep.subr.bf16.mxu0 0
      %4635 = vmatpush1.bf16.msra.mxu0 0
      %4636 = vmatprep.subr.bf16.mxu0 0
      %4637 = vmatpush1.bf16.msra.mxu0 0
      %4638 = vmatprep.subr.bf16.mxu0 0
      %4639 = vmatpush1.bf16.msra.mxu0 0
      %4640 = vmatprep.subr.bf16.mxu0 0
      %4641 = vmatpush1.bf16.msra.mxu0 0
      %4642 = vmatprep.subr.bf16.mxu0 0
      %4643 = vmatpush1.bf16.msra.mxu0 %v4578
      %4644 = vmatprep.subr.bf16.mxu0 0
      %4645 = vmatpush2.bf16.msra.mxu0 0
      %4646 = vmatprep.subr.bf16.mxu0 0
      %4647 = vmatpush2.bf16.msra.mxu0 0
      %4648 = vmatprep.subr.bf16.mxu0 0
      %4649 = vmatpush2.bf16.msra.mxu0 0
      %4650 = vmatprep.subr.bf16.mxu0 0
      %4651 = vmatpush2.bf16.msra.mxu0 0
      %4652 = vmatprep.subr.bf16.mxu0 0
      %4653 = vmatpush2.bf16.msra.mxu0 0
      %4654 = vmatprep.subr.bf16.mxu0 0
      %4655 = vmatpush2.bf16.msra.mxu0 0
      %4656 = vmatprep.subr.bf16.mxu0 0
      %4657 = vmatpush2.bf16.msra.mxu0 0
      %4658 = vmatprep.subr.bf16.mxu0 0
      %4659 = vmatpush2.bf16.msra.mxu0 0
      %4660 = vmatprep.mubr.bf16.mxu0 0
      %4661 = vmatmul.mubr.bf16.gmra.mxu0 %v4581
      %v4662 = vpop.f32.mrf.mxu0
      %v4663 = vadd.f32 0.0, %v4662
      %v4664 = vpop.f32.mrf.mxu0
      %v4665 = vpop.f32.mrf.mxu0
      %v4666 = vadd.f32 0.0, %v4665
      %v4667 = vpop.f32.mrf.mxu0
      %4668 = vmatprep.mubr.bf16.mxu0 0
      %4669 = vmatmul.mubr.bf16.gmra.mxu0 %v4584
      %v4670 = vpop.f32.mrf.mxu0
      %v4671 = vadd.f32 0.0, %v4670
      %v4672 = vpop.f32.mrf.mxu0
      %v4673 = vpop.f32.mrf.mxu0
      %v4674 = vadd.f32 0.0, %v4673
      %v4675 = vpop.f32.mrf.mxu0
      %4676 = vmatprep.mubr.bf16.mxu0 0
      %4677 = vmatmul.mubr.bf16.gmra.mxu0 %v4587
      %v4678 = vpop.f32.mrf.mxu0
      %v4679 = vadd.f32 0.0, %v4678
      %v4680 = vpop.f32.mrf.mxu0
      %v4681 = vpop.f32.mrf.mxu0
      %v4682 = vadd.f32 0.0, %v4681
      %v4683 = vpop.f32.mrf.mxu0
      %4684 = vmatprep.mubr.bf16.mxu0 0
      %4685 = vmatmul.mubr.bf16.gmra.mxu0 %v4590
      %v4686 = vpop.f32.mrf.mxu0
      %v4687 = vadd.f32 0.0, %v4686
      %v4688 = vpop.f32.mrf.mxu0
      %v4689 = vpop.f32.mrf.mxu0
      %v4690 = vadd.f32 0.0, %v4689
      %v4691 = vpop.f32.mrf.mxu0
      %4692 = vmatprep.mubr.bf16.mxu0 0
      %4693 = vmatmul.mubr.bf16.gmra.mxu0 %v4593
      %v4694 = vpop.f32.mrf.mxu0
      %v4695 = vadd.f32 0.0, %v4694
      %v4696 = vpop.f32.mrf.mxu0
      %v4697 = vpop.f32.mrf.mxu0
      %v4698 = vadd.f32 0.0, %v4697
      %v4699 = vpop.f32.mrf.mxu0
      %4700 = vmatprep.mubr.bf16.mxu0 0
      %4701 = vmatmul.mubr.bf16.gmra.mxu0 %v4596
      %v4702 = vpop.f32.mrf.mxu0
      %v4703 = vadd.f32 0.0, %v4702
      %v4704 = vpop.f32.mrf.mxu0
      %v4705 = vpop.f32.mrf.mxu0
      %v4706 = vadd.f32 0.0, %v4705
      %v4707 = vpop.f32.mrf.mxu0
      %4708 = vmatprep.mubr.bf16.mxu0 0
      %4709 = vmatmul.mubr.bf16.gmra.mxu0 %v4599
      %v4710 = vpop.f32.mrf.mxu0
      %v4711 = vadd.f32 0.0, %v4710
      %v4712 = vpop.f32.mrf.mxu0
      %v4713 = vpop.f32.mrf.mxu0
      %v4714 = vadd.f32 0.0, %v4713
      %v4715 = vpop.f32.mrf.mxu0
      %4716 = vmatprep.mubr.bf16.mxu0 0
      %4717 = vmatmul.mubr.bf16.gmra.mxu0 %v4602
      %v4718 = vpop.f32.mrf.mxu0
      %v4719 = vadd.f32 0.0, %v4718
      %v4720 = vpop.f32.mrf.mxu0
      %v4721 = vpop.f32.mrf.mxu0
      %v4722 = vadd.f32 0.0, %v4721
      %v4723 = vpop.f32.mrf.mxu0
      %4724 = vmatprep.mubr.bf16.mxu0 0
      %4725 = vmatmul.mubr.bf16.gmra.mxu0 %v4605
      %v4726 = vpop.f32.mrf.mxu0
      %v4727 = vadd.f32 0.0, %v4726
      %v4728 = vpop.f32.mrf.mxu0
      %v4729 = vpop.f32.mrf.mxu0
      %v4730 = vadd.f32 0.0, %v4729
      %v4731 = vpop.f32.mrf.mxu0
      %4732 = vmatprep.mubr.bf16.mxu0 0
      %4733 = vmatmul.mubr.bf16.gmra.mxu0 %v4608
      %v4734 = vpop.f32.mrf.mxu0
      %v4735 = vadd.f32 0.0, %v4734
      %v4736 = vpop.f32.mrf.mxu0
      %v4737 = vpop.f32.mrf.mxu0
      %v4738 = vadd.f32 0.0, %v4737
      %v4739 = vpop.f32.mrf.mxu0
      %4740 = vmatprep.mubr.bf16.mxu0 0
      %4741 = vmatmul.mubr.bf16.gmra.mxu0 %v4611
      %v4742 = vpop.f32.mrf.mxu0
      %v4743 = vadd.f32 0.0, %v4742
      %v4744 = vpop.f32.mrf.mxu0
      %v4745 = vpop.f32.mrf.mxu0
      %v4746 = vadd.f32 0.0, %v4745
      %v4747 = vpop.f32.mrf.mxu0
      %4748 = vmatprep.mubr.bf16.mxu0 0
      %4749 = vmatmul.mubr.bf16.gmra.mxu0 %v4614
      %v4750 = vpop.f32.mrf.mxu0
      %v4751 = vadd.f32 0.0, %v4750
      %v4752 = vpop.f32.mrf.mxu0
      %v4753 = vpop.f32.mrf.mxu0
      %v4754 = vadd.f32 0.0, %v4753
      %v4755 = vpop.f32.mrf.mxu0
      %4756 = vmatprep.mubr.bf16.mxu0 0
      %4757 = vmatmul.mubr.bf16.gmra.mxu0 %v4617
      %v4758 = vpop.f32.mrf.mxu0
      %v4759 = vadd.f32 0.0, %v4758
      %v4760 = vpop.f32.mrf.mxu0
      %v4761 = vpop.f32.mrf.mxu0
      %v4762 = vadd.f32 0.0, %v4761
      %v4763 = vpop.f32.mrf.mxu0
      %4764 = vmatprep.mubr.bf16.mxu0 0
      %4765 = vmatmul.mubr.bf16.gmra.mxu0 %v4620
      %v4766 = vpop.f32.mrf.mxu0
      %v4767 = vadd.f32 0.0, %v4766
      %v4768 = vpop.f32.mrf.mxu0
      %v4769 = vpop.f32.mrf.mxu0
      %v4770 = vadd.f32 0.0, %v4769
      %v4771 = vpop.f32.mrf.mxu0
      %4772 = vmatprep.mubr.bf16.mxu0 0
      %4773 = vmatmul.mubr.bf16.gmra.mxu0 %v4623
      %v4774 = vpop.f32.mrf.mxu0
      %v4775 = vadd.f32 0.0, %v4774
      %v4776 = vpop.f32.mrf.mxu0
      %v4777 = vpop.f32.mrf.mxu0
      %v4778 = vadd.f32 0.0, %v4777
      %v4779 = vpop.f32.mrf.mxu0
      %4780 = vmatprep.mubr.bf16.mxu0 0
      %4781 = vmatmul.mubr.bf16.gmra.mxu0 %v4626
      %v4782 = vpop.f32.mrf.mxu0
      %v4783 = vadd.f32 0.0, %v4782
      %v4784 = vpop.f32.mrf.mxu0
      %v4785 = vpop.f32.mrf.mxu0
      %v4786 = vadd.f32 0.0, %v4785
      %v4787 = vpop.f32.mrf.mxu0
      %4788 = vdwg.mxu0
      %v4789 = vadd.f32 %v4315, %v4663
      %v4790 = vadd.f32 %v4316, %v4666
      %v4791 = vadd.f32 %v4317, %v4671
      %v4792 = vadd.f32 %v4318, %v4674
      %v4793 = vadd.f32 %v4319, %v4679
      %v4794 = vadd.f32 %v4320, %v4682
      %v4795 = vadd.f32 %v4321, %v4687
      %v4796 = vadd.f32 %v4322, %v4690
      %v4797 = vadd.f32 %v4323, %v4695
      %v4798 = vadd.f32 %v4324, %v4698
      %v4799 = vadd.f32 %v4325, %v4703
      %v4800 = vadd.f32 %v4326, %v4706
      %v4801 = vadd.f32 %v4327, %v4711
      %v4802 = vadd.f32 %v4328, %v4714
      %v4803 = vadd.f32 %v4329, %v4719
      %v4804 = vadd.f32 %v4330, %v4722
      %v4805 = vadd.f32 %v4331, %v4727
      %v4806 = vadd.f32 %v4332, %v4730
      %v4807 = vadd.f32 %v4333, %v4735
      %v4808 = vadd.f32 %v4334, %v4738
      %v4809 = vadd.f32 %v4335, %v4743
      %v4810 = vadd.f32 %v4336, %v4746
      %v4811 = vadd.f32 %v4337, %v4751
      %v4812 = vadd.f32 %v4338, %v4754
      %v4813 = vadd.f32 %v4339, %v4759
      %v4814 = vadd.f32 %v4340, %v4762
      %v4815 = vadd.f32 %v4341, %v4767
      %v4816 = vadd.f32 %v4342, %v4770
      %v4817 = vadd.f32 %v4343, %v4775
      %v4818 = vadd.f32 %v4344, %v4778
      %v4819 = vadd.f32 %v4345, %v4783
      %v4820 = vadd.f32 %v4346, %v4786
      %v4821 = vld [vmem:[%s2] sm:$0x1]
      %v4823 = vlaneseq
      %v4824 = vshrl.u32 %v4823, 7
      %v4825 = vsub.s32 0, %v4824
      %v4826 = vrot.slane %v4821, %v4825
      %v4828 = vadd.f32 %v4789, %v4826
      %v4829 = vadd.f32 %v4790, %v4826
      %v4830 = vadd.f32 %v4791, %v4826
      %v4831 = vadd.f32 %v4792, %v4826
      %v4832 = vadd.f32 %v4793, %v4826
      %v4833 = vadd.f32 %v4794, %v4826
      %v4834 = vadd.f32 %v4795, %v4826
      %v4835 = vadd.f32 %v4796, %v4826
      %v4836 = vadd.f32 %v4797, %v4826
      %v4837 = vadd.f32 %v4798, %v4826
      %v4838 = vadd.f32 %v4799, %v4826
      %v4839 = vadd.f32 %v4800, %v4826
      %v4840 = vadd.f32 %v4801, %v4826
      %v4841 = vadd.f32 %v4802, %v4826
      %v4842 = vadd.f32 %v4803, %v4826
      %v4843 = vadd.f32 %v4804, %v4826
      %v4844 = vadd.f32 %v4805, %v4826
      %v4845 = vadd.f32 %v4806, %v4826
      %v4846 = vadd.f32 %v4807, %v4826
      %v4847 = vadd.f32 %v4808, %v4826
      %v4848 = vadd.f32 %v4809, %v4826
      %v4849 = vadd.f32 %v4810, %v4826
      %v4850 = vadd.f32 %v4811, %v4826
      %v4851 = vadd.f32 %v4812, %v4826
      %v4852 = vadd.f32 %v4813, %v4826
      %v4853 = vadd.f32 %v4814, %v4826
      %v4854 = vadd.f32 %v4815, %v4826
      %v4855 = vadd.f32 %v4816, %v4826
      %v4856 = vadd.f32 %v4817, %v4826
      %v4857 = vadd.f32 %v4818, %v4826
      %v4858 = vadd.f32 %v4819, %v4826
      %v4859 = vadd.f32 %v4820, %v4826
      %v4860 = vld [vmem:[%s3] sm:$0x1]
      %v4862 = vlaneseq
      %v4863 = vshrl.u32 %v4862, 7
      %v4864 = vsub.s32 0, %v4863
      %v4865 = vrot.slane %v4860, %v4864
      %v4867 = vmul.f32 %v4828, %v4865
      %v4868 = vmul.f32 %v4829, %v4865
      %v4869 = vmul.f32 %v4830, %v4865
      %v4870 = vmul.f32 %v4831, %v4865
      %v4871 = vmul.f32 %v4832, %v4865
      %v4872 = vmul.f32 %v4833, %v4865
      %v4873 = vmul.f32 %v4834, %v4865
      %v4874 = vmul.f32 %v4835, %v4865
      %v4875 = vmul.f32 %v4836, %v4865
      %v4876 = vmul.f32 %v4837, %v4865
      %v4877 = vmul.f32 %v4838, %v4865
      %v4878 = vmul.f32 %v4839, %v4865
      %v4879 = vmul.f32 %v4840, %v4865
      %v4880 = vmul.f32 %v4841, %v4865
      %v4881 = vmul.f32 %v4842, %v4865
      %v4882 = vmul.f32 %v4843, %v4865
      %v4883 = vmul.f32 %v4844, %v4865
      %v4884 = vmul.f32 %v4845, %v4865
      %v4885 = vmul.f32 %v4846, %v4865
      %v4886 = vmul.f32 %v4847, %v4865
      %v4887 = vmul.f32 %v4848, %v4865
      %v4888 = vmul.f32 %v4849, %v4865
      %v4889 = vmul.f32 %v4850, %v4865
      %v4890 = vmul.f32 %v4851, %v4865
      %v4891 = vmul.f32 %v4852, %v4865
      %v4892 = vmul.f32 %v4853, %v4865
      %v4893 = vmul.f32 %v4854, %v4865
      %v4894 = vmul.f32 %v4855, %v4865
      %v4895 = vmul.f32 %v4856, %v4865
      %v4896 = vmul.f32 %v4857, %v4865
      %v4897 = vmul.f32 %v4858, %v4865
      %v4898 = vmul.f32 %v4859, %v4865
      %v4899 = vld [vmem:[%s4] sm:$0x1]
      %v4901 = vlaneseq
      %v4902 = vshrl.u32 %v4901, 7
      %v4903 = vsub.s32 0, %v4902
      %v4904 = vrot.slane %v4899, %v4903
      %v4906 = vadd.f32 %v4867, %v4904
      %v4907 = vadd.f32 %v4868, %v4904
      %v4908 = vadd.f32 %v4869, %v4904
      %v4909 = vadd.f32 %v4870, %v4904
      %v4910 = vadd.f32 %v4871, %v4904
      %v4911 = vadd.f32 %v4872, %v4904
      %v4912 = vadd.f32 %v4873, %v4904
      %v4913 = vadd.f32 %v4874, %v4904
      %v4914 = vadd.f32 %v4875, %v4904
      %v4915 = vadd.f32 %v4876, %v4904
      %v4916 = vadd.f32 %v4877, %v4904
      %v4917 = vadd.f32 %v4878, %v4904
      %v4918 = vadd.f32 %v4879, %v4904
      %v4919 = vadd.f32 %v4880, %v4904
      %v4920 = vadd.f32 %v4881, %v4904
      %v4921 = vadd.f32 %v4882, %v4904
      %v4922 = vadd.f32 %v4883, %v4904
      %v4923 = vadd.f32 %v4884, %v4904
      %v4924 = vadd.f32 %v4885, %v4904
      %v4925 = vadd.f32 %v4886, %v4904
      %v4926 = vadd.f32 %v4887, %v4904
      %v4927 = vadd.f32 %v4888, %v4904
      %v4928 = vadd.f32 %v4889, %v4904
      %v4929 = vadd.f32 %v4890, %v4904
      %v4930 = vadd.f32 %v4891, %v4904
      %v4931 = vadd.f32 %v4892, %v4904
      %v4932 = vadd.f32 %v4893, %v4904
      %v4933 = vadd.f32 %v4894, %v4904
      %v4934 = vadd.f32 %v4895, %v4904
      %v4935 = vadd.f32 %v4896, %v4904
      %v4936 = vadd.f32 %v4897, %v4904
      %v4937 = vadd.f32 %v4898, %v4904
      %v4938 = vmax.f32 %v4906, 0.0
      %v4939 = vmax.f32 %v4907, 0.0
      %v4940 = vmax.f32 %v4908, 0.0
      %v4941 = vmax.f32 %v4909, 0.0
      %v4942 = vmax.f32 %v4910, 0.0
      %v4943 = vmax.f32 %v4911, 0.0
      %v4944 = vmax.f32 %v4912, 0.0
      %v4945 = vmax.f32 %v4913, 0.0
      %v4946 = vmax.f32 %v4914, 0.0
      %v4947 = vmax.f32 %v4915, 0.0
      %v4948 = vmax.f32 %v4916, 0.0
      %v4949 = vmax.f32 %v4917, 0.0
      %v4950 = vmax.f32 %v4918, 0.0
      %v4951 = vmax.f32 %v4919, 0.0
      %v4952 = vmax.f32 %v4920, 0.0
      %v4953 = vmax.f32 %v4921, 0.0
      %v4954 = vmax.f32 %v4922, 0.0
      %v4955 = vmax.f32 %v4923, 0.0
      %v4956 = vmax.f32 %v4924, 0.0
      %v4957 = vmax.f32 %v4925, 0.0
      %v4958 = vmax.f32 %v4926, 0.0
      %v4959 = vmax.f32 %v4927, 0.0
      %v4960 = vmax.f32 %v4928, 0.0
      %v4961 = vmax.f32 %v4929, 0.0
      %v4962 = vmax.f32 %v4930, 0.0
      %v4963 = vmax.f32 %v4931, 0.0
      %v4964 = vmax.f32 %v4932, 0.0
      %v4965 = vmax.f32 %v4933, 0.0
      %v4966 = vmax.f32 %v4934, 0.0
      %v4967 = vmax.f32 %v4935, 0.0
      %v4968 = vmax.f32 %v4936, 0.0
      %v4969 = vmax.f32 %v4937, 0.0
      %v4970 = vpack.c.bf16 %v4939, %v4938
      %v4971 = vpack.c.bf16 %v4941, %v4940
      %v4972 = vpack.c.bf16 %v4943, %v4942
      %v4973 = vpack.c.bf16 %v4945, %v4944
      %v4974 = vpack.c.bf16 %v4947, %v4946
      %v4975 = vpack.c.bf16 %v4949, %v4948
      %v4976 = vpack.c.bf16 %v4951, %v4950
      %v4977 = vpack.c.bf16 %v4953, %v4952
      %v4978 = vpack.c.bf16 %v4955, %v4954
      %v4979 = vpack.c.bf16 %v4957, %v4956
      %v4980 = vpack.c.bf16 %v4959, %v4958
      %v4981 = vpack.c.bf16 %v4961, %v4960
      %v4982 = vpack.c.bf16 %v4963, %v4962
      %v4983 = vpack.c.bf16 %v4965, %v4964
      %v4984 = vpack.c.bf16 %v4967, %v4966
      %v4985 = vpack.c.bf16 %v4969, %v4968
      %v5002 = vunpack.c.l.b16 %v4970
      %v5003 = vunpack.c.h.b16 %v4970
      %v5004 = vunpack.c.l.b16 %v4971
      %v5005 = vunpack.c.h.b16 %v4971
      %v5006 = vunpack.c.l.b16 %v4972
      %v5007 = vunpack.c.h.b16 %v4972
      %v5008 = vunpack.c.l.b16 %v4973
      %v5009 = vunpack.c.h.b16 %v4973
      %v5010 = vunpack.c.l.b16 %v4974
      %v5011 = vunpack.c.h.b16 %v4974
      %v5012 = vunpack.c.l.b16 %v4975
      %v5013 = vunpack.c.h.b16 %v4975
      %v5014 = vunpack.c.l.b16 %v4976
      %v5015 = vunpack.c.h.b16 %v4976
      %v5016 = vunpack.c.l.b16 %v4977
      %v5017 = vunpack.c.h.b16 %v4977
      %v5018 = vunpack.c.l.b16 %v4978
      %v5019 = vunpack.c.h.b16 %v4978
      %v5020 = vunpack.c.l.b16 %v4979
      %v5021 = vunpack.c.h.b16 %v4979
      %v5022 = vunpack.c.l.b16 %v4980
      %v5023 = vunpack.c.h.b16 %v4980
      %v5024 = vunpack.c.l.b16 %v4981
      %v5025 = vunpack.c.h.b16 %v4981
      %v5026 = vunpack.c.l.b16 %v4982
      %v5027 = vunpack.c.h.b16 %v4982
      %v5028 = vunpack.c.l.b16 %v4983
      %v5029 = vunpack.c.h.b16 %v4983
      %v5030 = vunpack.c.l.b16 %v4984
      %v5031 = vunpack.c.h.b16 %v4984
      %v5032 = vunpack.c.l.b16 %v4985
      %v5033 = vunpack.c.h.b16 %v4985
      %v5034 = vpack.c.b16 %v5002, %v5002
      %v5035 = vpack.c.b16 %v5003, %v5003
      %v5036 = vpack.c.b16 %v5004, %v5004
      %v5037 = vpack.c.b16 %v5005, %v5005
      %v5038 = vpack.c.b16 %v5006, %v5006
      %v5039 = vpack.c.b16 %v5007, %v5007
      %v5040 = vpack.c.b16 %v5008, %v5008
      %v5041 = vpack.c.b16 %v5009, %v5009
      %v5042 = vpack.c.b16 %v5010, %v5010
      %v5043 = vpack.c.b16 %v5011, %v5011
      %v5044 = vpack.c.b16 %v5012, %v5012
      %v5045 = vpack.c.b16 %v5013, %v5013
      %v5046 = vpack.c.b16 %v5014, %v5014
      %v5047 = vpack.c.b16 %v5015, %v5015
      %v5048 = vpack.c.b16 %v5016, %v5016
      %v5049 = vpack.c.b16 %v5017, %v5017
      %v5050 = vpack.c.b16 %v5018, %v5018
      %v5051 = vpack.c.b16 %v5019, %v5019
      %v5052 = vpack.c.b16 %v5020, %v5020
      %v5053 = vpack.c.b16 %v5021, %v5021
      %v5054 = vpack.c.b16 %v5022, %v5022
      %v5055 = vpack.c.b16 %v5023, %v5023
      %v5056 = vpack.c.b16 %v5024, %v5024
      %v5057 = vpack.c.b16 %v5025, %v5025
      %v5058 = vpack.c.b16 %v5026, %v5026
      %v5059 = vpack.c.b16 %v5027, %v5027
      %v5060 = vpack.c.b16 %v5028, %v5028
      %v5061 = vpack.c.b16 %v5029, %v5029
      %v5062 = vpack.c.b16 %v5030, %v5030
      %v5063 = vpack.c.b16 %v5031, %v5031
      %v5064 = vpack.c.b16 %v5032, %v5032
      %v5065 = vpack.c.b16 %v5033, %v5033
      %5098 = vst [vmem:[%s224] sm:$0xf] %v5034
      %5099 = vst [vmem:[%s224 + $0x4] sm:$0xf] %v5035
      %5100 = vst [vmem:[%s224 + $0x8] sm:$0xf] %v5036
      %5101 = vst [vmem:[%s224 + $0xc] sm:$0xf] %v5037
      %5102 = vst [vmem:[%s224 + $0x10] sm:$0xf] %v5038
      %5103 = vst [vmem:[%s224 + $0x14] sm:$0xf] %v5039
      %5104 = vst [vmem:[%s224 + $0x18] sm:$0xf] %v5040
      %5105 = vst [vmem:[%s224 + $0x1c] sm:$0xf] %v5041
      %5106 = vst [vmem:[%s224 + $0x20] sm:$0xf] %v5042
      %5107 = vst [vmem:[%s224 + $0x24] sm:$0xf] %v5043
      %5108 = vst [vmem:[%s224 + $0x28] sm:$0xf] %v5044
      %5109 = vst [vmem:[%s224 + $0x2c] sm:$0xf] %v5045
      %5110 = vst [vmem:[%s224 + $0x30] sm:$0xf] %v5046
      %5111 = vst [vmem:[%s224 + $0x34] sm:$0xf] %v5047
      %5112 = vst [vmem:[%s224 + $0x38] sm:$0xf] %v5048
      %5113 = vst [vmem:[%s224 + $0x3c] sm:$0xf] %v5049
      %5114 = vst [vmem:[%s224 + $0x40] sm:$0xf] %v5050
      %5115 = vst [vmem:[%s224 + $0x44] sm:$0xf] %v5051
      %5116 = vst [vmem:[%s224 + $0x48] sm:$0xf] %v5052
      %5117 = vst [vmem:[%s224 + $0x4c] sm:$0xf] %v5053
      %5118 = vst [vmem:[%s224 + $0x50] sm:$0xf] %v5054
      %5119 = vst [vmem:[%s224 + $0x54] sm:$0xf] %v5055
      %5120 = vst [vmem:[%s224 + $0x58] sm:$0xf] %v5056
      %5121 = vst [vmem:[%s224 + $0x5c] sm:$0xf] %v5057
      %5122 = vst [vmem:[%s224 + $0x60] sm:$0xf] %v5058
      %5123 = vst [vmem:[%s224 + $0x64] sm:$0xf] %v5059
      %5124 = vst [vmem:[%s224 + $0x68] sm:$0xf] %v5060
      %5125 = vst [vmem:[%s224 + $0x6c] sm:$0xf] %v5061
      %5126 = vst [vmem:[%s224 + $0x70] sm:$0xf] %v5062
      %5127 = vst [vmem:[%s224 + $0x74] sm:$0xf] %v5063
      %5128 = vst [vmem:[%s224 + $0x78] sm:$0xf] %v5064
      %5129 = vst [vmem:[%s224 + $0x7c] sm:$0xf] %v5065
      %s5130 = smul.u32 32, %s16
      %p5131 = scmp.lt.s32.totalorder %s5130, 63
      %s5132 = scalar_select %p5131, %s5130, 63
      %s5133 = smul.addr %s5132, 4
      %s5134 = scalar_lea.vmem %s5, %s5133
      // Predicated region
      $region41: #{wide_basic_forward.5} parent=39 // pred_check
        %p5135 = pneg %p144
      $region42: #{wide_basic_forward.5} parent=39 // pred_check_branch
        %5137 = sbr.rel (%p5135) target = $region44
      $region43: #{wide_basic_forward.5} parent=39 // pred_region
        %s5138 = smul.u32 32, %s16
      $region44: #{wide_basic_forward.5} parent=39 // pred_fallthru
        _
    $region40: #{wide_basic_forward.5} parent=5 // pred_fallthru
      _
    %p5139 = scmp.le.s32.totalorder 2, %s11
    // Predicated region
    $region45: #{wide_basic_forward.5} parent=5 // pred_check
      %p5140 = pneg %p5139
    $region46: #{wide_basic_forward.5} parent=5 // pred_check_branch
      %5142 = sbr.rel (%p5140) target = $region48
    $region47: #{wide_basic_forward.5} parent=5 // pred_region
      %s5143 = ssub.s32 %s11, 2
      // Predicated region
      $region49: #{wide_basic_forward.5} parent=47 // pred_check
        %p5144 = pneg %p150
      $region50: #{wide_basic_forward.5} parent=47 // pred_check_branch
        %5146 = sbr.rel (%p5144) target = $region52
      $region51: #{wide_basic_forward.5} parent=47 // pred_region
        %s5147 = smul.u32 32, %s17
        %p5148 = scmp.lt.s32.totalorder %s5147, 63
        %s5149 = scalar_select %p5148, %s5147, 63
        %s5150 = smul.addr %s5149, 4
        %s5151 = scalar_lea.vmem %s5, %s5150
      $region52: #{wide_basic_forward.5} parent=47 // pred_fallthru
        _
    $region48: #{wide_basic_forward.5} parent=5 // pred_fallthru
      _
  $region6: #{wide_basic_forward.5} parent=0 // loop_footer
    %s15 = sadd.s32 1, %s11
  $region7: #{wide_basic_forward.5} parent=0 // loop_footer_branch
    %10 = sbr.rel target = $region3
  $region8: #{wide_basic_forward.5} parent=0 // loop_exit
    _

// kernel: wide_basic_forward.7
$region0: #{wide_basic_forward.7}
  #allocation0 [shape = 'u32[]', space=smem, size = 0x4, offset = 0x4, fixed_abs, tag = 'smem constant byte address 0x4 - core index']
  #allocation1 [shape = 'u32[144,128]{1,0:T(1,128)}', space=vmem, size = 0x12000, scoped, tag = 'internal scratch']
  %s0 = inlined_call_operand.vmem [shape: bf16[2,18,18,128], index: 0, kind: input, shape index: {}]
  %s1 = inlined_call_operand.vmem [shape: bf16[9,128,128], index: 1, kind: input, shape index: {}]
  %s2 = inlined_call_operand.vmem [shape: f32[1,128], index: 2, kind: input, shape index: {}]
  %s3 = inlined_call_operand.vmem [shape: bf16[512,128], index: 3, kind: input, shape index: {}]
  %s4 = inlined_call_operand.vmem [shape: f32[512,128], index: 4, kind: output, shape index: {}]
  %s5 = sld [smem:[#allocation0]]
  $region49: #{wide_basic_forward.7} parent=0
    _
  %s7 = ssub.s32 1, %s5
  %s8 = scalar_select 0, %s7, %s5
  loop: start=0, step=1, limit=4
  $region2: #{wide_basic_forward.7} parent=0 // loop_pre_header
    _
  $region3: #{wide_basic_forward.7} parent=0 // loop_header
    %s10 = sphi 0, %s14
    %p11 = scmp.ge.s32.totalorder %s10, 4
    %s20 = sphi 0, %s22
    %s23 = sphi 0, %s20
    %s24 = sphi 0, %s23
    %s40 = sphi 0, %s24
    %s44 = sphi 0, %s44
    %s46 = sphi 0, %s44
    %s47 = sphi 0, %s46
    %s61 = sphi 0, %s47
    %s65 = sphi 0, %s65
    %s67 = sphi 0, %s65
    %s68 = sphi 0, %s67
    %s82 = sphi 0, %s68
    %s88 = sphi 0, %s90
    %s91 = sphi 0, %s88
    %s92 = sphi 0, %s91
    %s108 = sphi 0, %s92
    %s114 = sphi 0, %s116
    %s117 = sphi 0, %s114
    %s118 = sphi 0, %s117
    %s134 = sphi 0, %s118
  $region4: #{wide_basic_forward.7} parent=0 // loop_header_branch
    %13 = sbr.rel (%p11) target = $region8
  $region5: #{wide_basic_forward.7} parent=0 // loop_body
    %s15 = ssub.s32 %s10, 1
    %s16 = ssub.s32 %s10, 2
    %s17 = sadd.s32 %s10, 1
    %s18 = ssub.s32 %s10, %s17
    %p19 = scmp.eq.s32.totalorder %s18, 0
    %s21 = sadd.s32 %s20, 1
    %s22 = scalar_select %p19, %s20, %s21
    %p25 = pneg %p19
    %p26 = scmp.eq.s32.totalorder %s10, 1
    %p27 = por %p25, %p26
    %p28 = scmp.ne.s32.totalorder %s20, %s23
    %p29 = scmp.eq.s32.totalorder %s10, 0
    %p30 = por %p28, %p29
    %p31 = scmp.ne.s32.totalorder %s20, %s23
    %p32 = scmp.eq.s32.totalorder %s15, 1
    %p33 = por %p31, %p32
    %p34 = scmp.ne.s32.totalorder %s23, %s24
    %p35 = scmp.eq.s32.totalorder %s15, 0
    %p36 = por %p34, %p35
    %p37 = scmp.ne.s32.totalorder %s23, %s24
    %p38 = scmp.eq.s32.totalorder %s16, 1
    %p39 = por %p37, %p38
    %p41 = scmp.ne.s32.totalorder %s24, %s40
    %p42 = scmp.eq.s32.totalorder %s16, 0
    %p43 = por %p41, %p42
    %s45 = sadd.s32 %s44, 1
    %p48 = scmp.eq.s32.totalorder %s10, 1
    %p49 = scmp.ne.s32.totalorder %s44, %s46
    %p50 = scmp.eq.s32.totalorder %s10, 0
    %p51 = por %p49, %p50
    %p52 = scmp.ne.s32.totalorder %s44, %s46
    %p53 = scmp.eq.s32.totalorder %s15, 1
    %p54 = por %p52, %p53
    %p55 = scmp.ne.s32.totalorder %s46, %s47
    %p56 = scmp.eq.s32.totalorder %s15, 0
    %p57 = por %p55, %p56
    %p58 = scmp.ne.s32.totalorder %s46, %s47
    %p59 = scmp.eq.s32.totalorder %s16, 1
    %p60 = por %p58, %p59
    %p62 = scmp.ne.s32.totalorder %s47, %s61
    %p63 = scmp.eq.s32.totalorder %s16, 0
    %p64 = por %p62, %p63
    %s66 = sadd.s32 %s65, 1
    %p69 = scmp.eq.s32.totalorder %s10, 1
    %p70 = scmp.ne.s32.totalorder %s65, %s67
    %p71 = scmp.eq.s32.totalorder %s10, 0
    %p72 = por %p70, %p71
    %p73 = scmp.ne.s32.totalorder %s65, %s67
    %p74 = scmp.eq.s32.totalorder %s15, 1
    %p75 = por %p73, %p74
    %p76 = scmp.ne.s32.totalorder %s67, %s68
    %p77 = scmp.eq.s32.totalorder %s15, 0
    %p78 = por %p76, %p77
    %p79 = scmp.ne.s32.totalorder %s67, %s68
    %p80 = scmp.eq.s32.totalorder %s16, 1
    %p81 = por %p79, %p80
    %p83 = scmp.ne.s32.totalorder %s68, %s82
    %p84 = scmp.eq.s32.totalorder %s16, 0
    %p85 = por %p83, %p84
    %s86 = ssub.s32 %s10, %s17
    %p87 = scmp.eq.s32.totalorder %s86, 0
    %s89 = sadd.s32 %s88, 1
    %s90 = scalar_select %p87, %s88, %s89
    %p93 = pneg %p87
    %p94 = scmp.eq.s32.totalorder %s10, 1
    %p95 = por %p93, %p94
    %p96 = scmp.ne.s32.totalorder %s88, %s91
    %p97 = scmp.eq.s32.totalorder %s10, 0
    %p98 = por %p96, %p97
    %p99 = scmp.ne.s32.totalorder %s88, %s91
    %p100 = scmp.eq.s32.totalorder %s15, 1
    %p101 = por %p99, %p100
    %p102 = scmp.ne.s32.totalorder %s91, %s92
    %p103 = scmp.eq.s32.totalorder %s15, 0
    %p104 = por %p102, %p103
    %p105 = scmp.ne.s32.totalorder %s91, %s92
    %p106 = scmp.eq.s32.totalorder %s16, 1
    %p107 = por %p105, %p106
    %p109 = scmp.ne.s32.totalorder %s92, %s108
    %p110 = scmp.eq.s32.totalorder %s16, 0
    %p111 = por %p109, %p110
    %s112 = ssub.s32 %s10, %s17
    %p113 = scmp.eq.s32.totalorder %s112, 0
    %s115 = sadd.s32 %s114, 1
    %s116 = scalar_select %p113, %s114, %s115
    %p119 = pneg %p113
    %p120 = scmp.eq.s32.totalorder %s10, 1
    %p121 = por %p119, %p120
    %p122 = scmp.ne.s32.totalorder %s114, %s117
    %p123 = scmp.eq.s32.totalorder %s10, 0
    %p124 = por %p122, %p123
    %p125 = scmp.ne.s32.totalorder %s114, %s117
    %p126 = scmp.eq.s32.totalorder %s15, 1
    %p127 = por %p125, %p126
    %p128 = scmp.ne.s32.totalorder %s117, %s118
    %p129 = scmp.eq.s32.totalorder %s15, 0
    %p130 = por %p128, %p129
    %p131 = scmp.ne.s32.totalorder %s117, %s118
    %p132 = scmp.eq.s32.totalorder %s16, 1
    %p133 = por %p131, %p132
    %p135 = scmp.ne.s32.totalorder %s118, %s134
    %p136 = scmp.eq.s32.totalorder %s16, 0
    %p137 = por %p135, %p136
    %p138 = scmp.le.s32.totalorder 1, %s10
    %p139 = scmp.lt.s32.totalorder %s10, 3
    %p140 = pnand %p138, %p139
    %p141 = pneg %p140
    // Predicated region
    $region9: #{wide_basic_forward.7} parent=5 // pred_check
      _
    $region10: #{wide_basic_forward.7} parent=5 // pred_check_branch
      %143 = sbr.rel (%p140) target = $region12
    $region11: #{wide_basic_forward.7} parent=5 // pred_region
      %s144 = ssub.s32 %s10, 1
      // Predicated region
      $region13: #{wide_basic_forward.7} parent=11 // pred_check
        %p145 = pneg %p57
      $region14: #{wide_basic_forward.7} parent=11 // pred_check_branch
        %147 = sbr.rel (%p145) target = $region16
      $region15: #{wide_basic_forward.7} parent=11 // pred_region
        _
      $region16: #{wide_basic_forward.7} parent=11 // pred_fallthru
        _
      // Predicated region
      $region17: #{wide_basic_forward.7} parent=11 // pred_check
        %p148 = pneg %p78
      $region18: #{wide_basic_forward.7} parent=11 // pred_check_branch
        %150 = sbr.rel (%p148) target = $region20
      $region19: #{wide_basic_forward.7} parent=11 // pred_region
        _
      $region20: #{wide_basic_forward.7} parent=11 // pred_fallthru
        _
    $region12: #{wide_basic_forward.7} parent=5 // pred_fallthru
      _
    %p151 = scmp.lt.s32.totalorder %s10, 2
    // Predicated region
    $region21: #{wide_basic_forward.7} parent=5 // pred_check
      %p152 = pneg %p151
    $region22: #{wide_basic_forward.7} parent=5 // pred_check_branch
      %154 = sbr.rel (%p152) target = $region24
    $region23: #{wide_basic_forward.7} parent=5 // pred_region
      // Predicated region
      $region25: #{wide_basic_forward.7} parent=23 // pred_check
        %p155 = pneg %p30
      $region26: #{wide_basic_forward.7} parent=23 // pred_check_branch
        %157 = sbr.rel (%p155) target = $region28
      $region27: #{wide_basic_forward.7} parent=23 // pred_region
        %p158 = scmp.lt.s32.totalorder %s10, 1
        %s159 = scalar_select %p158, %s10, 1
        %s160 = smul.addr %s159, 54
        %s161 = smul.addr %s160, 4
        %s162 = scalar_lea.vmem %s0, %s161
      $region28: #{wide_basic_forward.7} parent=23 // pred_fallthru
        _
      // Predicated region
      $region29: #{wide_basic_forward.7} parent=23 // pred_check
        %p163 = pneg %p98
      $region30: #{wide_basic_forward.7} parent=23 // pred_check_branch
        %165 = sbr.rel (%p163) target = $region32
      $region31: #{wide_basic_forward.7} parent=23 // pred_region
        %s166 = smul.u32 32, %s10
        %p167 = scmp.lt.s32.totalorder %s166, 63
        %s168 = scalar_select %p167, %s166, 63
        %s169 = smul.addr %s168, 4
        %s170 = scalar_lea.vmem %s3, %s169
        %s171 = smul.u32 32, %s10
      $region32: #{wide_basic_forward.7} parent=23 // pred_fallthru
        _
    $region24: #{wide_basic_forward.7} parent=5 // pred_fallthru
      _
    %p172 = scmp.le.s32.totalorder 1, %s10
    %p173 = scmp.lt.s32.totalorder %s10, 3
    %p174 = pnand %p172, %p173
    %p175 = pneg %p174
    // Predicated region
    $region33: #{wide_basic_forward.7} parent=5 // pred_check
      _
    $region34: #{wide_basic_forward.7} parent=5 // pred_check_branch
      %177 = sbr.rel (%p174) target = $region36
    $region35: #{wide_basic_forward.7} parent=5 // pred_region
      %s178 = ssub.s32 %s10, 1
      %p179 = scmp.lt.s32.totalorder %s15, 1
      %s180 = scalar_select %p179, %s15, 1
      %s181 = smul.addr %s180, 54
      %s182 = smul.addr %s181, 4
      %s183 = scalar_lea.vmem %s0, %s182
      %p184 = pneg %p36
      %p185 = pneg %p33
      %p186 = pneg %p57
      %p187 = pneg %p54
      %p188 = pneg %p78
      %p189 = pneg %p75
      %s190 = smul.u32 32, %s15
      %p191 = scmp.lt.s32.totalorder %s190, 63
      %s192 = scalar_select %p191, %s190, 63
      %s193 = smul.addr %s192, 4
      %s194 = scalar_lea.vmem %s3, %s193
      %p195 = pneg %p104
      %p196 = pneg %p101
      %p197 = pneg %p130
      %p198 = pneg %p127
      %s199 = smul.u32 32, %s15
      %p200 = scmp.lt.s32.totalorder %s199, 63
      %s201 = scalar_select %p200, %s199, 63
      %s202 = smul.addr %s201, 8
      %s203 = scalar_lea.vmem %s4, %s202
      %p204 = scmp.lt.s32.totalorder %s15, 1
      %s205 = scalar_select %p204, %s15, 1
      %s206 = smul.addr %s205, 54
      %s207 = smul.addr %s206, 4
      %s208 = scalar_lea.vmem %s0, %s207
      %s209 = smul.u32 32, %s15
      %p210 = scmp.lt.s32.totalorder %s209, 63
      %s211 = scalar_select %p210, %s209, 63
      %s212 = smul.addr %s211, 4
      %s213 = scalar_lea.vmem %s3, %s212
      %s214 = smul.u32 32, %s15
      %s215 = smul.u32 32, %s15
      %p216 = scmp.lt.s32.totalorder %s215, 63
      %s217 = scalar_select %p216, %s215, 63
      %s218 = smul.addr %s217, 8
      %s219 = scalar_lea.vmem %s4, %s218
      %s220 = smul.u32 32, %s15
      %v222 = vld [vmem:[%s208] sm:$0xf]
      %v223 = vld [vmem:[%s208 + $0x4] sm:$0xf]
      %v224 = vld [vmem:[%s208 + $0xc] sm:$0xf]
      %v225 = vld [vmem:[%s208 + $0x10] sm:$0xf]
      %v226 = vld [vmem:[%s208 + $0x18] sm:$0xf]
      %v227 = vld [vmem:[%s208 + $0x1c] sm:$0xf]
      %v228 = vld [vmem:[%s208 + $0x24] sm:$0xf]
      %v229 = vld [vmem:[%s208 + $0x28] sm:$0xf]
      %v230 = vld [vmem:[%s208 + $0x30] sm:$0xf]
      %v231 = vld [vmem:[%s208 + $0x34] sm:$0xf]
      %v232 = vld [vmem:[%s208 + $0x3c] sm:$0xf]
      %v233 = vld [vmem:[%s208 + $0x40] sm:$0xf]
      %v234 = vld [vmem:[%s208 + $0x48] sm:$0xf]
      %v235 = vld [vmem:[%s208 + $0x4c] sm:$0xf]
      %v236 = vld [vmem:[%s208 + $0x54] sm:$0xf]
      %v237 = vld [vmem:[%s208 + $0x58] sm:$0xf]
      %v238 = vld [vmem:[%s208 + $0x60] sm:$0xf]
      %v239 = vld [vmem:[%s208 + $0x64] sm:$0xf]
      %v240 = vld [vmem:[%s208 + $0x6c] sm:$0xf]
      %v241 = vld [vmem:[%s208 + $0x70] sm:$0xf]
      %v242 = vld [vmem:[%s208 + $0x78] sm:$0xf]
      %v243 = vld [vmem:[%s208 + $0x7c] sm:$0xf]
      %v244 = vld [vmem:[%s208 + $0x84] sm:$0xf]
      %v245 = vld [vmem:[%s208 + $0x88] sm:$0xf]
      %v246 = vld [vmem:[%s208 + $0x90] sm:$0xf]
      %v247 = vld [vmem:[%s208 + $0x94] sm:$0xf]
      %v248 = vld [vmem:[%s208 + $0x9c] sm:$0xf]
      %v249 = vld [vmem:[%s208 + $0xa0] sm:$0xf]
      %v250 = vld [vmem:[%s208 + $0xa8] sm:$0xf]
      %v251 = vld [vmem:[%s208 + $0xac] sm:$0xf]
      %v252 = vld [vmem:[%s208 + $0xb4] sm:$0xf]
      %v253 = vld [vmem:[%s208 + $0xb8] sm:$0xf]
      %v254 = vld [vmem:[%s1] sm:$0xf]
      %v255 = vld [vmem:[%s1 + $0x4] sm:$0xf]
      %v256 = vld [vmem:[%s1 + $0x8] sm:$0xf]
      %v257 = vld [vmem:[%s1 + $0xc] sm:$0xf]
      %v258 = vld [vmem:[%s1 + $0x10] sm:$0xf]
      %v259 = vld [vmem:[%s1 + $0x14] sm:$0xf]
      %v260 = vld [vmem:[%s1 + $0x18] sm:$0xf]
      %v261 = vld [vmem:[%s1 + $0x1c] sm:$0xf]
      %v262 = vld [vmem:[%s1 + $0x20] sm:$0xf]
      %v263 = vld [vmem:[%s1 + $0x24] sm:$0xf]
      %v264 = vld [vmem:[%s1 + $0x28] sm:$0xf]
      %v265 = vld [vmem:[%s1 + $0x2c] sm:$0xf]
      %v266 = vld [vmem:[%s1 + $0x30] sm:$0xf]
      %v267 = vld [vmem:[%s1 + $0x34] sm:$0xf]
      %v268 = vld [vmem:[%s1 + $0x38] sm:$0xf]
      %v269 = vld [vmem:[%s1 + $0x3c] sm:$0xf]
      %v270 = vld [vmem:[%s208 + $0x8] sm:$0x1]
      %v271 = vld [vmem:[%s208 + $0x14] sm:$0x1]
      %v272 = vld [vmem:[%s208 + $0x20] sm:$0x1]
      %v273 = vld [vmem:[%s208 + $0x2c] sm:$0x1]
      %v274 = vld [vmem:[%s208 + $0x38] sm:$0x1]
      %v275 = vld [vmem:[%s208 + $0x44] sm:$0x1]
      %v276 = vld [vmem:[%s208 + $0x50] sm:$0x1]
      %v277 = vld [vmem:[%s208 + $0x5c] sm:$0x1]
      %v278 = vld [vmem:[%s208 + $0x68] sm:$0x1]
      %v279 = vld [vmem:[%s208 + $0x74] sm:$0x1]
      %v280 = vld [vmem:[%s208 + $0x80] sm:$0x1]
      %v281 = vld [vmem:[%s208 + $0x8c] sm:$0x1]
      %v282 = vld [vmem:[%s208 + $0x98] sm:$0x1]
      %v283 = vld [vmem:[%s208 + $0xa4] sm:$0x1]
      %v284 = vld [vmem:[%s208 + $0xb0] sm:$0x1]
      %v285 = vld [vmem:[%s208 + $0xbc] sm:$0x1]
      %vm286 = vsmask.f32 3328
      %vm287 = vsmask.f32 7440
      %vm288 = vmor %vm286, %vm287
      %v290 = vshrl.u32 %v222, 16
      %v292 = vrot.slane %v290, 4
      %v293 = vshll.u32 %v222, 16
      %v295 = vrot.slane %v293, 5
      %v296 = vor.u32 %v292, %v295
      %v297 = vrot.slane %v296, 4
      %v299 = vshll.u32 %v223, 16
      %v301 = vrot.slane %v299, 5
      %v302 = vsel %vm288, %v297, %v301
      %v303 = vshrl.u32 %v223, 16
      %v305 = vrot.slane %v303, 4
      %v306 = vor.u32 %v305, %v301
      %v307 = vrot.slane %v306, 4
      %v309 = vshll.u32 %v270, 16
      %v311 = vrot.slane %v309, 5
      %v312 = vsel %vm288, %v307, %v311
      %v314 = vshrl.u32 %v224, 16
      %v316 = vrot.slane %v314, 4
      %v317 = vshll.u32 %v224, 16
      %v319 = vrot.slane %v317, 5
      %v320 = vor.u32 %v316, %v319
      %v321 = vrot.slane %v320, 4
      %v323 = vshll.u32 %v225, 16
      %v325 = vrot.slane %v323, 5
      %v326 = vsel %vm288, %v321, %v325
      %v327 = vshrl.u32 %v225, 16
      %v329 = vrot.slane %v327, 4
      %v330 = vor.u32 %v329, %v325
      %v331 = vrot.slane %v330, 4
      %v333 = vshll.u32 %v271, 16
      %v335 = vrot.slane %v333, 5
      %v336 = vsel %vm288, %v331, %v335
      %v338 = vshrl.u32 %v226, 16
      %v340 = vrot.slane %v338, 4
      %v341 = vshll.u32 %v226, 16
      %v343 = vrot.slane %v341, 5
      %v344 = vor.u32 %v340, %v343
      %v345 = vrot.slane %v344, 4
      %v347 = vshll.u32 %v227, 16
      %v349 = vrot.slane %v347, 5
      %v350 = vsel %vm288, %v345, %v349
      %v351 = vshrl.u32 %v227, 16
      %v353 = vrot.slane %v351, 4
      %v354 = vor.u32 %v353, %v349
      %v355 = vrot.slane %v354, 4
      %v357 = vshll.u32 %v272, 16
      %v359 = vrot.slane %v357, 5
      %v360 = vsel %vm288, %v355, %v359
      %v362 = vshrl.u32 %v228, 16
      %v364 = vrot.slane %v362, 4
      %v365 = vshll.u32 %v228, 16
      %v367 = vrot.slane %v365, 5
      %v368 = vor.u32 %v364, %v367
      %v369 = vrot.slane %v368, 4
      %v371 = vshll.u32 %v229, 16
      %v373 = vrot.slane %v371, 5
      %v374 = vsel %vm288, %v369, %v373
      %v375 = vshrl.u32 %v229, 16
      %v377 = vrot.slane %v375, 4
      %v378 = vor.u32 %v377, %v373
      %v379 = vrot.slane %v378, 4
      %v381 = vshll.u32 %v273, 16
      %v383 = vrot.slane %v381, 5
      %v384 = vsel %vm288, %v379, %v383
      %v386 = vshrl.u32 %v230, 16
      %v388 = vrot.slane %v386, 4
      %v389 = vshll.u32 %v230, 16
      %v391 = vrot.slane %v389, 5
      %v392 = vor.u32 %v388, %v391
      %v393 = vrot.slane %v392, 4
      %v395 = vshll.u32 %v231, 16
      %v397 = vrot.slane %v395, 5
      %v398 = vsel %vm288, %v393, %v397
      %v399 = vshrl.u32 %v231, 16
      %v401 = vrot.slane %v399, 4
      %v402 = vor.u32 %v401, %v397
      %v403 = vrot.slane %v402, 4
      %v405 = vshll.u32 %v274, 16
      %v407 = vrot.slane %v405, 5
      %v408 = vsel %vm288, %v403, %v407
      %v410 = vshrl.u32 %v232, 16
      %v412 = vrot.slane %v410, 4
      %v413 = vshll.u32 %v232, 16
      %v415 = vrot.slane %v413, 5
      %v416 = vor.u32 %v412, %v415
      %v417 = vrot.slane %v416, 4
      %v419 = vshll.u32 %v233, 16
      %v421 = vrot.slane %v419, 5
      %v422 = vsel %vm288, %v417, %v421
      %v423 = vshrl.u32 %v233, 16
      %v425 = vrot.slane %v423, 4
      %v426 = vor.u32 %v425, %v421
      %v427 = vrot.slane %v426, 4
      %v429 = vshll.u32 %v275, 16
      %v431 = vrot.slane %v429, 5
      %v432 = vsel %vm288, %v427, %v431
      %v434 = vshrl.u32 %v234, 16
      %v436 = vrot.slane %v434, 4
      %v437 = vshll.u32 %v234, 16
      %v439 = vrot.slane %v437, 5
      %v440 = vor.u32 %v436, %v439
      %v441 = vrot.slane %v440, 4
      %v443 = vshll.u32 %v235, 16
      %v445 = vrot.slane %v443, 5
      %v446 = vsel %vm288, %v441, %v445
      %v447 = vshrl.u32 %v235, 16
      %v449 = vrot.slane %v447, 4
      %v450 = vor.u32 %v449, %v445
      %v451 = vrot.slane %v450, 4
      %v453 = vshll.u32 %v276, 16
      %v455 = vrot.slane %v453, 5
      %v456 = vsel %vm288, %v451, %v455
      %v458 = vshrl.u32 %v236, 16
      %v460 = vrot.slane %v458, 4
      %v461 = vshll.u32 %v236, 16
      %v463 = vrot.slane %v461, 5
      %v464 = vor.u32 %v460, %v463
      %v465 = vrot.slane %v464, 4
      %v467 = vshll.u32 %v237, 16
      %v469 = vrot.slane %v467, 5
      %v470 = vsel %vm288, %v465, %v469
      %v471 = vshrl.u32 %v237, 16
      %v473 = vrot.slane %v471, 4
      %v474 = vor.u32 %v473, %v469
      %v475 = vrot.slane %v474, 4
      %v477 = vshll.u32 %v277, 16
      %v479 = vrot.slane %v477, 5
      %v480 = vsel %vm288, %v475, %v479
      %v482 = vshrl.u32 %v238, 16
      %v484 = vrot.slane %v482, 4
      %v485 = vshll.u32 %v238, 16
      %v487 = vrot.slane %v485, 5
      %v488 = vor.u32 %v484, %v487
      %v489 = vrot.slane %v488, 4
      %v491 = vshll.u32 %v239, 16
      %v493 = vrot.slane %v491, 5
      %v494 = vsel %vm288, %v489, %v493
      %v495 = vshrl.u32 %v239, 16
      %v497 = vrot.slane %v495, 4
      %v498 = vor.u32 %v497, %v493
      %v499 = vrot.slane %v498, 4
      %v501 = vshll.u32 %v278, 16
      %v503 = vrot.slane %v501, 5
      %v504 = vsel %vm288, %v499, %v503
      %v506 = vshrl.u32 %v240, 16
      %v508 = vrot.slane %v506, 4
      %v509 = vshll.u32 %v240, 16
      %v511 = vrot.slane %v509, 5
      %v512 = vor.u32 %v508, %v511
      %v513 = vrot.slane %v512, 4
      %v515 = vshll.u32 %v241, 16
      %v517 = vrot.slane %v515, 5
      %v518 = vsel %vm288, %v513, %v517
      %v519 = vshrl.u32 %v241, 16
      %v521 = vrot.slane %v519, 4
      %v522 = vor.u32 %v521, %v517
      %v523 = vrot.slane %v522, 4
      %v525 = vshll.u32 %v279, 16
      %v527 = vrot.slane %v525, 5
      %v528 = vsel %vm288, %v523, %v527
      %v530 = vshrl.u32 %v242, 16
      %v532 = vrot.slane %v530, 4
      %v533 = vshll.u32 %v242, 16
      %v535 = vrot.slane %v533, 5
      %v536 = vor.u32 %v532, %v535
      %v537 = vrot.slane %v536, 4
      %v539 = vshll.u32 %v243, 16
      %v541 = vrot.slane %v539, 5
      %v542 = vsel %vm288, %v537, %v541
      %v543 = vshrl.u32 %v243, 16
      %v545 = vrot.slane %v543, 4
      %v546 = vor.u32 %v545, %v541
      %v547 = vrot.slane %v546, 4
      %v549 = vshll.u32 %v280, 16
      %v551 = vrot.slane %v549, 5
      %v552 = vsel %vm288, %v547, %v551
      %v554 = vshrl.u32 %v244, 16
      %v556 = vrot.slane %v554, 4
      %v557 = vshll.u32 %v244, 16
      %v559 = vrot.slane %v557, 5
      %v560 = vor.u32 %v556, %v559
      %v561 = vrot.slane %v560, 4
      %v563 = vshll.u32 %v245, 16
      %v565 = vrot.slane %v563, 5
      %v566 = vsel %vm288, %v561, %v565
      %v567 = vshrl.u32 %v245, 16
      %v569 = vrot.slane %v567, 4
      %v570 = vor.u32 %v569, %v565
      %v571 = vrot.slane %v570, 4
      %v573 = vshll.u32 %v281, 16
      %v575 = vrot.slane %v573, 5
      %v576 = vsel %vm288, %v571, %v575
      %v578 = vshrl.u32 %v246, 16
      %v580 = vrot.slane %v578, 4
      %v581 = vshll.u32 %v246, 16
      %v583 = vrot.slane %v581, 5
      %v584 = vor.u32 %v580, %v583
      %v585 = vrot.slane %v584, 4
      %v587 = vshll.u32 %v247, 16
      %v589 = vrot.slane %v587, 5
      %v590 = vsel %vm288, %v585, %v589
      %v591 = vshrl.u32 %v247, 16
      %v593 = vrot.slane %v591, 4
      %v594 = vor.u32 %v593, %v589
      %v595 = vrot.slane %v594, 4
      %v597 = vshll.u32 %v282, 16
      %v599 = vrot.slane %v597, 5
      %v600 = vsel %vm288, %v595, %v599
      %v602 = vshrl.u32 %v248, 16
      %v604 = vrot.slane %v602, 4
      %v605 = vshll.u32 %v248, 16
      %v607 = vrot.slane %v605, 5
      %v608 = vor.u32 %v604, %v607
      %v609 = vrot.slane %v608, 4
      %v611 = vshll.u32 %v249, 16
      %v613 = vrot.slane %v611, 5
      %v614 = vsel %vm288, %v609, %v613
      %v615 = vshrl.u32 %v249, 16
      %v617 = vrot.slane %v615, 4
      %v618 = vor.u32 %v617, %v613
      %v619 = vrot.slane %v618, 4
      %v621 = vshll.u32 %v283, 16
      %v623 = vrot.slane %v621, 5
      %v624 = vsel %vm288, %v619, %v623
      %v626 = vshrl.u32 %v250, 16
      %v628 = vrot.slane %v626, 4
      %v629 = vshll.u32 %v250, 16
      %v631 = vrot.slane %v629, 5
      %v632 = vor.u32 %v628, %v631
      %v633 = vrot.slane %v632, 4
      %v635 = vshll.u32 %v251, 16
      %v637 = vrot.slane %v635, 5
      %v638 = vsel %vm288, %v633, %v637
      %v639 = vshrl.u32 %v251, 16
      %v641 = vrot.slane %v639, 4
      %v642 = vor.u32 %v641, %v637
      %v643 = vrot.slane %v642, 4
      %v645 = vshll.u32 %v284, 16
      %v647 = vrot.slane %v645, 5
      %v648 = vsel %vm288, %v643, %v647
      %v650 = vshrl.u32 %v252, 16
      %v652 = vrot.slane %v650, 4
      %v653 = vshll.u32 %v252, 16
      %v655 = vrot.slane %v653, 5
      %v656 = vor.u32 %v652, %v655
      %v657 = vrot.slane %v656, 4
      %v659 = vshll.u32 %v253, 16
      %v661 = vrot.slane %v659, 5
      %v662 = vsel %vm288, %v657, %v661
      %v663 = vshrl.u32 %v253, 16
      %v665 = vrot.slane %v663, 4
      %v666 = vor.u32 %v665, %v661
      %v667 = vrot.slane %v666, 4
      %v669 = vshll.u32 %v285, 16
      %v671 = vrot.slane %v669, 5
      %v672 = vsel %vm288, %v667, %v671
      %s673 = scalar_lea.vmem %s1, 64
      %v674 = vld [vmem:[%s673] sm:$0xf]
      %v675 = vld [vmem:[%s673 + $0x4] sm:$0xf]
      %v676 = vld [vmem:[%s673 + $0x8] sm:$0xf]
      %v677 = vld [vmem:[%s673 + $0xc] sm:$0xf]
      %v678 = vld [vmem:[%s673 + $0x10] sm:$0xf]
      %v679 = vld [vmem:[%s673 + $0x14] sm:$0xf]
      %v680 = vld [vmem:[%s673 + $0x18] sm:$0xf]
      %v681 = vld [vmem:[%s673 + $0x1c] sm:$0xf]
      %v682 = vld [vmem:[%s673 + $0x20] sm:$0xf]
      %v683 = vld [vmem:[%s673 + $0x24] sm:$0xf]
      %v684 = vld [vmem:[%s673 + $0x28] sm:$0xf]
      %v685 = vld [vmem:[%s673 + $0x2c] sm:$0xf]
      %v686 = vld [vmem:[%s673 + $0x30] sm:$0xf]
      %v687 = vld [vmem:[%s673 + $0x34] sm:$0xf]
      %v688 = vld [vmem:[%s673 + $0x38] sm:$0xf]
      %v689 = vld [vmem:[%s673 + $0x3c] sm:$0xf]
      %v690 = vunpack.c.l.b16 %v302
      %v691 = vunpack.c.l.b16 %v312
      %v692 = vunpack.c.l.b16 %v326
      %v693 = vunpack.c.l.b16 %v336
      %v694 = vunpack.c.l.b16 %v350
      %v695 = vunpack.c.l.b16 %v360
      %v696 = vunpack.c.l.b16 %v374
      %v697 = vunpack.c.l.b16 %v384
      %v698 = vunpack.c.l.b16 %v398
      %v699 = vunpack.c.l.b16 %v408
      %v700 = vunpack.c.l.b16 %v422
      %v701 = vunpack.c.l.b16 %v432
      %v702 = vunpack.c.l.b16 %v446
      %v703 = vunpack.c.l.b16 %v456
      %v704 = vunpack.c.l.b16 %v470
      %v705 = vunpack.c.l.b16 %v480
      %v706 = vunpack.c.l.b16 %v494
      %v707 = vunpack.c.l.b16 %v504
      %v708 = vunpack.c.l.b16 %v518
      %v709 = vunpack.c.l.b16 %v528
      %v710 = vunpack.c.l.b16 %v542
      %v711 = vunpack.c.l.b16 %v552
      %v712 = vunpack.c.l.b16 %v566
      %v713 = vunpack.c.l.b16 %v576
      %v714 = vunpack.c.l.b16 %v590
      %v715 = vunpack.c.l.b16 %v600
      %v716 = vunpack.c.l.b16 %v614
      %v717 = vunpack.c.l.b16 %v624
      %v718 = vunpack.c.l.b16 %v638
      %v719 = vunpack.c.l.b16 %v648
      %v720 = vunpack.c.l.b16 %v662
      %v721 = vunpack.c.l.b16 %v672
      %v722 = vpack.c.b16 %v691, %v690
      %v723 = vpack.c.b16 %v693, %v692
      %v724 = vpack.c.b16 %v695, %v694
      %v725 = vpack.c.b16 %v697, %v696
      %v726 = vpack.c.b16 %v699, %v698
      %v727 = vpack.c.b16 %v701, %v700
      %v728 = vpack.c.b16 %v703, %v702
      %v729 = vpack.c.b16 %v705, %v704
      %v730 = vpack.c.b16 %v707, %v706
      %v731 = vpack.c.b16 %v709, %v708
      %v732 = vpack.c.b16 %v711, %v710
      %v733 = vpack.c.b16 %v713, %v712
      %v734 = vpack.c.b16 %v715, %v714
      %v735 = vpack.c.b16 %v717, %v716
      %v736 = vpack.c.b16 %v719, %v718
      %v737 = vpack.c.b16 %v721, %v720
      %v770 = vunpack.c.l.b16 %v674
      %v771 = vunpack.c.l.b16 %v675
      %v772 = vunpack.c.l.b16 %v676
      %v773 = vunpack.c.l.b16 %v677
      %v774 = vunpack.c.l.b16 %v678
      %v775 = vunpack.c.l.b16 %v679
      %v776 = vunpack.c.l.b16 %v680
      %v777 = vunpack.c.l.b16 %v681
      %v778 = vunpack.c.l.b16 %v682
      %v779 = vunpack.c.l.b16 %v683
      %v780 = vunpack.c.l.b16 %v684
      %v781 = vunpack.c.l.b16 %v685
      %v782 = vunpack.c.l.b16 %v686
      %v783 = vunpack.c.l.b16 %v687
      %v784 = vunpack.c.l.b16 %v688
      %v785 = vunpack.c.l.b16 %v689
      %v786 = vpack.c.b16 %v771, %v770
      %v787 = vpack.c.b16 %v773, %v772
      %v788 = vpack.c.b16 %v775, %v774
      %v789 = vpack.c.b16 %v777, %v776
      %v790 = vpack.c.b16 %v779, %v778
      %v791 = vpack.c.b16 %v781, %v780
      %v792 = vpack.c.b16 %v783, %v782
      %v793 = vpack.c.b16 %v785, %v784
      %802 = vmatprep.subr.bf16.mxu0 0
      %803 = vmatpush1.bf16.msra.mxu0 %v793
      %804 = vmatprep.subr.bf16.mxu0 0
      %805 = vmatpush1.bf16.msra.mxu0 %v792
      %806 = vmatprep.subr.bf16.mxu0 0
      %807 = vmatpush1.bf16.msra.mxu0 %v791
      %808 = vmatprep.subr.bf16.mxu0 0
      %809 = vmatpush1.bf16.msra.mxu0 %v790
      %810 = vmatprep.subr.bf16.mxu0 0
      %811 = vmatpush1.bf16.msra.mxu0 %v789
      %812 = vmatprep.subr.bf16.mxu0 0
      %813 = vmatpush1.bf16.msra.mxu0 %v788
      %814 = vmatprep.subr.bf16.mxu0 0
      %815 = vmatpush1.bf16.msra.mxu0 %v787
      %816 = vmatprep.subr.bf16.mxu0 0
      %817 = vmatpush1.bf16.msra.mxu0 %v786
      %818 = vmatprep.subr.bf16.mxu0 0
      %819 = vmatpush2.bf16.msra.mxu0 0
      %820 = vmatprep.subr.bf16.mxu0 0
      %821 = vmatpush2.bf16.msra.mxu0 0
      %822 = vmatprep.subr.bf16.mxu0 0
      %823 = vmatpush2.bf16.msra.mxu0 0
      %824 = vmatprep.subr.bf16.mxu0 0
      %825 = vmatpush2.bf16.msra.mxu0 0
      %826 = vmatprep.subr.bf16.mxu0 0
      %827 = vmatpush2.bf16.msra.mxu0 0
      %828 = vmatprep.subr.bf16.mxu0 0
      %829 = vmatpush2.bf16.msra.mxu0 0
      %830 = vmatprep.subr.bf16.mxu0 0
      %831 = vmatpush2.bf16.msra.mxu0 0
      %832 = vmatprep.subr.bf16.mxu0 0
      %833 = vmatpush2.bf16.msra.mxu0 0
      %834 = vmatprep.mubr.bf16.mxu0 0
      %835 = vmatmul.mubr.bf16.gmra.mxu0 %v722
      %v836 = vpop.f32.mrf.mxu0
      %v837 = vadd.f32 0.0, %v836
      %v838 = vpop.f32.mrf.mxu0
      %v839 = vpop.f32.mrf.mxu0
      %v840 = vadd.f32 0.0, %v839
      %v841 = vpop.f32.mrf.mxu0
      %842 = vmatprep.mubr.bf16.mxu0 0
      %843 = vmatmul.mubr.bf16.gmra.mxu0 %v723
      %v844 = vpop.f32.mrf.mxu0
      %v845 = vadd.f32 0.0, %v844
      %v846 = vpop.f32.mrf.mxu0
      %v847 = vpop.f32.mrf.mxu0
      %v848 = vadd.f32 0.0, %v847
      %v849 = vpop.f32.mrf.mxu0
      %850 = vmatprep.mubr.bf16.mxu0 0
      %851 = vmatmul.mubr.bf16.gmra.mxu0 %v724
      %v852 = vpop.f32.mrf.mxu0
      %v853 = vadd.f32 0.0, %v852
      %v854 = vpop.f32.mrf.mxu0
      %v855 = vpop.f32.mrf.mxu0
      %v856 = vadd.f32 0.0, %v855
      %v857 = vpop.f32.mrf.mxu0
      %858 = vmatprep.mubr.bf16.mxu0 0
      %859 = vmatmul.mubr.bf16.gmra.mxu0 %v725
      %v860 = vpop.f32.mrf.mxu0
      %v861 = vadd.f32 0.0, %v860
      %v862 = vpop.f32.mrf.mxu0
      %v863 = vpop.f32.mrf.mxu0
      %v864 = vadd.f32 0.0, %v863
      %v865 = vpop.f32.mrf.mxu0
      %866 = vmatprep.mubr.bf16.mxu0 0
      %867 = vmatmul.mubr.bf16.gmra.mxu0 %v726
      %v868 = vpop.f32.mrf.mxu0
      %v869 = vadd.f32 0.0, %v868
      %v870 = vpop.f32.mrf.mxu0
      %v871 = vpop.f32.mrf.mxu0
      %v872 = vadd.f32 0.0, %v871
      %v873 = vpop.f32.mrf.mxu0
      %874 = vmatprep.mubr.bf16.mxu0 0
      %875 = vmatmul.mubr.bf16.gmra.mxu0 %v727
      %v876 = vpop.f32.mrf.mxu0
      %v877 = vadd.f32 0.0, %v876
      %v878 = vpop.f32.mrf.mxu0
      %v879 = vpop.f32.mrf.mxu0
      %v880 = vadd.f32 0.0, %v879
      %v881 = vpop.f32.mrf.mxu0
      %882 = vmatprep.mubr.bf16.mxu0 0
      %883 = vmatmul.mubr.bf16.gmra.mxu0 %v728
      %v884 = vpop.f32.mrf.mxu0
      %v885 = vadd.f32 0.0, %v884
      %v886 = vpop.f32.mrf.mxu0
      %v887 = vpop.f32.mrf.mxu0
      %v888 = vadd.f32 0.0, %v887
      %v889 = vpop.f32.mrf.mxu0
      %890 = vmatprep.mubr.bf16.mxu0 0
      %891 = vmatmul.mubr.bf16.gmra.mxu0 %v729
      %v892 = vpop.f32.mrf.mxu0
      %v893 = vadd.f32 0.0, %v892
      %v894 = vpop.f32.mrf.mxu0
      %v895 = vpop.f32.mrf.mxu0
      %v896 = vadd.f32 0.0, %v895
      %v897 = vpop.f32.mrf.mxu0
      %898 = vmatprep.mubr.bf16.mxu0 0
      %899 = vmatmul.mubr.bf16.gmra.mxu0 %v730
      %v900 = vpop.f32.mrf.mxu0
      %v901 = vadd.f32 0.0, %v900
      %v902 = vpop.f32.mrf.mxu0
      %v903 = vpop.f32.mrf.mxu0
      %v904 = vadd.f32 0.0, %v903
      %v905 = vpop.f32.mrf.mxu0
      %906 = vmatprep.mubr.bf16.mxu0 0
      %907 = vmatmul.mubr.bf16.gmra.mxu0 %v731
      %v908 = vpop.f32.mrf.mxu0
      %v909 = vadd.f32 0.0, %v908
      %v910 = vpop.f32.mrf.mxu0
      %v911 = vpop.f32.mrf.mxu0
      %v912 = vadd.f32 0.0, %v911
      %v913 = vpop.f32.mrf.mxu0
      %914 = vmatprep.mubr.bf16.mxu0 0
      %915 = vmatmul.mubr.bf16.gmra.mxu0 %v732
      %v916 = vpop.f32.mrf.mxu0
      %v917 = vadd.f32 0.0, %v916
      %v918 = vpop.f32.mrf.mxu0
      %v919 = vpop.f32.mrf.mxu0
      %v920 = vadd.f32 0.0, %v919
      %v921 = vpop.f32.mrf.mxu0
      %922 = vmatprep.mubr.bf16.mxu0 0
      %923 = vmatmul.mubr.bf16.gmra.mxu0 %v733
      %v924 = vpop.f32.mrf.mxu0
      %v925 = vadd.f32 0.0, %v924
      %v926 = vpop.f32.mrf.mxu0
      %v927 = vpop.f32.mrf.mxu0
      %v928 = vadd.f32 0.0, %v927
      %v929 = vpop.f32.mrf.mxu0
      %930 = vmatprep.mubr.bf16.mxu0 0
      %931 = vmatmul.mubr.bf16.gmra.mxu0 %v734
      %v932 = vpop.f32.mrf.mxu0
      %v933 = vadd.f32 0.0, %v932
      %v934 = vpop.f32.mrf.mxu0
      %v935 = vpop.f32.mrf.mxu0
      %v936 = vadd.f32 0.0, %v935
      %v937 = vpop.f32.mrf.mxu0
      %938 = vmatprep.mubr.bf16.mxu0 0
      %939 = vmatmul.mubr.bf16.gmra.mxu0 %v735
      %v940 = vpop.f32.mrf.mxu0
      %v941 = vadd.f32 0.0, %v940
      %v942 = vpop.f32.mrf.mxu0
      %v943 = vpop.f32.mrf.mxu0
      %v944 = vadd.f32 0.0, %v943
      %v945 = vpop.f32.mrf.mxu0
      %946 = vmatprep.mubr.bf16.mxu0 0
      %947 = vmatmul.mubr.bf16.gmra.mxu0 %v736
      %v948 = vpop.f32.mrf.mxu0
      %v949 = vadd.f32 0.0, %v948
      %v950 = vpop.f32.mrf.mxu0
      %v951 = vpop.f32.mrf.mxu0
      %v952 = vadd.f32 0.0, %v951
      %v953 = vpop.f32.mrf.mxu0
      %954 = vmatprep.mubr.bf16.mxu0 0
      %955 = vmatmul.mubr.bf16.gmra.mxu0 %v737
      %v956 = vpop.f32.mrf.mxu0
      %v957 = vadd.f32 0.0, %v956
      %v958 = vpop.f32.mrf.mxu0
      %v959 = vpop.f32.mrf.mxu0
      %v960 = vadd.f32 0.0, %v959
      %v961 = vpop.f32.mrf.mxu0
      %962 = vdwg.mxu0
      %v995 = vunpack.c.l.b16 %v222
      %v996 = vunpack.c.l.b16 %v223
      %v997 = vunpack.c.l.b16 %v224
      %v998 = vunpack.c.l.b16 %v225
      %v999 = vunpack.c.l.b16 %v226
      %v1000 = vunpack.c.l.b16 %v227
      %v1001 = vunpack.c.l.b16 %v228
      %v1002 = vunpack.c.l.b16 %v229
      %v1003 = vunpack.c.l.b16 %v230
      %v1004 = vunpack.c.l.b16 %v231
      %v1005 = vunpack.c.l.b16 %v232
      %v1006 = vunpack.c.l.b16 %v233
      %v1007 = vunpack.c.l.b16 %v234
      %v1008 = vunpack.c.l.b16 %v235
      %v1009 = vunpack.c.l.b16 %v236
      %v1010 = vunpack.c.l.b16 %v237
      %v1011 = vunpack.c.l.b16 %v238
      %v1012 = vunpack.c.l.b16 %v239
      %v1013 = vunpack.c.l.b16 %v240
      %v1014 = vunpack.c.l.b16 %v241
      %v1015 = vunpack.c.l.b16 %v242
      %v1016 = vunpack.c.l.b16 %v243
      %v1017 = vunpack.c.l.b16 %v244
      %v1018 = vunpack.c.l.b16 %v245
      %v1019 = vunpack.c.l.b16 %v246
      %v1020 = vunpack.c.l.b16 %v247
      %v1021 = vunpack.c.l.b16 %v248
      %v1022 = vunpack.c.l.b16 %v249
      %v1023 = vunpack.c.l.b16 %v250
      %v1024 = vunpack.c.l.b16 %v251
      %v1025 = vunpack.c.l.b16 %v252
      %v1026 = vunpack.c.l.b16 %v253
      %v1027 = vpack.c.b16 %v996, %v995
      %v1028 = vpack.c.b16 %v998, %v997
      %v1029 = vpack.c.b16 %v1000, %v999
      %v1030 = vpack.c.b16 %v1002, %v1001
      %v1031 = vpack.c.b16 %v1004, %v1003
      %v1032 = vpack.c.b16 %v1006, %v1005
      %v1033 = vpack.c.b16 %v1008, %v1007
      %v1034 = vpack.c.b16 %v1010, %v1009
      %v1035 = vpack.c.b16 %v1012, %v1011
      %v1036 = vpack.c.b16 %v1014, %v1013
      %v1037 = vpack.c.b16 %v1016, %v1015
      %v1038 = vpack.c.b16 %v1018, %v1017
      %v1039 = vpack.c.b16 %v1020, %v1019
      %v1040 = vpack.c.b16 %v1022, %v1021
      %v1041 = vpack.c.b16 %v1024, %v1023
      %v1042 = vpack.c.b16 %v1026, %v1025
      %v1075 = vunpack.c.l.b16 %v254
      %v1076 = vunpack.c.l.b16 %v255
      %v1077 = vunpack.c.l.b16 %v256
      %v1078 = vunpack.c.l.b16 %v257
      %v1079 = vunpack.c.l.b16 %v258
      %v1080 = vunpack.c.l.b16 %v259
      %v1081 = vunpack.c.l.b16 %v260
      %v1082 = vunpack.c.l.b16 %v261
      %v1083 = vunpack.c.l.b16 %v262
      %v1084 = vunpack.c.l.b16 %v263
      %v1085 = vunpack.c.l.b16 %v264
      %v1086 = vunpack.c.l.b16 %v265
      %v1087 = vunpack.c.l.b16 %v266
      %v1088 = vunpack.c.l.b16 %v267
      %v1089 = vunpack.c.l.b16 %v268
      %v1090 = vunpack.c.l.b16 %v269
      %v1091 = vpack.c.b16 %v1076, %v1075
      %v1092 = vpack.c.b16 %v1078, %v1077
      %v1093 = vpack.c.b16 %v1080, %v1079
      %v1094 = vpack.c.b16 %v1082, %v1081
      %v1095 = vpack.c.b16 %v1084, %v1083
      %v1096 = vpack.c.b16 %v1086, %v1085
      %v1097 = vpack.c.b16 %v1088, %v1087
      %v1098 = vpack.c.b16 %v1090, %v1089
      %1107 = vmatprep.subr.bf16.mxu0 0
      %1108 = vmatpush1.bf16.msra.mxu0 %v1098
      %1109 = vmatprep.subr.bf16.mxu0 0
      %1110 = vmatpush1.bf16.msra.mxu0 %v1097
      %1111 = vmatprep.subr.bf16.mxu0 0
      %1112 = vmatpush1.bf16.msra.mxu0 %v1096
      %1113 = vmatprep.subr.bf16.mxu0 0
      %1114 = vmatpush1.bf16.msra.mxu0 %v1095
      %1115 = vmatprep.subr.bf16.mxu0 0
      %1116 = vmatpush1.bf16.msra.mxu0 %v1094
      %1117 = vmatprep.subr.bf16.mxu0 0
      %1118 = vmatpush1.bf16.msra.mxu0 %v1093
      %1119 = vmatprep.subr.bf16.mxu0 0
      %1120 = vmatpush1.bf16.msra.mxu0 %v1092
      %1121 = vmatprep.subr.bf16.mxu0 0
      %1122 = vmatpush1.bf16.msra.mxu0 %v1091
      %1123 = vmatprep.subr.bf16.mxu0 0
      %1124 = vmatpush2.bf16.msra.mxu0 0
      %1125 = vmatprep.subr.bf16.mxu0 0
      %1126 = vmatpush2.bf16.msra.mxu0 0
      %1127 = vmatprep.subr.bf16.mxu0 0
      %1128 = vmatpush2.bf16.msra.mxu0 0
      %1129 = vmatprep.subr.bf16.mxu0 0
      %1130 = vmatpush2.bf16.msra.mxu0 0
      %1131 = vmatprep.subr.bf16.mxu0 0
      %1132 = vmatpush2.bf16.msra.mxu0 0
      %1133 = vmatprep.subr.bf16.mxu0 0
      %1134 = vmatpush2.bf16.msra.mxu0 0
      %1135 = vmatprep.subr.bf16.mxu0 0
      %1136 = vmatpush2.bf16.msra.mxu0 0
      %1137 = vmatprep.subr.bf16.mxu0 0
      %1138 = vmatpush2.bf16.msra.mxu0 0
      %1139 = vmatprep.mubr.bf16.mxu0 0
      %1140 = vmatmul.mubr.bf16.gmra.mxu0 %v1027
      %v1141 = vpop.f32.mrf.mxu0
      %v1142 = vadd.f32 %v837, %v1141
      %v1143 = vpop.f32.mrf.mxu0
      %v1144 = vpop.f32.mrf.mxu0
      %v1145 = vadd.f32 %v840, %v1144
      %v1146 = vpop.f32.mrf.mxu0
      %1147 = vmatprep.mubr.bf16.mxu0 0
      %1148 = vmatmul.mubr.bf16.gmra.mxu0 %v1028
      %v1149 = vpop.f32.mrf.mxu0
      %v1150 = vadd.f32 %v845, %v1149
      %v1151 = vpop.f32.mrf.mxu0
      %v1152 = vpop.f32.mrf.mxu0
      %v1153 = vadd.f32 %v848, %v1152
      %v1154 = vpop.f32.mrf.mxu0
      %1155 = vmatprep.mubr.bf16.mxu0 0
      %1156 = vmatmul.mubr.bf16.gmra.mxu0 %v1029
      %v1157 = vpop.f32.mrf.mxu0
      %v1158 = vadd.f32 %v853, %v1157
      %v1159 = vpop.f32.mrf.mxu0
      %v1160 = vpop.f32.mrf.mxu0
      %v1161 = vadd.f32 %v856, %v1160
      %v1162 = vpop.f32.mrf.mxu0
      %1163 = vmatprep.mubr.bf16.mxu0 0
      %1164 = vmatmul.mubr.bf16.gmra.mxu0 %v1030
      %v1165 = vpop.f32.mrf.mxu0
      %v1166 = vadd.f32 %v861, %v1165
      %v1167 = vpop.f32.mrf.mxu0
      %v1168 = vpop.f32.mrf.mxu0
      %v1169 = vadd.f32 %v864, %v1168
      %v1170 = vpop.f32.mrf.mxu0
      %1171 = vmatprep.mubr.bf16.mxu0 0
      %1172 = vmatmul.mubr.bf16.gmra.mxu0 %v1031
      %v1173 = vpop.f32.mrf.mxu0
      %v1174 = vadd.f32 %v869, %v1173
      %v1175 = vpop.f32.mrf.mxu0
      %v1176 = vpop.f32.mrf.mxu0
      %v1177 = vadd.f32 %v872, %v1176
      %v1178 = vpop.f32.mrf.mxu0
      %1179 = vmatprep.mubr.bf16.mxu0 0
      %1180 = vmatmul.mubr.bf16.gmra.mxu0 %v1032
      %v1181 = vpop.f32.mrf.mxu0
      %v1182 = vadd.f32 %v877, %v1181
      %v1183 = vpop.f32.mrf.mxu0
      %v1184 = vpop.f32.mrf.mxu0
      %v1185 = vadd.f32 %v880, %v1184
      %v1186 = vpop.f32.mrf.mxu0
      %1187 = vmatprep.mubr.bf16.mxu0 0
      %1188 = vmatmul.mubr.bf16.gmra.mxu0 %v1033
      %v1189 = vpop.f32.mrf.mxu0
      %v1190 = vadd.f32 %v885, %v1189
      %v1191 = vpop.f32.mrf.mxu0
      %v1192 = vpop.f32.mrf.mxu0
      %v1193 = vadd.f32 %v888, %v1192
      %v1194 = vpop.f32.mrf.mxu0
      %1195 = vmatprep.mubr.bf16.mxu0 0
      %1196 = vmatmul.mubr.bf16.gmra.mxu0 %v1034
      %v1197 = vpop.f32.mrf.mxu0
      %v1198 = vadd.f32 %v893, %v1197
      %v1199 = vpop.f32.mrf.mxu0
      %v1200 = vpop.f32.mrf.mxu0
      %v1201 = vadd.f32 %v896, %v1200
      %v1202 = vpop.f32.mrf.mxu0
      %1203 = vmatprep.mubr.bf16.mxu0 0
      %1204 = vmatmul.mubr.bf16.gmra.mxu0 %v1035
      %v1205 = vpop.f32.mrf.mxu0
      %v1206 = vadd.f32 %v901, %v1205
      %v1207 = vpop.f32.mrf.mxu0
      %v1208 = vpop.f32.mrf.mxu0
      %v1209 = vadd.f32 %v904, %v1208
      %v1210 = vpop.f32.mrf.mxu0
      %1211 = vmatprep.mubr.bf16.mxu0 0
      %1212 = vmatmul.mubr.bf16.gmra.mxu0 %v1036
      %v1213 = vpop.f32.mrf.mxu0
      %v1214 = vadd.f32 %v909, %v1213
      %v1215 = vpop.f32.mrf.mxu0
      %v1216 = vpop.f32.mrf.mxu0
      %v1217 = vadd.f32 %v912, %v1216
      %v1218 = vpop.f32.mrf.mxu0
      %1219 = vmatprep.mubr.bf16.mxu0 0
      %1220 = vmatmul.mubr.bf16.gmra.mxu0 %v1037
      %v1221 = vpop.f32.mrf.mxu0
      %v1222 = vadd.f32 %v917, %v1221
      %v1223 = vpop.f32.mrf.mxu0
      %v1224 = vpop.f32.mrf.mxu0
      %v1225 = vadd.f32 %v920, %v1224
      %v1226 = vpop.f32.mrf.mxu0
      %1227 = vmatprep.mubr.bf16.mxu0 0
      %1228 = vmatmul.mubr.bf16.gmra.mxu0 %v1038
      %v1229 = vpop.f32.mrf.mxu0
      %v1230 = vadd.f32 %v925, %v1229
      %v1231 = vpop.f32.mrf.mxu0
      %v1232 = vpop.f32.mrf.mxu0
      %v1233 = vadd.f32 %v928, %v1232
      %v1234 = vpop.f32.mrf.mxu0
      %1235 = vmatprep.mubr.bf16.mxu0 0
      %1236 = vmatmul.mubr.bf16.gmra.mxu0 %v1039
      %v1237 = vpop.f32.mrf.mxu0
      %v1238 = vadd.f32 %v933, %v1237
      %v1239 = vpop.f32.mrf.mxu0
      %v1240 = vpop.f32.mrf.mxu0
      %v1241 = vadd.f32 %v936, %v1240
      %v1242 = vpop.f32.mrf.mxu0
      %1243 = vmatprep.mubr.bf16.mxu0 0
      %1244 = vmatmul.mubr.bf16.gmra.mxu0 %v1040
      %v1245 = vpop.f32.mrf.mxu0
      %v1246 = vadd.f32 %v941, %v1245
      %v1247 = vpop.f32.mrf.mxu0
      %v1248 = vpop.f32.mrf.mxu0
      %v1249 = vadd.f32 %v944, %v1248
      %v1250 = vpop.f32.mrf.mxu0
      %1251 = vmatprep.mubr.bf16.mxu0 0
      %1252 = vmatmul.mubr.bf16.gmra.mxu0 %v1041
      %v1253 = vpop.f32.mrf.mxu0
      %v1254 = vadd.f32 %v949, %v1253
      %v1255 = vpop.f32.mrf.mxu0
      %v1256 = vpop.f32.mrf.mxu0
      %v1257 = vadd.f32 %v952, %v1256
      %v1258 = vpop.f32.mrf.mxu0
      %1259 = vmatprep.mubr.bf16.mxu0 0
      %1260 = vmatmul.mubr.bf16.gmra.mxu0 %v1042
      %v1261 = vpop.f32.mrf.mxu0
      %v1262 = vadd.f32 %v957, %v1261
      %v1263 = vpop.f32.mrf.mxu0
      %v1264 = vpop.f32.mrf.mxu0
      %v1265 = vadd.f32 %v960, %v1264
      %v1266 = vpop.f32.mrf.mxu0
      %1267 = vdwg.mxu0
      %v1268 = vld [vmem:[%s208] sm:$0xe]
      %v1269 = vld [vmem:[%s208 + $0xc] sm:$0xe]
      %v1270 = vld [vmem:[%s208 + $0x18] sm:$0xe]
      %v1271 = vld [vmem:[%s208 + $0x24] sm:$0xe]
      %v1272 = vld [vmem:[%s208 + $0x30] sm:$0xe]
      %v1273 = vld [vmem:[%s208 + $0x3c] sm:$0xe]
      %v1274 = vld [vmem:[%s208 + $0x48] sm:$0xe]
      %v1275 = vld [vmem:[%s208 + $0x54] sm:$0xe]
      %v1276 = vld [vmem:[%s208 + $0x60] sm:$0xe]
      %v1277 = vld [vmem:[%s208 + $0x6c] sm:$0xe]
      %v1278 = vld [vmem:[%s208 + $0x78] sm:$0xe]
      %v1279 = vld [vmem:[%s208 + $0x84] sm:$0xe]
      %v1280 = vld [vmem:[%s208 + $0x90] sm:$0xe]
      %v1281 = vld [vmem:[%s208 + $0x9c] sm:$0xe]
      %v1282 = vld [vmem:[%s208 + $0xa8] sm:$0xe]
      %v1283 = vld [vmem:[%s208 + $0xb4] sm:$0xe]
      %vm1316 = vcmask 1042432
      %vm1317 = vcmask 1046532
      %vm1318 = vmor %vm1316, %vm1317
      %v1319 = vrot.slane %v1268, 5
      %v1320 = vrot.slane %v1319, 4
      %v1321 = vrot.slane %v223, 5
      %v1322 = vsel %vm1318, %v1320, %v1321
      %v1323 = vrot.slane %v1321, 4
      %v1324 = vrot.slane %v270, 5
      %v1325 = vsel %vm1318, %v1323, %v1324
      %v1326 = vrot.slane %v1269, 5
      %v1327 = vrot.slane %v1326, 4
      %v1328 = vrot.slane %v225, 5
      %v1329 = vsel %vm1318, %v1327, %v1328
      %v1330 = vrot.slane %v1328, 4
      %v1331 = vrot.slane %v271, 5
      %v1332 = vsel %vm1318, %v1330, %v1331
      %v1333 = vrot.slane %v1270, 5
      %v1334 = vrot.slane %v1333, 4
      %v1335 = vrot.slane %v227, 5
      %v1336 = vsel %vm1318, %v1334, %v1335
      %v1337 = vrot.slane %v1335, 4
      %v1338 = vrot.slane %v272, 5
      %v1339 = vsel %vm1318, %v1337, %v1338
      %v1340 = vrot.slane %v1271, 5
      %v1341 = vrot.slane %v1340, 4
      %v1342 = vrot.slane %v229, 5
      %v1343 = vsel %vm1318, %v1341, %v1342
      %v1344 = vrot.slane %v1342, 4
      %v1345 = vrot.slane %v273, 5
      %v1346 = vsel %vm1318, %v1344, %v1345
      %v1347 = vrot.slane %v1272, 5
      %v1348 = vrot.slane %v1347, 4
      %v1349 = vrot.slane %v231, 5
      %v1350 = vsel %vm1318, %v1348, %v1349
      %v1351 = vrot.slane %v1349, 4
      %v1352 = vrot.slane %v274, 5
      %v1353 = vsel %vm1318, %v1351, %v1352
      %v1354 = vrot.slane %v1273, 5
      %v1355 = vrot.slane %v1354, 4
      %v1356 = vrot.slane %v233, 5
      %v1357 = vsel %vm1318, %v1355, %v1356
      %v1358 = vrot.slane %v1356, 4
      %v1359 = vrot.slane %v275, 5
      %v1360 = vsel %vm1318, %v1358, %v1359
      %v1361 = vrot.slane %v1274, 5
      %v1362 = vrot.slane %v1361, 4
      %v1363 = vrot.slane %v235, 5
      %v1364 = vsel %vm1318, %v1362, %v1363
      %v1365 = vrot.slane %v1363, 4
      %v1366 = vrot.slane %v276, 5
      %v1367 = vsel %vm1318, %v1365, %v1366
      %v1368 = vrot.slane %v1275, 5
      %v1369 = vrot.slane %v1368, 4
      %v1370 = vrot.slane %v237, 5
      %v1371 = vsel %vm1318, %v1369, %v1370
      %v1372 = vrot.slane %v1370, 4
      %v1373 = vrot.slane %v277, 5
      %v1374 = vsel %vm1318, %v1372, %v1373
      %v1375 = vrot.slane %v1276, 5
      %v1376 = vrot.slane %v1375, 4
      %v1377 = vrot.slane %v239, 5
      %v1378 = vsel %vm1318, %v1376, %v1377
      %v1379 = vrot.slane %v1377, 4
      %v1380 = vrot.slane %v278, 5
      %v1381 = vsel %vm1318, %v1379, %v1380
      %v1382 = vrot.slane %v1277, 5
      %v1383 = vrot.slane %v1382, 4
      %v1384 = vrot.slane %v241, 5
      %v1385 = vsel %vm1318, %v1383, %v1384
      %v1386 = vrot.slane %v1384, 4
      %v1387 = vrot.slane %v279, 5
      %v1388 = vsel %vm1318, %v1386, %v1387
      %v1389 = vrot.slane %v1278, 5
      %v1390 = vrot.slane %v1389, 4
      %v1391 = vrot.slane %v243, 5
      %v1392 = vsel %vm1318, %v1390, %v1391
      %v1393 = vrot.slane %v1391, 4
      %v1394 = vrot.slane %v280, 5
      %v1395 = vsel %vm1318, %v1393, %v1394
      %v1396 = vrot.slane %v1279, 5
      %v1397 = vrot.slane %v1396, 4
      %v1398 = vrot.slane %v245, 5
      %v1399 = vsel %vm1318, %v1397, %v1398
      %v1400 = vrot.slane %v1398, 4
      %v1401 = vrot.slane %v281, 5
      %v1402 = vsel %vm1318, %v1400, %v1401
      %v1403 = vrot.slane %v1280, 5
      %v1404 = vrot.slane %v1403, 4
      %v1405 = vrot.slane %v247, 5
      %v1406 = vsel %vm1318, %v1404, %v1405
      %v1407 = vrot.slane %v1405, 4
      %v1408 = vrot.slane %v282, 5
      %v1409 = vsel %vm1318, %v1407, %v1408
      %v1410 = vrot.slane %v1281, 5
      %v1411 = vrot.slane %v1410, 4
      %v1412 = vrot.slane %v249, 5
      %v1413 = vsel %vm1318, %v1411, %v1412
      %v1414 = vrot.slane %v1412, 4
      %v1415 = vrot.slane %v283, 5
      %v1416 = vsel %vm1318, %v1414, %v1415
      %v1417 = vrot.slane %v1282, 5
      %v1418 = vrot.slane %v1417, 4
      %v1419 = vrot.slane %v251, 5
      %v1420 = vsel %vm1318, %v1418, %v1419
      %v1421 = vrot.slane %v1419, 4
      %v1422 = vrot.slane %v284, 5
      %v1423 = vsel %vm1318, %v1421, %v1422
      %v1424 = vrot.slane %v1283, 5
      %v1425 = vrot.slane %v1424, 4
      %v1426 = vrot.slane %v253, 5
      %v1427 = vsel %vm1318, %v1425, %v1426
      %v1428 = vrot.slane %v1426, 4
      %v1429 = vrot.slane %v285, 5
      %v1430 = vsel %vm1318, %v1428, %v1429
      %s1431 = scalar_lea.vmem %s1, 128
      %v1432 = vld [vmem:[%s1431] sm:$0xf]
      %v1433 = vld [vmem:[%s1431 + $0x4] sm:$0xf]
      %v1434 = vld [vmem:[%s1431 + $0x8] sm:$0xf]
      %v1435 = vld [vmem:[%s1431 + $0xc] sm:$0xf]
      %v1436 = vld [vmem:[%s1431 + $0x10] sm:$0xf]
      %v1437 = vld [vmem:[%s1431 + $0x14] sm:$0xf]
      %v1438 = vld [vmem:[%s1431 + $0x18] sm:$0xf]
      %v1439 = vld [vmem:[%s1431 + $0x1c] sm:$0xf]
      %v1440 = vld [vmem:[%s1431 + $0x20] sm:$0xf]
      %v1441 = vld [vmem:[%s1431 + $0x24] sm:$0xf]
      %v1442 = vld [vmem:[%s1431 + $0x28] sm:$0xf]
      %v1443 = vld [vmem:[%s1431 + $0x2c] sm:$0xf]
      %v1444 = vld [vmem:[%s1431 + $0x30] sm:$0xf]
      %v1445 = vld [vmem:[%s1431 + $0x34] sm:$0xf]
      %v1446 = vld [vmem:[%s1431 + $0x38] sm:$0xf]
      %v1447 = vld [vmem:[%s1431 + $0x3c] sm:$0xf]
      %v1448 = vunpack.c.l.b16 %v1322
      %v1449 = vunpack.c.l.b16 %v1325
      %v1450 = vunpack.c.l.b16 %v1329
      %v1451 = vunpack.c.l.b16 %v1332
      %v1452 = vunpack.c.l.b16 %v1336
      %v1453 = vunpack.c.l.b16 %v1339
      %v1454 = vunpack.c.l.b16 %v1343
      %v1455 = vunpack.c.l.b16 %v1346
      %v1456 = vunpack.c.l.b16 %v1350
      %v1457 = vunpack.c.l.b16 %v1353
      %v1458 = vunpack.c.l.b16 %v1357
      %v1459 = vunpack.c.l.b16 %v1360
      %v1460 = vunpack.c.l.b16 %v1364
      %v1461 = vunpack.c.l.b16 %v1367
      %v1462 = vunpack.c.l.b16 %v1371
      %v1463 = vunpack.c.l.b16 %v1374
      %v1464 = vunpack.c.l.b16 %v1378
      %v1465 = vunpack.c.l.b16 %v1381
      %v1466 = vunpack.c.l.b16 %v1385
      %v1467 = vunpack.c.l.b16 %v1388
      %v1468 = vunpack.c.l.b16 %v1392
      %v1469 = vunpack.c.l.b16 %v1395
      %v1470 = vunpack.c.l.b16 %v1399
      %v1471 = vunpack.c.l.b16 %v1402
      %v1472 = vunpack.c.l.b16 %v1406
      %v1473 = vunpack.c.l.b16 %v1409
      %v1474 = vunpack.c.l.b16 %v1413
      %v1475 = vunpack.c.l.b16 %v1416
      %v1476 = vunpack.c.l.b16 %v1420
      %v1477 = vunpack.c.l.b16 %v1423
      %v1478 = vunpack.c.l.b16 %v1427
      %v1479 = vunpack.c.l.b16 %v1430
      %v1480 = vpack.c.b16 %v1449, %v1448
      %v1481 = vpack.c.b16 %v1451, %v1450
      %v1482 = vpack.c.b16 %v1453, %v1452
      %v1483 = vpack.c.b16 %v1455, %v1454
      %v1484 = vpack.c.b16 %v1457, %v1456
      %v1485 = vpack.c.b16 %v1459, %v1458
      %v1486 = vpack.c.b16 %v1461, %v1460
      %v1487 = vpack.c.b16 %v1463, %v1462
      %v1488 = vpack.c.b16 %v1465, %v1464
      %v1489 = vpack.c.b16 %v1467, %v1466
      %v1490 = vpack.c.b16 %v1469, %v1468
      %v1491 = vpack.c.b16 %v1471, %v1470
      %v1492 = vpack.c.b16 %v1473, %v1472
      %v1493 = vpack.c.b16 %v1475, %v1474
      %v1494 = vpack.c.b16 %v1477, %v1476
      %v1495 = vpack.c.b16 %v1479, %v1478
      %v1528 = vunpack.c.l.b16 %v1432
      %v1529 = vunpack.c.l.b16 %v1433
      %v1530 = vunpack.c.l.b16 %v1434
      %v1531 = vunpack.c.l.b16 %v1435
      %v1532 = vunpack.c.l.b16 %v1436
      %v1533 = vunpack.c.l.b16 %v1437
      %v1534 = vunpack.c.l.b16 %v1438
      %v1535 = vunpack.c.l.b16 %v1439
      %v1536 = vunpack.c.l.b16 %v1440
      %v1537 = vunpack.c.l.b16 %v1441
      %v1538 = vunpack.c.l.b16 %v1442
      %v1539 = vunpack.c.l.b16 %v1443
      %v1540 = vunpack.c.l.b16 %v1444
      %v1541 = vunpack.c.l.b16 %v1445
      %v1542 = vunpack.c.l.b16 %v1446
      %v1543 = vunpack.c.l.b16 %v1447
      %v1544 = vpack.c.b16 %v1529, %v1528
      %v1545 = vpack.c.b16 %v1531, %v1530
      %v1546 = vpack.c.b16 %v1533, %v1532
      %v1547 = vpack.c.b16 %v1535, %v1534
      %v1548 = vpack.c.b16 %v1537, %v1536
      %v1549 = vpack.c.b16 %v1539, %v1538
      %v1550 = vpack.c.b16 %v1541, %v1540
      %v1551 = vpack.c.b16 %v1543, %v1542
      %1560 = vmatprep.subr.bf16.mxu0 0
      %1561 = vmatpush1.bf16.msra.mxu0 %v1551
      %1562 = vmatprep.subr.bf16.mxu0 0
      %1563 = vmatpush1.bf16.msra.mxu0 %v1550
      %1564 = vmatprep.subr.bf16.mxu0 0
      %1565 = vmatpush1.bf16.msra.mxu0 %v1549
      %1566 = vmatprep.subr.bf16.mxu0 0
      %1567 = vmatpush1.bf16.msra.mxu0 %v1548
      %1568 = vmatprep.subr.bf16.mxu0 0
      %1569 = vmatpush1.bf16.msra.mxu0 %v1547
      %1570 = vmatprep.subr.bf16.mxu0 0
      %1571 = vmatpush1.bf16.msra.mxu0 %v1546
      %1572 = vmatprep.subr.bf16.mxu0 0
      %1573 = vmatpush1.bf16.msra.mxu0 %v1545
      %1574 = vmatprep.subr.bf16.mxu0 0
      %1575 = vmatpush1.bf16.msra.mxu0 %v1544
      %1576 = vmatprep.subr.bf16.mxu0 0
      %1577 = vmatpush2.bf16.msra.mxu0 0
      %1578 = vmatprep.subr.bf16.mxu0 0
      %1579 = vmatpush2.bf16.msra.mxu0 0
      %1580 = vmatprep.subr.bf16.mxu0 0
      %1581 = vmatpush2.bf16.msra.mxu0 0
      %1582 = vmatprep.subr.bf16.mxu0 0
      %1583 = vmatpush2.bf16.msra.mxu0 0
      %1584 = vmatprep.subr.bf16.mxu0 0
      %1585 = vmatpush2.bf16.msra.mxu0 0
      %1586 = vmatprep.subr.bf16.mxu0 0
      %1587 = vmatpush2.bf16.msra.mxu0 0
      %1588 = vmatprep.subr.bf16.mxu0 0
      %1589 = vmatpush2.bf16.msra.mxu0 0
      %1590 = vmatprep.subr.bf16.mxu0 0
      %1591 = vmatpush2.bf16.msra.mxu0 0
      %1592 = vmatprep.mubr.bf16.mxu0 0
      %1593 = vmatmul.mubr.bf16.gmra.mxu0 %v1480
      %v1594 = vpop.f32.mrf.mxu0
      %v1595 = vadd.f32 0.0, %v1594
      %v1596 = vpop.f32.mrf.mxu0
      %v1597 = vpop.f32.mrf.mxu0
      %v1598 = vadd.f32 0.0, %v1597
      %v1599 = vpop.f32.mrf.mxu0
      %1600 = vmatprep.mubr.bf16.mxu0 0
      %1601 = vmatmul.mubr.bf16.gmra.mxu0 %v1481
      %v1602 = vpop.f32.mrf.mxu0
      %v1603 = vadd.f32 0.0, %v1602
      %v1604 = vpop.f32.mrf.mxu0
      %v1605 = vpop.f32.mrf.mxu0
      %v1606 = vadd.f32 0.0, %v1605
      %v1607 = vpop.f32.mrf.mxu0
      %1608 = vmatprep.mubr.bf16.mxu0 0
      %1609 = vmatmul.mubr.bf16.gmra.mxu0 %v1482
      %v1610 = vpop.f32.mrf.mxu0
      %v1611 = vadd.f32 0.0, %v1610
      %v1612 = vpop.f32.mrf.mxu0
      %v1613 = vpop.f32.mrf.mxu0
      %v1614 = vadd.f32 0.0, %v1613
      %v1615 = vpop.f32.mrf.mxu0
      %1616 = vmatprep.mubr.bf16.mxu0 0
      %1617 = vmatmul.mubr.bf16.gmra.mxu0 %v1483
      %v1618 = vpop.f32.mrf.mxu0
      %v1619 = vadd.f32 0.0, %v1618
      %v1620 = vpop.f32.mrf.mxu0
      %v1621 = vpop.f32.mrf.mxu0
      %v1622 = vadd.f32 0.0, %v1621
      %v1623 = vpop.f32.mrf.mxu0
      %1624 = vmatprep.mubr.bf16.mxu0 0
      %1625 = vmatmul.mubr.bf16.gmra.mxu0 %v1484
      %v1626 = vpop.f32.mrf.mxu0
      %v1627 = vadd.f32 0.0, %v1626
      %v1628 = vpop.f32.mrf.mxu0
      %v1629 = vpop.f32.mrf.mxu0
      %v1630 = vadd.f32 0.0, %v1629
      %v1631 = vpop.f32.mrf.mxu0
      %1632 = vmatprep.mubr.bf16.mxu0 0
      %1633 = vmatmul.mubr.bf16.gmra.mxu0 %v1485
      %v1634 = vpop.f32.mrf.mxu0
      %v1635 = vadd.f32 0.0, %v1634
      %v1636 = vpop.f32.mrf.mxu0
      %v1637 = vpop.f32.mrf.mxu0
      %v1638 = vadd.f32 0.0, %v1637
      %v1639 = vpop.f32.mrf.mxu0
      %1640 = vmatprep.mubr.bf16.mxu0 0
      %1641 = vmatmul.mubr.bf16.gmra.mxu0 %v1486
      %v1642 = vpop.f32.mrf.mxu0
      %v1643 = vadd.f32 0.0, %v1642
      %v1644 = vpop.f32.mrf.mxu0
      %v1645 = vpop.f32.mrf.mxu0
      %v1646 = vadd.f32 0.0, %v1645
      %v1647 = vpop.f32.mrf.mxu0
      %1648 = vmatprep.mubr.bf16.mxu0 0
      %1649 = vmatmul.mubr.bf16.gmra.mxu0 %v1487
      %v1650 = vpop.f32.mrf.mxu0
      %v1651 = vadd.f32 0.0, %v1650
      %v1652 = vpop.f32.mrf.mxu0
      %v1653 = vpop.f32.mrf.mxu0
      %v1654 = vadd.f32 0.0, %v1653
      %v1655 = vpop.f32.mrf.mxu0
      %1656 = vmatprep.mubr.bf16.mxu0 0
      %1657 = vmatmul.mubr.bf16.gmra.mxu0 %v1488
      %v1658 = vpop.f32.mrf.mxu0
      %v1659 = vadd.f32 0.0, %v1658
      %v1660 = vpop.f32.mrf.mxu0
      %v1661 = vpop.f32.mrf.mxu0
      %v1662 = vadd.f32 0.0, %v1661
      %v1663 = vpop.f32.mrf.mxu0
      %1664 = vmatprep.mubr.bf16.mxu0 0
      %1665 = vmatmul.mubr.bf16.gmra.mxu0 %v1489
      %v1666 = vpop.f32.mrf.mxu0
      %v1667 = vadd.f32 0.0, %v1666
      %v1668 = vpop.f32.mrf.mxu0
      %v1669 = vpop.f32.mrf.mxu0
      %v1670 = vadd.f32 0.0, %v1669
      %v1671 = vpop.f32.mrf.mxu0
      %1672 = vmatprep.mubr.bf16.mxu0 0
      %1673 = vmatmul.mubr.bf16.gmra.mxu0 %v1490
      %v1674 = vpop.f32.mrf.mxu0
      %v1675 = vadd.f32 0.0, %v1674
      %v1676 = vpop.f32.mrf.mxu0
      %v1677 = vpop.f32.mrf.mxu0
      %v1678 = vadd.f32 0.0, %v1677
      %v1679 = vpop.f32.mrf.mxu0
      %1680 = vmatprep.mubr.bf16.mxu0 0
      %1681 = vmatmul.mubr.bf16.gmra.mxu0 %v1491
      %v1682 = vpop.f32.mrf.mxu0
      %v1683 = vadd.f32 0.0, %v1682
      %v1684 = vpop.f32.mrf.mxu0
      %v1685 = vpop.f32.mrf.mxu0
      %v1686 = vadd.f32 0.0, %v1685
      %v1687 = vpop.f32.mrf.mxu0
      %1688 = vmatprep.mubr.bf16.mxu0 0
      %1689 = vmatmul.mubr.bf16.gmra.mxu0 %v1492
      %v1690 = vpop.f32.mrf.mxu0
      %v1691 = vadd.f32 0.0, %v1690
      %v1692 = vpop.f32.mrf.mxu0
      %v1693 = vpop.f32.mrf.mxu0
      %v1694 = vadd.f32 0.0, %v1693
      %v1695 = vpop.f32.mrf.mxu0
      %1696 = vmatprep.mubr.bf16.mxu0 0
      %1697 = vmatmul.mubr.bf16.gmra.mxu0 %v1493
      %v1698 = vpop.f32.mrf.mxu0
      %v1699 = vadd.f32 0.0, %v1698
      %v1700 = vpop.f32.mrf.mxu0
      %v1701 = vpop.f32.mrf.mxu0
      %v1702 = vadd.f32 0.0, %v1701
      %v1703 = vpop.f32.mrf.mxu0
      %1704 = vmatprep.mubr.bf16.mxu0 0
      %1705 = vmatmul.mubr.bf16.gmra.mxu0 %v1494
      %v1706 = vpop.f32.mrf.mxu0
      %v1707 = vadd.f32 0.0, %v1706
      %v1708 = vpop.f32.mrf.mxu0
      %v1709 = vpop.f32.mrf.mxu0
      %v1710 = vadd.f32 0.0, %v1709
      %v1711 = vpop.f32.mrf.mxu0
      %1712 = vmatprep.mubr.bf16.mxu0 0
      %1713 = vmatmul.mubr.bf16.gmra.mxu0 %v1495
      %v1714 = vpop.f32.mrf.mxu0
      %v1715 = vadd.f32 0.0, %v1714
      %v1716 = vpop.f32.mrf.mxu0
      %v1717 = vpop.f32.mrf.mxu0
      %v1718 = vadd.f32 0.0, %v1717
      %v1719 = vpop.f32.mrf.mxu0
      %1720 = vdwg.mxu0
      %v1721 = vadd.f32 %v1142, %v1595
      %v1722 = vadd.f32 %v1145, %v1598
      %v1723 = vadd.f32 %v1150, %v1603
      %v1724 = vadd.f32 %v1153, %v1606
      %v1725 = vadd.f32 %v1158, %v1611
      %v1726 = vadd.f32 %v1161, %v1614
      %v1727 = vadd.f32 %v1166, %v1619
      %v1728 = vadd.f32 %v1169, %v1622
      %v1729 = vadd.f32 %v1174, %v1627
      %v1730 = vadd.f32 %v1177, %v1630
      %v1731 = vadd.f32 %v1182, %v1635
      %v1732 = vadd.f32 %v1185, %v1638
      %v1733 = vadd.f32 %v1190, %v1643
      %v1734 = vadd.f32 %v1193, %v1646
      %v1735 = vadd.f32 %v1198, %v1651
      %v1736 = vadd.f32 %v1201, %v1654
      %v1737 = vadd.f32 %v1206, %v1659
      %v1738 = vadd.f32 %v1209, %v1662
      %v1739 = vadd.f32 %v1214, %v1667
      %v1740 = vadd.f32 %v1217, %v1670
      %v1741 = vadd.f32 %v1222, %v1675
      %v1742 = vadd.f32 %v1225, %v1678
      %v1743 = vadd.f32 %v1230, %v1683
      %v1744 = vadd.f32 %v1233, %v1686
      %v1745 = vadd.f32 %v1238, %v1691
      %v1746 = vadd.f32 %v1241, %v1694
      %v1747 = vadd.f32 %v1246, %v1699
      %v1748 = vadd.f32 %v1249, %v1702
      %v1749 = vadd.f32 %v1254, %v1707
      %v1750 = vadd.f32 %v1257, %v1710
      %v1751 = vadd.f32 %v1262, %v1715
      %v1752 = vadd.f32 %v1265, %v1718
      %s1753 = scalar_lea.vmem %s208, 12
      %v1754 = vld [vmem:[%s1753] sm:$0xf]
      %v1755 = vld [vmem:[%s1753 + $0x4] sm:$0xf]
      %v1756 = vld [vmem:[%s1753 + $0xc] sm:$0xf]
      %v1757 = vld [vmem:[%s1753 + $0x10] sm:$0xf]
      %v1758 = vld [vmem:[%s1753 + $0x18] sm:$0xf]
      %v1759 = vld [vmem:[%s1753 + $0x1c] sm:$0xf]
      %v1760 = vld [vmem:[%s1753 + $0x24] sm:$0xf]
      %v1761 = vld [vmem:[%s1753 + $0x28] sm:$0xf]
      %v1762 = vld [vmem:[%s1753 + $0x30] sm:$0xf]
      %v1763 = vld [vmem:[%s1753 + $0x34] sm:$0xf]
      %v1764 = vld [vmem:[%s1753 + $0x3c] sm:$0xf]
      %v1765 = vld [vmem:[%s1753 + $0x40] sm:$0xf]
      %v1766 = vld [vmem:[%s1753 + $0x48] sm:$0xf]
      %v1767 = vld [vmem:[%s1753 + $0x4c] sm:$0xf]
      %v1768 = vld [vmem:[%s1753 + $0x54] sm:$0xf]
      %v1769 = vld [vmem:[%s1753 + $0x58] sm:$0xf]
      %v1770 = vld [vmem:[%s1753 + $0x60] sm:$0xf]
      %v1771 = vld [vmem:[%s1753 + $0x64] sm:$0xf]
      %v1772 = vld [vmem:[%s1753 + $0x6c] sm:$0xf]
      %v1773 = vld [vmem:[%s1753 + $0x70] sm:$0xf]
      %v1774 = vld [vmem:[%s1753 + $0x78] sm:$0xf]
      %v1775 = vld [vmem:[%s1753 + $0x7c] sm:$0xf]
      %v1776 = vld [vmem:[%s1753 + $0x84] sm:$0xf]
      %v1777 = vld [vmem:[%s1753 + $0x88] sm:$0xf]
      %v1778 = vld [vmem:[%s1753 + $0x90] sm:$0xf]
      %v1779 = vld [vmem:[%s1753 + $0x94] sm:$0xf]
      %v1780 = vld [vmem:[%s1753 + $0x9c] sm:$0xf]
      %v1781 = vld [vmem:[%s1753 + $0xa0] sm:$0xf]
      %v1782 = vld [vmem:[%s1753 + $0xa8] sm:$0xf]
      %v1783 = vld [vmem:[%s1753 + $0xac] sm:$0xf]
      %v1784 = vld [vmem:[%s1753 + $0xb4] sm:$0xf]
      %v1785 = vld [vmem:[%s1753 + $0xb8] sm:$0xf]
      %s1786 = scalar_lea.vmem %s1, 192
      %v1787 = vld [vmem:[%s1786] sm:$0xf]
      %v1788 = vld [vmem:[%s1786 + $0x4] sm:$0xf]
      %v1789 = vld [vmem:[%s1786 + $0x8] sm:$0xf]
      %v1790 = vld [vmem:[%s1786 + $0xc] sm:$0xf]
      %v1791 = vld [vmem:[%s1786 + $0x10] sm:$0xf]
      %v1792 = vld [vmem:[%s1786 + $0x14] sm:$0xf]
      %v1793 = vld [vmem:[%s1786 + $0x18] sm:$0xf]
      %v1794 = vld [vmem:[%s1786 + $0x1c] sm:$0xf]
      %v1795 = vld [vmem:[%s1786 + $0x20] sm:$0xf]
      %v1796 = vld [vmem:[%s1786 + $0x24] sm:$0xf]
      %v1797 = vld [vmem:[%s1786 + $0x28] sm:$0xf]
      %v1798 = vld [vmem:[%s1786 + $0x2c] sm:$0xf]
      %v1799 = vld [vmem:[%s1786 + $0x30] sm:$0xf]
      %v1800 = vld [vmem:[%s1786 + $0x34] sm:$0xf]
      %v1801 = vld [vmem:[%s1786 + $0x38] sm:$0xf]
      %v1802 = vld [vmem:[%s1786 + $0x3c] sm:$0xf]
      %v1835 = vunpack.c.l.b16 %v1754
      %v1836 = vunpack.c.l.b16 %v1755
      %v1837 = vunpack.c.l.b16 %v1756
      %v1838 = vunpack.c.l.b16 %v1757
      %v1839 = vunpack.c.l.b16 %v1758
      %v1840 = vunpack.c.l.b16 %v1759
      %v1841 = vunpack.c.l.b16 %v1760
      %v1842 = vunpack.c.l.b16 %v1761
      %v1843 = vunpack.c.l.b16 %v1762
      %v1844 = vunpack.c.l.b16 %v1763
      %v1845 = vunpack.c.l.b16 %v1764
      %v1846 = vunpack.c.l.b16 %v1765
      %v1847 = vunpack.c.l.b16 %v1766
      %v1848 = vunpack.c.l.b16 %v1767
      %v1849 = vunpack.c.l.b16 %v1768
      %v1850 = vunpack.c.l.b16 %v1769
      %v1851 = vunpack.c.l.b16 %v1770
      %v1852 = vunpack.c.l.b16 %v1771
      %v1853 = vunpack.c.l.b16 %v1772
      %v1854 = vunpack.c.l.b16 %v1773
      %v1855 = vunpack.c.l.b16 %v1774
      %v1856 = vunpack.c.l.b16 %v1775
      %v1857 = vunpack.c.l.b16 %v1776
      %v1858 = vunpack.c.l.b16 %v1777
      %v1859 = vunpack.c.l.b16 %v1778
      %v1860 = vunpack.c.l.b16 %v1779
      %v1861 = vunpack.c.l.b16 %v1780
      %v1862 = vunpack.c.l.b16 %v1781
      %v1863 = vunpack.c.l.b16 %v1782
      %v1864 = vunpack.c.l.b16 %v1783
      %v1865 = vunpack.c.l.b16 %v1784
      %v1866 = vunpack.c.l.b16 %v1785
      %v1867 = vpack.c.b16 %v1836, %v1835
      %v1868 = vpack.c.b16 %v1838, %v1837
      %v1869 = vpack.c.b16 %v1840, %v1839
      %v1870 = vpack.c.b16 %v1842, %v1841
      %v1871 = vpack.c.b16 %v1844, %v1843
      %v1872 = vpack.c.b16 %v1846, %v1845
      %v1873 = vpack.c.b16 %v1848, %v1847
      %v1874 = vpack.c.b16 %v1850, %v1849
      %v1875 = vpack.c.b16 %v1852, %v1851
      %v1876 = vpack.c.b16 %v1854, %v1853
      %v1877 = vpack.c.b16 %v1856, %v1855
      %v1878 = vpack.c.b16 %v1858, %v1857
      %v1879 = vpack.c.b16 %v1860, %v1859
      %v1880 = vpack.c.b16 %v1862, %v1861
      %v1881 = vpack.c.b16 %v1864, %v1863
      %v1882 = vpack.c.b16 %v1866, %v1865
      %v1915 = vunpack.c.l.b16 %v1787
      %v1916 = vunpack.c.l.b16 %v1788
      %v1917 = vunpack.c.l.b16 %v1789
      %v1918 = vunpack.c.l.b16 %v1790
      %v1919 = vunpack.c.l.b16 %v1791
      %v1920 = vunpack.c.l.b16 %v1792
      %v1921 = vunpack.c.l.b16 %v1793
      %v1922 = vunpack.c.l.b16 %v1794
      %v1923 = vunpack.c.l.b16 %v1795
      %v1924 = vunpack.c.l.b16 %v1796
      %v1925 = vunpack.c.l.b16 %v1797
      %v1926 = vunpack.c.l.b16 %v1798
      %v1927 = vunpack.c.l.b16 %v1799
      %v1928 = vunpack.c.l.b16 %v1800
      %v1929 = vunpack.c.l.b16 %v1801
      %v1930 = vunpack.c.l.b16 %v1802
      %v1931 = vpack.c.b16 %v1916, %v1915
      %v1932 = vpack.c.b16 %v1918, %v1917
      %v1933 = vpack.c.b16 %v1920, %v1919
      %v1934 = vpack.c.b16 %v1922, %v1921
      %v1935 = vpack.c.b16 %v1924, %v1923
      %v1936 = vpack.c.b16 %v1926, %v1925
      %v1937 = vpack.c.b16 %v1928, %v1927
      %v1938 = vpack.c.b16 %v1930, %v1929
      %1947 = vmatprep.subr.bf16.mxu0 0
      %1948 = vmatpush1.bf16.msra.mxu0 %v1938
      %1949 = vmatprep.subr.bf16.mxu0 0
      %1950 = vmatpush1.bf16.msra.mxu0 %v1937
      %1951 = vmatprep.subr.bf16.mxu0 0
      %1952 = vmatpush1.bf16.msra.mxu0 %v1936
      %1953 = vmatprep.subr.bf16.mxu0 0
      %1954 = vmatpush1.bf16.msra.mxu0 %v1935
      %1955 = vmatprep.subr.bf16.mxu0 0
      %1956 = vmatpush1.bf16.msra.mxu0 %v1934
      %1957 = vmatprep.subr.bf16.mxu0 0
      %1958 = vmatpush1.bf16.msra.mxu0 %v1933
      %1959 = vmatprep.subr.bf16.mxu0 0
      %1960 = vmatpush1.bf16.msra.mxu0 %v1932
      %1961 = vmatprep.subr.bf16.mxu0 0
      %1962 = vmatpush1.bf16.msra.mxu0 %v1931
      %1963 = vmatprep.subr.bf16.mxu0 0
      %1964 = vmatpush2.bf16.msra.mxu0 0
      %1965 = vmatprep.subr.bf16.mxu0 0
      %1966 = vmatpush2.bf16.msra.mxu0 0
      %1967 = vmatprep.subr.bf16.mxu0 0
      %1968 = vmatpush2.bf16.msra.mxu0 0
      %1969 = vmatprep.subr.bf16.mxu0 0
      %1970 = vmatpush2.bf16.msra.mxu0 0
      %1971 = vmatprep.subr.bf16.mxu0 0
      %1972 = vmatpush2.bf16.msra.mxu0 0
      %1973 = vmatprep.subr.bf16.mxu0 0
      %1974 = vmatpush2.bf16.msra.mxu0 0
      %1975 = vmatprep.subr.bf16.mxu0 0
      %1976 = vmatpush2.bf16.msra.mxu0 0
      %1977 = vmatprep.subr.bf16.mxu0 0
      %1978 = vmatpush2.bf16.msra.mxu0 0
      %1979 = vmatprep.mubr.bf16.mxu0 0
      %1980 = vmatmul.mubr.bf16.gmra.mxu0 %v1867
      %v1981 = vpop.f32.mrf.mxu0
      %v1982 = vadd.f32 0.0, %v1981
      %v1983 = vpop.f32.mrf.mxu0
      %v1984 = vpop.f32.mrf.mxu0
      %v1985 = vadd.f32 0.0, %v1984
      %v1986 = vpop.f32.mrf.mxu0
      %1987 = vmatprep.mubr.bf16.mxu0 0
      %1988 = vmatmul.mubr.bf16.gmra.mxu0 %v1868
      %v1989 = vpop.f32.mrf.mxu0
      %v1990 = vadd.f32 0.0, %v1989
      %v1991 = vpop.f32.mrf.mxu0
      %v1992 = vpop.f32.mrf.mxu0
      %v1993 = vadd.f32 0.0, %v1992
      %v1994 = vpop.f32.mrf.mxu0
      %1995 = vmatprep.mubr.bf16.mxu0 0
      %1996 = vmatmul.mubr.bf16.gmra.mxu0 %v1869
      %v1997 = vpop.f32.mrf.mxu0
      %v1998 = vadd.f32 0.0, %v1997
      %v1999 = vpop.f32.mrf.mxu0
      %v2000 = vpop.f32.mrf.mxu0
      %v2001 = vadd.f32 0.0, %v2000
      %v2002 = vpop.f32.mrf.mxu0
      %2003 = vmatprep.mubr.bf16.mxu0 0
      %2004 = vmatmul.mubr.bf16.gmra.mxu0 %v1870
      %v2005 = vpop.f32.mrf.mxu0
      %v2006 = vadd.f32 0.0, %v2005
      %v2007 = vpop.f32.mrf.mxu0
      %v2008 = vpop.f32.mrf.mxu0
      %v2009 = vadd.f32 0.0, %v2008
      %v2010 = vpop.f32.mrf.mxu0
      %2011 = vmatprep.mubr.bf16.mxu0 0
      %2012 = vmatmul.mubr.bf16.gmra.mxu0 %v1871
      %v2013 = vpop.f32.mrf.mxu0
      %v2014 = vadd.f32 0.0, %v2013
      %v2015 = vpop.f32.mrf.mxu0
      %v2016 = vpop.f32.mrf.mxu0
      %v2017 = vadd.f32 0.0, %v2016
      %v2018 = vpop.f32.mrf.mxu0
      %2019 = vmatprep.mubr.bf16.mxu0 0
      %2020 = vmatmul.mubr.bf16.gmra.mxu0 %v1872
      %v2021 = vpop.f32.mrf.mxu0
      %v2022 = vadd.f32 0.0, %v2021
      %v2023 = vpop.f32.mrf.mxu0
      %v2024 = vpop.f32.mrf.mxu0
      %v2025 = vadd.f32 0.0, %v2024
      %v2026 = vpop.f32.mrf.mxu0
      %2027 = vmatprep.mubr.bf16.mxu0 0
      %2028 = vmatmul.mubr.bf16.gmra.mxu0 %v1873
      %v2029 = vpop.f32.mrf.mxu0
      %v2030 = vadd.f32 0.0, %v2029
      %v2031 = vpop.f32.mrf.mxu0
      %v2032 = vpop.f32.mrf.mxu0
      %v2033 = vadd.f32 0.0, %v2032
      %v2034 = vpop.f32.mrf.mxu0
      %2035 = vmatprep.mubr.bf16.mxu0 0
      %2036 = vmatmul.mubr.bf16.gmra.mxu0 %v1874
      %v2037 = vpop.f32.mrf.mxu0
      %v2038 = vadd.f32 0.0, %v2037
      %v2039 = vpop.f32.mrf.mxu0
      %v2040 = vpop.f32.mrf.mxu0
      %v2041 = vadd.f32 0.0, %v2040
      %v2042 = vpop.f32.mrf.mxu0
      %2043 = vmatprep.mubr.bf16.mxu0 0
      %2044 = vmatmul.mubr.bf16.gmra.mxu0 %v1875
      %v2045 = vpop.f32.mrf.mxu0
      %v2046 = vadd.f32 0.0, %v2045
      %v2047 = vpop.f32.mrf.mxu0
      %v2048 = vpop.f32.mrf.mxu0
      %v2049 = vadd.f32 0.0, %v2048
      %v2050 = vpop.f32.mrf.mxu0
      %2051 = vmatprep.mubr.bf16.mxu0 0
      %2052 = vmatmul.mubr.bf16.gmra.mxu0 %v1876
      %v2053 = vpop.f32.mrf.mxu0
      %v2054 = vadd.f32 0.0, %v2053
      %v2055 = vpop.f32.mrf.mxu0
      %v2056 = vpop.f32.mrf.mxu0
      %v2057 = vadd.f32 0.0, %v2056
      %v2058 = vpop.f32.mrf.mxu0
      %2059 = vmatprep.mubr.bf16.mxu0 0
      %2060 = vmatmul.mubr.bf16.gmra.mxu0 %v1877
      %v2061 = vpop.f32.mrf.mxu0
      %v2062 = vadd.f32 0.0, %v2061
      %v2063 = vpop.f32.mrf.mxu0
      %v2064 = vpop.f32.mrf.mxu0
      %v2065 = vadd.f32 0.0, %v2064
      %v2066 = vpop.f32.mrf.mxu0
      %2067 = vmatprep.mubr.bf16.mxu0 0
      %2068 = vmatmul.mubr.bf16.gmra.mxu0 %v1878
      %v2069 = vpop.f32.mrf.mxu0
      %v2070 = vadd.f32 0.0, %v2069
      %v2071 = vpop.f32.mrf.mxu0
      %v2072 = vpop.f32.mrf.mxu0
      %v2073 = vadd.f32 0.0, %v2072
      %v2074 = vpop.f32.mrf.mxu0
      %2075 = vmatprep.mubr.bf16.mxu0 0
      %2076 = vmatmul.mubr.bf16.gmra.mxu0 %v1879
      %v2077 = vpop.f32.mrf.mxu0
      %v2078 = vadd.f32 0.0, %v2077
      %v2079 = vpop.f32.mrf.mxu0
      %v2080 = vpop.f32.mrf.mxu0
      %v2081 = vadd.f32 0.0, %v2080
      %v2082 = vpop.f32.mrf.mxu0
      %2083 = vmatprep.mubr.bf16.mxu0 0
      %2084 = vmatmul.mubr.bf16.gmra.mxu0 %v1880
      %v2085 = vpop.f32.mrf.mxu0
      %v2086 = vadd.f32 0.0, %v2085
      %v2087 = vpop.f32.mrf.mxu0
      %v2088 = vpop.f32.mrf.mxu0
      %v2089 = vadd.f32 0.0, %v2088
      %v2090 = vpop.f32.mrf.mxu0
      %2091 = vmatprep.mubr.bf16.mxu0 0
      %2092 = vmatmul.mubr.bf16.gmra.mxu0 %v1881
      %v2093 = vpop.f32.mrf.mxu0
      %v2094 = vadd.f32 0.0, %v2093
      %v2095 = vpop.f32.mrf.mxu0
      %v2096 = vpop.f32.mrf.mxu0
      %v2097 = vadd.f32 0.0, %v2096
      %v2098 = vpop.f32.mrf.mxu0
      %2099 = vmatprep.mubr.bf16.mxu0 0
      %2100 = vmatmul.mubr.bf16.gmra.mxu0 %v1882
      %v2101 = vpop.f32.mrf.mxu0
      %v2102 = vadd.f32 0.0, %v2101
      %v2103 = vpop.f32.mrf.mxu0
      %v2104 = vpop.f32.mrf.mxu0
      %v2105 = vadd.f32 0.0, %v2104
      %v2106 = vpop.f32.mrf.mxu0
      %2107 = vdwg.mxu0
      %v2108 = vadd.f32 %v1721, %v1982
      %v2109 = vadd.f32 %v1722, %v1985
      %v2110 = vadd.f32 %v1723, %v1990
      %v2111 = vadd.f32 %v1724, %v1993
      %v2112 = vadd.f32 %v1725, %v1998
      %v2113 = vadd.f32 %v1726, %v2001
      %v2114 = vadd.f32 %v1727, %v2006
      %v2115 = vadd.f32 %v1728, %v2009
      %v2116 = vadd.f32 %v1729, %v2014
      %v2117 = vadd.f32 %v1730, %v2017
      %v2118 = vadd.f32 %v1731, %v2022
      %v2119 = vadd.f32 %v1732, %v2025
      %v2120 = vadd.f32 %v1733, %v2030
      %v2121 = vadd.f32 %v1734, %v2033
      %v2122 = vadd.f32 %v1735, %v2038
      %v2123 = vadd.f32 %v1736, %v2041
      %v2124 = vadd.f32 %v1737, %v2046
      %v2125 = vadd.f32 %v1738, %v2049
      %v2126 = vadd.f32 %v1739, %v2054
      %v2127 = vadd.f32 %v1740, %v2057
      %v2128 = vadd.f32 %v1741, %v2062
      %v2129 = vadd.f32 %v1742, %v2065
      %v2130 = vadd.f32 %v1743, %v2070
      %v2131 = vadd.f32 %v1744, %v2073
      %v2132 = vadd.f32 %v1745, %v2078
      %v2133 = vadd.f32 %v1746, %v2081
      %v2134 = vadd.f32 %v1747, %v2086
      %v2135 = vadd.f32 %v1748, %v2089
      %v2136 = vadd.f32 %v1749, %v2094
      %v2137 = vadd.f32 %v1750, %v2097
      %v2138 = vadd.f32 %v1751, %v2102
      %v2139 = vadd.f32 %v1752, %v2105
      %v2140 = vld [vmem:[%s1753] sm:$0xf]
      %v2141 = vld [vmem:[%s1753 + $0x4] sm:$0xf]
      %v2142 = vld [vmem:[%s1753 + $0x8] sm:$0x1]
      %v2143 = vld [vmem:[%s1753 + $0xc] sm:$0xf]
      %v2144 = vld [vmem:[%s1753 + $0x10] sm:$0xf]
      %v2145 = vld [vmem:[%s1753 + $0x14] sm:$0x1]
      %v2146 = vld [vmem:[%s1753 + $0x18] sm:$0xf]
      %v2147 = vld [vmem:[%s1753 + $0x1c] sm:$0xf]
      %v2148 = vld [vmem:[%s1753 + $0x20] sm:$0x1]
      %v2149 = vld [vmem:[%s1753 + $0x24] sm:$0xf]
      %v2150 = vld [vmem:[%s1753 + $0x28] sm:$0xf]
      %v2151 = vld [vmem:[%s1753 + $0x2c] sm:$0x1]
      %v2152 = vld [vmem:[%s1753 + $0x30] sm:$0xf]
      %v2153 = vld [vmem:[%s1753 + $0x34] sm:$0xf]
      %v2154 = vld [vmem:[%s1753 + $0x38] sm:$0x1]
      %v2155 = vld [vmem:[%s1753 + $0x3c] sm:$0xf]
      %v2156 = vld [vmem:[%s1753 + $0x40] sm:$0xf]
      %v2157 = vld [vmem:[%s1753 + $0x44] sm:$0x1]
      %v2158 = vld [vmem:[%s1753 + $0x48] sm:$0xf]
      %v2159 = vld [vmem:[%s1753 + $0x4c] sm:$0xf]
      %v2160 = vld [vmem:[%s1753 + $0x50] sm:$0x1]
      %v2161 = vld [vmem:[%s1753 + $0x54] sm:$0xf]
      %v2162 = vld [vmem:[%s1753 + $0x58] sm:$0xf]
      %v2163 = vld [vmem:[%s1753 + $0x5c] sm:$0x1]
      %v2164 = vld [vmem:[%s1753 + $0x60] sm:$0xf]
      %v2165 = vld [vmem:[%s1753 + $0x64] sm:$0xf]
      %v2166 = vld [vmem:[%s1753 + $0x68] sm:$0x1]
      %v2167 = vld [vmem:[%s1753 + $0x6c] sm:$0xf]
      %v2168 = vld [vmem:[%s1753 + $0x70] sm:$0xf]
      %v2169 = vld [vmem:[%s1753 + $0x74] sm:$0x1]
      %v2170 = vld [vmem:[%s1753 + $0x78] sm:$0xf]
      %v2171 = vld [vmem:[%s1753 + $0x7c] sm:$0xf]
      %v2172 = vld [vmem:[%s1753 + $0x80] sm:$0x1]
      %v2173 = vld [vmem:[%s1753 + $0x84] sm:$0xf]
      %v2174 = vld [vmem:[%s1753 + $0x88] sm:$0xf]
      %v2175 = vld [vmem:[%s1753 + $0x8c] sm:$0x1]
      %v2176 = vld [vmem:[%s1753 + $0x90] sm:$0xf]
      %v2177 = vld [vmem:[%s1753 + $0x94] sm:$0xf]
      %v2178 = vld [vmem:[%s1753 + $0x98] sm:$0x1]
      %v2179 = vld [vmem:[%s1753 + $0x9c] sm:$0xf]
      %v2180 = vld [vmem:[%s1753 + $0xa0] sm:$0xf]
      %v2181 = vld [vmem:[%s1753 + $0xa4] sm:$0x1]
      %v2182 = vld [vmem:[%s1753 + $0xa8] sm:$0xf]
      %v2183 = vld [vmem:[%s1753 + $0xac] sm:$0xf]
      %v2184 = vld [vmem:[%s1753 + $0xb0] sm:$0x1]
      %v2185 = vld [vmem:[%s1753 + $0xb4] sm:$0xf]
      %v2186 = vld [vmem:[%s1753 + $0xb8] sm:$0xf]
      %v2187 = vld [vmem:[%s1753 + $0xbc] sm:$0x1]
      %v2189 = vshrl.u32 %v2140, 16
      %v2191 = vrot.slane %v2189, 4
      %v2192 = vshll.u32 %v2140, 16
      %v2194 = vrot.slane %v2192, 5
      %v2195 = vor.u32 %v2191, %v2194
      %v2196 = vrot.slane %v2195, 4
      %v2198 = vshll.u32 %v2141, 16
      %v2200 = vrot.slane %v2198, 5
      %v2201 = vsel %vm288, %v2196, %v2200
      %v2202 = vshrl.u32 %v2141, 16
      %v2204 = vrot.slane %v2202, 4
      %v2205 = vor.u32 %v2204, %v2200
      %v2206 = vrot.slane %v2205, 4
      %v2208 = vshll.u32 %v2142, 16
      %v2210 = vrot.slane %v2208, 5
      %v2211 = vsel %vm288, %v2206, %v2210
      %v2213 = vshrl.u32 %v2143, 16
      %v2215 = vrot.slane %v2213, 4
      %v2216 = vshll.u32 %v2143, 16
      %v2218 = vrot.slane %v2216, 5
      %v2219 = vor.u32 %v2215, %v2218
      %v2220 = vrot.slane %v2219, 4
      %v2222 = vshll.u32 %v2144, 16
      %v2224 = vrot.slane %v2222, 5
      %v2225 = vsel %vm288, %v2220, %v2224
      %v2226 = vshrl.u32 %v2144, 16
      %v2228 = vrot.slane %v2226, 4
      %v2229 = vor.u32 %v2228, %v2224
      %v2230 = vrot.slane %v2229, 4
      %v2232 = vshll.u32 %v2145, 16
      %v2234 = vrot.slane %v2232, 5
      %v2235 = vsel %vm288, %v2230, %v2234
      %v2237 = vshrl.u32 %v2146, 16
      %v2239 = vrot.slane %v2237, 4
      %v2240 = vshll.u32 %v2146, 16
      %v2242 = vrot.slane %v2240, 5
      %v2243 = vor.u32 %v2239, %v2242
      %v2244 = vrot.slane %v2243, 4
      %v2246 = vshll.u32 %v2147, 16
      %v2248 = vrot.slane %v2246, 5
      %v2249 = vsel %vm288, %v2244, %v2248
      %v2250 = vshrl.u32 %v2147, 16
      %v2252 = vrot.slane %v2250, 4
      %v2253 = vor.u32 %v2252, %v2248
      %v2254 = vrot.slane %v2253, 4
      %v2256 = vshll.u32 %v2148, 16
      %v2258 = vrot.slane %v2256, 5
      %v2259 = vsel %vm288, %v2254, %v2258
      %v2261 = vshrl.u32 %v2149, 16
      %v2263 = vrot.slane %v2261, 4
      %v2264 = vshll.u32 %v2149, 16
      %v2266 = vrot.slane %v2264, 5
      %v2267 = vor.u32 %v2263, %v2266
      %v2268 = vrot.slane %v2267, 4
      %v2270 = vshll.u32 %v2150, 16
      %v2272 = vrot.slane %v2270, 5
      %v2273 = vsel %vm288, %v2268, %v2272
      %v2274 = vshrl.u32 %v2150, 16
      %v2276 = vrot.slane %v2274, 4
      %v2277 = vor.u32 %v2276, %v2272
      %v2278 = vrot.slane %v2277, 4
      %v2280 = vshll.u32 %v2151, 16
      %v2282 = vrot.slane %v2280, 5
      %v2283 = vsel %vm288, %v2278, %v2282
      %v2285 = vshrl.u32 %v2152, 16
      %v2287 = vrot.slane %v2285, 4
      %v2288 = vshll.u32 %v2152, 16
      %v2290 = vrot.slane %v2288, 5
      %v2291 = vor.u32 %v2287, %v2290
      %v2292 = vrot.slane %v2291, 4
      %v2294 = vshll.u32 %v2153, 16
      %v2296 = vrot.slane %v2294, 5
      %v2297 = vsel %vm288, %v2292, %v2296
      %v2298 = vshrl.u32 %v2153, 16
      %v2300 = vrot.slane %v2298, 4
      %v2301 = vor.u32 %v2300, %v2296
      %v2302 = vrot.slane %v2301, 4
      %v2304 = vshll.u32 %v2154, 16
      %v2306 = vrot.slane %v2304, 5
      %v2307 = vsel %vm288, %v2302, %v2306
      %v2309 = vshrl.u32 %v2155, 16
      %v2311 = vrot.slane %v2309, 4
      %v2312 = vshll.u32 %v2155, 16
      %v2314 = vrot.slane %v2312, 5
      %v2315 = vor.u32 %v2311, %v2314
      %v2316 = vrot.slane %v2315, 4
      %v2318 = vshll.u32 %v2156, 16
      %v2320 = vrot.slane %v2318, 5
      %v2321 = vsel %vm288, %v2316, %v2320
      %v2322 = vshrl.u32 %v2156, 16
      %v2324 = vrot.slane %v2322, 4
      %v2325 = vor.u32 %v2324, %v2320
      %v2326 = vrot.slane %v2325, 4
      %v2328 = vshll.u32 %v2157, 16
      %v2330 = vrot.slane %v2328, 5
      %v2331 = vsel %vm288, %v2326, %v2330
      %v2333 = vshrl.u32 %v2158, 16
      %v2335 = vrot.slane %v2333, 4
      %v2336 = vshll.u32 %v2158, 16
      %v2338 = vrot.slane %v2336, 5
      %v2339 = vor.u32 %v2335, %v2338
      %v2340 = vrot.slane %v2339, 4
      %v2342 = vshll.u32 %v2159, 16
      %v2344 = vrot.slane %v2342, 5
      %v2345 = vsel %vm288, %v2340, %v2344
      %v2346 = vshrl.u32 %v2159, 16
      %v2348 = vrot.slane %v2346, 4
      %v2349 = vor.u32 %v2348, %v2344
      %v2350 = vrot.slane %v2349, 4
      %v2352 = vshll.u32 %v2160, 16
      %v2354 = vrot.slane %v2352, 5
      %v2355 = vsel %vm288, %v2350, %v2354
      %v2357 = vshrl.u32 %v2161, 16
      %v2359 = vrot.slane %v2357, 4
      %v2360 = vshll.u32 %v2161, 16
      %v2362 = vrot.slane %v2360, 5
      %v2363 = vor.u32 %v2359, %v2362
      %v2364 = vrot.slane %v2363, 4
      %v2366 = vshll.u32 %v2162, 16
      %v2368 = vrot.slane %v2366, 5
      %v2369 = vsel %vm288, %v2364, %v2368
      %v2370 = vshrl.u32 %v2162, 16
      %v2372 = vrot.slane %v2370, 4
      %v2373 = vor.u32 %v2372, %v2368
      %v2374 = vrot.slane %v2373, 4
      %v2376 = vshll.u32 %v2163, 16
      %v2378 = vrot.slane %v2376, 5
      %v2379 = vsel %vm288, %v2374, %v2378
      %v2381 = vshrl.u32 %v2164, 16
      %v2383 = vrot.slane %v2381, 4
      %v2384 = vshll.u32 %v2164, 16
      %v2386 = vrot.slane %v2384, 5
      %v2387 = vor.u32 %v2383, %v2386
      %v2388 = vrot.slane %v2387, 4
      %v2390 = vshll.u32 %v2165, 16
      %v2392 = vrot.slane %v2390, 5
      %v2393 = vsel %vm288, %v2388, %v2392
      %v2394 = vshrl.u32 %v2165, 16
      %v2396 = vrot.slane %v2394, 4
      %v2397 = vor.u32 %v2396, %v2392
      %v2398 = vrot.slane %v2397, 4
      %v2400 = vshll.u32 %v2166, 16
      %v2402 = vrot.slane %v2400, 5
      %v2403 = vsel %vm288, %v2398, %v2402
      %v2405 = vshrl.u32 %v2167, 16
      %v2407 = vrot.slane %v2405, 4
      %v2408 = vshll.u32 %v2167, 16
      %v2410 = vrot.slane %v2408, 5
      %v2411 = vor.u32 %v2407, %v2410
      %v2412 = vrot.slane %v2411, 4
      %v2414 = vshll.u32 %v2168, 16
      %v2416 = vrot.slane %v2414, 5
      %v2417 = vsel %vm288, %v2412, %v2416
      %v2418 = vshrl.u32 %v2168, 16
      %v2420 = vrot.slane %v2418, 4
      %v2421 = vor.u32 %v2420, %v2416
      %v2422 = vrot.slane %v2421, 4
      %v2424 = vshll.u32 %v2169, 16
      %v2426 = vrot.slane %v2424, 5
      %v2427 = vsel %vm288, %v2422, %v2426
      %v2429 = vshrl.u32 %v2170, 16
      %v2431 = vrot.slane %v2429, 4
      %v2432 = vshll.u32 %v2170, 16
      %v2434 = vrot.slane %v2432, 5
      %v2435 = vor.u32 %v2431, %v2434
      %v2436 = vrot.slane %v2435, 4
      %v2438 = vshll.u32 %v2171, 16
      %v2440 = vrot.slane %v2438, 5
      %v2441 = vsel %vm288, %v2436, %v2440
      %v2442 = vshrl.u32 %v2171, 16
      %v2444 = vrot.slane %v2442, 4
      %v2445 = vor.u32 %v2444, %v2440
      %v2446 = vrot.slane %v2445, 4
      %v2448 = vshll.u32 %v2172, 16
      %v2450 = vrot.slane %v2448, 5
      %v2451 = vsel %vm288, %v2446, %v2450
      %v2453 = vshrl.u32 %v2173, 16
      %v2455 = vrot.slane %v2453, 4
      %v2456 = vshll.u32 %v2173, 16
      %v2458 = vrot.slane %v2456, 5
      %v2459 = vor.u32 %v2455, %v2458
      %v2460 = vrot.slane %v2459, 4
      %v2462 = vshll.u32 %v2174, 16
      %v2464 = vrot.slane %v2462, 5
      %v2465 = vsel %vm288, %v2460, %v2464
      %v2466 = vshrl.u32 %v2174, 16
      %v2468 = vrot.slane %v2466, 4
      %v2469 = vor.u32 %v2468, %v2464
      %v2470 = vrot.slane %v2469, 4
      %v2472 = vshll.u32 %v2175, 16
      %v2474 = vrot.slane %v2472, 5
      %v2475 = vsel %vm288, %v2470, %v2474
      %v2477 = vshrl.u32 %v2176, 16
      %v2479 = vrot.slane %v2477, 4
      %v2480 = vshll.u32 %v2176, 16
      %v2482 = vrot.slane %v2480, 5
      %v2483 = vor.u32 %v2479, %v2482
      %v2484 = vrot.slane %v2483, 4
      %v2486 = vshll.u32 %v2177, 16
      %v2488 = vrot.slane %v2486, 5
      %v2489 = vsel %vm288, %v2484, %v2488
      %v2490 = vshrl.u32 %v2177, 16
      %v2492 = vrot.slane %v2490, 4
      %v2493 = vor.u32 %v2492, %v2488
      %v2494 = vrot.slane %v2493, 4
      %v2496 = vshll.u32 %v2178, 16
      %v2498 = vrot.slane %v2496, 5
      %v2499 = vsel %vm288, %v2494, %v2498
      %v2501 = vshrl.u32 %v2179, 16
      %v2503 = vrot.slane %v2501, 4
      %v2504 = vshll.u32 %v2179, 16
      %v2506 = vrot.slane %v2504, 5
      %v2507 = vor.u32 %v2503, %v2506
      %v2508 = vrot.slane %v2507, 4
      %v2510 = vshll.u32 %v2180, 16
      %v2512 = vrot.slane %v2510, 5
      %v2513 = vsel %vm288, %v2508, %v2512
      %v2514 = vshrl.u32 %v2180, 16
      %v2516 = vrot.slane %v2514, 4
      %v2517 = vor.u32 %v2516, %v2512
      %v2518 = vrot.slane %v2517, 4
      %v2520 = vshll.u32 %v2181, 16
      %v2522 = vrot.slane %v2520, 5
      %v2523 = vsel %vm288, %v2518, %v2522
      %v2525 = vshrl.u32 %v2182, 16
      %v2527 = vrot.slane %v2525, 4
      %v2528 = vshll.u32 %v2182, 16
      %v2530 = vrot.slane %v2528, 5
      %v2531 = vor.u32 %v2527, %v2530
      %v2532 = vrot.slane %v2531, 4
      %v2534 = vshll.u32 %v2183, 16
      %v2536 = vrot.slane %v2534, 5
      %v2537 = vsel %vm288, %v2532, %v2536
      %v2538 = vshrl.u32 %v2183, 16
      %v2540 = vrot.slane %v2538, 4
      %v2541 = vor.u32 %v2540, %v2536
      %v2542 = vrot.slane %v2541, 4
      %v2544 = vshll.u32 %v2184, 16
      %v2546 = vrot.slane %v2544, 5
      %v2547 = vsel %vm288, %v2542, %v2546
      %v2549 = vshrl.u32 %v2185, 16
      %v2551 = vrot.slane %v2549, 4
      %v2552 = vshll.u32 %v2185, 16
      %v2554 = vrot.slane %v2552, 5
      %v2555 = vor.u32 %v2551, %v2554
      %v2556 = vrot.slane %v2555, 4
      %v2558 = vshll.u32 %v2186, 16
      %v2560 = vrot.slane %v2558, 5
      %v2561 = vsel %vm288, %v2556, %v2560
      %v2562 = vshrl.u32 %v2186, 16
      %v2564 = vrot.slane %v2562, 4
      %v2565 = vor.u32 %v2564, %v2560
      %v2566 = vrot.slane %v2565, 4
      %v2568 = vshll.u32 %v2187, 16
      %v2570 = vrot.slane %v2568, 5
      %v2571 = vsel %vm288, %v2566, %v2570
      %s2572 = scalar_lea.vmem %s1, 256
      %v2573 = vld [vmem:[%s2572] sm:$0xf]
      %v2574 = vld [vmem:[%s2572 + $0x4] sm:$0xf]
      %v2575 = vld [vmem:[%s2572 + $0x8] sm:$0xf]
      %v2576 = vld [vmem:[%s2572 + $0xc] sm:$0xf]
      %v2577 = vld [vmem:[%s2572 + $0x10] sm:$0xf]
      %v2578 = vld [vmem:[%s2572 + $0x14] sm:$0xf]
      %v2579 = vld [vmem:[%s2572 + $0x18] sm:$0xf]
      %v2580 = vld [vmem:[%s2572 + $0x1c] sm:$0xf]
      %v2581 = vld [vmem:[%s2572 + $0x20] sm:$0xf]
      %v2582 = vld [vmem:[%s2572 + $0x24] sm:$0xf]
      %v2583 = vld [vmem:[%s2572 + $0x28] sm:$0xf]
      %v2584 = vld [vmem:[%s2572 + $0x2c] sm:$0xf]
      %v2585 = vld [vmem:[%s2572 + $0x30] sm:$0xf]
      %v2586 = vld [vmem:[%s2572 + $0x34] sm:$0xf]
      %v2587 = vld [vmem:[%s2572 + $0x38] sm:$0xf]
      %v2588 = vld [vmem:[%s2572 + $0x3c] sm:$0xf]
      %v2589 = vunpack.c.l.b16 %v2201
      %v2590 = vunpack.c.l.b16 %v2211
      %v2591 = vunpack.c.l.b16 %v2225
      %v2592 = vunpack.c.l.b16 %v2235
      %v2593 = vunpack.c.l.b16 %v2249
      %v2594 = vunpack.c.l.b16 %v2259
      %v2595 = vunpack.c.l.b16 %v2273
      %v2596 = vunpack.c.l.b16 %v2283
      %v2597 = vunpack.c.l.b16 %v2297
      %v2598 = vunpack.c.l.b16 %v2307
      %v2599 = vunpack.c.l.b16 %v2321
      %v2600 = vunpack.c.l.b16 %v2331
      %v2601 = vunpack.c.l.b16 %v2345
      %v2602 = vunpack.c.l.b16 %v2355
      %v2603 = vunpack.c.l.b16 %v2369
      %v2604 = vunpack.c.l.b16 %v2379
      %v2605 = vunpack.c.l.b16 %v2393
      %v2606 = vunpack.c.l.b16 %v2403
      %v2607 = vunpack.c.l.b16 %v2417
      %v2608 = vunpack.c.l.b16 %v2427
      %v2609 = vunpack.c.l.b16 %v2441
      %v2610 = vunpack.c.l.b16 %v2451
      %v2611 = vunpack.c.l.b16 %v2465
      %v2612 = vunpack.c.l.b16 %v2475
      %v2613 = vunpack.c.l.b16 %v2489
      %v2614 = vunpack.c.l.b16 %v2499
      %v2615 = vunpack.c.l.b16 %v2513
      %v2616 = vunpack.c.l.b16 %v2523
      %v2617 = vunpack.c.l.b16 %v2537
      %v2618 = vunpack.c.l.b16 %v2547
      %v2619 = vunpack.c.l.b16 %v2561
      %v2620 = vunpack.c.l.b16 %v2571
      %v2621 = vpack.c.b16 %v2590, %v2589
      %v2622 = vpack.c.b16 %v2592, %v2591
      %v2623 = vpack.c.b16 %v2594, %v2593
      %v2624 = vpack.c.b16 %v2596, %v2595
      %v2625 = vpack.c.b16 %v2598, %v2597
      %v2626 = vpack.c.b16 %v2600, %v2599
      %v2627 = vpack.c.b16 %v2602, %v2601
      %v2628 = vpack.c.b16 %v2604, %v2603
      %v2629 = vpack.c.b16 %v2606, %v2605
      %v2630 = vpack.c.b16 %v2608, %v2607
      %v2631 = vpack.c.b16 %v2610, %v2609
      %v2632 = vpack.c.b16 %v2612, %v2611
      %v2633 = vpack.c.b16 %v2614, %v2613
      %v2634 = vpack.c.b16 %v2616, %v2615
      %v2635 = vpack.c.b16 %v2618, %v2617
      %v2636 = vpack.c.b16 %v2620, %v2619
      %v2669 = vunpack.c.l.b16 %v2573
      %v2670 = vunpack.c.l.b16 %v2574
      %v2671 = vunpack.c.l.b16 %v2575
      %v2672 = vunpack.c.l.b16 %v2576
      %v2673 = vunpack.c.l.b16 %v2577
      %v2674 = vunpack.c.l.b16 %v2578
      %v2675 = vunpack.c.l.b16 %v2579
      %v2676 = vunpack.c.l.b16 %v2580
      %v2677 = vunpack.c.l.b16 %v2581
      %v2678 = vunpack.c.l.b16 %v2582
      %v2679 = vunpack.c.l.b16 %v2583
      %v2680 = vunpack.c.l.b16 %v2584
      %v2681 = vunpack.c.l.b16 %v2585
      %v2682 = vunpack.c.l.b16 %v2586
      %v2683 = vunpack.c.l.b16 %v2587
      %v2684 = vunpack.c.l.b16 %v2588
      %v2685 = vpack.c.b16 %v2670, %v2669
      %v2686 = vpack.c.b16 %v2672, %v2671
      %v2687 = vpack.c.b16 %v2674, %v2673
      %v2688 = vpack.c.b16 %v2676, %v2675
      %v2689 = vpack.c.b16 %v2678, %v2677
      %v2690 = vpack.c.b16 %v2680, %v2679
      %v2691 = vpack.c.b16 %v2682, %v2681
      %v2692 = vpack.c.b16 %v2684, %v2683
      %2701 = vmatprep.subr.bf16.mxu0 0
      %2702 = vmatpush1.bf16.msra.mxu0 %v2692
      %2703 = vmatprep.subr.bf16.mxu0 0
      %2704 = vmatpush1.bf16.msra.mxu0 %v2691
      %2705 = vmatprep.subr.bf16.mxu0 0
      %2706 = vmatpush1.bf16.msra.mxu0 %v2690
      %2707 = vmatprep.subr.bf16.mxu0 0
      %2708 = vmatpush1.bf16.msra.mxu0 %v2689
      %2709 = vmatprep.subr.bf16.mxu0 0
      %2710 = vmatpush1.bf16.msra.mxu0 %v2688
      %2711 = vmatprep.subr.bf16.mxu0 0
      %2712 = vmatpush1.bf16.msra.mxu0 %v2687
      %2713 = vmatprep.subr.bf16.mxu0 0
      %2714 = vmatpush1.bf16.msra.mxu0 %v2686
      %2715 = vmatprep.subr.bf16.mxu0 0
      %2716 = vmatpush1.bf16.msra.mxu0 %v2685
      %2717 = vmatprep.subr.bf16.mxu0 0
      %2718 = vmatpush2.bf16.msra.mxu0 0
      %2719 = vmatprep.subr.bf16.mxu0 0
      %2720 = vmatpush2.bf16.msra.mxu0 0
      %2721 = vmatprep.subr.bf16.mxu0 0
      %2722 = vmatpush2.bf16.msra.mxu0 0
      %2723 = vmatprep.subr.bf16.mxu0 0
      %2724 = vmatpush2.bf16.msra.mxu0 0
      %2725 = vmatprep.subr.bf16.mxu0 0
      %2726 = vmatpush2.bf16.msra.mxu0 0
      %2727 = vmatprep.subr.bf16.mxu0 0
      %2728 = vmatpush2.bf16.msra.mxu0 0
      %2729 = vmatprep.subr.bf16.mxu0 0
      %2730 = vmatpush2.bf16.msra.mxu0 0
      %2731 = vmatprep.subr.bf16.mxu0 0
      %2732 = vmatpush2.bf16.msra.mxu0 0
      %2733 = vmatprep.mubr.bf16.mxu0 0
      %2734 = vmatmul.mubr.bf16.gmra.mxu0 %v2621
      %v2735 = vpop.f32.mrf.mxu0
      %v2736 = vadd.f32 0.0, %v2735
      %v2737 = vpop.f32.mrf.mxu0
      %v2738 = vpop.f32.mrf.mxu0
      %v2739 = vadd.f32 0.0, %v2738
      %v2740 = vpop.f32.mrf.mxu0
      %2741 = vmatprep.mubr.bf16.mxu0 0
      %2742 = vmatmul.mubr.bf16.gmra.mxu0 %v2622
      %v2743 = vpop.f32.mrf.mxu0
      %v2744 = vadd.f32 0.0, %v2743
      %v2745 = vpop.f32.mrf.mxu0
      %v2746 = vpop.f32.mrf.mxu0
      %v2747 = vadd.f32 0.0, %v2746
      %v2748 = vpop.f32.mrf.mxu0
      %2749 = vmatprep.mubr.bf16.mxu0 0
      %2750 = vmatmul.mubr.bf16.gmra.mxu0 %v2623
      %v2751 = vpop.f32.mrf.mxu0
      %v2752 = vadd.f32 0.0, %v2751
      %v2753 = vpop.f32.mrf.mxu0
      %v2754 = vpop.f32.mrf.mxu0
      %v2755 = vadd.f32 0.0, %v2754
      %v2756 = vpop.f32.mrf.mxu0
      %2757 = vmatprep.mubr.bf16.mxu0 0
      %2758 = vmatmul.mubr.bf16.gmra.mxu0 %v2624
      %v2759 = vpop.f32.mrf.mxu0
      %v2760 = vadd.f32 0.0, %v2759
      %v2761 = vpop.f32.mrf.mxu0
      %v2762 = vpop.f32.mrf.mxu0
      %v2763 = vadd.f32 0.0, %v2762
      %v2764 = vpop.f32.mrf.mxu0
      %2765 = vmatprep.mubr.bf16.mxu0 0
      %2766 = vmatmul.mubr.bf16.gmra.mxu0 %v2625
      %v2767 = vpop.f32.mrf.mxu0
      %v2768 = vadd.f32 0.0, %v2767
      %v2769 = vpop.f32.mrf.mxu0
      %v2770 = vpop.f32.mrf.mxu0
      %v2771 = vadd.f32 0.0, %v2770
      %v2772 = vpop.f32.mrf.mxu0
      %2773 = vmatprep.mubr.bf16.mxu0 0
      %2774 = vmatmul.mubr.bf16.gmra.mxu0 %v2626
      %v2775 = vpop.f32.mrf.mxu0
      %v2776 = vadd.f32 0.0, %v2775
      %v2777 = vpop.f32.mrf.mxu0
      %v2778 = vpop.f32.mrf.mxu0
      %v2779 = vadd.f32 0.0, %v2778
      %v2780 = vpop.f32.mrf.mxu0
      %2781 = vmatprep.mubr.bf16.mxu0 0
      %2782 = vmatmul.mubr.bf16.gmra.mxu0 %v2627
      %v2783 = vpop.f32.mrf.mxu0
      %v2784 = vadd.f32 0.0, %v2783
      %v2785 = vpop.f32.mrf.mxu0
      %v2786 = vpop.f32.mrf.mxu0
      %v2787 = vadd.f32 0.0, %v2786
      %v2788 = vpop.f32.mrf.mxu0
      %2789 = vmatprep.mubr.bf16.mxu0 0
      %2790 = vmatmul.mubr.bf16.gmra.mxu0 %v2628
      %v2791 = vpop.f32.mrf.mxu0
      %v2792 = vadd.f32 0.0, %v2791
      %v2793 = vpop.f32.mrf.mxu0
      %v2794 = vpop.f32.mrf.mxu0
      %v2795 = vadd.f32 0.0, %v2794
      %v2796 = vpop.f32.mrf.mxu0
      %2797 = vmatprep.mubr.bf16.mxu0 0
      %2798 = vmatmul.mubr.bf16.gmra.mxu0 %v2629
      %v2799 = vpop.f32.mrf.mxu0
      %v2800 = vadd.f32 0.0, %v2799
      %v2801 = vpop.f32.mrf.mxu0
      %v2802 = vpop.f32.mrf.mxu0
      %v2803 = vadd.f32 0.0, %v2802
      %v2804 = vpop.f32.mrf.mxu0
      %2805 = vmatprep.mubr.bf16.mxu0 0
      %2806 = vmatmul.mubr.bf16.gmra.mxu0 %v2630
      %v2807 = vpop.f32.mrf.mxu0
      %v2808 = vadd.f32 0.0, %v2807
      %v2809 = vpop.f32.mrf.mxu0
      %v2810 = vpop.f32.mrf.mxu0
      %v2811 = vadd.f32 0.0, %v2810
      %v2812 = vpop.f32.mrf.mxu0
      %2813 = vmatprep.mubr.bf16.mxu0 0
      %2814 = vmatmul.mubr.bf16.gmra.mxu0 %v2631
      %v2815 = vpop.f32.mrf.mxu0
      %v2816 = vadd.f32 0.0, %v2815
      %v2817 = vpop.f32.mrf.mxu0
      %v2818 = vpop.f32.mrf.mxu0
      %v2819 = vadd.f32 0.0, %v2818
      %v2820 = vpop.f32.mrf.mxu0
      %2821 = vmatprep.mubr.bf16.mxu0 0
      %2822 = vmatmul.mubr.bf16.gmra.mxu0 %v2632
      %v2823 = vpop.f32.mrf.mxu0
      %v2824 = vadd.f32 0.0, %v2823
      %v2825 = vpop.f32.mrf.mxu0
      %v2826 = vpop.f32.mrf.mxu0
      %v2827 = vadd.f32 0.0, %v2826
      %v2828 = vpop.f32.mrf.mxu0
      %2829 = vmatprep.mubr.bf16.mxu0 0
      %2830 = vmatmul.mubr.bf16.gmra.mxu0 %v2633
      %v2831 = vpop.f32.mrf.mxu0
      %v2832 = vadd.f32 0.0, %v2831
      %v2833 = vpop.f32.mrf.mxu0
      %v2834 = vpop.f32.mrf.mxu0
      %v2835 = vadd.f32 0.0, %v2834
      %v2836 = vpop.f32.mrf.mxu0
      %2837 = vmatprep.mubr.bf16.mxu0 0
      %2838 = vmatmul.mubr.bf16.gmra.mxu0 %v2634
      %v2839 = vpop.f32.mrf.mxu0
      %v2840 = vadd.f32 0.0, %v2839
      %v2841 = vpop.f32.mrf.mxu0
      %v2842 = vpop.f32.mrf.mxu0
      %v2843 = vadd.f32 0.0, %v2842
      %v2844 = vpop.f32.mrf.mxu0
      %2845 = vmatprep.mubr.bf16.mxu0 0
      %2846 = vmatmul.mubr.bf16.gmra.mxu0 %v2635
      %v2847 = vpop.f32.mrf.mxu0
      %v2848 = vadd.f32 0.0, %v2847
      %v2849 = vpop.f32.mrf.mxu0
      %v2850 = vpop.f32.mrf.mxu0
      %v2851 = vadd.f32 0.0, %v2850
      %v2852 = vpop.f32.mrf.mxu0
      %2853 = vmatprep.mubr.bf16.mxu0 0
      %2854 = vmatmul.mubr.bf16.gmra.mxu0 %v2636
      %v2855 = vpop.f32.mrf.mxu0
      %v2856 = vadd.f32 0.0, %v2855
      %v2857 = vpop.f32.mrf.mxu0
      %v2858 = vpop.f32.mrf.mxu0
      %v2859 = vadd.f32 0.0, %v2858
      %v2860 = vpop.f32.mrf.mxu0
      %2861 = vdwg.mxu0
      %v2862 = vadd.f32 %v2108, %v2736
      %v2863 = vadd.f32 %v2109, %v2739
      %v2864 = vadd.f32 %v2110, %v2744
      %v2865 = vadd.f32 %v2111, %v2747
      %v2866 = vadd.f32 %v2112, %v2752
      %v2867 = vadd.f32 %v2113, %v2755
      %v2868 = vadd.f32 %v2114, %v2760
      %v2869 = vadd.f32 %v2115, %v2763
      %v2870 = vadd.f32 %v2116, %v2768
      %v2871 = vadd.f32 %v2117, %v2771
      %v2872 = vadd.f32 %v2118, %v2776
      %v2873 = vadd.f32 %v2119, %v2779
      %v2874 = vadd.f32 %v2120, %v2784
      %v2875 = vadd.f32 %v2121, %v2787
      %v2876 = vadd.f32 %v2122, %v2792
      %v2877 = vadd.f32 %v2123, %v2795
      %v2878 = vadd.f32 %v2124, %v2800
      %v2879 = vadd.f32 %v2125, %v2803
      %v2880 = vadd.f32 %v2126, %v2808
      %v2881 = vadd.f32 %v2127, %v2811
      %v2882 = vadd.f32 %v2128, %v2816
      %v2883 = vadd.f32 %v2129, %v2819
      %v2884 = vadd.f32 %v2130, %v2824
      %v2885 = vadd.f32 %v2131, %v2827
      %v2886 = vadd.f32 %v2132, %v2832
      %v2887 = vadd.f32 %v2133, %v2835
      %v2888 = vadd.f32 %v2134, %v2840
      %v2889 = vadd.f32 %v2135, %v2843
      %v2890 = vadd.f32 %v2136, %v2848
      %v2891 = vadd.f32 %v2137, %v2851
      %v2892 = vadd.f32 %v2138, %v2856
      %v2893 = vadd.f32 %v2139, %v2859
      %v2894 = vld [vmem:[%s1753] sm:$0xe]
      %v2895 = vld [vmem:[%s1753 + $0xc] sm:$0xe]
      %v2896 = vld [vmem:[%s1753 + $0x18] sm:$0xe]
      %v2897 = vld [vmem:[%s1753 + $0x24] sm:$0xe]
      %v2898 = vld [vmem:[%s1753 + $0x30] sm:$0xe]
      %v2899 = vld [vmem:[%s1753 + $0x3c] sm:$0xe]
      %v2900 = vld [vmem:[%s1753 + $0x48] sm:$0xe]
      %v2901 = vld [vmem:[%s1753 + $0x54] sm:$0xe]
      %v2902 = vld [vmem:[%s1753 + $0x60] sm:$0xe]
      %v2903 = vld [vmem:[%s1753 + $0x6c] sm:$0xe]
      %v2904 = vld [vmem:[%s1753 + $0x78] sm:$0xe]
      %v2905 = vld [vmem:[%s1753 + $0x84] sm:$0xe]
      %v2906 = vld [vmem:[%s1753 + $0x90] sm:$0xe]
      %v2907 = vld [vmem:[%s1753 + $0x9c] sm:$0xe]
      %v2908 = vld [vmem:[%s1753 + $0xa8] sm:$0xe]
      %v2909 = vld [vmem:[%s1753 + $0xb4] sm:$0xe]
      %v2958 = vrot.slane %v2894, 5
      %v2959 = vrot.slane %v2958, 4
      %v2960 = vrot.slane %v2141, 5
      %v2961 = vsel %vm1318, %v2959, %v2960
      %v2962 = vrot.slane %v2960, 4
      %v2963 = vrot.slane %v2142, 5
      %v2964 = vsel %vm1318, %v2962, %v2963
      %v2965 = vrot.slane %v2895, 5
      %v2966 = vrot.slane %v2965, 4
      %v2967 = vrot.slane %v2144, 5
      %v2968 = vsel %vm1318, %v2966, %v2967
      %v2969 = vrot.slane %v2967, 4
      %v2970 = vrot.slane %v2145, 5
      %v2971 = vsel %vm1318, %v2969, %v2970
      %v2972 = vrot.slane %v2896, 5
      %v2973 = vrot.slane %v2972, 4
      %v2974 = vrot.slane %v2147, 5
      %v2975 = vsel %vm1318, %v2973, %v2974
      %v2976 = vrot.slane %v2974, 4
      %v2977 = vrot.slane %v2148, 5
      %v2978 = vsel %vm1318, %v2976, %v2977
      %v2979 = vrot.slane %v2897, 5
      %v2980 = vrot.slane %v2979, 4
      %v2981 = vrot.slane %v2150, 5
      %v2982 = vsel %vm1318, %v2980, %v2981
      %v2983 = vrot.slane %v2981, 4
      %v2984 = vrot.slane %v2151, 5
      %v2985 = vsel %vm1318, %v2983, %v2984
      %v2986 = vrot.slane %v2898, 5
      %v2987 = vrot.slane %v2986, 4
      %v2988 = vrot.slane %v2153, 5
      %v2989 = vsel %vm1318, %v2987, %v2988
      %v2990 = vrot.slane %v2988, 4
      %v2991 = vrot.slane %v2154, 5
      %v2992 = vsel %vm1318, %v2990, %v2991
      %v2993 = vrot.slane %v2899, 5
      %v2994 = vrot.slane %v2993, 4
      %v2995 = vrot.slane %v2156, 5
      %v2996 = vsel %vm1318, %v2994, %v2995
      %v2997 = vrot.slane %v2995, 4
      %v2998 = vrot.slane %v2157, 5
      %v2999 = vsel %vm1318, %v2997, %v2998
      %v3000 = vrot.slane %v2900, 5
      %v3001 = vrot.slane %v3000, 4
      %v3002 = vrot.slane %v2159, 5
      %v3003 = vsel %vm1318, %v3001, %v3002
      %v3004 = vrot.slane %v3002, 4
      %v3005 = vrot.slane %v2160, 5
      %v3006 = vsel %vm1318, %v3004, %v3005
      %v3007 = vrot.slane %v2901, 5
      %v3008 = vrot.slane %v3007, 4
      %v3009 = vrot.slane %v2162, 5
      %v3010 = vsel %vm1318, %v3008, %v3009
      %v3011 = vrot.slane %v3009, 4
      %v3012 = vrot.slane %v2163, 5
      %v3013 = vsel %vm1318, %v3011, %v3012
      %v3014 = vrot.slane %v2902, 5
      %v3015 = vrot.slane %v3014, 4
      %v3016 = vrot.slane %v2165, 5
      %v3017 = vsel %vm1318, %v3015, %v3016
      %v3018 = vrot.slane %v3016, 4
      %v3019 = vrot.slane %v2166, 5
      %v3020 = vsel %vm1318, %v3018, %v3019
      %v3021 = vrot.slane %v2903, 5
      %v3022 = vrot.slane %v3021, 4
      %v3023 = vrot.slane %v2168, 5
      %v3024 = vsel %vm1318, %v3022, %v3023
      %v3025 = vrot.slane %v3023, 4
      %v3026 = vrot.slane %v2169, 5
      %v3027 = vsel %vm1318, %v3025, %v3026
      %v3028 = vrot.slane %v2904, 5
      %v3029 = vrot.slane %v3028, 4
      %v3030 = vrot.slane %v2171, 5
      %v3031 = vsel %vm1318, %v3029, %v3030
      %v3032 = vrot.slane %v3030, 4
      %v3033 = vrot.slane %v2172, 5
      %v3034 = vsel %vm1318, %v3032, %v3033
      %v3035 = vrot.slane %v2905, 5
      %v3036 = vrot.slane %v3035, 4
      %v3037 = vrot.slane %v2174, 5
      %v3038 = vsel %vm1318, %v3036, %v3037
      %v3039 = vrot.slane %v3037, 4
      %v3040 = vrot.slane %v2175, 5
      %v3041 = vsel %vm1318, %v3039, %v3040
      %v3042 = vrot.slane %v2906, 5
      %v3043 = vrot.slane %v3042, 4
      %v3044 = vrot.slane %v2177, 5
      %v3045 = vsel %vm1318, %v3043, %v3044
      %v3046 = vrot.slane %v3044, 4
      %v3047 = vrot.slane %v2178, 5
      %v3048 = vsel %vm1318, %v3046, %v3047
      %v3049 = vrot.slane %v2907, 5
      %v3050 = vrot.slane %v3049, 4
      %v3051 = vrot.slane %v2180, 5
      %v3052 = vsel %vm1318, %v3050, %v3051
      %v3053 = vrot.slane %v3051, 4
      %v3054 = vrot.slane %v2181, 5
      %v3055 = vsel %vm1318, %v3053, %v3054
      %v3056 = vrot.slane %v2908, 5
      %v3057 = vrot.slane %v3056, 4
      %v3058 = vrot.slane %v2183, 5
      %v3059 = vsel %vm1318, %v3057, %v3058
      %v3060 = vrot.slane %v3058, 4
      %v3061 = vrot.slane %v2184, 5
      %v3062 = vsel %vm1318, %v3060, %v3061
      %v3063 = vrot.slane %v2909, 5
      %v3064 = vrot.slane %v3063, 4
      %v3065 = vrot.slane %v2186, 5
      %v3066 = vsel %vm1318, %v3064, %v3065
      %v3067 = vrot.slane %v3065, 4
      %v3068 = vrot.slane %v2187, 5
      %v3069 = vsel %vm1318, %v3067, %v3068
      %s3070 = scalar_lea.vmem %s1, 320
      %v3071 = vld [vmem:[%s3070] sm:$0xf]
      %v3072 = vld [vmem:[%s3070 + $0x4] sm:$0xf]
      %v3073 = vld [vmem:[%s3070 + $0x8] sm:$0xf]
      %v3074 = vld [vmem:[%s3070 + $0xc] sm:$0xf]
      %v3075 = vld [vmem:[%s3070 + $0x10] sm:$0xf]
      %v3076 = vld [vmem:[%s3070 + $0x14] sm:$0xf]
      %v3077 = vld [vmem:[%s3070 + $0x18] sm:$0xf]
      %v3078 = vld [vmem:[%s3070 + $0x1c] sm:$0xf]
      %v3079 = vld [vmem:[%s3070 + $0x20] sm:$0xf]
      %v3080 = vld [vmem:[%s3070 + $0x24] sm:$0xf]
      %v3081 = vld [vmem:[%s3070 + $0x28] sm:$0xf]
      %v3082 = vld [vmem:[%s3070 + $0x2c] sm:$0xf]
      %v3083 = vld [vmem:[%s3070 + $0x30] sm:$0xf]
      %v3084 = vld [vmem:[%s3070 + $0x34] sm:$0xf]
      %v3085 = vld [vmem:[%s3070 + $0x38] sm:$0xf]
      %v3086 = vld [vmem:[%s3070 + $0x3c] sm:$0xf]
      %v3087 = vunpack.c.l.b16 %v2961
      %v3088 = vunpack.c.l.b16 %v2964
      %v3089 = vunpack.c.l.b16 %v2968
      %v3090 = vunpack.c.l.b16 %v2971
      %v3091 = vunpack.c.l.b16 %v2975
      %v3092 = vunpack.c.l.b16 %v2978
      %v3093 = vunpack.c.l.b16 %v2982
      %v3094 = vunpack.c.l.b16 %v2985
      %v3095 = vunpack.c.l.b16 %v2989
      %v3096 = vunpack.c.l.b16 %v2992
      %v3097 = vunpack.c.l.b16 %v2996
      %v3098 = vunpack.c.l.b16 %v2999
      %v3099 = vunpack.c.l.b16 %v3003
      %v3100 = vunpack.c.l.b16 %v3006
      %v3101 = vunpack.c.l.b16 %v3010
      %v3102 = vunpack.c.l.b16 %v3013
      %v3103 = vunpack.c.l.b16 %v3017
      %v3104 = vunpack.c.l.b16 %v3020
      %v3105 = vunpack.c.l.b16 %v3024
      %v3106 = vunpack.c.l.b16 %v3027
      %v3107 = vunpack.c.l.b16 %v3031
      %v3108 = vunpack.c.l.b16 %v3034
      %v3109 = vunpack.c.l.b16 %v3038
      %v3110 = vunpack.c.l.b16 %v3041
      %v3111 = vunpack.c.l.b16 %v3045
      %v3112 = vunpack.c.l.b16 %v3048
      %v3113 = vunpack.c.l.b16 %v3052
      %v3114 = vunpack.c.l.b16 %v3055
      %v3115 = vunpack.c.l.b16 %v3059
      %v3116 = vunpack.c.l.b16 %v3062
      %v3117 = vunpack.c.l.b16 %v3066
      %v3118 = vunpack.c.l.b16 %v3069
      %v3119 = vpack.c.b16 %v3088, %v3087
      %v3120 = vpack.c.b16 %v3090, %v3089
      %v3121 = vpack.c.b16 %v3092, %v3091
      %v3122 = vpack.c.b16 %v3094, %v3093
      %v3123 = vpack.c.b16 %v3096, %v3095
      %v3124 = vpack.c.b16 %v3098, %v3097
      %v3125 = vpack.c.b16 %v3100, %v3099
      %v3126 = vpack.c.b16 %v3102, %v3101
      %v3127 = vpack.c.b16 %v3104, %v3103
      %v3128 = vpack.c.b16 %v3106, %v3105
      %v3129 = vpack.c.b16 %v3108, %v3107
      %v3130 = vpack.c.b16 %v3110, %v3109
      %v3131 = vpack.c.b16 %v3112, %v3111
      %v3132 = vpack.c.b16 %v3114, %v3113
      %v3133 = vpack.c.b16 %v3116, %v3115
      %v3134 = vpack.c.b16 %v3118, %v3117
      %v3167 = vunpack.c.l.b16 %v3071
      %v3168 = vunpack.c.l.b16 %v3072
      %v3169 = vunpack.c.l.b16 %v3073
      %v3170 = vunpack.c.l.b16 %v3074
      %v3171 = vunpack.c.l.b16 %v3075
      %v3172 = vunpack.c.l.b16 %v3076
      %v3173 = vunpack.c.l.b16 %v3077
      %v3174 = vunpack.c.l.b16 %v3078
      %v3175 = vunpack.c.l.b16 %v3079
      %v3176 = vunpack.c.l.b16 %v3080
      %v3177 = vunpack.c.l.b16 %v3081
      %v3178 = vunpack.c.l.b16 %v3082
      %v3179 = vunpack.c.l.b16 %v3083
      %v3180 = vunpack.c.l.b16 %v3084
      %v3181 = vunpack.c.l.b16 %v3085
      %v3182 = vunpack.c.l.b16 %v3086
      %v3183 = vpack.c.b16 %v3168, %v3167
      %v3184 = vpack.c.b16 %v3170, %v3169
      %v3185 = vpack.c.b16 %v3172, %v3171
      %v3186 = vpack.c.b16 %v3174, %v3173
      %v3187 = vpack.c.b16 %v3176, %v3175
      %v3188 = vpack.c.b16 %v3178, %v3177
      %v3189 = vpack.c.b16 %v3180, %v3179
      %v3190 = vpack.c.b16 %v3182, %v3181
      %3199 = vmatprep.subr.bf16.mxu0 0
      %3200 = vmatpush1.bf16.msra.mxu0 %v3190
      %3201 = vmatprep.subr.bf16.mxu0 0
      %3202 = vmatpush1.bf16.msra.mxu0 %v3189
      %3203 = vmatprep.subr.bf16.mxu0 0
      %3204 = vmatpush1.bf16.msra.mxu0 %v3188
      %3205 = vmatprep.subr.bf16.mxu0 0
      %3206 = vmatpush1.bf16.msra.mxu0 %v3187
      %3207 = vmatprep.subr.bf16.mxu0 0
      %3208 = vmatpush1.bf16.msra.mxu0 %v3186
      %3209 = vmatprep.subr.bf16.mxu0 0
      %3210 = vmatpush1.bf16.msra.mxu0 %v3185
      %3211 = vmatprep.subr.bf16.mxu0 0
      %3212 = vmatpush1.bf16.msra.mxu0 %v3184
      %3213 = vmatprep.subr.bf16.mxu0 0
      %3214 = vmatpush1.bf16.msra.mxu0 %v3183
      %3215 = vmatprep.subr.bf16.mxu0 0
      %3216 = vmatpush2.bf16.msra.mxu0 0
      %3217 = vmatprep.subr.bf16.mxu0 0
      %3218 = vmatpush2.bf16.msra.mxu0 0
      %3219 = vmatprep.subr.bf16.mxu0 0
      %3220 = vmatpush2.bf16.msra.mxu0 0
      %3221 = vmatprep.subr.bf16.mxu0 0
      %3222 = vmatpush2.bf16.msra.mxu0 0
      %3223 = vmatprep.subr.bf16.mxu0 0
      %3224 = vmatpush2.bf16.msra.mxu0 0
      %3225 = vmatprep.subr.bf16.mxu0 0
      %3226 = vmatpush2.bf16.msra.mxu0 0
      %3227 = vmatprep.subr.bf16.mxu0 0
      %3228 = vmatpush2.bf16.msra.mxu0 0
      %3229 = vmatprep.subr.bf16.mxu0 0
      %3230 = vmatpush2.bf16.msra.mxu0 0
      %3231 = vmatprep.mubr.bf16.mxu0 0
      %3232 = vmatmul.mubr.bf16.gmra.mxu0 %v3119
      %v3233 = vpop.f32.mrf.mxu0
      %v3234 = vadd.f32 0.0, %v3233
      %v3235 = vpop.f32.mrf.mxu0
      %v3236 = vpop.f32.mrf.mxu0
      %v3237 = vadd.f32 0.0, %v3236
      %v3238 = vpop.f32.mrf.mxu0
      %3239 = vmatprep.mubr.bf16.mxu0 0
      %3240 = vmatmul.mubr.bf16.gmra.mxu0 %v3120
      %v3241 = vpop.f32.mrf.mxu0
      %v3242 = vadd.f32 0.0, %v3241
      %v3243 = vpop.f32.mrf.mxu0
      %v3244 = vpop.f32.mrf.mxu0
      %v3245 = vadd.f32 0.0, %v3244
      %v3246 = vpop.f32.mrf.mxu0
      %3247 = vmatprep.mubr.bf16.mxu0 0
      %3248 = vmatmul.mubr.bf16.gmra.mxu0 %v3121
      %v3249 = vpop.f32.mrf.mxu0
      %v3250 = vadd.f32 0.0, %v3249
      %v3251 = vpop.f32.mrf.mxu0
      %v3252 = vpop.f32.mrf.mxu0
      %v3253 = vadd.f32 0.0, %v3252
      %v3254 = vpop.f32.mrf.mxu0
      %3255 = vmatprep.mubr.bf16.mxu0 0
      %3256 = vmatmul.mubr.bf16.gmra.mxu0 %v3122
      %v3257 = vpop.f32.mrf.mxu0
      %v3258 = vadd.f32 0.0, %v3257
      %v3259 = vpop.f32.mrf.mxu0
      %v3260 = vpop.f32.mrf.mxu0
      %v3261 = vadd.f32 0.0, %v3260
      %v3262 = vpop.f32.mrf.mxu0
      %3263 = vmatprep.mubr.bf16.mxu0 0
      %3264 = vmatmul.mubr.bf16.gmra.mxu0 %v3123
      %v3265 = vpop.f32.mrf.mxu0
      %v3266 = vadd.f32 0.0, %v3265
      %v3267 = vpop.f32.mrf.mxu0
      %v3268 = vpop.f32.mrf.mxu0
      %v3269 = vadd.f32 0.0, %v3268
      %v3270 = vpop.f32.mrf.mxu0
      %3271 = vmatprep.mubr.bf16.mxu0 0
      %3272 = vmatmul.mubr.bf16.gmra.mxu0 %v3124
      %v3273 = vpop.f32.mrf.mxu0
      %v3274 = vadd.f32 0.0, %v3273
      %v3275 = vpop.f32.mrf.mxu0
      %v3276 = vpop.f32.mrf.mxu0
      %v3277 = vadd.f32 0.0, %v3276
      %v3278 = vpop.f32.mrf.mxu0
      %3279 = vmatprep.mubr.bf16.mxu0 0
      %3280 = vmatmul.mubr.bf16.gmra.mxu0 %v3125
      %v3281 = vpop.f32.mrf.mxu0
      %v3282 = vadd.f32 0.0, %v3281
      %v3283 = vpop.f32.mrf.mxu0
      %v3284 = vpop.f32.mrf.mxu0
      %v3285 = vadd.f32 0.0, %v3284
      %v3286 = vpop.f32.mrf.mxu0
      %3287 = vmatprep.mubr.bf16.mxu0 0
      %3288 = vmatmul.mubr.bf16.gmra.mxu0 %v3126
      %v3289 = vpop.f32.mrf.mxu0
      %v3290 = vadd.f32 0.0, %v3289
      %v3291 = vpop.f32.mrf.mxu0
      %v3292 = vpop.f32.mrf.mxu0
      %v3293 = vadd.f32 0.0, %v3292
      %v3294 = vpop.f32.mrf.mxu0
      %3295 = vmatprep.mubr.bf16.mxu0 0
      %3296 = vmatmul.mubr.bf16.gmra.mxu0 %v3127
      %v3297 = vpop.f32.mrf.mxu0
      %v3298 = vadd.f32 0.0, %v3297
      %v3299 = vpop.f32.mrf.mxu0
      %v3300 = vpop.f32.mrf.mxu0
      %v3301 = vadd.f32 0.0, %v3300
      %v3302 = vpop.f32.mrf.mxu0
      %3303 = vmatprep.mubr.bf16.mxu0 0
      %3304 = vmatmul.mubr.bf16.gmra.mxu0 %v3128
      %v3305 = vpop.f32.mrf.mxu0
      %v3306 = vadd.f32 0.0, %v3305
      %v3307 = vpop.f32.mrf.mxu0
      %v3308 = vpop.f32.mrf.mxu0
      %v3309 = vadd.f32 0.0, %v3308
      %v3310 = vpop.f32.mrf.mxu0
      %3311 = vmatprep.mubr.bf16.mxu0 0
      %3312 = vmatmul.mubr.bf16.gmra.mxu0 %v3129
      %v3313 = vpop.f32.mrf.mxu0
      %v3314 = vadd.f32 0.0, %v3313
      %v3315 = vpop.f32.mrf.mxu0
      %v3316 = vpop.f32.mrf.mxu0
      %v3317 = vadd.f32 0.0, %v3316
      %v3318 = vpop.f32.mrf.mxu0
      %3319 = vmatprep.mubr.bf16.mxu0 0
      %3320 = vmatmul.mubr.bf16.gmra.mxu0 %v3130
      %v3321 = vpop.f32.mrf.mxu0
      %v3322 = vadd.f32 0.0, %v3321
      %v3323 = vpop.f32.mrf.mxu0
      %v3324 = vpop.f32.mrf.mxu0
      %v3325 = vadd.f32 0.0, %v3324
      %v3326 = vpop.f32.mrf.mxu0
      %3327 = vmatprep.mubr.bf16.mxu0 0
      %3328 = vmatmul.mubr.bf16.gmra.mxu0 %v3131
      %v3329 = vpop.f32.mrf.mxu0
      %v3330 = vadd.f32 0.0, %v3329
      %v3331 = vpop.f32.mrf.mxu0
      %v3332 = vpop.f32.mrf.mxu0
      %v3333 = vadd.f32 0.0, %v3332
      %v3334 = vpop.f32.mrf.mxu0
      %3335 = vmatprep.mubr.bf16.mxu0 0
      %3336 = vmatmul.mubr.bf16.gmra.mxu0 %v3132
      %v3337 = vpop.f32.mrf.mxu0
      %v3338 = vadd.f32 0.0, %v3337
      %v3339 = vpop.f32.mrf.mxu0
      %v3340 = vpop.f32.mrf.mxu0
      %v3341 = vadd.f32 0.0, %v3340
      %v3342 = vpop.f32.mrf.mxu0
      %3343 = vmatprep.mubr.bf16.mxu0 0
      %3344 = vmatmul.mubr.bf16.gmra.mxu0 %v3133
      %v3345 = vpop.f32.mrf.mxu0
      %v3346 = vadd.f32 0.0, %v3345
      %v3347 = vpop.f32.mrf.mxu0
      %v3348 = vpop.f32.mrf.mxu0
      %v3349 = vadd.f32 0.0, %v3348
      %v3350 = vpop.f32.mrf.mxu0
      %3351 = vmatprep.mubr.bf16.mxu0 0
      %3352 = vmatmul.mubr.bf16.gmra.mxu0 %v3134
      %v3353 = vpop.f32.mrf.mxu0
      %v3354 = vadd.f32 0.0, %v3353
      %v3355 = vpop.f32.mrf.mxu0
      %v3356 = vpop.f32.mrf.mxu0
      %v3357 = vadd.f32 0.0, %v3356
      %v3358 = vpop.f32.mrf.mxu0
      %3359 = vdwg.mxu0
      %v3360 = vadd.f32 %v2862, %v3234
      %v3361 = vadd.f32 %v2863, %v3237
      %v3362 = vadd.f32 %v2864, %v3242
      %v3363 = vadd.f32 %v2865, %v3245
      %v3364 = vadd.f32 %v2866, %v3250
      %v3365 = vadd.f32 %v2867, %v3253
      %v3366 = vadd.f32 %v2868, %v3258
      %v3367 = vadd.f32 %v2869, %v3261
      %v3368 = vadd.f32 %v2870, %v3266
      %v3369 = vadd.f32 %v2871, %v3269
      %v3370 = vadd.f32 %v2872, %v3274
      %v3371 = vadd.f32 %v2873, %v3277
      %v3372 = vadd.f32 %v2874, %v3282
      %v3373 = vadd.f32 %v2875, %v3285
      %v3374 = vadd.f32 %v2876, %v3290
      %v3375 = vadd.f32 %v2877, %v3293
      %v3376 = vadd.f32 %v2878, %v3298
      %v3377 = vadd.f32 %v2879, %v3301
      %v3378 = vadd.f32 %v2880, %v3306
      %v3379 = vadd.f32 %v2881, %v3309
      %v3380 = vadd.f32 %v2882, %v3314
      %v3381 = vadd.f32 %v2883, %v3317
      %v3382 = vadd.f32 %v2884, %v3322
      %v3383 = vadd.f32 %v2885, %v3325
      %v3384 = vadd.f32 %v2886, %v3330
      %v3385 = vadd.f32 %v2887, %v3333
      %v3386 = vadd.f32 %v2888, %v3338
      %v3387 = vadd.f32 %v2889, %v3341
      %v3388 = vadd.f32 %v2890, %v3346
      %v3389 = vadd.f32 %v2891, %v3349
      %v3390 = vadd.f32 %v2892, %v3354
      %v3391 = vadd.f32 %v2893, %v3357
      %s3392 = scalar_lea.vmem %s208, 24
      %v3393 = vld [vmem:[%s3392] sm:$0xf]
      %v3394 = vld [vmem:[%s3392 + $0x4] sm:$0xf]
      %v3395 = vld [vmem:[%s3392 + $0xc] sm:$0xf]
      %v3396 = vld [vmem:[%s3392 + $0x10] sm:$0xf]
      %v3397 = vld [vmem:[%s3392 + $0x18] sm:$0xf]
      %v3398 = vld [vmem:[%s3392 + $0x1c] sm:$0xf]
      %v3399 = vld [vmem:[%s3392 + $0x24] sm:$0xf]
      %v3400 = vld [vmem:[%s3392 + $0x28] sm:$0xf]
      %v3401 = vld [vmem:[%s3392 + $0x30] sm:$0xf]
      %v3402 = vld [vmem:[%s3392 + $0x34] sm:$0xf]
      %v3403 = vld [vmem:[%s3392 + $0x3c] sm:$0xf]
      %v3404 = vld [vmem:[%s3392 + $0x40] sm:$0xf]
      %v3405 = vld [vmem:[%s3392 + $0x48] sm:$0xf]
      %v3406 = vld [vmem:[%s3392 + $0x4c] sm:$0xf]
      %v3407 = vld [vmem:[%s3392 + $0x54] sm:$0xf]
      %v3408 = vld [vmem:[%s3392 + $0x58] sm:$0xf]
      %v3409 = vld [vmem:[%s3392 + $0x60] sm:$0xf]
      %v3410 = vld [vmem:[%s3392 + $0x64] sm:$0xf]
      %v3411 = vld [vmem:[%s3392 + $0x6c] sm:$0xf]
      %v3412 = vld [vmem:[%s3392 + $0x70] sm:$0xf]
      %v3413 = vld [vmem:[%s3392 + $0x78] sm:$0xf]
      %v3414 = vld [vmem:[%s3392 + $0x7c] sm:$0xf]
      %v3415 = vld [vmem:[%s3392 + $0x84] sm:$0xf]
      %v3416 = vld [vmem:[%s3392 + $0x88] sm:$0xf]
      %v3417 = vld [vmem:[%s3392 + $0x90] sm:$0xf]
      %v3418 = vld [vmem:[%s3392 + $0x94] sm:$0xf]
      %v3419 = vld [vmem:[%s3392 + $0x9c] sm:$0xf]
      %v3420 = vld [vmem:[%s3392 + $0xa0] sm:$0xf]
      %v3421 = vld [vmem:[%s3392 + $0xa8] sm:$0xf]
      %v3422 = vld [vmem:[%s3392 + $0xac] sm:$0xf]
      %v3423 = vld [vmem:[%s3392 + $0xb4] sm:$0xf]
      %v3424 = vld [vmem:[%s3392 + $0xb8] sm:$0xf]
      %s3425 = scalar_lea.vmem %s1, 384
      %v3426 = vld [vmem:[%s3425] sm:$0xf]
      %v3427 = vld [vmem:[%s3425 + $0x4] sm:$0xf]
      %v3428 = vld [vmem:[%s3425 + $0x8] sm:$0xf]
      %v3429 = vld [vmem:[%s3425 + $0xc] sm:$0xf]
      %v3430 = vld [vmem:[%s3425 + $0x10] sm:$0xf]
      %v3431 = vld [vmem:[%s3425 + $0x14] sm:$0xf]
      %v3432 = vld [vmem:[%s3425 + $0x18] sm:$0xf]
      %v3433 = vld [vmem:[%s3425 + $0x1c] sm:$0xf]
      %v3434 = vld [vmem:[%s3425 + $0x20] sm:$0xf]
      %v3435 = vld [vmem:[%s3425 + $0x24] sm:$0xf]
      %v3436 = vld [vmem:[%s3425 + $0x28] sm:$0xf]
      %v3437 = vld [vmem:[%s3425 + $0x2c] sm:$0xf]
      %v3438 = vld [vmem:[%s3425 + $0x30] sm:$0xf]
      %v3439 = vld [vmem:[%s3425 + $0x34] sm:$0xf]
      %v3440 = vld [vmem:[%s3425 + $0x38] sm:$0xf]
      %v3441 = vld [vmem:[%s3425 + $0x3c] sm:$0xf]
      %v3474 = vunpack.c.l.b16 %v3393
      %v3475 = vunpack.c.l.b16 %v3394
      %v3476 = vunpack.c.l.b16 %v3395
      %v3477 = vunpack.c.l.b16 %v3396
      %v3478 = vunpack.c.l.b16 %v3397
      %v3479 = vunpack.c.l.b16 %v3398
      %v3480 = vunpack.c.l.b16 %v3399
      %v3481 = vunpack.c.l.b16 %v3400
      %v3482 = vunpack.c.l.b16 %v3401
      %v3483 = vunpack.c.l.b16 %v3402
      %v3484 = vunpack.c.l.b16 %v3403
      %v3485 = vunpack.c.l.b16 %v3404
      %v3486 = vunpack.c.l.b16 %v3405
      %v3487 = vunpack.c.l.b16 %v3406
      %v3488 = vunpack.c.l.b16 %v3407
      %v3489 = vunpack.c.l.b16 %v3408
      %v3490 = vunpack.c.l.b16 %v3409
      %v3491 = vunpack.c.l.b16 %v3410
      %v3492 = vunpack.c.l.b16 %v3411
      %v3493 = vunpack.c.l.b16 %v3412
      %v3494 = vunpack.c.l.b16 %v3413
      %v3495 = vunpack.c.l.b16 %v3414
      %v3496 = vunpack.c.l.b16 %v3415
      %v3497 = vunpack.c.l.b16 %v3416
      %v3498 = vunpack.c.l.b16 %v3417
      %v3499 = vunpack.c.l.b16 %v3418
      %v3500 = vunpack.c.l.b16 %v3419
      %v3501 = vunpack.c.l.b16 %v3420
      %v3502 = vunpack.c.l.b16 %v3421
      %v3503 = vunpack.c.l.b16 %v3422
      %v3504 = vunpack.c.l.b16 %v3423
      %v3505 = vunpack.c.l.b16 %v3424
      %v3506 = vpack.c.b16 %v3475, %v3474
      %v3507 = vpack.c.b16 %v3477, %v3476
      %v3508 = vpack.c.b16 %v3479, %v3478
      %v3509 = vpack.c.b16 %v3481, %v3480
      %v3510 = vpack.c.b16 %v3483, %v3482
      %v3511 = vpack.c.b16 %v3485, %v3484
      %v3512 = vpack.c.b16 %v3487, %v3486
      %v3513 = vpack.c.b16 %v3489, %v3488
      %v3514 = vpack.c.b16 %v3491, %v3490
      %v3515 = vpack.c.b16 %v3493, %v3492
      %v3516 = vpack.c.b16 %v3495, %v3494
      %v3517 = vpack.c.b16 %v3497, %v3496
      %v3518 = vpack.c.b16 %v3499, %v3498
      %v3519 = vpack.c.b16 %v3501, %v3500
      %v3520 = vpack.c.b16 %v3503, %v3502
      %v3521 = vpack.c.b16 %v3505, %v3504
      %v3554 = vunpack.c.l.b16 %v3426
      %v3555 = vunpack.c.l.b16 %v3427
      %v3556 = vunpack.c.l.b16 %v3428
      %v3557 = vunpack.c.l.b16 %v3429
      %v3558 = vunpack.c.l.b16 %v3430
      %v3559 = vunpack.c.l.b16 %v3431
      %v3560 = vunpack.c.l.b16 %v3432
      %v3561 = vunpack.c.l.b16 %v3433
      %v3562 = vunpack.c.l.b16 %v3434
      %v3563 = vunpack.c.l.b16 %v3435
      %v3564 = vunpack.c.l.b16 %v3436
      %v3565 = vunpack.c.l.b16 %v3437
      %v3566 = vunpack.c.l.b16 %v3438
      %v3567 = vunpack.c.l.b16 %v3439
      %v3568 = vunpack.c.l.b16 %v3440
      %v3569 = vunpack.c.l.b16 %v3441
      %v3570 = vpack.c.b16 %v3555, %v3554
      %v3571 = vpack.c.b16 %v3557, %v3556
      %v3572 = vpack.c.b16 %v3559, %v3558
      %v3573 = vpack.c.b16 %v3561, %v3560
      %v3574 = vpack.c.b16 %v3563, %v3562
      %v3575 = vpack.c.b16 %v3565, %v3564
      %v3576 = vpack.c.b16 %v3567, %v3566
      %v3577 = vpack.c.b16 %v3569, %v3568
      %3586 = vmatprep.subr.bf16.mxu0 0
      %3587 = vmatpush1.bf16.msra.mxu0 %v3577
      %3588 = vmatprep.subr.bf16.mxu0 0
      %3589 = vmatpush1.bf16.msra.mxu0 %v3576
      %3590 = vmatprep.subr.bf16.mxu0 0
      %3591 = vmatpush1.bf16.msra.mxu0 %v3575
      %3592 = vmatprep.subr.bf16.mxu0 0
      %3593 = vmatpush1.bf16.msra.mxu0 %v3574
      %3594 = vmatprep.subr.bf16.mxu0 0
      %3595 = vmatpush1.bf16.msra.mxu0 %v3573
      %3596 = vmatprep.subr.bf16.mxu0 0
      %3597 = vmatpush1.bf16.msra.mxu0 %v3572
      %3598 = vmatprep.subr.bf16.mxu0 0
      %3599 = vmatpush1.bf16.msra.mxu0 %v3571
      %3600 = vmatprep.subr.bf16.mxu0 0
      %3601 = vmatpush1.bf16.msra.mxu0 %v3570
      %3602 = vmatprep.subr.bf16.mxu0 0
      %3603 = vmatpush2.bf16.msra.mxu0 0
      %3604 = vmatprep.subr.bf16.mxu0 0
      %3605 = vmatpush2.bf16.msra.mxu0 0
      %3606 = vmatprep.subr.bf16.mxu0 0
      %3607 = vmatpush2.bf16.msra.mxu0 0
      %3608 = vmatprep.subr.bf16.mxu0 0
      %3609 = vmatpush2.bf16.msra.mxu0 0
      %3610 = vmatprep.subr.bf16.mxu0 0
      %3611 = vmatpush2.bf16.msra.mxu0 0
      %3612 = vmatprep.subr.bf16.mxu0 0
      %3613 = vmatpush2.bf16.msra.mxu0 0
      %3614 = vmatprep.subr.bf16.mxu0 0
      %3615 = vmatpush2.bf16.msra.mxu0 0
      %3616 = vmatprep.subr.bf16.mxu0 0
      %3617 = vmatpush2.bf16.msra.mxu0 0
      %3618 = vmatprep.mubr.bf16.mxu0 0
      %3619 = vmatmul.mubr.bf16.gmra.mxu0 %v3506
      %v3620 = vpop.f32.mrf.mxu0
      %v3621 = vadd.f32 0.0, %v3620
      %v3622 = vpop.f32.mrf.mxu0
      %v3623 = vpop.f32.mrf.mxu0
      %v3624 = vadd.f32 0.0, %v3623
      %v3625 = vpop.f32.mrf.mxu0
      %3626 = vmatprep.mubr.bf16.mxu0 0
      %3627 = vmatmul.mubr.bf16.gmra.mxu0 %v3507
      %v3628 = vpop.f32.mrf.mxu0
      %v3629 = vadd.f32 0.0, %v3628
      %v3630 = vpop.f32.mrf.mxu0
      %v3631 = vpop.f32.mrf.mxu0
      %v3632 = vadd.f32 0.0, %v3631
      %v3633 = vpop.f32.mrf.mxu0
      %3634 = vmatprep.mubr.bf16.mxu0 0
      %3635 = vmatmul.mubr.bf16.gmra.mxu0 %v3508
      %v3636 = vpop.f32.mrf.mxu0
      %v3637 = vadd.f32 0.0, %v3636
      %v3638 = vpop.f32.mrf.mxu0
      %v3639 = vpop.f32.mrf.mxu0
      %v3640 = vadd.f32 0.0, %v3639
      %v3641 = vpop.f32.mrf.mxu0
      %3642 = vmatprep.mubr.bf16.mxu0 0
      %3643 = vmatmul.mubr.bf16.gmra.mxu0 %v3509
      %v3644 = vpop.f32.mrf.mxu0
      %v3645 = vadd.f32 0.0, %v3644
      %v3646 = vpop.f32.mrf.mxu0
      %v3647 = vpop.f32.mrf.mxu0
      %v3648 = vadd.f32 0.0, %v3647
      %v3649 = vpop.f32.mrf.mxu0
      %3650 = vmatprep.mubr.bf16.mxu0 0
      %3651 = vmatmul.mubr.bf16.gmra.mxu0 %v3510
      %v3652 = vpop.f32.mrf.mxu0
      %v3653 = vadd.f32 0.0, %v3652
      %v3654 = vpop.f32.mrf.mxu0
      %v3655 = vpop.f32.mrf.mxu0
      %v3656 = vadd.f32 0.0, %v3655
      %v3657 = vpop.f32.mrf.mxu0
      %3658 = vmatprep.mubr.bf16.mxu0 0
      %3659 = vmatmul.mubr.bf16.gmra.mxu0 %v3511
      %v3660 = vpop.f32.mrf.mxu0
      %v3661 = vadd.f32 0.0, %v3660
      %v3662 = vpop.f32.mrf.mxu0
      %v3663 = vpop.f32.mrf.mxu0
      %v3664 = vadd.f32 0.0, %v3663
      %v3665 = vpop.f32.mrf.mxu0
      %3666 = vmatprep.mubr.bf16.mxu0 0
      %3667 = vmatmul.mubr.bf16.gmra.mxu0 %v3512
      %v3668 = vpop.f32.mrf.mxu0
      %v3669 = vadd.f32 0.0, %v3668
      %v3670 = vpop.f32.mrf.mxu0
      %v3671 = vpop.f32.mrf.mxu0
      %v3672 = vadd.f32 0.0, %v3671
      %v3673 = vpop.f32.mrf.mxu0
      %3674 = vmatprep.mubr.bf16.mxu0 0
      %3675 = vmatmul.mubr.bf16.gmra.mxu0 %v3513
      %v3676 = vpop.f32.mrf.mxu0
      %v3677 = vadd.f32 0.0, %v3676
      %v3678 = vpop.f32.mrf.mxu0
      %v3679 = vpop.f32.mrf.mxu0
      %v3680 = vadd.f32 0.0, %v3679
      %v3681 = vpop.f32.mrf.mxu0
      %3682 = vmatprep.mubr.bf16.mxu0 0
      %3683 = vmatmul.mubr.bf16.gmra.mxu0 %v3514
      %v3684 = vpop.f32.mrf.mxu0
      %v3685 = vadd.f32 0.0, %v3684
      %v3686 = vpop.f32.mrf.mxu0
      %v3687 = vpop.f32.mrf.mxu0
      %v3688 = vadd.f32 0.0, %v3687
      %v3689 = vpop.f32.mrf.mxu0
      %3690 = vmatprep.mubr.bf16.mxu0 0
      %3691 = vmatmul.mubr.bf16.gmra.mxu0 %v3515
      %v3692 = vpop.f32.mrf.mxu0
      %v3693 = vadd.f32 0.0, %v3692
      %v3694 = vpop.f32.mrf.mxu0
      %v3695 = vpop.f32.mrf.mxu0
      %v3696 = vadd.f32 0.0, %v3695
      %v3697 = vpop.f32.mrf.mxu0
      %3698 = vmatprep.mubr.bf16.mxu0 0
      %3699 = vmatmul.mubr.bf16.gmra.mxu0 %v3516
      %v3700 = vpop.f32.mrf.mxu0
      %v3701 = vadd.f32 0.0, %v3700
      %v3702 = vpop.f32.mrf.mxu0
      %v3703 = vpop.f32.mrf.mxu0
      %v3704 = vadd.f32 0.0, %v3703
      %v3705 = vpop.f32.mrf.mxu0
      %3706 = vmatprep.mubr.bf16.mxu0 0
      %3707 = vmatmul.mubr.bf16.gmra.mxu0 %v3517
      %v3708 = vpop.f32.mrf.mxu0
      %v3709 = vadd.f32 0.0, %v3708
      %v3710 = vpop.f32.mrf.mxu0
      %v3711 = vpop.f32.mrf.mxu0
      %v3712 = vadd.f32 0.0, %v3711
      %v3713 = vpop.f32.mrf.mxu0
      %3714 = vmatprep.mubr.bf16.mxu0 0
      %3715 = vmatmul.mubr.bf16.gmra.mxu0 %v3518
      %v3716 = vpop.f32.mrf.mxu0
      %v3717 = vadd.f32 0.0, %v3716
      %v3718 = vpop.f32.mrf.mxu0
      %v3719 = vpop.f32.mrf.mxu0
      %v3720 = vadd.f32 0.0, %v3719
      %v3721 = vpop.f32.mrf.mxu0
      %3722 = vmatprep.mubr.bf16.mxu0 0
      %3723 = vmatmul.mubr.bf16.gmra.mxu0 %v3519
      %v3724 = vpop.f32.mrf.mxu0
      %v3725 = vadd.f32 0.0, %v3724
      %v3726 = vpop.f32.mrf.mxu0
      %v3727 = vpop.f32.mrf.mxu0
      %v3728 = vadd.f32 0.0, %v3727
      %v3729 = vpop.f32.mrf.mxu0
      %3730 = vmatprep.mubr.bf16.mxu0 0
      %3731 = vmatmul.mubr.bf16.gmra.mxu0 %v3520
      %v3732 = vpop.f32.mrf.mxu0
      %v3733 = vadd.f32 0.0, %v3732
      %v3734 = vpop.f32.mrf.mxu0
      %v3735 = vpop.f32.mrf.mxu0
      %v3736 = vadd.f32 0.0, %v3735
      %v3737 = vpop.f32.mrf.mxu0
      %3738 = vmatprep.mubr.bf16.mxu0 0
      %3739 = vmatmul.mubr.bf16.gmra.mxu0 %v3521
      %v3740 = vpop.f32.mrf.mxu0
      %v3741 = vadd.f32 0.0, %v3740
      %v3742 = vpop.f32.mrf.mxu0
      %v3743 = vpop.f32.mrf.mxu0
      %v3744 = vadd.f32 0.0, %v3743
      %v3745 = vpop.f32.mrf.mxu0
      %3746 = vdwg.mxu0
      %v3747 = vadd.f32 %v3360, %v3621
      %v3748 = vadd.f32 %v3361, %v3624
      %v3749 = vadd.f32 %v3362, %v3629
      %v3750 = vadd.f32 %v3363, %v3632
      %v3751 = vadd.f32 %v3364, %v3637
      %v3752 = vadd.f32 %v3365, %v3640
      %v3753 = vadd.f32 %v3366, %v3645
      %v3754 = vadd.f32 %v3367, %v3648
      %v3755 = vadd.f32 %v3368, %v3653
      %v3756 = vadd.f32 %v3369, %v3656
      %v3757 = vadd.f32 %v3370, %v3661
      %v3758 = vadd.f32 %v3371, %v3664
      %v3759 = vadd.f32 %v3372, %v3669
      %v3760 = vadd.f32 %v3373, %v3672
      %v3761 = vadd.f32 %v3374, %v3677
      %v3762 = vadd.f32 %v3375, %v3680
      %v3763 = vadd.f32 %v3376, %v3685
      %v3764 = vadd.f32 %v3377, %v3688
      %v3765 = vadd.f32 %v3378, %v3693
      %v3766 = vadd.f32 %v3379, %v3696
      %v3767 = vadd.f32 %v3380, %v3701
      %v3768 = vadd.f32 %v3381, %v3704
      %v3769 = vadd.f32 %v3382, %v3709
      %v3770 = vadd.f32 %v3383, %v3712
      %v3771 = vadd.f32 %v3384, %v3717
      %v3772 = vadd.f32 %v3385, %v3720
      %v3773 = vadd.f32 %v3386, %v3725
      %v3774 = vadd.f32 %v3387, %v3728
      %v3775 = vadd.f32 %v3388, %v3733
      %v3776 = vadd.f32 %v3389, %v3736
      %v3777 = vadd.f32 %v3390, %v3741
      %v3778 = vadd.f32 %v3391, %v3744
      %v3779 = vld [vmem:[%s3392] sm:$0xf]
      %v3780 = vld [vmem:[%s3392 + $0x4] sm:$0xf]
      %v3781 = vld [vmem:[%s3392 + $0x8] sm:$0x1]
      %v3782 = vld [vmem:[%s3392 + $0xc] sm:$0xf]
      %v3783 = vld [vmem:[%s3392 + $0x10] sm:$0xf]
      %v3784 = vld [vmem:[%s3392 + $0x14] sm:$0x1]
      %v3785 = vld [vmem:[%s3392 + $0x18] sm:$0xf]
      %v3786 = vld [vmem:[%s3392 + $0x1c] sm:$0xf]
      %v3787 = vld [vmem:[%s3392 + $0x20] sm:$0x1]
      %v3788 = vld [vmem:[%s3392 + $0x24] sm:$0xf]
      %v3789 = vld [vmem:[%s3392 + $0x28] sm:$0xf]
      %v3790 = vld [vmem:[%s3392 + $0x2c] sm:$0x1]
      %v3791 = vld [vmem:[%s3392 + $0x30] sm:$0xf]
      %v3792 = vld [vmem:[%s3392 + $0x34] sm:$0xf]
      %v3793 = vld [vmem:[%s3392 + $0x38] sm:$0x1]
      %v3794 = vld [vmem:[%s3392 + $0x3c] sm:$0xf]
      %v3795 = vld [vmem:[%s3392 + $0x40] sm:$0xf]
      %v3796 = vld [vmem:[%s3392 + $0x44] sm:$0x1]
      %v3797 = vld [vmem:[%s3392 + $0x48] sm:$0xf]
      %v3798 = vld [vmem:[%s3392 + $0x4c] sm:$0xf]
      %v3799 = vld [vmem:[%s3392 + $0x50] sm:$0x1]
      %v3800 = vld [vmem:[%s3392 + $0x54] sm:$0xf]
      %v3801 = vld [vmem:[%s3392 + $0x58] sm:$0xf]
      %v3802 = vld [vmem:[%s3392 + $0x5c] sm:$0x1]
      %v3803 = vld [vmem:[%s3392 + $0x60] sm:$0xf]
      %v3804 = vld [vmem:[%s3392 + $0x64] sm:$0xf]
      %v3805 = vld [vmem:[%s3392 + $0x68] sm:$0x1]
      %v3806 = vld [vmem:[%s3392 + $0x6c] sm:$0xf]
      %v3807 = vld [vmem:[%s3392 + $0x70] sm:$0xf]
      %v3808 = vld [vmem:[%s3392 + $0x74] sm:$0x1]
      %v3809 = vld [vmem:[%s3392 + $0x78] sm:$0xf]
      %v3810 = vld [vmem:[%s3392 + $0x7c] sm:$0xf]
      %v3811 = vld [vmem:[%s3392 + $0x80] sm:$0x1]
      %v3812 = vld [vmem:[%s3392 + $0x84] sm:$0xf]
      %v3813 = vld [vmem:[%s3392 + $0x88] sm:$0xf]
      %v3814 = vld [vmem:[%s3392 + $0x8c] sm:$0x1]
      %v3815 = vld [vmem:[%s3392 + $0x90] sm:$0xf]
      %v3816 = vld [vmem:[%s3392 + $0x94] sm:$0xf]
      %v3817 = vld [vmem:[%s3392 + $0x98] sm:$0x1]
      %v3818 = vld [vmem:[%s3392 + $0x9c] sm:$0xf]
      %v3819 = vld [vmem:[%s3392 + $0xa0] sm:$0xf]
      %v3820 = vld [vmem:[%s3392 + $0xa4] sm:$0x1]
      %v3821 = vld [vmem:[%s3392 + $0xa8] sm:$0xf]
      %v3822 = vld [vmem:[%s3392 + $0xac] sm:$0xf]
      %v3823 = vld [vmem:[%s3392 + $0xb0] sm:$0x1]
      %v3824 = vld [vmem:[%s3392 + $0xb4] sm:$0xf]
      %v3825 = vld [vmem:[%s3392 + $0xb8] sm:$0xf]
      %v3826 = vld [vmem:[%s3392 + $0xbc] sm:$0x1]
      %v3828 = vshrl.u32 %v3779, 16
      %v3830 = vrot.slane %v3828, 4
      %v3831 = vshll.u32 %v3779, 16
      %v3833 = vrot.slane %v3831, 5
      %v3834 = vor.u32 %v3830, %v3833
      %v3835 = vrot.slane %v3834, 4
      %v3837 = vshll.u32 %v3780, 16
      %v3839 = vrot.slane %v3837, 5
      %v3840 = vsel %vm288, %v3835, %v3839
      %v3841 = vshrl.u32 %v3780, 16
      %v3843 = vrot.slane %v3841, 4
      %v3844 = vor.u32 %v3843, %v3839
      %v3845 = vrot.slane %v3844, 4
      %v3847 = vshll.u32 %v3781, 16
      %v3849 = vrot.slane %v3847, 5
      %v3850 = vsel %vm288, %v3845, %v3849
      %v3852 = vshrl.u32 %v3782, 16
      %v3854 = vrot.slane %v3852, 4
      %v3855 = vshll.u32 %v3782, 16
      %v3857 = vrot.slane %v3855, 5
      %v3858 = vor.u32 %v3854, %v3857
      %v3859 = vrot.slane %v3858, 4
      %v3861 = vshll.u32 %v3783, 16
      %v3863 = vrot.slane %v3861, 5
      %v3864 = vsel %vm288, %v3859, %v3863
      %v3865 = vshrl.u32 %v3783, 16
      %v3867 = vrot.slane %v3865, 4
      %v3868 = vor.u32 %v3867, %v3863
      %v3869 = vrot.slane %v3868, 4
      %v3871 = vshll.u32 %v3784, 16
      %v3873 = vrot.slane %v3871, 5
      %v3874 = vsel %vm288, %v3869, %v3873
      %v3876 = vshrl.u32 %v3785, 16
      %v3878 = vrot.slane %v3876, 4
      %v3879 = vshll.u32 %v3785, 16
      %v3881 = vrot.slane %v3879, 5
      %v3882 = vor.u32 %v3878, %v3881
      %v3883 = vrot.slane %v3882, 4
      %v3885 = vshll.u32 %v3786, 16
      %v3887 = vrot.slane %v3885, 5
      %v3888 = vsel %vm288, %v3883, %v3887
      %v3889 = vshrl.u32 %v3786, 16
      %v3891 = vrot.slane %v3889, 4
      %v3892 = vor.u32 %v3891, %v3887
      %v3893 = vrot.slane %v3892, 4
      %v3895 = vshll.u32 %v3787, 16
      %v3897 = vrot.slane %v3895, 5
      %v3898 = vsel %vm288, %v3893, %v3897
      %v3900 = vshrl.u32 %v3788, 16
      %v3902 = vrot.slane %v3900, 4
      %v3903 = vshll.u32 %v3788, 16
      %v3905 = vrot.slane %v3903, 5
      %v3906 = vor.u32 %v3902, %v3905
      %v3907 = vrot.slane %v3906, 4
      %v3909 = vshll.u32 %v3789, 16
      %v3911 = vrot.slane %v3909, 5
      %v3912 = vsel %vm288, %v3907, %v3911
      %v3913 = vshrl.u32 %v3789, 16
      %v3915 = vrot.slane %v3913, 4
      %v3916 = vor.u32 %v3915, %v3911
      %v3917 = vrot.slane %v3916, 4
      %v3919 = vshll.u32 %v3790, 16
      %v3921 = vrot.slane %v3919, 5
      %v3922 = vsel %vm288, %v3917, %v3921
      %v3924 = vshrl.u32 %v3791, 16
      %v3926 = vrot.slane %v3924, 4
      %v3927 = vshll.u32 %v3791, 16
      %v3929 = vrot.slane %v3927, 5
      %v3930 = vor.u32 %v3926, %v3929
      %v3931 = vrot.slane %v3930, 4
      %v3933 = vshll.u32 %v3792, 16
      %v3935 = vrot.slane %v3933, 5
      %v3936 = vsel %vm288, %v3931, %v3935
      %v3937 = vshrl.u32 %v3792, 16
      %v3939 = vrot.slane %v3937, 4
      %v3940 = vor.u32 %v3939, %v3935
      %v3941 = vrot.slane %v3940, 4
      %v3943 = vshll.u32 %v3793, 16
      %v3945 = vrot.slane %v3943, 5
      %v3946 = vsel %vm288, %v3941, %v3945
      %v3948 = vshrl.u32 %v3794, 16
      %v3950 = vrot.slane %v3948, 4
      %v3951 = vshll.u32 %v3794, 16
      %v3953 = vrot.slane %v3951, 5
      %v3954 = vor.u32 %v3950, %v3953
      %v3955 = vrot.slane %v3954, 4
      %v3957 = vshll.u32 %v3795, 16
      %v3959 = vrot.slane %v3957, 5
      %v3960 = vsel %vm288, %v3955, %v3959
      %v3961 = vshrl.u32 %v3795, 16
      %v3963 = vrot.slane %v3961, 4
      %v3964 = vor.u32 %v3963, %v3959
      %v3965 = vrot.slane %v3964, 4
      %v3967 = vshll.u32 %v3796, 16
      %v3969 = vrot.slane %v3967, 5
      %v3970 = vsel %vm288, %v3965, %v3969
      %v3972 = vshrl.u32 %v3797, 16
      %v3974 = vrot.slane %v3972, 4
      %v3975 = vshll.u32 %v3797, 16
      %v3977 = vrot.slane %v3975, 5
      %v3978 = vor.u32 %v3974, %v3977
      %v3979 = vrot.slane %v3978, 4
      %v3981 = vshll.u32 %v3798, 16
      %v3983 = vrot.slane %v3981, 5
      %v3984 = vsel %vm288, %v3979, %v3983
      %v3985 = vshrl.u32 %v3798, 16
      %v3987 = vrot.slane %v3985, 4
      %v3988 = vor.u32 %v3987, %v3983
      %v3989 = vrot.slane %v3988, 4
      %v3991 = vshll.u32 %v3799, 16
      %v3993 = vrot.slane %v3991, 5
      %v3994 = vsel %vm288, %v3989, %v3993
      %v3996 = vshrl.u32 %v3800, 16
      %v3998 = vrot.slane %v3996, 4
      %v3999 = vshll.u32 %v3800, 16
      %v4001 = vrot.slane %v3999, 5
      %v4002 = vor.u32 %v3998, %v4001
      %v4003 = vrot.slane %v4002, 4
      %v4005 = vshll.u32 %v3801, 16
      %v4007 = vrot.slane %v4005, 5
      %v4008 = vsel %vm288, %v4003, %v4007
      %v4009 = vshrl.u32 %v3801, 16
      %v4011 = vrot.slane %v4009, 4
      %v4012 = vor.u32 %v4011, %v4007
      %v4013 = vrot.slane %v4012, 4
      %v4015 = vshll.u32 %v3802, 16
      %v4017 = vrot.slane %v4015, 5
      %v4018 = vsel %vm288, %v4013, %v4017
      %v4020 = vshrl.u32 %v3803, 16
      %v4022 = vrot.slane %v4020, 4
      %v4023 = vshll.u32 %v3803, 16
      %v4025 = vrot.slane %v4023, 5
      %v4026 = vor.u32 %v4022, %v4025
      %v4027 = vrot.slane %v4026, 4
      %v4029 = vshll.u32 %v3804, 16
      %v4031 = vrot.slane %v4029, 5
      %v4032 = vsel %vm288, %v4027, %v4031
      %v4033 = vshrl.u32 %v3804, 16
      %v4035 = vrot.slane %v4033, 4
      %v4036 = vor.u32 %v4035, %v4031
      %v4037 = vrot.slane %v4036, 4
      %v4039 = vshll.u32 %v3805, 16
      %v4041 = vrot.slane %v4039, 5
      %v4042 = vsel %vm288, %v4037, %v4041
      %v4044 = vshrl.u32 %v3806, 16
      %v4046 = vrot.slane %v4044, 4
      %v4047 = vshll.u32 %v3806, 16
      %v4049 = vrot.slane %v4047, 5
      %v4050 = vor.u32 %v4046, %v4049
      %v4051 = vrot.slane %v4050, 4
      %v4053 = vshll.u32 %v3807, 16
      %v4055 = vrot.slane %v4053, 5
      %v4056 = vsel %vm288, %v4051, %v4055
      %v4057 = vshrl.u32 %v3807, 16
      %v4059 = vrot.slane %v4057, 4
      %v4060 = vor.u32 %v4059, %v4055
      %v4061 = vrot.slane %v4060, 4
      %v4063 = vshll.u32 %v3808, 16
      %v4065 = vrot.slane %v4063, 5
      %v4066 = vsel %vm288, %v4061, %v4065
      %v4068 = vshrl.u32 %v3809, 16
      %v4070 = vrot.slane %v4068, 4
      %v4071 = vshll.u32 %v3809, 16
      %v4073 = vrot.slane %v4071, 5
      %v4074 = vor.u32 %v4070, %v4073
      %v4075 = vrot.slane %v4074, 4
      %v4077 = vshll.u32 %v3810, 16
      %v4079 = vrot.slane %v4077, 5
      %v4080 = vsel %vm288, %v4075, %v4079
      %v4081 = vshrl.u32 %v3810, 16
      %v4083 = vrot.slane %v4081, 4
      %v4084 = vor.u32 %v4083, %v4079
      %v4085 = vrot.slane %v4084, 4
      %v4087 = vshll.u32 %v3811, 16
      %v4089 = vrot.slane %v4087, 5
      %v4090 = vsel %vm288, %v4085, %v4089
      %v4092 = vshrl.u32 %v3812, 16
      %v4094 = vrot.slane %v4092, 4
      %v4095 = vshll.u32 %v3812, 16
      %v4097 = vrot.slane %v4095, 5
      %v4098 = vor.u32 %v4094, %v4097
      %v4099 = vrot.slane %v4098, 4
      %v4101 = vshll.u32 %v3813, 16
      %v4103 = vrot.slane %v4101, 5
      %v4104 = vsel %vm288, %v4099, %v4103
      %v4105 = vshrl.u32 %v3813, 16
      %v4107 = vrot.slane %v4105, 4
      %v4108 = vor.u32 %v4107, %v4103
      %v4109 = vrot.slane %v4108, 4
      %v4111 = vshll.u32 %v3814, 16
      %v4113 = vrot.slane %v4111, 5
      %v4114 = vsel %vm288, %v4109, %v4113
      %v4116 = vshrl.u32 %v3815, 16
      %v4118 = vrot.slane %v4116, 4
      %v4119 = vshll.u32 %v3815, 16
      %v4121 = vrot.slane %v4119, 5
      %v4122 = vor.u32 %v4118, %v4121
      %v4123 = vrot.slane %v4122, 4
      %v4125 = vshll.u32 %v3816, 16
      %v4127 = vrot.slane %v4125, 5
      %v4128 = vsel %vm288, %v4123, %v4127
      %v4129 = vshrl.u32 %v3816, 16
      %v4131 = vrot.slane %v4129, 4
      %v4132 = vor.u32 %v4131, %v4127
      %v4133 = vrot.slane %v4132, 4
      %v4135 = vshll.u32 %v3817, 16
      %v4137 = vrot.slane %v4135, 5
      %v4138 = vsel %vm288, %v4133, %v4137
      %v4140 = vshrl.u32 %v3818, 16
      %v4142 = vrot.slane %v4140, 4
      %v4143 = vshll.u32 %v3818, 16
      %v4145 = vrot.slane %v4143, 5
      %v4146 = vor.u32 %v4142, %v4145
      %v4147 = vrot.slane %v4146, 4
      %v4149 = vshll.u32 %v3819, 16
      %v4151 = vrot.slane %v4149, 5
      %v4152 = vsel %vm288, %v4147, %v4151
      %v4153 = vshrl.u32 %v3819, 16
      %v4155 = vrot.slane %v4153, 4
      %v4156 = vor.u32 %v4155, %v4151
      %v4157 = vrot.slane %v4156, 4
      %v4159 = vshll.u32 %v3820, 16
      %v4161 = vrot.slane %v4159, 5
      %v4162 = vsel %vm288, %v4157, %v4161
      %v4164 = vshrl.u32 %v3821, 16
      %v4166 = vrot.slane %v4164, 4
      %v4167 = vshll.u32 %v3821, 16
      %v4169 = vrot.slane %v4167, 5
      %v4170 = vor.u32 %v4166, %v4169
      %v4171 = vrot.slane %v4170, 4
      %v4173 = vshll.u32 %v3822, 16
      %v4175 = vrot.slane %v4173, 5
      %v4176 = vsel %vm288, %v4171, %v4175
      %v4177 = vshrl.u32 %v3822, 16
      %v4179 = vrot.slane %v4177, 4
      %v4180 = vor.u32 %v4179, %v4175
      %v4181 = vrot.slane %v4180, 4
      %v4183 = vshll.u32 %v3823, 16
      %v4185 = vrot.slane %v4183, 5
      %v4186 = vsel %vm288, %v4181, %v4185
      %v4188 = vshrl.u32 %v3824, 16
      %v4190 = vrot.slane %v4188, 4
      %v4191 = vshll.u32 %v3824, 16
      %v4193 = vrot.slane %v4191, 5
      %v4194 = vor.u32 %v4190, %v4193
      %v4195 = vrot.slane %v4194, 4
      %v4197 = vshll.u32 %v3825, 16
      %v4199 = vrot.slane %v4197, 5
      %v4200 = vsel %vm288, %v4195, %v4199
      %v4201 = vshrl.u32 %v3825, 16
      %v4203 = vrot.slane %v4201, 4
      %v4204 = vor.u32 %v4203, %v4199
      %v4205 = vrot.slane %v4204, 4
      %v4207 = vshll.u32 %v3826, 16
      %v4209 = vrot.slane %v4207, 5
      %v4210 = vsel %vm288, %v4205, %v4209
      %s4211 = scalar_lea.vmem %s1, 448
      %v4212 = vld [vmem:[%s4211] sm:$0xf]
      %v4213 = vld [vmem:[%s4211 + $0x4] sm:$0xf]
      %v4214 = vld [vmem:[%s4211 + $0x8] sm:$0xf]
      %v4215 = vld [vmem:[%s4211 + $0xc] sm:$0xf]
      %v4216 = vld [vmem:[%s4211 + $0x10] sm:$0xf]
      %v4217 = vld [vmem:[%s4211 + $0x14] sm:$0xf]
      %v4218 = vld [vmem:[%s4211 + $0x18] sm:$0xf]
      %v4219 = vld [vmem:[%s4211 + $0x1c] sm:$0xf]
      %v4220 = vld [vmem:[%s4211 + $0x20] sm:$0xf]
      %v4221 = vld [vmem:[%s4211 + $0x24] sm:$0xf]
      %v4222 = vld [vmem:[%s4211 + $0x28] sm:$0xf]
      %v4223 = vld [vmem:[%s4211 + $0x2c] sm:$0xf]
      %v4224 = vld [vmem:[%s4211 + $0x30] sm:$0xf]
      %v4225 = vld [vmem:[%s4211 + $0x34] sm:$0xf]
      %v4226 = vld [vmem:[%s4211 + $0x38] sm:$0xf]
      %v4227 = vld [vmem:[%s4211 + $0x3c] sm:$0xf]
      %v4228 = vunpack.c.l.b16 %v3840
      %v4229 = vunpack.c.l.b16 %v3850
      %v4230 = vunpack.c.l.b16 %v3864
      %v4231 = vunpack.c.l.b16 %v3874
      %v4232 = vunpack.c.l.b16 %v3888
      %v4233 = vunpack.c.l.b16 %v3898
      %v4234 = vunpack.c.l.b16 %v3912
      %v4235 = vunpack.c.l.b16 %v3922
      %v4236 = vunpack.c.l.b16 %v3936
      %v4237 = vunpack.c.l.b16 %v3946
      %v4238 = vunpack.c.l.b16 %v3960
      %v4239 = vunpack.c.l.b16 %v3970
      %v4240 = vunpack.c.l.b16 %v3984
      %v4241 = vunpack.c.l.b16 %v3994
      %v4242 = vunpack.c.l.b16 %v4008
      %v4243 = vunpack.c.l.b16 %v4018
      %v4244 = vunpack.c.l.b16 %v4032
      %v4245 = vunpack.c.l.b16 %v4042
      %v4246 = vunpack.c.l.b16 %v4056
      %v4247 = vunpack.c.l.b16 %v4066
      %v4248 = vunpack.c.l.b16 %v4080
      %v4249 = vunpack.c.l.b16 %v4090
      %v4250 = vunpack.c.l.b16 %v4104
      %v4251 = vunpack.c.l.b16 %v4114
      %v4252 = vunpack.c.l.b16 %v4128
      %v4253 = vunpack.c.l.b16 %v4138
      %v4254 = vunpack.c.l.b16 %v4152
      %v4255 = vunpack.c.l.b16 %v4162
      %v4256 = vunpack.c.l.b16 %v4176
      %v4257 = vunpack.c.l.b16 %v4186
      %v4258 = vunpack.c.l.b16 %v4200
      %v4259 = vunpack.c.l.b16 %v4210
      %v4260 = vpack.c.b16 %v4229, %v4228
      %v4261 = vpack.c.b16 %v4231, %v4230
      %v4262 = vpack.c.b16 %v4233, %v4232
      %v4263 = vpack.c.b16 %v4235, %v4234
      %v4264 = vpack.c.b16 %v4237, %v4236
      %v4265 = vpack.c.b16 %v4239, %v4238
      %v4266 = vpack.c.b16 %v4241, %v4240
      %v4267 = vpack.c.b16 %v4243, %v4242
      %v4268 = vpack.c.b16 %v4245, %v4244
      %v4269 = vpack.c.b16 %v4247, %v4246
      %v4270 = vpack.c.b16 %v4249, %v4248
      %v4271 = vpack.c.b16 %v4251, %v4250
      %v4272 = vpack.c.b16 %v4253, %v4252
      %v4273 = vpack.c.b16 %v4255, %v4254
      %v4274 = vpack.c.b16 %v4257, %v4256
      %v4275 = vpack.c.b16 %v4259, %v4258
      %v4308 = vunpack.c.l.b16 %v4212
      %v4309 = vunpack.c.l.b16 %v4213
      %v4310 = vunpack.c.l.b16 %v4214
      %v4311 = vunpack.c.l.b16 %v4215
      %v4312 = vunpack.c.l.b16 %v4216
      %v4313 = vunpack.c.l.b16 %v4217
      %v4314 = vunpack.c.l.b16 %v4218
      %v4315 = vunpack.c.l.b16 %v4219
      %v4316 = vunpack.c.l.b16 %v4220
      %v4317 = vunpack.c.l.b16 %v4221
      %v4318 = vunpack.c.l.b16 %v4222
      %v4319 = vunpack.c.l.b16 %v4223
      %v4320 = vunpack.c.l.b16 %v4224
      %v4321 = vunpack.c.l.b16 %v4225
      %v4322 = vunpack.c.l.b16 %v4226
      %v4323 = vunpack.c.l.b16 %v4227
      %v4324 = vpack.c.b16 %v4309, %v4308
      %v4325 = vpack.c.b16 %v4311, %v4310
      %v4326 = vpack.c.b16 %v4313, %v4312
      %v4327 = vpack.c.b16 %v4315, %v4314
      %v4328 = vpack.c.b16 %v4317, %v4316
      %v4329 = vpack.c.b16 %v4319, %v4318
      %v4330 = vpack.c.b16 %v4321, %v4320
      %v4331 = vpack.c.b16 %v4323, %v4322
      %4340 = vmatprep.subr.bf16.mxu0 0
      %4341 = vmatpush1.bf16.msra.mxu0 %v4331
      %4342 = vmatprep.subr.bf16.mxu0 0
      %4343 = vmatpush1.bf16.msra.mxu0 %v4330
      %4344 = vmatprep.subr.bf16.mxu0 0
      %4345 = vmatpush1.bf16.msra.mxu0 %v4329
      %4346 = vmatprep.subr.bf16.mxu0 0
      %4347 = vmatpush1.bf16.msra.mxu0 %v4328
      %4348 = vmatprep.subr.bf16.mxu0 0
      %4349 = vmatpush1.bf16.msra.mxu0 %v4327
      %4350 = vmatprep.subr.bf16.mxu0 0
      %4351 = vmatpush1.bf16.msra.mxu0 %v4326
      %4352 = vmatprep.subr.bf16.mxu0 0
      %4353 = vmatpush1.bf16.msra.mxu0 %v4325
      %4354 = vmatprep.subr.bf16.mxu0 0
      %4355 = vmatpush1.bf16.msra.mxu0 %v4324
      %4356 = vmatprep.subr.bf16.mxu0 0
      %4357 = vmatpush2.bf16.msra.mxu0 0
      %4358 = vmatprep.subr.bf16.mxu0 0
      %4359 = vmatpush2.bf16.msra.mxu0 0
      %4360 = vmatprep.subr.bf16.mxu0 0
      %4361 = vmatpush2.bf16.msra.mxu0 0
      %4362 = vmatprep.subr.bf16.mxu0 0
      %4363 = vmatpush2.bf16.msra.mxu0 0
      %4364 = vmatprep.subr.bf16.mxu0 0
      %4365 = vmatpush2.bf16.msra.mxu0 0
      %4366 = vmatprep.subr.bf16.mxu0 0
      %4367 = vmatpush2.bf16.msra.mxu0 0
      %4368 = vmatprep.subr.bf16.mxu0 0
      %4369 = vmatpush2.bf16.msra.mxu0 0
      %4370 = vmatprep.subr.bf16.mxu0 0
      %4371 = vmatpush2.bf16.msra.mxu0 0
      %4372 = vmatprep.mubr.bf16.mxu0 0
      %4373 = vmatmul.mubr.bf16.gmra.mxu0 %v4260
      %v4374 = vpop.f32.mrf.mxu0
      %v4375 = vadd.f32 0.0, %v4374
      %v4376 = vpop.f32.mrf.mxu0
      %v4377 = vpop.f32.mrf.mxu0
      %v4378 = vadd.f32 0.0, %v4377
      %v4379 = vpop.f32.mrf.mxu0
      %4380 = vmatprep.mubr.bf16.mxu0 0
      %4381 = vmatmul.mubr.bf16.gmra.mxu0 %v4261
      %v4382 = vpop.f32.mrf.mxu0
      %v4383 = vadd.f32 0.0, %v4382
      %v4384 = vpop.f32.mrf.mxu0
      %v4385 = vpop.f32.mrf.mxu0
      %v4386 = vadd.f32 0.0, %v4385
      %v4387 = vpop.f32.mrf.mxu0
      %4388 = vmatprep.mubr.bf16.mxu0 0
      %4389 = vmatmul.mubr.bf16.gmra.mxu0 %v4262
      %v4390 = vpop.f32.mrf.mxu0
      %v4391 = vadd.f32 0.0, %v4390
      %v4392 = vpop.f32.mrf.mxu0
      %v4393 = vpop.f32.mrf.mxu0
      %v4394 = vadd.f32 0.0, %v4393
      %v4395 = vpop.f32.mrf.mxu0
      %4396 = vmatprep.mubr.bf16.mxu0 0
      %4397 = vmatmul.mubr.bf16.gmra.mxu0 %v4263
      %v4398 = vpop.f32.mrf.mxu0
      %v4399 = vadd.f32 0.0, %v4398
      %v4400 = vpop.f32.mrf.mxu0
      %v4401 = vpop.f32.mrf.mxu0
      %v4402 = vadd.f32 0.0, %v4401
      %v4403 = vpop.f32.mrf.mxu0
      %4404 = vmatprep.mubr.bf16.mxu0 0
      %4405 = vmatmul.mubr.bf16.gmra.mxu0 %v4264
      %v4406 = vpop.f32.mrf.mxu0
      %v4407 = vadd.f32 0.0, %v4406
      %v4408 = vpop.f32.mrf.mxu0
      %v4409 = vpop.f32.mrf.mxu0
      %v4410 = vadd.f32 0.0, %v4409
      %v4411 = vpop.f32.mrf.mxu0
      %4412 = vmatprep.mubr.bf16.mxu0 0
      %4413 = vmatmul.mubr.bf16.gmra.mxu0 %v4265
      %v4414 = vpop.f32.mrf.mxu0
      %v4415 = vadd.f32 0.0, %v4414
      %v4416 = vpop.f32.mrf.mxu0
      %v4417 = vpop.f32.mrf.mxu0
      %v4418 = vadd.f32 0.0, %v4417
      %v4419 = vpop.f32.mrf.mxu0
      %4420 = vmatprep.mubr.bf16.mxu0 0
      %4421 = vmatmul.mubr.bf16.gmra.mxu0 %v4266
      %v4422 = vpop.f32.mrf.mxu0
      %v4423 = vadd.f32 0.0, %v4422
      %v4424 = vpop.f32.mrf.mxu0
      %v4425 = vpop.f32.mrf.mxu0
      %v4426 = vadd.f32 0.0, %v4425
      %v4427 = vpop.f32.mrf.mxu0
      %4428 = vmatprep.mubr.bf16.mxu0 0
      %4429 = vmatmul.mubr.bf16.gmra.mxu0 %v4267
      %v4430 = vpop.f32.mrf.mxu0
      %v4431 = vadd.f32 0.0, %v4430
      %v4432 = vpop.f32.mrf.mxu0
      %v4433 = vpop.f32.mrf.mxu0
      %v4434 = vadd.f32 0.0, %v4433
      %v4435 = vpop.f32.mrf.mxu0
      %4436 = vmatprep.mubr.bf16.mxu0 0
      %4437 = vmatmul.mubr.bf16.gmra.mxu0 %v4268
      %v4438 = vpop.f32.mrf.mxu0
      %v4439 = vadd.f32 0.0, %v4438
      %v4440 = vpop.f32.mrf.mxu0
      %v4441 = vpop.f32.mrf.mxu0
      %v4442 = vadd.f32 0.0, %v4441
      %v4443 = vpop.f32.mrf.mxu0
      %4444 = vmatprep.mubr.bf16.mxu0 0
      %4445 = vmatmul.mubr.bf16.gmra.mxu0 %v4269
      %v4446 = vpop.f32.mrf.mxu0
      %v4447 = vadd.f32 0.0, %v4446
      %v4448 = vpop.f32.mrf.mxu0
      %v4449 = vpop.f32.mrf.mxu0
      %v4450 = vadd.f32 0.0, %v4449
      %v4451 = vpop.f32.mrf.mxu0
      %4452 = vmatprep.mubr.bf16.mxu0 0
      %4453 = vmatmul.mubr.bf16.gmra.mxu0 %v4270
      %v4454 = vpop.f32.mrf.mxu0
      %v4455 = vadd.f32 0.0, %v4454
      %v4456 = vpop.f32.mrf.mxu0
      %v4457 = vpop.f32.mrf.mxu0
      %v4458 = vadd.f32 0.0, %v4457
      %v4459 = vpop.f32.mrf.mxu0
      %4460 = vmatprep.mubr.bf16.mxu0 0
      %4461 = vmatmul.mubr.bf16.gmra.mxu0 %v4271
      %v4462 = vpop.f32.mrf.mxu0
      %v4463 = vadd.f32 0.0, %v4462
      %v4464 = vpop.f32.mrf.mxu0
      %v4465 = vpop.f32.mrf.mxu0
      %v4466 = vadd.f32 0.0, %v4465
      %v4467 = vpop.f32.mrf.mxu0
      %4468 = vmatprep.mubr.bf16.mxu0 0
      %4469 = vmatmul.mubr.bf16.gmra.mxu0 %v4272
      %v4470 = vpop.f32.mrf.mxu0
      %v4471 = vadd.f32 0.0, %v4470
      %v4472 = vpop.f32.mrf.mxu0
      %v4473 = vpop.f32.mrf.mxu0
      %v4474 = vadd.f32 0.0, %v4473
      %v4475 = vpop.f32.mrf.mxu0
      %4476 = vmatprep.mubr.bf16.mxu0 0
      %4477 = vmatmul.mubr.bf16.gmra.mxu0 %v4273
      %v4478 = vpop.f32.mrf.mxu0
      %v4479 = vadd.f32 0.0, %v4478
      %v4480 = vpop.f32.mrf.mxu0
      %v4481 = vpop.f32.mrf.mxu0
      %v4482 = vadd.f32 0.0, %v4481
      %v4483 = vpop.f32.mrf.mxu0
      %4484 = vmatprep.mubr.bf16.mxu0 0
      %4485 = vmatmul.mubr.bf16.gmra.mxu0 %v4274
      %v4486 = vpop.f32.mrf.mxu0
      %v4487 = vadd.f32 0.0, %v4486
      %v4488 = vpop.f32.mrf.mxu0
      %v4489 = vpop.f32.mrf.mxu0
      %v4490 = vadd.f32 0.0, %v4489
      %v4491 = vpop.f32.mrf.mxu0
      %4492 = vmatprep.mubr.bf16.mxu0 0
      %4493 = vmatmul.mubr.bf16.gmra.mxu0 %v4275
      %v4494 = vpop.f32.mrf.mxu0
      %v4495 = vadd.f32 0.0, %v4494
      %v4496 = vpop.f32.mrf.mxu0
      %v4497 = vpop.f32.mrf.mxu0
      %v4498 = vadd.f32 0.0, %v4497
      %v4499 = vpop.f32.mrf.mxu0
      %4500 = vdwg.mxu0
      %v4501 = vadd.f32 %v3747, %v4375
      %v4502 = vadd.f32 %v3748, %v4378
      %v4503 = vadd.f32 %v3749, %v4383
      %v4504 = vadd.f32 %v3750, %v4386
      %v4505 = vadd.f32 %v3751, %v4391
      %v4506 = vadd.f32 %v3752, %v4394
      %v4507 = vadd.f32 %v3753, %v4399
      %v4508 = vadd.f32 %v3754, %v4402
      %v4509 = vadd.f32 %v3755, %v4407
      %v4510 = vadd.f32 %v3756, %v4410
      %v4511 = vadd.f32 %v3757, %v4415
      %v4512 = vadd.f32 %v3758, %v4418
      %v4513 = vadd.f32 %v3759, %v4423
      %v4514 = vadd.f32 %v3760, %v4426
      %v4515 = vadd.f32 %v3761, %v4431
      %v4516 = vadd.f32 %v3762, %v4434
      %v4517 = vadd.f32 %v3763, %v4439
      %v4518 = vadd.f32 %v3764, %v4442
      %v4519 = vadd.f32 %v3765, %v4447
      %v4520 = vadd.f32 %v3766, %v4450
      %v4521 = vadd.f32 %v3767, %v4455
      %v4522 = vadd.f32 %v3768, %v4458
      %v4523 = vadd.f32 %v3769, %v4463
      %v4524 = vadd.f32 %v3770, %v4466
      %v4525 = vadd.f32 %v3771, %v4471
      %v4526 = vadd.f32 %v3772, %v4474
      %v4527 = vadd.f32 %v3773, %v4479
      %v4528 = vadd.f32 %v3774, %v4482
      %v4529 = vadd.f32 %v3775, %v4487
      %v4530 = vadd.f32 %v3776, %v4490
      %v4531 = vadd.f32 %v3777, %v4495
      %v4532 = vadd.f32 %v3778, %v4498
      %v4533 = vld [vmem:[%s3392] sm:$0xe]
      %v4534 = vld [vmem:[%s3392 + $0xc] sm:$0xe]
      %v4535 = vld [vmem:[%s3392 + $0x18] sm:$0xe]
      %v4536 = vld [vmem:[%s3392 + $0x24] sm:$0xe]
      %v4537 = vld [vmem:[%s3392 + $0x30] sm:$0xe]
      %v4538 = vld [vmem:[%s3392 + $0x3c] sm:$0xe]
      %v4539 = vld [vmem:[%s3392 + $0x48] sm:$0xe]
      %v4540 = vld [vmem:[%s3392 + $0x54] sm:$0xe]
      %v4541 = vld [vmem:[%s3392 + $0x60] sm:$0xe]
      %v4542 = vld [vmem:[%s3392 + $0x6c] sm:$0xe]
      %v4543 = vld [vmem:[%s3392 + $0x78] sm:$0xe]
      %v4544 = vld [vmem:[%s3392 + $0x84] sm:$0xe]
      %v4545 = vld [vmem:[%s3392 + $0x90] sm:$0xe]
      %v4546 = vld [vmem:[%s3392 + $0x9c] sm:$0xe]
      %v4547 = vld [vmem:[%s3392 + $0xa8] sm:$0xe]
      %v4548 = vld [vmem:[%s3392 + $0xb4] sm:$0xe]
      %v4597 = vrot.slane %v4533, 5
      %v4598 = vrot.slane %v4597, 4
      %v4599 = vrot.slane %v3780, 5
      %v4600 = vsel %vm1318, %v4598, %v4599
      %v4601 = vrot.slane %v4599, 4
      %v4602 = vrot.slane %v3781, 5
      %v4603 = vsel %vm1318, %v4601, %v4602
      %v4604 = vrot.slane %v4534, 5
      %v4605 = vrot.slane %v4604, 4
      %v4606 = vrot.slane %v3783, 5
      %v4607 = vsel %vm1318, %v4605, %v4606
      %v4608 = vrot.slane %v4606, 4
      %v4609 = vrot.slane %v3784, 5
      %v4610 = vsel %vm1318, %v4608, %v4609
      %v4611 = vrot.slane %v4535, 5
      %v4612 = vrot.slane %v4611, 4
      %v4613 = vrot.slane %v3786, 5
      %v4614 = vsel %vm1318, %v4612, %v4613
      %v4615 = vrot.slane %v4613, 4
      %v4616 = vrot.slane %v3787, 5
      %v4617 = vsel %vm1318, %v4615, %v4616
      %v4618 = vrot.slane %v4536, 5
      %v4619 = vrot.slane %v4618, 4
      %v4620 = vrot.slane %v3789, 5
      %v4621 = vsel %vm1318, %v4619, %v4620
      %v4622 = vrot.slane %v4620, 4
      %v4623 = vrot.slane %v3790, 5
      %v4624 = vsel %vm1318, %v4622, %v4623
      %v4625 = vrot.slane %v4537, 5
      %v4626 = vrot.slane %v4625, 4
      %v4627 = vrot.slane %v3792, 5
      %v4628 = vsel %vm1318, %v4626, %v4627
      %v4629 = vrot.slane %v4627, 4
      %v4630 = vrot.slane %v3793, 5
      %v4631 = vsel %vm1318, %v4629, %v4630
      %v4632 = vrot.slane %v4538, 5
      %v4633 = vrot.slane %v4632, 4
      %v4634 = vrot.slane %v3795, 5
      %v4635 = vsel %vm1318, %v4633, %v4634
      %v4636 = vrot.slane %v4634, 4
      %v4637 = vrot.slane %v3796, 5
      %v4638 = vsel %vm1318, %v4636, %v4637
      %v4639 = vrot.slane %v4539, 5
      %v4640 = vrot.slane %v4639, 4
      %v4641 = vrot.slane %v3798, 5
      %v4642 = vsel %vm1318, %v4640, %v4641
      %v4643 = vrot.slane %v4641, 4
      %v4644 = vrot.slane %v3799, 5
      %v4645 = vsel %vm1318, %v4643, %v4644
      %v4646 = vrot.slane %v4540, 5
      %v4647 = vrot.slane %v4646, 4
      %v4648 = vrot.slane %v3801, 5
      %v4649 = vsel %vm1318, %v4647, %v4648
      %v4650 = vrot.slane %v4648, 4
      %v4651 = vrot.slane %v3802, 5
      %v4652 = vsel %vm1318, %v4650, %v4651
      %v4653 = vrot.slane %v4541, 5
      %v4654 = vrot.slane %v4653, 4
      %v4655 = vrot.slane %v3804, 5
      %v4656 = vsel %vm1318, %v4654, %v4655
      %v4657 = vrot.slane %v4655, 4
      %v4658 = vrot.slane %v3805, 5
      %v4659 = vsel %vm1318, %v4657, %v4658
      %v4660 = vrot.slane %v4542, 5
      %v4661 = vrot.slane %v4660, 4
      %v4662 = vrot.slane %v3807, 5
      %v4663 = vsel %vm1318, %v4661, %v4662
      %v4664 = vrot.slane %v4662, 4
      %v4665 = vrot.slane %v3808, 5
      %v4666 = vsel %vm1318, %v4664, %v4665
      %v4667 = vrot.slane %v4543, 5
      %v4668 = vrot.slane %v4667, 4
      %v4669 = vrot.slane %v3810, 5
      %v4670 = vsel %vm1318, %v4668, %v4669
      %v4671 = vrot.slane %v4669, 4
      %v4672 = vrot.slane %v3811, 5
      %v4673 = vsel %vm1318, %v4671, %v4672
      %v4674 = vrot.slane %v4544, 5
      %v4675 = vrot.slane %v4674, 4
      %v4676 = vrot.slane %v3813, 5
      %v4677 = vsel %vm1318, %v4675, %v4676
      %v4678 = vrot.slane %v4676, 4
      %v4679 = vrot.slane %v3814, 5
      %v4680 = vsel %vm1318, %v4678, %v4679
      %v4681 = vrot.slane %v4545, 5
      %v4682 = vrot.slane %v4681, 4
      %v4683 = vrot.slane %v3816, 5
      %v4684 = vsel %vm1318, %v4682, %v4683
      %v4685 = vrot.slane %v4683, 4
      %v4686 = vrot.slane %v3817, 5
      %v4687 = vsel %vm1318, %v4685, %v4686
      %v4688 = vrot.slane %v4546, 5
      %v4689 = vrot.slane %v4688, 4
      %v4690 = vrot.slane %v3819, 5
      %v4691 = vsel %vm1318, %v4689, %v4690
      %v4692 = vrot.slane %v4690, 4
      %v4693 = vrot.slane %v3820, 5
      %v4694 = vsel %vm1318, %v4692, %v4693
      %v4695 = vrot.slane %v4547, 5
      %v4696 = vrot.slane %v4695, 4
      %v4697 = vrot.slane %v3822, 5
      %v4698 = vsel %vm1318, %v4696, %v4697
      %v4699 = vrot.slane %v4697, 4
      %v4700 = vrot.slane %v3823, 5
      %v4701 = vsel %vm1318, %v4699, %v4700
      %v4702 = vrot.slane %v4548, 5
      %v4703 = vrot.slane %v4702, 4
      %v4704 = vrot.slane %v3825, 5
      %v4705 = vsel %vm1318, %v4703, %v4704
      %v4706 = vrot.slane %v4704, 4
      %v4707 = vrot.slane %v3826, 5
      %v4708 = vsel %vm1318, %v4706, %v4707
      %s4709 = scalar_lea.vmem %s1, 512
      %v4710 = vld [vmem:[%s4709] sm:$0xf]
      %v4711 = vld [vmem:[%s4709 + $0x4] sm:$0xf]
      %v4712 = vld [vmem:[%s4709 + $0x8] sm:$0xf]
      %v4713 = vld [vmem:[%s4709 + $0xc] sm:$0xf]
      %v4714 = vld [vmem:[%s4709 + $0x10] sm:$0xf]
      %v4715 = vld [vmem:[%s4709 + $0x14] sm:$0xf]
      %v4716 = vld [vmem:[%s4709 + $0x18] sm:$0xf]
      %v4717 = vld [vmem:[%s4709 + $0x1c] sm:$0xf]
      %v4718 = vld [vmem:[%s4709 + $0x20] sm:$0xf]
      %v4719 = vld [vmem:[%s4709 + $0x24] sm:$0xf]
      %v4720 = vld [vmem:[%s4709 + $0x28] sm:$0xf]
      %v4721 = vld [vmem:[%s4709 + $0x2c] sm:$0xf]
      %v4722 = vld [vmem:[%s4709 + $0x30] sm:$0xf]
      %v4723 = vld [vmem:[%s4709 + $0x34] sm:$0xf]
      %v4724 = vld [vmem:[%s4709 + $0x38] sm:$0xf]
      %v4725 = vld [vmem:[%s4709 + $0x3c] sm:$0xf]
      %v4726 = vunpack.c.l.b16 %v4600
      %v4727 = vunpack.c.l.b16 %v4603
      %v4728 = vunpack.c.l.b16 %v4607
      %v4729 = vunpack.c.l.b16 %v4610
      %v4730 = vunpack.c.l.b16 %v4614
      %v4731 = vunpack.c.l.b16 %v4617
      %v4732 = vunpack.c.l.b16 %v4621
      %v4733 = vunpack.c.l.b16 %v4624
      %v4734 = vunpack.c.l.b16 %v4628
      %v4735 = vunpack.c.l.b16 %v4631
      %v4736 = vunpack.c.l.b16 %v4635
      %v4737 = vunpack.c.l.b16 %v4638
      %v4738 = vunpack.c.l.b16 %v4642
      %v4739 = vunpack.c.l.b16 %v4645
      %v4740 = vunpack.c.l.b16 %v4649
      %v4741 = vunpack.c.l.b16 %v4652
      %v4742 = vunpack.c.l.b16 %v4656
      %v4743 = vunpack.c.l.b16 %v4659
      %v4744 = vunpack.c.l.b16 %v4663
      %v4745 = vunpack.c.l.b16 %v4666
      %v4746 = vunpack.c.l.b16 %v4670
      %v4747 = vunpack.c.l.b16 %v4673
      %v4748 = vunpack.c.l.b16 %v4677
      %v4749 = vunpack.c.l.b16 %v4680
      %v4750 = vunpack.c.l.b16 %v4684
      %v4751 = vunpack.c.l.b16 %v4687
      %v4752 = vunpack.c.l.b16 %v4691
      %v4753 = vunpack.c.l.b16 %v4694
      %v4754 = vunpack.c.l.b16 %v4698
      %v4755 = vunpack.c.l.b16 %v4701
      %v4756 = vunpack.c.l.b16 %v4705
      %v4757 = vunpack.c.l.b16 %v4708
      %v4758 = vpack.c.b16 %v4727, %v4726
      %v4759 = vpack.c.b16 %v4729, %v4728
      %v4760 = vpack.c.b16 %v4731, %v4730
      %v4761 = vpack.c.b16 %v4733, %v4732
      %v4762 = vpack.c.b16 %v4735, %v4734
      %v4763 = vpack.c.b16 %v4737, %v4736
      %v4764 = vpack.c.b16 %v4739, %v4738
      %v4765 = vpack.c.b16 %v4741, %v4740
      %v4766 = vpack.c.b16 %v4743, %v4742
      %v4767 = vpack.c.b16 %v4745, %v4744
      %v4768 = vpack.c.b16 %v4747, %v4746
      %v4769 = vpack.c.b16 %v4749, %v4748
      %v4770 = vpack.c.b16 %v4751, %v4750
      %v4771 = vpack.c.b16 %v4753, %v4752
      %v4772 = vpack.c.b16 %v4755, %v4754
      %v4773 = vpack.c.b16 %v4757, %v4756
      %v4806 = vunpack.c.l.b16 %v4710
      %v4807 = vunpack.c.l.b16 %v4711
      %v4808 = vunpack.c.l.b16 %v4712
      %v4809 = vunpack.c.l.b16 %v4713
      %v4810 = vunpack.c.l.b16 %v4714
      %v4811 = vunpack.c.l.b16 %v4715
      %v4812 = vunpack.c.l.b16 %v4716
      %v4813 = vunpack.c.l.b16 %v4717
      %v4814 = vunpack.c.l.b16 %v4718
      %v4815 = vunpack.c.l.b16 %v4719
      %v4816 = vunpack.c.l.b16 %v4720
      %v4817 = vunpack.c.l.b16 %v4721
      %v4818 = vunpack.c.l.b16 %v4722
      %v4819 = vunpack.c.l.b16 %v4723
      %v4820 = vunpack.c.l.b16 %v4724
      %v4821 = vunpack.c.l.b16 %v4725
      %v4822 = vpack.c.b16 %v4807, %v4806
      %v4823 = vpack.c.b16 %v4809, %v4808
      %v4824 = vpack.c.b16 %v4811, %v4810
      %v4825 = vpack.c.b16 %v4813, %v4812
      %v4826 = vpack.c.b16 %v4815, %v4814
      %v4827 = vpack.c.b16 %v4817, %v4816
      %v4828 = vpack.c.b16 %v4819, %v4818
      %v4829 = vpack.c.b16 %v4821, %v4820
      %4838 = vmatprep.subr.bf16.mxu0 0
      %4839 = vmatpush1.bf16.msra.mxu0 %v4829
      %4840 = vmatprep.subr.bf16.mxu0 0
      %4841 = vmatpush1.bf16.msra.mxu0 %v4828
      %4842 = vmatprep.subr.bf16.mxu0 0
      %4843 = vmatpush1.bf16.msra.mxu0 %v4827
      %4844 = vmatprep.subr.bf16.mxu0 0
      %4845 = vmatpush1.bf16.msra.mxu0 %v4826
      %4846 = vmatprep.subr.bf16.mxu0 0
      %4847 = vmatpush1.bf16.msra.mxu0 %v4825
      %4848 = vmatprep.subr.bf16.mxu0 0
      %4849 = vmatpush1.bf16.msra.mxu0 %v4824
      %4850 = vmatprep.subr.bf16.mxu0 0
      %4851 = vmatpush1.bf16.msra.mxu0 %v4823
      %4852 = vmatprep.subr.bf16.mxu0 0
      %4853 = vmatpush1.bf16.msra.mxu0 %v4822
      %4854 = vmatprep.subr.bf16.mxu0 0
      %4855 = vmatpush2.bf16.msra.mxu0 0
      %4856 = vmatprep.subr.bf16.mxu0 0
      %4857 = vmatpush2.bf16.msra.mxu0 0
      %4858 = vmatprep.subr.bf16.mxu0 0
      %4859 = vmatpush2.bf16.msra.mxu0 0
      %4860 = vmatprep.subr.bf16.mxu0 0
      %4861 = vmatpush2.bf16.msra.mxu0 0
      %4862 = vmatprep.subr.bf16.mxu0 0
      %4863 = vmatpush2.bf16.msra.mxu0 0
      %4864 = vmatprep.subr.bf16.mxu0 0
      %4865 = vmatpush2.bf16.msra.mxu0 0
      %4866 = vmatprep.subr.bf16.mxu0 0
      %4867 = vmatpush2.bf16.msra.mxu0 0
      %4868 = vmatprep.subr.bf16.mxu0 0
      %4869 = vmatpush2.bf16.msra.mxu0 0
      %4870 = vmatprep.mubr.bf16.mxu0 0
      %4871 = vmatmul.mubr.bf16.gmra.mxu0 %v4758
      %v4872 = vpop.f32.mrf.mxu0
      %v4873 = vadd.f32 0.0, %v4872
      %v4874 = vpop.f32.mrf.mxu0
      %v4875 = vpop.f32.mrf.mxu0
      %v4876 = vadd.f32 0.0, %v4875
      %v4877 = vpop.f32.mrf.mxu0
      %4878 = vmatprep.mubr.bf16.mxu0 0
      %4879 = vmatmul.mubr.bf16.gmra.mxu0 %v4759
      %v4880 = vpop.f32.mrf.mxu0
      %v4881 = vadd.f32 0.0, %v4880
      %v4882 = vpop.f32.mrf.mxu0
      %v4883 = vpop.f32.mrf.mxu0
      %v4884 = vadd.f32 0.0, %v4883
      %v4885 = vpop.f32.mrf.mxu0
      %4886 = vmatprep.mubr.bf16.mxu0 0
      %4887 = vmatmul.mubr.bf16.gmra.mxu0 %v4760
      %v4888 = vpop.f32.mrf.mxu0
      %v4889 = vadd.f32 0.0, %v4888
      %v4890 = vpop.f32.mrf.mxu0
      %v4891 = vpop.f32.mrf.mxu0
      %v4892 = vadd.f32 0.0, %v4891
      %v4893 = vpop.f32.mrf.mxu0
      %4894 = vmatprep.mubr.bf16.mxu0 0
      %4895 = vmatmul.mubr.bf16.gmra.mxu0 %v4761
      %v4896 = vpop.f32.mrf.mxu0
      %v4897 = vadd.f32 0.0, %v4896
      %v4898 = vpop.f32.mrf.mxu0
      %v4899 = vpop.f32.mrf.mxu0
      %v4900 = vadd.f32 0.0, %v4899
      %v4901 = vpop.f32.mrf.mxu0
      %4902 = vmatprep.mubr.bf16.mxu0 0
      %4903 = vmatmul.mubr.bf16.gmra.mxu0 %v4762
      %v4904 = vpop.f32.mrf.mxu0
      %v4905 = vadd.f32 0.0, %v4904
      %v4906 = vpop.f32.mrf.mxu0
      %v4907 = vpop.f32.mrf.mxu0
      %v4908 = vadd.f32 0.0, %v4907
      %v4909 = vpop.f32.mrf.mxu0
      %4910 = vmatprep.mubr.bf16.mxu0 0
      %4911 = vmatmul.mubr.bf16.gmra.mxu0 %v4763
      %v4912 = vpop.f32.mrf.mxu0
      %v4913 = vadd.f32 0.0, %v4912
      %v4914 = vpop.f32.mrf.mxu0
      %v4915 = vpop.f32.mrf.mxu0
      %v4916 = vadd.f32 0.0, %v4915
      %v4917 = vpop.f32.mrf.mxu0
      %4918 = vmatprep.mubr.bf16.mxu0 0
      %4919 = vmatmul.mubr.bf16.gmra.mxu0 %v4764
      %v4920 = vpop.f32.mrf.mxu0
      %v4921 = vadd.f32 0.0, %v4920
      %v4922 = vpop.f32.mrf.mxu0
      %v4923 = vpop.f32.mrf.mxu0
      %v4924 = vadd.f32 0.0, %v4923
      %v4925 = vpop.f32.mrf.mxu0
      %4926 = vmatprep.mubr.bf16.mxu0 0
      %4927 = vmatmul.mubr.bf16.gmra.mxu0 %v4765
      %v4928 = vpop.f32.mrf.mxu0
      %v4929 = vadd.f32 0.0, %v4928
      %v4930 = vpop.f32.mrf.mxu0
      %v4931 = vpop.f32.mrf.mxu0
      %v4932 = vadd.f32 0.0, %v4931
      %v4933 = vpop.f32.mrf.mxu0
      %4934 = vmatprep.mubr.bf16.mxu0 0
      %4935 = vmatmul.mubr.bf16.gmra.mxu0 %v4766
      %v4936 = vpop.f32.mrf.mxu0
      %v4937 = vadd.f32 0.0, %v4936
      %v4938 = vpop.f32.mrf.mxu0
      %v4939 = vpop.f32.mrf.mxu0
      %v4940 = vadd.f32 0.0, %v4939
      %v4941 = vpop.f32.mrf.mxu0
      %4942 = vmatprep.mubr.bf16.mxu0 0
      %4943 = vmatmul.mubr.bf16.gmra.mxu0 %v4767
      %v4944 = vpop.f32.mrf.mxu0
      %v4945 = vadd.f32 0.0, %v4944
      %v4946 = vpop.f32.mrf.mxu0
      %v4947 = vpop.f32.mrf.mxu0
      %v4948 = vadd.f32 0.0, %v4947
      %v4949 = vpop.f32.mrf.mxu0
      %4950 = vmatprep.mubr.bf16.mxu0 0
      %4951 = vmatmul.mubr.bf16.gmra.mxu0 %v4768
      %v4952 = vpop.f32.mrf.mxu0
      %v4953 = vadd.f32 0.0, %v4952
      %v4954 = vpop.f32.mrf.mxu0
      %v4955 = vpop.f32.mrf.mxu0
      %v4956 = vadd.f32 0.0, %v4955
      %v4957 = vpop.f32.mrf.mxu0
      %4958 = vmatprep.mubr.bf16.mxu0 0
      %4959 = vmatmul.mubr.bf16.gmra.mxu0 %v4769
      %v4960 = vpop.f32.mrf.mxu0
      %v4961 = vadd.f32 0.0, %v4960
      %v4962 = vpop.f32.mrf.mxu0
      %v4963 = vpop.f32.mrf.mxu0
      %v4964 = vadd.f32 0.0, %v4963
      %v4965 = vpop.f32.mrf.mxu0
      %4966 = vmatprep.mubr.bf16.mxu0 0
      %4967 = vmatmul.mubr.bf16.gmra.mxu0 %v4770
      %v4968 = vpop.f32.mrf.mxu0
      %v4969 = vadd.f32 0.0, %v4968
      %v4970 = vpop.f32.mrf.mxu0
      %v4971 = vpop.f32.mrf.mxu0
      %v4972 = vadd.f32 0.0, %v4971
      %v4973 = vpop.f32.mrf.mxu0
      %4974 = vmatprep.mubr.bf16.mxu0 0
      %4975 = vmatmul.mubr.bf16.gmra.mxu0 %v4771
      %v4976 = vpop.f32.mrf.mxu0
      %v4977 = vadd.f32 0.0, %v4976
      %v4978 = vpop.f32.mrf.mxu0
      %v4979 = vpop.f32.mrf.mxu0
      %v4980 = vadd.f32 0.0, %v4979
      %v4981 = vpop.f32.mrf.mxu0
      %4982 = vmatprep.mubr.bf16.mxu0 0
      %4983 = vmatmul.mubr.bf16.gmra.mxu0 %v4772
      %v4984 = vpop.f32.mrf.mxu0
      %v4985 = vadd.f32 0.0, %v4984
      %v4986 = vpop.f32.mrf.mxu0
      %v4987 = vpop.f32.mrf.mxu0
      %v4988 = vadd.f32 0.0, %v4987
      %v4989 = vpop.f32.mrf.mxu0
      %4990 = vmatprep.mubr.bf16.mxu0 0
      %4991 = vmatmul.mubr.bf16.gmra.mxu0 %v4773
      %v4992 = vpop.f32.mrf.mxu0
      %v4993 = vadd.f32 0.0, %v4992
      %v4994 = vpop.f32.mrf.mxu0
      %v4995 = vpop.f32.mrf.mxu0
      %v4996 = vadd.f32 0.0, %v4995
      %v4997 = vpop.f32.mrf.mxu0
      %4998 = vdwg.mxu0
      %v4999 = vadd.f32 %v4501, %v4873
      %v5000 = vadd.f32 %v4502, %v4876
      %v5001 = vadd.f32 %v4503, %v4881
      %v5002 = vadd.f32 %v4504, %v4884
      %v5003 = vadd.f32 %v4505, %v4889
      %v5004 = vadd.f32 %v4506, %v4892
      %v5005 = vadd.f32 %v4507, %v4897
      %v5006 = vadd.f32 %v4508, %v4900
      %v5007 = vadd.f32 %v4509, %v4905
      %v5008 = vadd.f32 %v4510, %v4908
      %v5009 = vadd.f32 %v4511, %v4913
      %v5010 = vadd.f32 %v4512, %v4916
      %v5011 = vadd.f32 %v4513, %v4921
      %v5012 = vadd.f32 %v4514, %v4924
      %v5013 = vadd.f32 %v4515, %v4929
      %v5014 = vadd.f32 %v4516, %v4932
      %v5015 = vadd.f32 %v4517, %v4937
      %v5016 = vadd.f32 %v4518, %v4940
      %v5017 = vadd.f32 %v4519, %v4945
      %v5018 = vadd.f32 %v4520, %v4948
      %v5019 = vadd.f32 %v4521, %v4953
      %v5020 = vadd.f32 %v4522, %v4956
      %v5021 = vadd.f32 %v4523, %v4961
      %v5022 = vadd.f32 %v4524, %v4964
      %v5023 = vadd.f32 %v4525, %v4969
      %v5024 = vadd.f32 %v4526, %v4972
      %v5025 = vadd.f32 %v4527, %v4977
      %v5026 = vadd.f32 %v4528, %v4980
      %v5027 = vadd.f32 %v4529, %v4985
      %v5028 = vadd.f32 %v4530, %v4988
      %v5029 = vadd.f32 %v4531, %v4993
      %v5030 = vadd.f32 %v4532, %v4996
      %v5031 = vld [vmem:[%s2] sm:$0x1]
      %v5033 = vlaneseq
      %v5034 = vshrl.u32 %v5033, 7
      %v5035 = vsub.s32 0, %v5034
      %v5036 = vrot.slane %v5031, %v5035
      %v5038 = vadd.f32 %v4999, %v5036
      %v5039 = vadd.f32 %v5000, %v5036
      %v5040 = vadd.f32 %v5001, %v5036
      %v5041 = vadd.f32 %v5002, %v5036
      %v5042 = vadd.f32 %v5003, %v5036
      %v5043 = vadd.f32 %v5004, %v5036
      %v5044 = vadd.f32 %v5005, %v5036
      %v5045 = vadd.f32 %v5006, %v5036
      %v5046 = vadd.f32 %v5007, %v5036
      %v5047 = vadd.f32 %v5008, %v5036
      %v5048 = vadd.f32 %v5009, %v5036
      %v5049 = vadd.f32 %v5010, %v5036
      %v5050 = vadd.f32 %v5011, %v5036
      %v5051 = vadd.f32 %v5012, %v5036
      %v5052 = vadd.f32 %v5013, %v5036
      %v5053 = vadd.f32 %v5014, %v5036
      %v5054 = vadd.f32 %v5015, %v5036
      %v5055 = vadd.f32 %v5016, %v5036
      %v5056 = vadd.f32 %v5017, %v5036
      %v5057 = vadd.f32 %v5018, %v5036
      %v5058 = vadd.f32 %v5019, %v5036
      %v5059 = vadd.f32 %v5020, %v5036
      %v5060 = vadd.f32 %v5021, %v5036
      %v5061 = vadd.f32 %v5022, %v5036
      %v5062 = vadd.f32 %v5023, %v5036
      %v5063 = vadd.f32 %v5024, %v5036
      %v5064 = vadd.f32 %v5025, %v5036
      %v5065 = vadd.f32 %v5026, %v5036
      %v5066 = vadd.f32 %v5027, %v5036
      %v5067 = vadd.f32 %v5028, %v5036
      %v5068 = vadd.f32 %v5029, %v5036
      %v5069 = vadd.f32 %v5030, %v5036
      %v5070 = vld [vmem:[%s213] sm:$0xf]
      %v5071 = vld [vmem:[%s213 + $0x4] sm:$0xf]
      %v5072 = vld [vmem:[%s213 + $0x8] sm:$0xf]
      %v5073 = vld [vmem:[%s213 + $0xc] sm:$0xf]
      %v5074 = vld [vmem:[%s213 + $0x10] sm:$0xf]
      %v5075 = vld [vmem:[%s213 + $0x14] sm:$0xf]
      %v5076 = vld [vmem:[%s213 + $0x18] sm:$0xf]
      %v5077 = vld [vmem:[%s213 + $0x1c] sm:$0xf]
      %v5078 = vld [vmem:[%s213 + $0x20] sm:$0xf]
      %v5079 = vld [vmem:[%s213 + $0x24] sm:$0xf]
      %v5080 = vld [vmem:[%s213 + $0x28] sm:$0xf]
      %v5081 = vld [vmem:[%s213 + $0x2c] sm:$0xf]
      %v5082 = vld [vmem:[%s213 + $0x30] sm:$0xf]
      %v5083 = vld [vmem:[%s213 + $0x34] sm:$0xf]
      %v5084 = vld [vmem:[%s213 + $0x38] sm:$0xf]
      %v5085 = vld [vmem:[%s213 + $0x3c] sm:$0xf]
      %v5086 = vld [vmem:[%s213 + $0x40] sm:$0xf]
      %v5087 = vld [vmem:[%s213 + $0x44] sm:$0xf]
      %v5088 = vld [vmem:[%s213 + $0x48] sm:$0xf]
      %v5089 = vld [vmem:[%s213 + $0x4c] sm:$0xf]
      %v5090 = vld [vmem:[%s213 + $0x50] sm:$0xf]
      %v5091 = vld [vmem:[%s213 + $0x54] sm:$0xf]
      %v5092 = vld [vmem:[%s213 + $0x58] sm:$0xf]
      %v5093 = vld [vmem:[%s213 + $0x5c] sm:$0xf]
      %v5094 = vld [vmem:[%s213 + $0x60] sm:$0xf]
      %v5095 = vld [vmem:[%s213 + $0x64] sm:$0xf]
      %v5096 = vld [vmem:[%s213 + $0x68] sm:$0xf]
      %v5097 = vld [vmem:[%s213 + $0x6c] sm:$0xf]
      %v5098 = vld [vmem:[%s213 + $0x70] sm:$0xf]
      %v5099 = vld [vmem:[%s213 + $0x74] sm:$0xf]
      %v5100 = vld [vmem:[%s213 + $0x78] sm:$0xf]
      %v5101 = vld [vmem:[%s213 + $0x7c] sm:$0xf]
      %v5102 = vunpack.c.l.bf16 %v5070
      %v5103 = vunpack.c.l.bf16 %v5071
      %v5104 = vunpack.c.l.bf16 %v5072
      %v5105 = vunpack.c.l.bf16 %v5073
      %v5106 = vunpack.c.l.bf16 %v5074
      %v5107 = vunpack.c.l.bf16 %v5075
      %v5108 = vunpack.c.l.bf16 %v5076
      %v5109 = vunpack.c.l.bf16 %v5077
      %v5110 = vunpack.c.l.bf16 %v5078
      %v5111 = vunpack.c.l.bf16 %v5079
      %v5112 = vunpack.c.l.bf16 %v5080
      %v5113 = vunpack.c.l.bf16 %v5081
      %v5114 = vunpack.c.l.bf16 %v5082
      %v5115 = vunpack.c.l.bf16 %v5083
      %v5116 = vunpack.c.l.bf16 %v5084
      %v5117 = vunpack.c.l.bf16 %v5085
      %v5118 = vunpack.c.l.bf16 %v5086
      %v5119 = vunpack.c.l.bf16 %v5087
      %v5120 = vunpack.c.l.bf16 %v5088
      %v5121 = vunpack.c.l.bf16 %v5089
      %v5122 = vunpack.c.l.bf16 %v5090
      %v5123 = vunpack.c.l.bf16 %v5091
      %v5124 = vunpack.c.l.bf16 %v5092
      %v5125 = vunpack.c.l.bf16 %v5093
      %v5126 = vunpack.c.l.bf16 %v5094
      %v5127 = vunpack.c.l.bf16 %v5095
      %v5128 = vunpack.c.l.bf16 %v5096
      %v5129 = vunpack.c.l.bf16 %v5097
      %v5130 = vunpack.c.l.bf16 %v5098
      %v5131 = vunpack.c.l.bf16 %v5099
      %v5132 = vunpack.c.l.bf16 %v5100
      %v5133 = vunpack.c.l.bf16 %v5101
      %v5134 = vadd.f32 %v5038, %v5102
      %v5135 = vadd.f32 %v5039, %v5103
      %v5136 = vadd.f32 %v5040, %v5104
      %v5137 = vadd.f32 %v5041, %v5105
      %v5138 = vadd.f32 %v5042, %v5106
      %v5139 = vadd.f32 %v5043, %v5107
      %v5140 = vadd.f32 %v5044, %v5108
      %v5141 = vadd.f32 %v5045, %v5109
      %v5142 = vadd.f32 %v5046, %v5110
      %v5143 = vadd.f32 %v5047, %v5111
      %v5144 = vadd.f32 %v5048, %v5112
      %v5145 = vadd.f32 %v5049, %v5113
      %v5146 = vadd.f32 %v5050, %v5114
      %v5147 = vadd.f32 %v5051, %v5115
      %v5148 = vadd.f32 %v5052, %v5116
      %v5149 = vadd.f32 %v5053, %v5117
      %v5150 = vadd.f32 %v5054, %v5118
      %v5151 = vadd.f32 %v5055, %v5119
      %v5152 = vadd.f32 %v5056, %v5120
      %v5153 = vadd.f32 %v5057, %v5121
      %v5154 = vadd.f32 %v5058, %v5122
      %v5155 = vadd.f32 %v5059, %v5123
      %v5156 = vadd.f32 %v5060, %v5124
      %v5157 = vadd.f32 %v5061, %v5125
      %v5158 = vadd.f32 %v5062, %v5126
      %v5159 = vadd.f32 %v5063, %v5127
      %v5160 = vadd.f32 %v5064, %v5128
      %v5161 = vadd.f32 %v5065, %v5129
      %v5162 = vadd.f32 %v5066, %v5130
      %v5163 = vadd.f32 %v5067, %v5131
      %v5164 = vadd.f32 %v5068, %v5132
      %v5165 = vadd.f32 %v5069, %v5133
      %5166 = vst [vmem:[%s219] sm:$0xff] %v5134
      %5167 = vst [vmem:[%s219 + $0x8] sm:$0xff] %v5135
      %5168 = vst [vmem:[%s219 + $0x10] sm:$0xff] %v5136
      %5169 = vst [vmem:[%s219 + $0x18] sm:$0xff] %v5137
      %5170 = vst [vmem:[%s219 + $0x20] sm:$0xff] %v5138
      %5171 = vst [vmem:[%s219 + $0x28] sm:$0xff] %v5139
      %5172 = vst [vmem:[%s219 + $0x30] sm:$0xff] %v5140
      %5173 = vst [vmem:[%s219 + $0x38] sm:$0xff] %v5141
      %5174 = vst [vmem:[%s219 + $0x40] sm:$0xff] %v5142
      %5175 = vst [vmem:[%s219 + $0x48] sm:$0xff] %v5143
      %5176 = vst [vmem:[%s219 + $0x50] sm:$0xff] %v5144
      %5177 = vst [vmem:[%s219 + $0x58] sm:$0xff] %v5145
      %5178 = vst [vmem:[%s219 + $0x60] sm:$0xff] %v5146
      %5179 = vst [vmem:[%s219 + $0x68] sm:$0xff] %v5147
      %5180 = vst [vmem:[%s219 + $0x70] sm:$0xff] %v5148
      %5181 = vst [vmem:[%s219 + $0x78] sm:$0xff] %v5149
      %5182 = vst [vmem:[%s219 + $0x80] sm:$0xff] %v5150
      %5183 = vst [vmem:[%s219 + $0x88] sm:$0xff] %v5151
      %5184 = vst [vmem:[%s219 + $0x90] sm:$0xff] %v5152
      %5185 = vst [vmem:[%s219 + $0x98] sm:$0xff] %v5153
      %5186 = vst [vmem:[%s219 + $0xa0] sm:$0xff] %v5154
      %5187 = vst [vmem:[%s219 + $0xa8] sm:$0xff] %v5155
      %5188 = vst [vmem:[%s219 + $0xb0] sm:$0xff] %v5156
      %5189 = vst [vmem:[%s219 + $0xb8] sm:$0xff] %v5157
      %5190 = vst [vmem:[%s219 + $0xc0] sm:$0xff] %v5158
      %5191 = vst [vmem:[%s219 + $0xc8] sm:$0xff] %v5159
      %5192 = vst [vmem:[%s219 + $0xd0] sm:$0xff] %v5160
      %5193 = vst [vmem:[%s219 + $0xd8] sm:$0xff] %v5161
      %5194 = vst [vmem:[%s219 + $0xe0] sm:$0xff] %v5162
      %5195 = vst [vmem:[%s219 + $0xe8] sm:$0xff] %v5163
      %5196 = vst [vmem:[%s219 + $0xf0] sm:$0xff] %v5164
      %5197 = vst [vmem:[%s219 + $0xf8] sm:$0xff] %v5165
      %s5198 = smul.u32 32, %s15
      %p5199 = scmp.lt.s32.totalorder %s5198, 63
      %s5200 = scalar_select %p5199, %s5198, 63
      %s5201 = smul.addr %s5200, 8
      %s5202 = scalar_lea.vmem %s4, %s5201
      // Predicated region
      $region37: #{wide_basic_forward.7} parent=35 // pred_check
        %p5203 = pneg %p127
      $region38: #{wide_basic_forward.7} parent=35 // pred_check_branch
        %5205 = sbr.rel (%p5203) target = $region40
      $region39: #{wide_basic_forward.7} parent=35 // pred_region
        %s5206 = smul.u32 32, %s15
      $region40: #{wide_basic_forward.7} parent=35 // pred_fallthru
        _
    $region36: #{wide_basic_forward.7} parent=5 // pred_fallthru
      _
    %p5207 = scmp.le.s32.totalorder 2, %s10
    // Predicated region
    $region41: #{wide_basic_forward.7} parent=5 // pred_check
      %p5208 = pneg %p5207
    $region42: #{wide_basic_forward.7} parent=5 // pred_check_branch
      %5210 = sbr.rel (%p5208) target = $region44
    $region43: #{wide_basic_forward.7} parent=5 // pred_region
      %s5211 = ssub.s32 %s10, 2
      // Predicated region
      $region45: #{wide_basic_forward.7} parent=43 // pred_check
        %p5212 = pneg %p133
      $region46: #{wide_basic_forward.7} parent=43 // pred_check_branch
        %5214 = sbr.rel (%p5212) target = $region48
      $region47: #{wide_basic_forward.7} parent=43 // pred_region
        %s5215 = smul.u32 32, %s16
        %p5216 = scmp.lt.s32.totalorder %s5215, 63
        %s5217 = scalar_select %p5216, %s5215, 63
        %s5218 = smul.addr %s5217, 8
        %s5219 = scalar_lea.vmem %s4, %s5218
      $region48: #{wide_basic_forward.7} parent=43 // pred_fallthru
        _
    $region44: #{wide_basic_forward.7} parent=5 // pred_fallthru
      _
  $region6: #{wide_basic_forward.7} parent=0 // loop_footer
    %s14 = sadd.s32 1, %s10
  $region7: #{wide_basic_forward.7} parent=0 // loop_footer_branch
    %9 = sbr.rel target = $region3
  $region8: #{wide_basic_forward.7} parent=0 // loop_exit
    _

</llo_original>
